<compile_context>
chip_gen: v7x
topology: tpu7x:2x2x1
jax: 0.10.0
libtpu: 0.0.40
codegen_flags: <defaults>
</compile_context>

<pallas_src>
import math
from functools import partial

import jax
import jax.numpy as jnp
from jax.experimental import pallas as pl
from jax.experimental.pallas import tpu as pltpu


# ----------------------------------------------------------------------------
# Pallas kernel: fused mediator attention + dwc residual + output projection
# (one batch element per grid step)
# ----------------------------------------------------------------------------
def _softmax_last(s):
    # f32 in, f32 out; max-subtract for stability, EUP approx reciprocal.
    m = jnp.max(s, axis=-1, keepdims=True)
    e = jnp.exp(s - m)
    return e * pl.reciprocal(jnp.sum(e, axis=-1, keepdims=True), approx=True)


def _mediator_attn_kernel(q_ref, k_ref, v_ref, med_ref, pb_ref, mb_ref,
                          dwc_ref, wp_ref, bp_ref, o_ref):
    # q/k/v: [H, N, D] bf16   med: [H, M, D] bf16
    # pb: [H, M, N] f32       mb: [H, N, M] f32
    # dwc: [N, C] bf16        wp: [C, C] bf16   bp: [1, C] f32   out: [N, C] f32
    H, N, D = q_ref.shape
    scale = float(D) ** -0.5

    wp = wp_ref[...]                                               # [C, C] bf16

    # proj(attn + dwc) = attn @ Wp + dwc @ Wp + bp; start with the dwc branch
    # (this is the only K=C matmul, so it seeds the f32 accumulator).
    acc = jnp.dot(dwc_ref[...], wp, preferred_element_type=jnp.float32)   # [N, C]
    acc = acc + bp_ref[...]                                        # + proj bias

    for h in range(H):                                             # static unroll (H small)
        q = q_ref[h]                                               # [N, D] bf16
        k = k_ref[h]                                               # [N, D] bf16
        v = v_ref[h]                                               # [N, D] bf16
        med = med_ref[h]                                           # [M, D] bf16

        # stage 1: mediators attend to keys -> mediator values
        s1 = jnp.einsum('md,nd->mn', med, k,
                        preferred_element_type=jnp.float32) * scale + pb_ref[h]
        a1 = _softmax_last(s1)                                     # [M, N] f32
        mv = jnp.dot(a1.astype(jnp.bfloat16), v,
                     preferred_element_type=jnp.float32)           # [M, D] f32

        # stage 2: queries attend to mediators
        s2 = jnp.einsum('nd,md->nm', q, med,
                        preferred_element_type=jnp.float32) * scale + mb_ref[h]
        a2 = _softmax_last(s2)                                     # [N, M] f32
        o_h = jnp.dot(a2.astype(jnp.bfloat16), mv.astype(jnp.bfloat16),
                      preferred_element_type=jnp.float32)          # [N, D] f32

        # head merge folded into the output projection:
        #   concat_h(o_h) @ Wp == sum_h o_h @ Wp[h*D:(h+1)*D, :]
        acc = acc + jnp.dot(o_h.astype(jnp.bfloat16),
                            wp[h * D:(h + 1) * D, :],
                            preferred_element_type=jnp.float32)

    o_ref[...] = acc.astype(o_ref.dtype)


def mediator_attention_pallas(q, k, v, med, pb, mb, dwc, w_proj, b_proj):
    """q/k/v: [B,H,N,D] bf16, med: [B,H,M,D] bf16, pb: [H,M,N] f32,
    mb: [H,N,M] f32, dwc: [B,N,C] bf16, w_proj: [C,C] bf16, b_proj: [1,C] f32
    -> [B, N, C] f32"""
    B, H, N, D = q.shape
    M = med.shape[2]
    C = H * D

    return pl.pallas_call(
        _mediator_attn_kernel,
        out_shape=jax.ShapeDtypeStruct((B, N, C), jnp.float32),
        grid_spec=pltpu.PrefetchScalarGridSpec(
            num_scalar_prefetch=0,
            grid=(B,),
            in_specs=[
                pl.BlockSpec((None, H, N, D), lambda b: (b, 0, 0, 0)),  # q
                pl.BlockSpec((None, H, N, D), lambda b: (b, 0, 0, 0)),  # k
                pl.BlockSpec((None, H, N, D), lambda b: (b, 0, 0, 0)),  # v
                pl.BlockSpec((None, H, M, D), lambda b: (b, 0, 0, 0)),  # mediators
                pl.BlockSpec((H, M, N), lambda b: (0, 0, 0)),           # pos bias (resident)
                pl.BlockSpec((H, N, M), lambda b: (0, 0, 0)),           # mediator bias (resident)
                pl.BlockSpec((None, N, C), lambda b: (b, 0, 0)),        # dwc(v) tokens
                pl.BlockSpec((C, C), lambda b: (0, 0)),                 # proj weight (resident)
                pl.BlockSpec((1, C), lambda b: (0, 0)),                 # proj bias (resident)
            ],
            out_specs=pl.BlockSpec((None, N, C), lambda b: (b, 0, 0)),
        ),
        compiler_params=pltpu.CompilerParams(
            dimension_semantics=("parallel",)),                        # feeds 2 TCs on v7x
    )(q, k, v, med, pb, mb, dwc, w_proj, b_proj)


# ----------------------------------------------------------------------------
# Wrapper glue (plain XLA): QKV linear, q-pooling, bias interpolation, dwc
# ----------------------------------------------------------------------------
def _prepare_inputs(params, x, *, num_heads, latent_size, mediator_num):
    b, n, c = x.shape
    lh, lw = latent_size
    head_dim = c // num_heads
    pool = int(round(mediator_num ** 0.5))

    # QKV projection (ordinary XLA matmul — keep the tiny-K work off the kernel)
    qkv = x @ params['w_qkv'] + params['b_qkv']                    # [b, n, 3c]
    q, k, v = qkv[..., :c], qkv[..., c:2 * c], qkv[..., 2 * c:]

    # mediator tokens = adaptive average pool of q over the spatial grid
    q_img = q.reshape(b, lh, lw, c)
    med = q_img.reshape(b, pool, lh // pool, pool, lw // pool, c).mean(axis=(2, 4))
    med = med.reshape(b, mediator_num, c)                          # [b, m, c]

    # split heads -> [b, H, s, d]
    def heads(t):
        return t.reshape(b, -1, num_heads, head_dim).transpose(0, 2, 1, 3)
    qh, kh, vh, medh = heads(q), heads(k), heads(v), heads(med)

    # position biases (batch independent, computed once per call)
    pb1 = jax.image.resize(params['an_bias'],
                           (num_heads, mediator_num, lh, lw),
                           method='bilinear').reshape(num_heads, mediator_num, n)
    pb2 = (params['ah_bias'] + params['aw_bias']).reshape(num_heads, mediator_num, n)
    pb = (pb1 + pb2).astype(jnp.float32)                           # [H, m, n]

    mb1 = jax.image.resize(params['na_bias'],
                           (num_heads, mediator_num, lh, lw),
                           method='bilinear').reshape(num_heads, mediator_num, n)
    mb1 = mb1.transpose(0, 2, 1)                                   # [H, n, m]
    mb2 = (params['ha_bias'] + params['wa_bias']).reshape(num_heads, n, mediator_num)
    mb = (mb1 + mb2).astype(jnp.float32)                           # [H, n, m]

    # depthwise 3x3 conv branch on v
    v_img = v.reshape(b, lh, lw, c).transpose(0, 3, 1, 2)          # [b, c, h, w]
    dwc = jax.lax.conv_general_dilated(
        v_img, params['w_dwc'], window_strides=(1, 1), padding=((1, 1), (1, 1)),
        dimension_numbers=('NCHW', 'OIHW', 'NCHW'), feature_group_count=c)
    dwc = dwc + params['b_dwc'][None, :, None, None]
    dwc_tok = dwc.transpose(0, 2, 3, 1).reshape(b, n, c)           # [b, n, c]

    return qh, kh, vh, medh, pb, mb, dwc_tok


def attention_with_mediators_forward(params, x, *, num_heads, latent_size,
                                     mediator_num):
    c = x.shape[-1]
    qh, kh, vh, medh, pb, mb, dwc_tok = _prepare_inputs(
        params, x, num_heads=num_heads, latent_size=latent_size,
        mediator_num=mediator_num)
    return mediator_attention_pallas(
        qh.astype(jnp.bfloat16), kh.astype(jnp.bfloat16), vh.astype(jnp.bfloat16),
        medh.astype(jnp.bfloat16), pb, mb, dwc_tok.astype(jnp.bfloat16),
        params['w_proj'].astype(jnp.bfloat16),
        params['b_proj'].reshape(1, c).astype(jnp.float32))


def attention_with_mediators_reference(params, x, *, num_heads, latent_size,
                                       mediator_num):
    """Pure-JAX f32 reference of the same forward (for self-check)."""
    qh, kh, vh, medh, pb, mb, dwc_tok = _prepare_inputs(
        params, x, num_heads=num_heads, latent_size=latent_size,
        mediator_num=mediator_num)
    b, h, n, d = qh.shape
    c = h * d
    scale = d ** -0.5
    a1 = jax.nn.softmax(jnp.einsum('bhmd,bhnd->bhmn', medh, kh) * scale + pb[None], -1)
    mv = jnp.einsum('bhmn,bhnd->bhmd', a1, vh)
    a2 = jax.nn.softmax(jnp.einsum('bhnd,bhmd->bhnm', qh, medh) * scale + mb[None], -1)
    o = jnp.einsum('bhnm,bhmd->bhnd', a2, mv)
    o = o.transpose(0, 2, 1, 3).reshape(b, n, c)
    return (o + dwc_tok) @ params['w_proj'] + params['b_proj'][None, None, :]


# ----------------------------------------------------------------------------
# Parameters + module wrapper mirroring the PyTorch class
# ----------------------------------------------------------------------------
def _init_params(key, dim, latent_size, num_heads, mediator_num, qkv_bias):
    ks = jax.random.split(key, 12)
    lh, lw = latent_size

    def uniform(k, shape, fan_in):
        bound = 1.0 / math.sqrt(fan_in)
        return jax.random.uniform(k, shape, jnp.float32, -bound, bound)

    def trunc(k, shape, std=0.02):
        return std * jax.random.truncated_normal(k, -2.0, 2.0, shape, jnp.float32)

    b_qkv = uniform(ks[1], (3 * dim,), dim) if qkv_bias else jnp.zeros((3 * dim,), jnp.float32)
    return {
        'w_qkv': uniform(ks[0], (dim, 3 * dim), dim),      # stored as [in, out]
        'b_qkv': b_qkv,
        'w_proj': uniform(ks[2], (dim, dim), dim),         # stored as [in, out]
        'b_proj': uniform(ks[3], (dim,), dim),
        'w_dwc': uniform(ks[4], (dim, 1, 3, 3), 9),        # depthwise OIHW
        'b_dwc': uniform(ks[5], (dim,), 9),
        'an_bias': trunc(ks[6], (num_heads, mediator_num, 7, 7)),
        'na_bias': trunc(ks[7], (num_heads, mediator_num, 7, 7)),
        'ah_bias': trunc(ks[8], (num_heads, mediator_num, lh, 1)),
        'aw_bias': trunc(ks[9], (num_heads, mediator_num, 1, lw)),
        'ha_bias': trunc(ks[10], (num_heads, lh, 1, mediator_num)),
        'wa_bias': trunc(ks[11], (num_heads, 1, lw, mediator_num)),
    }


class AttentionWithMediators:
    def __init__(self, dim, latent_size, num_heads, qkv_bias=True, qk_scale=None,
                 attn_drop=0.0, proj_drop=0.0, shift_size=0, mediator_num=64,
                 key=None, **kwargs):
        assert dim % num_heads == 0
        pool = int(round(mediator_num ** 0.5))
        assert pool * pool == mediator_num
        assert latent_size[0] % pool == 0 and latent_size[1] % pool == 0
        # TODO(synk): adaptive avg-pool only implemented for evenly divisible latent sizes.
        # TODO(synk): dropout (attn_drop / proj_drop) omitted — defaults are 0.0 (identity).
        # Note: the PyTorch module ignores qk_scale and always uses head_dim**-0.5; mirrored.
        self.dim = dim
        self.latent_size = tuple(latent_size)
        self.num_heads = num_heads
        self.mediator_num = mediator_num
        self.shift_size = shift_size          # stored, unused in forward (as in PyTorch)

        if key is None:
            key = jax.random.PRNGKey(0)
        self.params = _init_params(key, dim, self.latent_size, num_heads,
                                   mediator_num, qkv_bias)
        cfg = dict(num_heads=num_heads, latent_size=self.latent_size,
                   mediator_num=mediator_num)
        self._forward = jax.jit(partial(attention_with_mediators_forward, **cfg))
        self._reference = jax.jit(partial(attention_with_mediators_reference, **cfg))

    def __call__(self, x, mask=None):
        return self._forward(self.params, x)

    forward = __call__

    def reference(self, x):
        return self._reference(self.params, x)


if __name__ == "__main__":
    DIM, HEADS, LATENT, MED = 128, 4, (16, 16), 64
    B = 2
    N = LATENT[0] * LATENT[1]          # 256 tokens

    key = jax.random.PRNGKey(0)
    k_param, k_x = jax.random.split(key)

    model = AttentionWithMediators(DIM, LATENT, HEADS, mediator_num=MED, key=k_param)
    x = jax.random.normal(k_x, (B, N, DIM), jnp.float32)

    out = jax.block_until_ready(model(x))
    assert out.shape == (B, N, DIM)
    assert bool(jnp.all(jnp.isfinite(out)))

    # self-check against the pure-JAX f32 reference (kernel path uses bf16 operands)
    ref = jax.block_until_ready(model.reference(x))
    max_err = float(jnp.max(jnp.abs(out - ref)))
    assert max_err < 0.2, f"kernel mismatch: max abs err {max_err}"

    print("KERNEL_OK")
</pallas_src>

<mosaic_0001>
module attributes {stable_mosaic.version = 11 : i64} {
  func.func @_mediator_attn_kernel(%arg0: i32, %arg1: memref<1x4x256x32xbf16, #tpu.memory_space<vmem>>, %arg2: memref<1x4x256x32xbf16, #tpu.memory_space<vmem>>, %arg3: memref<1x4x256x32xbf16, #tpu.memory_space<vmem>>, %arg4: memref<1x4x64x32xbf16, #tpu.memory_space<vmem>>, %arg5: memref<4x64x256xf32, #tpu.memory_space<vmem>>, %arg6: memref<4x256x64xf32, #tpu.memory_space<vmem>>, %arg7: memref<1x256x128xbf16, #tpu.memory_space<vmem>>, %arg8: memref<128x128xbf16, #tpu.memory_space<vmem>>, %arg9: memref<1x128xf32, #tpu.memory_space<vmem>>, %arg10: memref<1x256x128xf32, #tpu.memory_space<vmem>>) attributes {dimension_semantics = [#tpu.dimension_semantics<parallel>], iteration_bounds = array<i64: 2>, scalar_prefetch = 0 : i64, scratch_operands = 0 : i64, tpu.core_type = #tpu.core_type<tc>, window_params = [{transform_indices = @transform_0, window_bounds = array<i64: 1, 4, 256, 32>}, {transform_indices = @transform_1, window_bounds = array<i64: 1, 4, 256, 32>}, {transform_indices = @transform_2, window_bounds = array<i64: 1, 4, 256, 32>}, {transform_indices = @transform_3, window_bounds = array<i64: 1, 4, 64, 32>}, {pipeline_mode = #tpu.pipeline_mode<synchronous>, transform_indices = @transform_4, window_bounds = array<i64: 4, 64, 256>}, {pipeline_mode = #tpu.pipeline_mode<synchronous>, transform_indices = @transform_5, window_bounds = array<i64: 4, 256, 64>}, {transform_indices = @transform_6, window_bounds = array<i64: 1, 256, 128>}, {pipeline_mode = #tpu.pipeline_mode<synchronous>, transform_indices = @transform_7, window_bounds = array<i64: 128, 128>}, {pipeline_mode = #tpu.pipeline_mode<synchronous>, transform_indices = @transform_8, window_bounds = array<i64: 1, 128>}, {transform_indices = @transform_9, window_bounds = array<i64: 1, 256, 128>}]} {
    %c0 = arith.constant 0 : index
    %c0_0 = arith.constant 0 : index
    %0 = vector.load %arg8[%c0, %c0_0] : memref<128x128xbf16, #tpu.memory_space<vmem>>, vector<128x128xbf16>
    %c0_1 = arith.constant 0 : index
    %c0_2 = arith.constant 0 : index
    %c0_3 = arith.constant 0 : index
    %1 = vector.load %arg7[%c0_1, %c0_2, %c0_3] : memref<1x256x128xbf16, #tpu.memory_space<vmem>>, vector<1x256x128xbf16>
    %2 = vector.shape_cast %1 : vector<1x256x128xbf16> to vector<256x128xbf16>
    %cst = arith.constant dense<0.000000e+00> : vector<256x128xf32>
    %3 = tpu.matmul %2, %0, %cst {dimension_numbers = #tpu.dot_dimension_numbers<[1], [0], [0], [1], [0, 0, 1, 1], [], []>} : vector<256x128xbf16>, vector<128x128xbf16>, vector<256x128xf32> -> vector<256x128xf32>
    %c0_4 = arith.constant 0 : index
    %c0_5 = arith.constant 0 : index
    %4 = vector.load %arg9[%c0_4, %c0_5] : memref<1x128xf32, #tpu.memory_space<vmem>>, vector<1x128xf32>
    %5 = vector.broadcast %4 : vector<1x128xf32> to vector<256x128xf32>
    %6 = arith.addf %3, %5 : vector<256x128xf32>
    %c0_6 = arith.constant 0 : index
    %c0_7 = arith.constant 0 : index
    %c0_8 = arith.constant 0 : index
    %c0_9 = arith.constant 0 : index
    %7 = vector.load %arg1[%c0_6, %c0_7, %c0_8, %c0_9] : memref<1x4x256x32xbf16, #tpu.memory_space<vmem>>, vector<1x1x256x32xbf16>
    %8 = vector.shape_cast %7 : vector<1x1x256x32xbf16> to vector<256x32xbf16>
    %c0_10 = arith.constant 0 : index
    %c0_11 = arith.constant 0 : index
    %c0_12 = arith.constant 0 : index
    %c0_13 = arith.constant 0 : index
    %9 = vector.load %arg2[%c0_10, %c0_11, %c0_12, %c0_13] : memref<1x4x256x32xbf16, #tpu.memory_space<vmem>>, vector<1x1x256x32xbf16>
    %10 = vector.shape_cast %9 : vector<1x1x256x32xbf16> to vector<256x32xbf16>
    %c0_14 = arith.constant 0 : index
    %c0_15 = arith.constant 0 : index
    %c0_16 = arith.constant 0 : index
    %c0_17 = arith.constant 0 : index
    %11 = vector.load %arg3[%c0_14, %c0_15, %c0_16, %c0_17] : memref<1x4x256x32xbf16, #tpu.memory_space<vmem>>, vector<1x1x256x32xbf16>
    %12 = vector.shape_cast %11 : vector<1x1x256x32xbf16> to vector<256x32xbf16>
    %c0_18 = arith.constant 0 : index
    %c0_19 = arith.constant 0 : index
    %c0_20 = arith.constant 0 : index
    %c0_21 = arith.constant 0 : index
    %13 = vector.load %arg4[%c0_18, %c0_19, %c0_20, %c0_21] : memref<1x4x64x32xbf16, #tpu.memory_space<vmem>>, vector<1x1x64x32xbf16>
    %14 = vector.shape_cast %13 : vector<1x1x64x32xbf16> to vector<64x32xbf16>
    "tpu.trace_start"() <{level = 10 : i32, message = "md,nd->mn"}> : () -> ()
    %cst_22 = arith.constant dense<0.000000e+00> : vector<64x256xf32>
    %15 = tpu.matmul %14, %10, %cst_22 {dimension_numbers = #tpu.dot_dimension_numbers<[1], [1], [0], [0], [0, 0, 1, 0], [], []>} : vector<64x32xbf16>, vector<256x32xbf16>, vector<64x256xf32> -> vector<64x256xf32>
    "tpu.trace_stop"() : () -> ()
    %cst_23 = arith.constant 0.176776692 : f32
    %16 = vector.broadcast %cst_23 : f32 to vector<64x256xf32>
    %17 = arith.mulf %15, %16 : vector<64x256xf32>
    %c0_24 = arith.constant 0 : index
    %c0_25 = arith.constant 0 : index
    %c0_26 = arith.constant 0 : index
    %18 = vector.load %arg5[%c0_24, %c0_25, %c0_26] : memref<4x64x256xf32, #tpu.memory_space<vmem>>, vector<1x64x256xf32>
    %19 = vector.shape_cast %18 : vector<1x64x256xf32> to vector<64x256xf32>
    %20 = arith.addf %17, %19 : vector<64x256xf32>
    %cst_27 = arith.constant dense<0xFF800000> : vector<64xf32>
    %21 = vector.multi_reduction <maximumf>, %20, %cst_27 [1] : vector<64x256xf32> to vector<64xf32>
    %22 = vector.shape_cast %21 : vector<64xf32> to vector<64x1xf32>
    %23 = vector.broadcast %22 : vector<64x1xf32> to vector<64x256xf32>
    %24 = arith.subf %20, %23 : vector<64x256xf32>
    %25 = math.exp %24 : vector<64x256xf32>
    %cst_28 = arith.constant dense<0.000000e+00> : vector<64xf32>
    %26 = vector.multi_reduction <add>, %25, %cst_28 [1] : vector<64x256xf32> to vector<64xf32>
    %27 = vector.shape_cast %26 : vector<64xf32> to vector<64x1xf32>
    %28 = tpu.reciprocal %27 {approx = true} : vector<64x1xf32> -> vector<64x1xf32>
    %29 = vector.broadcast %28 : vector<64x1xf32> to vector<64x256xf32>
    %30 = arith.mulf %25, %29 : vector<64x256xf32>
    %31 = arith.truncf %30 : vector<64x256xf32> to vector<64x256xbf16>
    %cst_29 = arith.constant dense<0.000000e+00> : vector<64x32xf32>
    %32 = tpu.matmul %31, %12, %cst_29 {dimension_numbers = #tpu.dot_dimension_numbers<[1], [0], [0], [1], [0, 0, 1, 1], [], []>} : vector<64x256xbf16>, vector<256x32xbf16>, vector<64x32xf32> -> vector<64x32xf32>
    "tpu.trace_start"() <{level = 10 : i32, message = "nd,md->nm"}> : () -> ()
    %cst_30 = arith.constant dense<0.000000e+00> : vector<256x64xf32>
    %33 = tpu.matmul %8, %14, %cst_30 {dimension_numbers = #tpu.dot_dimension_numbers<[1], [1], [0], [0], [0, 0, 1, 0], [], []>} : vector<256x32xbf16>, vector<64x32xbf16>, vector<256x64xf32> -> vector<256x64xf32>
    "tpu.trace_stop"() : () -> ()
    %cst_31 = arith.constant 0.176776692 : f32
    %34 = vector.broadcast %cst_31 : f32 to vector<256x64xf32>
    %35 = arith.mulf %33, %34 : vector<256x64xf32>
    %c0_32 = arith.constant 0 : index
    %c0_33 = arith.constant 0 : index
    %c0_34 = arith.constant 0 : index
    %36 = vector.load %arg6[%c0_32, %c0_33, %c0_34] : memref<4x256x64xf32, #tpu.memory_space<vmem>>, vector<1x256x64xf32>
    %37 = vector.shape_cast %36 : vector<1x256x64xf32> to vector<256x64xf32>
    %38 = arith.addf %35, %37 : vector<256x64xf32>
    %cst_35 = arith.constant dense<0xFF800000> : vector<256xf32>
    %39 = vector.multi_reduction <maximumf>, %38, %cst_35 [1] : vector<256x64xf32> to vector<256xf32>
    %40 = vector.shape_cast %39 : vector<256xf32> to vector<256x1xf32>
    %41 = vector.broadcast %40 : vector<256x1xf32> to vector<256x64xf32>
    %42 = arith.subf %38, %41 : vector<256x64xf32>
    %43 = math.exp %42 : vector<256x64xf32>
    %cst_36 = arith.constant dense<0.000000e+00> : vector<256xf32>
    %44 = vector.multi_reduction <add>, %43, %cst_36 [1] : vector<256x64xf32> to vector<256xf32>
    %45 = vector.shape_cast %44 : vector<256xf32> to vector<256x1xf32>
    %46 = tpu.reciprocal %45 {approx = true} : vector<256x1xf32> -> vector<256x1xf32>
    %47 = vector.broadcast %46 : vector<256x1xf32> to vector<256x64xf32>
    %48 = arith.mulf %43, %47 : vector<256x64xf32>
    %49 = arith.truncf %48 : vector<256x64xf32> to vector<256x64xbf16>
    %50 = arith.truncf %32 : vector<64x32xf32> to vector<64x32xbf16>
    %cst_37 = arith.constant dense<0.000000e+00> : vector<256x32xf32>
    %51 = tpu.matmul %49, %50, %cst_37 {dimension_numbers = #tpu.dot_dimension_numbers<[1], [0], [0], [1], [0, 0, 1, 1], [], []>} : vector<256x64xbf16>, vector<64x32xbf16>, vector<256x32xf32> -> vector<256x32xf32>
    %52 = arith.truncf %51 : vector<256x32xf32> to vector<256x32xbf16>
    %53 = vector.extract_strided_slice %0 {offsets = [0, 0], sizes = [32, 128], strides = [1, 1]} : vector<128x128xbf16> to vector<32x128xbf16>
    %cst_38 = arith.constant dense<0.000000e+00> : vector<256x128xf32>
    %54 = tpu.matmul %52, %53, %cst_38 {dimension_numbers = #tpu.dot_dimension_numbers<[1], [0], [0], [1], [0, 0, 1, 1], [], []>} : vector<256x32xbf16>, vector<32x128xbf16>, vector<256x128xf32> -> vector<256x128xf32>
    %55 = arith.addf %6, %54 : vector<256x128xf32>
    %c0_39 = arith.constant 0 : index
    %c1 = arith.constant 1 : index
    %c0_40 = arith.constant 0 : index
    %c0_41 = arith.constant 0 : index
    %56 = vector.load %arg1[%c0_39, %c1, %c0_40, %c0_41] : memref<1x4x256x32xbf16, #tpu.memory_space<vmem>>, vector<1x1x256x32xbf16>
    %57 = vector.shape_cast %56 : vector<1x1x256x32xbf16> to vector<256x32xbf16>
    %c0_42 = arith.constant 0 : index
    %c1_43 = arith.constant 1 : index
    %c0_44 = arith.constant 0 : index
    %c0_45 = arith.constant 0 : index
    %58 = vector.load %arg2[%c0_42, %c1_43, %c0_44, %c0_45] : memref<1x4x256x32xbf16, #tpu.memory_space<vmem>>, vector<1x1x256x32xbf16>
    %59 = vector.shape_cast %58 : vector<1x1x256x32xbf16> to vector<256x32xbf16>
    %c0_46 = arith.constant 0 : index
    %c1_47 = arith.constant 1 : index
    %c0_48 = arith.constant 0 : index
    %c0_49 = arith.constant 0 : index
    %60 = vector.load %arg3[%c0_46, %c1_47, %c0_48, %c0_49] : memref<1x4x256x32xbf16, #tpu.memory_space<vmem>>, vector<1x1x256x32xbf16>
    %61 = vector.shape_cast %60 : vector<1x1x256x32xbf16> to vector<256x32xbf16>
    %c0_50 = arith.constant 0 : index
    %c1_51 = arith.constant 1 : index
    %c0_52 = arith.constant 0 : index
    %c0_53 = arith.constant 0 : index
    %62 = vector.load %arg4[%c0_50, %c1_51, %c0_52, %c0_53] : memref<1x4x64x32xbf16, #tpu.memory_space<vmem>>, vector<1x1x64x32xbf16>
    %63 = vector.shape_cast %62 : vector<1x1x64x32xbf16> to vector<64x32xbf16>
    "tpu.trace_start"() <{level = 10 : i32, message = "md,nd->mn"}> : () -> ()
    %cst_54 = arith.constant dense<0.000000e+00> : vector<64x256xf32>
    %64 = tpu.matmul %63, %59, %cst_54 {dimension_numbers = #tpu.dot_dimension_numbers<[1], [1], [0], [0], [0, 0, 1, 0], [], []>} : vector<64x32xbf16>, vector<256x32xbf16>, vector<64x256xf32> -> vector<64x256xf32>
    "tpu.trace_stop"() : () -> ()
    %cst_55 = arith.constant 0.176776692 : f32
    %65 = vector.broadcast %cst_55 : f32 to vector<64x256xf32>
    %66 = arith.mulf %64, %65 : vector<64x256xf32>
    %c1_56 = arith.constant 1 : index
    %c0_57 = arith.constant 0 : index
    %c0_58 = arith.constant 0 : index
    %67 = vector.load %arg5[%c1_56, %c0_57, %c0_58] : memref<4x64x256xf32, #tpu.memory_space<vmem>>, vector<1x64x256xf32>
    %68 = vector.shape_cast %67 : vector<1x64x256xf32> to vector<64x256xf32>
    %69 = arith.addf %66, %68 : vector<64x256xf32>
    %cst_59 = arith.constant dense<0xFF800000> : vector<64xf32>
    %70 = vector.multi_reduction <maximumf>, %69, %cst_59 [1] : vector<64x256xf32> to vector<64xf32>
    %71 = vector.shape_cast %70 : vector<64xf32> to vector<64x1xf32>
    %72 = vector.broadcast %71 : vector<64x1xf32> to vector<64x256xf32>
    %73 = arith.subf %69, %72 : vector<64x256xf32>
    %74 = math.exp %73 : vector<64x256xf32>
    %cst_60 = arith.constant dense<0.000000e+00> : vector<64xf32>
    %75 = vector.multi_reduction <add>, %74, %cst_60 [1] : vector<64x256xf32> to vector<64xf32>
    %76 = vector.shape_cast %75 : vector<64xf32> to vector<64x1xf32>
    %77 = tpu.reciprocal %76 {approx = true} : vector<64x1xf32> -> vector<64x1xf32>
    %78 = vector.broadcast %77 : vector<64x1xf32> to vector<64x256xf32>
    %79 = arith.mulf %74, %78 : vector<64x256xf32>
    %80 = arith.truncf %79 : vector<64x256xf32> to vector<64x256xbf16>
    %cst_61 = arith.constant dense<0.000000e+00> : vector<64x32xf32>
    %81 = tpu.matmul %80, %61, %cst_61 {dimension_numbers = #tpu.dot_dimension_numbers<[1], [0], [0], [1], [0, 0, 1, 1], [], []>} : vector<64x256xbf16>, vector<256x32xbf16>, vector<64x32xf32> -> vector<64x32xf32>
    "tpu.trace_start"() <{level = 10 : i32, message = "nd,md->nm"}> : () -> ()
    %cst_62 = arith.constant dense<0.000000e+00> : vector<256x64xf32>
    %82 = tpu.matmul %57, %63, %cst_62 {dimension_numbers = #tpu.dot_dimension_numbers<[1], [1], [0], [0], [0, 0, 1, 0], [], []>} : vector<256x32xbf16>, vector<64x32xbf16>, vector<256x64xf32> -> vector<256x64xf32>
    "tpu.trace_stop"() : () -> ()
    %cst_63 = arith.constant 0.176776692 : f32
    %83 = vector.broadcast %cst_63 : f32 to vector<256x64xf32>
    %84 = arith.mulf %82, %83 : vector<256x64xf32>
    %c1_64 = arith.constant 1 : index
    %c0_65 = arith.constant 0 : index
    %c0_66 = arith.constant 0 : index
    %85 = vector.load %arg6[%c1_64, %c0_65, %c0_66] : memref<4x256x64xf32, #tpu.memory_space<vmem>>, vector<1x256x64xf32>
    %86 = vector.shape_cast %85 : vector<1x256x64xf32> to vector<256x64xf32>
    %87 = arith.addf %84, %86 : vector<256x64xf32>
    %cst_67 = arith.constant dense<0xFF800000> : vector<256xf32>
    %88 = vector.multi_reduction <maximumf>, %87, %cst_67 [1] : vector<256x64xf32> to vector<256xf32>
    %89 = vector.shape_cast %88 : vector<256xf32> to vector<256x1xf32>
    %90 = vector.broadcast %89 : vector<256x1xf32> to vector<256x64xf32>
    %91 = arith.subf %87, %90 : vector<256x64xf32>
    %92 = math.exp %91 : vector<256x64xf32>
    %cst_68 = arith.constant dense<0.000000e+00> : vector<256xf32>
    %93 = vector.multi_reduction <add>, %92, %cst_68 [1] : vector<256x64xf32> to vector<256xf32>
    %94 = vector.shape_cast %93 : vector<256xf32> to vector<256x1xf32>
    %95 = tpu.reciprocal %94 {approx = true} : vector<256x1xf32> -> vector<256x1xf32>
    %96 = vector.broadcast %95 : vector<256x1xf32> to vector<256x64xf32>
    %97 = arith.mulf %92, %96 : vector<256x64xf32>
    %98 = arith.truncf %97 : vector<256x64xf32> to vector<256x64xbf16>
    %99 = arith.truncf %81 : vector<64x32xf32> to vector<64x32xbf16>
    %cst_69 = arith.constant dense<0.000000e+00> : vector<256x32xf32>
    %100 = tpu.matmul %98, %99, %cst_69 {dimension_numbers = #tpu.dot_dimension_numbers<[1], [0], [0], [1], [0, 0, 1, 1], [], []>} : vector<256x64xbf16>, vector<64x32xbf16>, vector<256x32xf32> -> vector<256x32xf32>
    %101 = arith.truncf %100 : vector<256x32xf32> to vector<256x32xbf16>
    %102 = vector.extract_strided_slice %0 {offsets = [32, 0], sizes = [32, 128], strides = [1, 1]} : vector<128x128xbf16> to vector<32x128xbf16>
    %cst_70 = arith.constant dense<0.000000e+00> : vector<256x128xf32>
    %103 = tpu.matmul %101, %102, %cst_70 {dimension_numbers = #tpu.dot_dimension_numbers<[1], [0], [0], [1], [0, 0, 1, 1], [], []>} : vector<256x32xbf16>, vector<32x128xbf16>, vector<256x128xf32> -> vector<256x128xf32>
    %104 = arith.addf %55, %103 : vector<256x128xf32>
    %c0_71 = arith.constant 0 : index
    %c2 = arith.constant 2 : index
    %c0_72 = arith.constant 0 : index
    %c0_73 = arith.constant 0 : index
    %105 = vector.load %arg1[%c0_71, %c2, %c0_72, %c0_73] : memref<1x4x256x32xbf16, #tpu.memory_space<vmem>>, vector<1x1x256x32xbf16>
    %106 = vector.shape_cast %105 : vector<1x1x256x32xbf16> to vector<256x32xbf16>
    %c0_74 = arith.constant 0 : index
    %c2_75 = arith.constant 2 : index
    %c0_76 = arith.constant 0 : index
    %c0_77 = arith.constant 0 : index
    %107 = vector.load %arg2[%c0_74, %c2_75, %c0_76, %c0_77] : memref<1x4x256x32xbf16, #tpu.memory_space<vmem>>, vector<1x1x256x32xbf16>
    %108 = vector.shape_cast %107 : vector<1x1x256x32xbf16> to vector<256x32xbf16>
    %c0_78 = arith.constant 0 : index
    %c2_79 = arith.constant 2 : index
    %c0_80 = arith.constant 0 : index
    %c0_81 = arith.constant 0 : index
    %109 = vector.load %arg3[%c0_78, %c2_79, %c0_80, %c0_81] : memref<1x4x256x32xbf16, #tpu.memory_space<vmem>>, vector<1x1x256x32xbf16>
    %110 = vector.shape_cast %109 : vector<1x1x256x32xbf16> to vector<256x32xbf16>
    %c0_82 = arith.constant 0 : index
    %c2_83 = arith.constant 2 : index
    %c0_84 = arith.constant 0 : index
    %c0_85 = arith.constant 0 : index
    %111 = vector.load %arg4[%c0_82, %c2_83, %c0_84, %c0_85] : memref<1x4x64x32xbf16, #tpu.memory_space<vmem>>, vector<1x1x64x32xbf16>
    %112 = vector.shape_cast %111 : vector<1x1x64x32xbf16> to vector<64x32xbf16>
    "tpu.trace_start"() <{level = 10 : i32, message = "md,nd->mn"}> : () -> ()
    %cst_86 = arith.constant dense<0.000000e+00> : vector<64x256xf32>
    %113 = tpu.matmul %112, %108, %cst_86 {dimension_numbers = #tpu.dot_dimension_numbers<[1], [1], [0], [0], [0, 0, 1, 0], [], []>} : vector<64x32xbf16>, vector<256x32xbf16>, vector<64x256xf32> -> vector<64x256xf32>
    "tpu.trace_stop"() : () -> ()
    %cst_87 = arith.constant 0.176776692 : f32
    %114 = vector.broadcast %cst_87 : f32 to vector<64x256xf32>
    %115 = arith.mulf %113, %114 : vector<64x256xf32>
    %c2_88 = arith.constant 2 : index
    %c0_89 = arith.constant 0 : index
    %c0_90 = arith.constant 0 : index
    %116 = vector.load %arg5[%c2_88, %c0_89, %c0_90] : memref<4x64x256xf32, #tpu.memory_space<vmem>>, vector<1x64x256xf32>
    %117 = vector.shape_cast %116 : vector<1x64x256xf32> to vector<64x256xf32>
    %118 = arith.addf %115, %117 : vector<64x256xf32>
    %cst_91 = arith.constant dense<0xFF800000> : vector<64xf32>
    %119 = vector.multi_reduction <maximumf>, %118, %cst_91 [1] : vector<64x256xf32> to vector<64xf32>
    %120 = vector.shape_cast %119 : vector<64xf32> to vector<64x1xf32>
    %121 = vector.broadcast %120 : vector<64x1xf32> to vector<64x256xf32>
    %122 = arith.subf %118, %121 : vector<64x256xf32>
    %123 = math.exp %122 : vector<64x256xf32>
    %cst_92 = arith.constant dense<0.000000e+00> : vector<64xf32>
    %124 = vector.multi_reduction <add>, %123, %cst_92 [1] : vector<64x256xf32> to vector<64xf32>
    %125 = vector.shape_cast %124 : vector<64xf32> to vector<64x1xf32>
    %126 = tpu.reciprocal %125 {approx = true} : vector<64x1xf32> -> vector<64x1xf32>
    %127 = vector.broadcast %126 : vector<64x1xf32> to vector<64x256xf32>
    %128 = arith.mulf %123, %127 : vector<64x256xf32>
    %129 = arith.truncf %128 : vector<64x256xf32> to vector<64x256xbf16>
    %cst_93 = arith.constant dense<0.000000e+00> : vector<64x32xf32>
    %130 = tpu.matmul %129, %110, %cst_93 {dimension_numbers = #tpu.dot_dimension_numbers<[1], [0], [0], [1], [0, 0, 1, 1], [], []>} : vector<64x256xbf16>, vector<256x32xbf16>, vector<64x32xf32> -> vector<64x32xf32>
    "tpu.trace_start"() <{level = 10 : i32, message = "nd,md->nm"}> : () -> ()
    %cst_94 = arith.constant dense<0.000000e+00> : vector<256x64xf32>
    %131 = tpu.matmul %106, %112, %cst_94 {dimension_numbers = #tpu.dot_dimension_numbers<[1], [1], [0], [0], [0, 0, 1, 0], [], []>} : vector<256x32xbf16>, vector<64x32xbf16>, vector<256x64xf32> -> vector<256x64xf32>
    "tpu.trace_stop"() : () -> ()
    %cst_95 = arith.constant 0.176776692 : f32
    %132 = vector.broadcast %cst_95 : f32 to vector<256x64xf32>
    %133 = arith.mulf %131, %132 : vector<256x64xf32>
    %c2_96 = arith.constant 2 : index
    %c0_97 = arith.constant 0 : index
    %c0_98 = arith.constant 0 : index
    %134 = vector.load %arg6[%c2_96, %c0_97, %c0_98] : memref<4x256x64xf32, #tpu.memory_space<vmem>>, vector<1x256x64xf32>
    %135 = vector.shape_cast %134 : vector<1x256x64xf32> to vector<256x64xf32>
    %136 = arith.addf %133, %135 : vector<256x64xf32>
    %cst_99 = arith.constant dense<0xFF800000> : vector<256xf32>
    %137 = vector.multi_reduction <maximumf>, %136, %cst_99 [1] : vector<256x64xf32> to vector<256xf32>
    %138 = vector.shape_cast %137 : vector<256xf32> to vector<256x1xf32>
    %139 = vector.broadcast %138 : vector<256x1xf32> to vector<256x64xf32>
    %140 = arith.subf %136, %139 : vector<256x64xf32>
    %141 = math.exp %140 : vector<256x64xf32>
    %cst_100 = arith.constant dense<0.000000e+00> : vector<256xf32>
    %142 = vector.multi_reduction <add>, %141, %cst_100 [1] : vector<256x64xf32> to vector<256xf32>
    %143 = vector.shape_cast %142 : vector<256xf32> to vector<256x1xf32>
    %144 = tpu.reciprocal %143 {approx = true} : vector<256x1xf32> -> vector<256x1xf32>
    %145 = vector.broadcast %144 : vector<256x1xf32> to vector<256x64xf32>
    %146 = arith.mulf %141, %145 : vector<256x64xf32>
    %147 = arith.truncf %146 : vector<256x64xf32> to vector<256x64xbf16>
    %148 = arith.truncf %130 : vector<64x32xf32> to vector<64x32xbf16>
    %cst_101 = arith.constant dense<0.000000e+00> : vector<256x32xf32>
    %149 = tpu.matmul %147, %148, %cst_101 {dimension_numbers = #tpu.dot_dimension_numbers<[1], [0], [0], [1], [0, 0, 1, 1], [], []>} : vector<256x64xbf16>, vector<64x32xbf16>, vector<256x32xf32> -> vector<256x32xf32>
    %150 = arith.truncf %149 : vector<256x32xf32> to vector<256x32xbf16>
    %151 = vector.extract_strided_slice %0 {offsets = [64, 0], sizes = [32, 128], strides = [1, 1]} : vector<128x128xbf16> to vector<32x128xbf16>
    %cst_102 = arith.constant dense<0.000000e+00> : vector<256x128xf32>
    %152 = tpu.matmul %150, %151, %cst_102 {dimension_numbers = #tpu.dot_dimension_numbers<[1], [0], [0], [1], [0, 0, 1, 1], [], []>} : vector<256x32xbf16>, vector<32x128xbf16>, vector<256x128xf32> -> vector<256x128xf32>
    %153 = arith.addf %104, %152 : vector<256x128xf32>
    %c0_103 = arith.constant 0 : index
    %c3 = arith.constant 3 : index
    %c0_104 = arith.constant 0 : index
    %c0_105 = arith.constant 0 : index
    %154 = vector.load %arg1[%c0_103, %c3, %c0_104, %c0_105] : memref<1x4x256x32xbf16, #tpu.memory_space<vmem>>, vector<1x1x256x32xbf16>
    %155 = vector.shape_cast %154 : vector<1x1x256x32xbf16> to vector<256x32xbf16>
    %c0_106 = arith.constant 0 : index
    %c3_107 = arith.constant 3 : index
    %c0_108 = arith.constant 0 : index
    %c0_109 = arith.constant 0 : index
    %156 = vector.load %arg2[%c0_106, %c3_107, %c0_108, %c0_109] : memref<1x4x256x32xbf16, #tpu.memory_space<vmem>>, vector<1x1x256x32xbf16>
    %157 = vector.shape_cast %156 : vector<1x1x256x32xbf16> to vector<256x32xbf16>
    %c0_110 = arith.constant 0 : index
    %c3_111 = arith.constant 3 : index
    %c0_112 = arith.constant 0 : index
    %c0_113 = arith.constant 0 : index
    %158 = vector.load %arg3[%c0_110, %c3_111, %c0_112, %c0_113] : memref<1x4x256x32xbf16, #tpu.memory_space<vmem>>, vector<1x1x256x32xbf16>
    %159 = vector.shape_cast %158 : vector<1x1x256x32xbf16> to vector<256x32xbf16>
    %c0_114 = arith.constant 0 : index
    %c3_115 = arith.constant 3 : index
    %c0_116 = arith.constant 0 : index
    %c0_117 = arith.constant 0 : index
    %160 = vector.load %arg4[%c0_114, %c3_115, %c0_116, %c0_117] : memref<1x4x64x32xbf16, #tpu.memory_space<vmem>>, vector<1x1x64x32xbf16>
    %161 = vector.shape_cast %160 : vector<1x1x64x32xbf16> to vector<64x32xbf16>
    "tpu.trace_start"() <{level = 10 : i32, message = "md,nd->mn"}> : () -> ()
    %cst_118 = arith.constant dense<0.000000e+00> : vector<64x256xf32>
    %162 = tpu.matmul %161, %157, %cst_118 {dimension_numbers = #tpu.dot_dimension_numbers<[1], [1], [0], [0], [0, 0, 1, 0], [], []>} : vector<64x32xbf16>, vector<256x32xbf16>, vector<64x256xf32> -> vector<64x256xf32>
    "tpu.trace_stop"() : () -> ()
    %cst_119 = arith.constant 0.176776692 : f32
    %163 = vector.broadcast %cst_119 : f32 to vector<64x256xf32>
    %164 = arith.mulf %162, %163 : vector<64x256xf32>
    %c3_120 = arith.constant 3 : index
    %c0_121 = arith.constant 0 : index
    %c0_122 = arith.constant 0 : index
    %165 = vector.load %arg5[%c3_120, %c0_121, %c0_122] : memref<4x64x256xf32, #tpu.memory_space<vmem>>, vector<1x64x256xf32>
    %166 = vector.shape_cast %165 : vector<1x64x256xf32> to vector<64x256xf32>
    %167 = arith.addf %164, %166 : vector<64x256xf32>
    %cst_123 = arith.constant dense<0xFF800000> : vector<64xf32>
    %168 = vector.multi_reduction <maximumf>, %167, %cst_123 [1] : vector<64x256xf32> to vector<64xf32>
    %169 = vector.shape_cast %168 : vector<64xf32> to vector<64x1xf32>
    %170 = vector.broadcast %169 : vector<64x1xf32> to vector<64x256xf32>
    %171 = arith.subf %167, %170 : vector<64x256xf32>
    %172 = math.exp %171 : vector<64x256xf32>
    %cst_124 = arith.constant dense<0.000000e+00> : vector<64xf32>
    %173 = vector.multi_reduction <add>, %172, %cst_124 [1] : vector<64x256xf32> to vector<64xf32>
    %174 = vector.shape_cast %173 : vector<64xf32> to vector<64x1xf32>
    %175 = tpu.reciprocal %174 {approx = true} : vector<64x1xf32> -> vector<64x1xf32>
    %176 = vector.broadcast %175 : vector<64x1xf32> to vector<64x256xf32>
    %177 = arith.mulf %172, %176 : vector<64x256xf32>
    %178 = arith.truncf %177 : vector<64x256xf32> to vector<64x256xbf16>
    %cst_125 = arith.constant dense<0.000000e+00> : vector<64x32xf32>
    %179 = tpu.matmul %178, %159, %cst_125 {dimension_numbers = #tpu.dot_dimension_numbers<[1], [0], [0], [1], [0, 0, 1, 1], [], []>} : vector<64x256xbf16>, vector<256x32xbf16>, vector<64x32xf32> -> vector<64x32xf32>
    "tpu.trace_start"() <{level = 10 : i32, message = "nd,md->nm"}> : () -> ()
    %cst_126 = arith.constant dense<0.000000e+00> : vector<256x64xf32>
    %180 = tpu.matmul %155, %161, %cst_126 {dimension_numbers = #tpu.dot_dimension_numbers<[1], [1], [0], [0], [0, 0, 1, 0], [], []>} : vector<256x32xbf16>, vector<64x32xbf16>, vector<256x64xf32> -> vector<256x64xf32>
    "tpu.trace_stop"() : () -> ()
    %cst_127 = arith.constant 0.176776692 : f32
    %181 = vector.broadcast %cst_127 : f32 to vector<256x64xf32>
    %182 = arith.mulf %180, %181 : vector<256x64xf32>
    %c3_128 = arith.constant 3 : index
    %c0_129 = arith.constant 0 : index
    %c0_130 = arith.constant 0 : index
    %183 = vector.load %arg6[%c3_128, %c0_129, %c0_130] : memref<4x256x64xf32, #tpu.memory_space<vmem>>, vector<1x256x64xf32>
    %184 = vector.shape_cast %183 : vector<1x256x64xf32> to vector<256x64xf32>
    %185 = arith.addf %182, %184 : vector<256x64xf32>
    %cst_131 = arith.constant dense<0xFF800000> : vector<256xf32>
    %186 = vector.multi_reduction <maximumf>, %185, %cst_131 [1] : vector<256x64xf32> to vector<256xf32>
    %187 = vector.shape_cast %186 : vector<256xf32> to vector<256x1xf32>
    %188 = vector.broadcast %187 : vector<256x1xf32> to vector<256x64xf32>
    %189 = arith.subf %185, %188 : vector<256x64xf32>
    %190 = math.exp %189 : vector<256x64xf32>
    %cst_132 = arith.constant dense<0.000000e+00> : vector<256xf32>
    %191 = vector.multi_reduction <add>, %190, %cst_132 [1] : vector<256x64xf32> to vector<256xf32>
    %192 = vector.shape_cast %191 : vector<256xf32> to vector<256x1xf32>
    %193 = tpu.reciprocal %192 {approx = true} : vector<256x1xf32> -> vector<256x1xf32>
    %194 = vector.broadcast %193 : vector<256x1xf32> to vector<256x64xf32>
    %195 = arith.mulf %190, %194 : vector<256x64xf32>
    %196 = arith.truncf %195 : vector<256x64xf32> to vector<256x64xbf16>
    %197 = arith.truncf %179 : vector<64x32xf32> to vector<64x32xbf16>
    %cst_133 = arith.constant dense<0.000000e+00> : vector<256x32xf32>
    %198 = tpu.matmul %196, %197, %cst_133 {dimension_numbers = #tpu.dot_dimension_numbers<[1], [0], [0], [1], [0, 0, 1, 1], [], []>} : vector<256x64xbf16>, vector<64x32xbf16>, vector<256x32xf32> -> vector<256x32xf32>
    %199 = arith.truncf %198 : vector<256x32xf32> to vector<256x32xbf16>
    %200 = vector.extract_strided_slice %0 {offsets = [96, 0], sizes = [32, 128], strides = [1, 1]} : vector<128x128xbf16> to vector<32x128xbf16>
    %cst_134 = arith.constant dense<0.000000e+00> : vector<256x128xf32>
    %201 = tpu.matmul %199, %200, %cst_134 {dimension_numbers = #tpu.dot_dimension_numbers<[1], [0], [0], [1], [0, 0, 1, 1], [], []>} : vector<256x32xbf16>, vector<32x128xbf16>, vector<256x128xf32> -> vector<256x128xf32>
    %202 = arith.addf %153, %201 : vector<256x128xf32>
    %c0_135 = arith.constant 0 : index
    %c0_136 = arith.constant 0 : index
    %c0_137 = arith.constant 0 : index
    %203 = vector.load %arg10[%c0_135, %c0_136, %c0_137] : memref<1x256x128xf32, #tpu.memory_space<vmem>>, vector<1x256x128xf32>
    %204 = vector.shape_cast %203 : vector<1x256x128xf32> to vector<256x128xf32>
    %205 = vector.shape_cast %202 : vector<256x128xf32> to vector<1x256x128xf32>
    tpu.vector_store %arg10[%c0_135, %c0_136, %c0_137], %205 {strides = array<i32>} : memref<1x256x128xf32, #tpu.memory_space<vmem>>, vector<1x256x128xf32>,
    return
  }
  func.func @transform_0(%arg0: i32) -> (i32, i32, i32, i32) {
    %c0_i32 = arith.constant 0 : i32
    %c0_i32_0 = arith.constant 0 : i32
    %c0_i32_1 = arith.constant 0 : i32
    %c0_i32_2 = arith.constant 0 : i32
    return %arg0, %c0_i32, %c0_i32_0, %c0_i32_1 : i32, i32, i32, i32
  }
  func.func @transform_1(%arg0: i32) -> (i32, i32, i32, i32) {
    %c0_i32 = arith.constant 0 : i32
    %c0_i32_0 = arith.constant 0 : i32
    %c0_i32_1 = arith.constant 0 : i32
    %c0_i32_2 = arith.constant 0 : i32
    return %arg0, %c0_i32, %c0_i32_0, %c0_i32_1 : i32, i32, i32, i32
  }
  func.func @transform_2(%arg0: i32) -> (i32, i32, i32, i32) {
    %c0_i32 = arith.constant 0 : i32
    %c0_i32_0 = arith.constant 0 : i32
    %c0_i32_1 = arith.constant 0 : i32
    %c0_i32_2 = arith.constant 0 : i32
    return %arg0, %c0_i32, %c0_i32_0, %c0_i32_1 : i32, i32, i32, i32
  }
  func.func @transform_3(%arg0: i32) -> (i32, i32, i32, i32) {
    %c0_i32 = arith.constant 0 : i32
    %c0_i32_0 = arith.constant 0 : i32
    %c0_i32_1 = arith.constant 0 : i32
    %c0_i32_2 = arith.constant 0 : i32
    return %arg0, %c0_i32, %c0_i32_0, %c0_i32_1 : i32, i32, i32, i32
  }
  func.func @transform_4(%arg0: i32) -> (i32, i32, i32) {
    %c0_i32 = arith.constant 0 : i32
    %c0_i32_0 = arith.constant 0 : i32
    %c0_i32_1 = arith.constant 0 : i32
    %c0_i32_2 = arith.constant 0 : i32
    return %c0_i32, %c0_i32_0, %c0_i32_1 : i32, i32, i32
  }
  func.func @transform_5(%arg0: i32) -> (i32, i32, i32) {
    %c0_i32 = arith.constant 0 : i32
    %c0_i32_0 = arith.constant 0 : i32
    %c0_i32_1 = arith.constant 0 : i32
    %c0_i32_2 = arith.constant 0 : i32
    return %c0_i32, %c0_i32_0, %c0_i32_1 : i32, i32, i32
  }
  func.func @transform_6(%arg0: i32) -> (i32, i32, i32) {
    %c0_i32 = arith.constant 0 : i32
    %c0_i32_0 = arith.constant 0 : i32
    %c0_i32_1 = arith.constant 0 : i32
    return %arg0, %c0_i32, %c0_i32_0 : i32, i32, i32
  }
  func.func @transform_7(%arg0: i32) -> (i32, i32) {
    %c0_i32 = arith.constant 0 : i32
    %c0_i32_0 = arith.constant 0 : i32
    %c0_i32_1 = arith.constant 0 : i32
    return %c0_i32, %c0_i32_0 : i32, i32
  }
  func.func @transform_8(%arg0: i32) -> (i32, i32) {
    %c0_i32 = arith.constant 0 : i32
    %c0_i32_0 = arith.constant 0 : i32
    %c0_i32_1 = arith.constant 0 : i32
    return %c0_i32, %c0_i32_0 : i32, i32
  }
  func.func @transform_9(%arg0: i32) -> (i32, i32, i32) {
    %c0_i32 = arith.constant 0 : i32
    %c0_i32_0 = arith.constant 0 : i32
    %c0_i32_1 = arith.constant 0 : i32
    return %arg0, %c0_i32, %c0_i32_0 : i32, i32, i32
  }
}

</mosaic_0001>

<llo_original>
// kernel: attention_with_mediators_forward.1
$region0: #{attention_with_mediators_forward.1}
  #allocation0 [shape = 'u32[]', space=smem, size = 0x4, offset = 0x4, fixed_abs, tag = 'smem constant byte address 0x4 - core index']
  #allocation1 [shape = 'u32[144,128]{1,0:T(1,128)}', space=vmem, size = 0x12000, scoped, tag = 'internal scratch']
  %s0 = inlined_call_operand.vmem [shape: bf16[2,4,256,32], index: 0, kind: input, shape index: {}]
  %s1 = inlined_call_operand.vmem [shape: bf16[2,4,256,32], index: 1, kind: input, shape index: {}]
  %s2 = inlined_call_operand.vmem [shape: bf16[2,4,256,32], index: 2, kind: input, shape index: {}]
  %s3 = inlined_call_operand.vmem [shape: bf16[2,4,64,32], index: 3, kind: input, shape index: {}]
  %s4 = inlined_call_operand.vmem [shape: f32[4,64,256], index: 4, kind: input, shape index: {}]
  %s5 = inlined_call_operand.vmem [shape: f32[4,256,64], index: 5, kind: input, shape index: {}]
  %s6 = inlined_call_operand.vmem [shape: bf16[2,256,128], index: 6, kind: input, shape index: {}]
  %s7 = inlined_call_operand.vmem [shape: bf16[128,128], index: 7, kind: input, shape index: {}]
  %s8 = inlined_call_operand.vmem [shape: f32[1,128], index: 8, kind: input, shape index: {}]
  %s9 = inlined_call_operand.hbm [shape: f32[2,256,128], index: 9, kind: output, shape index: {}]
  %s10 = sld [smem:[#allocation0]]
  $region69: #{attention_with_mediators_forward.1} parent=0
    _
  %s12 = ssub.s32 1, %s10
  %s13 = scalar_select 0, %s12, %s10
  $region1: #{attention_with_mediators_forward.1} parent=0
    #allocation2 [shape = 'u8[262144]{0}', space=vmem, size = 0x40000, scoped, tag = 'output window, operand 0']
    #allocation3 [shape = 's32[2]{0}', space=sflag, size = 0x8, scoped, tag = 'scoped memory for attention_with_mediators_forward.1']
    %14 = vsyncpa [#allocation3], 0
    %s15 = scalar_lea.sflag [#allocation3], 1
    %16 = vsyncpa %s15, 0
    loop: start=0, step=1, limit=4
    $region2: #{attention_with_mediators_forward.1} parent=1 // loop_pre_header
      _
    $region3: #{attention_with_mediators_forward.1} parent=1 // loop_header
      %s18 = sphi 0, %s22
      %p19 = scmp.ge.s32.totalorder %s18, 4
      %s28 = sphi 0, %s30
      %s31 = sphi 0, %s28
      %s32 = sphi 0, %s31
      %s48 = sphi 0, %s32
      %s54 = sphi 0, %s56
      %s57 = sphi 0, %s54
      %s58 = sphi 0, %s57
      %s74 = sphi 0, %s58
      %s80 = sphi 0, %s82
      %s83 = sphi 0, %s80
      %s84 = sphi 0, %s83
      %s100 = sphi 0, %s84
      %s106 = sphi 0, %s108
      %s109 = sphi 0, %s106
      %s110 = sphi 0, %s109
      %s126 = sphi 0, %s110
      %s130 = sphi 0, %s130
      %s132 = sphi 0, %s130
      %s133 = sphi 0, %s132
      %s147 = sphi 0, %s133
      %s151 = sphi 0, %s151
      %s153 = sphi 0, %s151
      %s154 = sphi 0, %s153
      %s168 = sphi 0, %s154
      %s174 = sphi 0, %s176
      %s177 = sphi 0, %s174
      %s178 = sphi 0, %s177
      %s194 = sphi 0, %s178
      %s198 = sphi 0, %s198
      %s200 = sphi 0, %s198
      %s201 = sphi 0, %s200
      %s215 = sphi 0, %s201
      %s219 = sphi 0, %s219
      %s221 = sphi 0, %s219
      %s222 = sphi 0, %s221
      %s236 = sphi 0, %s222
      %s242 = sphi 0, %s244
      %s245 = sphi 0, %s242
      %s246 = sphi 0, %s245
      %s262 = sphi 0, %s246
    $region4: #{attention_with_mediators_forward.1} parent=1 // loop_header_branch
      %21 = sbr.rel (%p19) target = $region8
    $region5: #{attention_with_mediators_forward.1} parent=1 // loop_body
      %s23 = ssub.s32 %s18, 1
      %s24 = ssub.s32 %s18, 2
      %s25 = sadd.s32 %s18, 1
      %s26 = ssub.s32 %s18, %s25
      %p27 = scmp.eq.s32.totalorder %s26, 0
      %s29 = sadd.s32 %s28, 1
      %s30 = scalar_select %p27, %s28, %s29
      %p33 = pneg %p27
      %p34 = scmp.eq.s32.totalorder %s18, 1
      %p35 = por %p33, %p34
      %p36 = scmp.ne.s32.totalorder %s28, %s31
      %p37 = scmp.eq.s32.totalorder %s18, 0
      %p38 = por %p36, %p37
      %p39 = scmp.ne.s32.totalorder %s28, %s31
      %p40 = scmp.eq.s32.totalorder %s23, 1
      %p41 = por %p39, %p40
      %p42 = scmp.ne.s32.totalorder %s31, %s32
      %p43 = scmp.eq.s32.totalorder %s23, 0
      %p44 = por %p42, %p43
      %p45 = scmp.ne.s32.totalorder %s31, %s32
      %p46 = scmp.eq.s32.totalorder %s24, 1
      %p47 = por %p45, %p46
      %p49 = scmp.ne.s32.totalorder %s32, %s48
      %p50 = scmp.eq.s32.totalorder %s24, 0
      %p51 = por %p49, %p50
      %s52 = ssub.s32 %s18, %s25
      %p53 = scmp.eq.s32.totalorder %s52, 0
      %s55 = sadd.s32 %s54, 1
      %s56 = scalar_select %p53, %s54, %s55
      %p59 = pneg %p53
      %p60 = scmp.eq.s32.totalorder %s18, 1
      %p61 = por %p59, %p60
      %p62 = scmp.ne.s32.totalorder %s54, %s57
      %p63 = scmp.eq.s32.totalorder %s18, 0
      %p64 = por %p62, %p63
      %p65 = scmp.ne.s32.totalorder %s54, %s57
      %p66 = scmp.eq.s32.totalorder %s23, 1
      %p67 = por %p65, %p66
      %p68 = scmp.ne.s32.totalorder %s57, %s58
      %p69 = scmp.eq.s32.totalorder %s23, 0
      %p70 = por %p68, %p69
      %p71 = scmp.ne.s32.totalorder %s57, %s58
      %p72 = scmp.eq.s32.totalorder %s24, 1
      %p73 = por %p71, %p72
      %p75 = scmp.ne.s32.totalorder %s58, %s74
      %p76 = scmp.eq.s32.totalorder %s24, 0
      %p77 = por %p75, %p76
      %s78 = ssub.s32 %s18, %s25
      %p79 = scmp.eq.s32.totalorder %s78, 0
      %s81 = sadd.s32 %s80, 1
      %s82 = scalar_select %p79, %s80, %s81
      %p85 = pneg %p79
      %p86 = scmp.eq.s32.totalorder %s18, 1
      %p87 = por %p85, %p86
      %p88 = scmp.ne.s32.totalorder %s80, %s83
      %p89 = scmp.eq.s32.totalorder %s18, 0
      %p90 = por %p88, %p89
      %p91 = scmp.ne.s32.totalorder %s80, %s83
      %p92 = scmp.eq.s32.totalorder %s23, 1
      %p93 = por %p91, %p92
      %p94 = scmp.ne.s32.totalorder %s83, %s84
      %p95 = scmp.eq.s32.totalorder %s23, 0
      %p96 = por %p94, %p95
      %p97 = scmp.ne.s32.totalorder %s83, %s84
      %p98 = scmp.eq.s32.totalorder %s24, 1
      %p99 = por %p97, %p98
      %p101 = scmp.ne.s32.totalorder %s84, %s100
      %p102 = scmp.eq.s32.totalorder %s24, 0
      %p103 = por %p101, %p102
      %s104 = ssub.s32 %s18, %s25
      %p105 = scmp.eq.s32.totalorder %s104, 0
      %s107 = sadd.s32 %s106, 1
      %s108 = scalar_select %p105, %s106, %s107
      %p111 = pneg %p105
      %p112 = scmp.eq.s32.totalorder %s18, 1
      %p113 = por %p111, %p112
      %p114 = scmp.ne.s32.totalorder %s106, %s109
      %p115 = scmp.eq.s32.totalorder %s18, 0
      %p116 = por %p114, %p115
      %p117 = scmp.ne.s32.totalorder %s106, %s109
      %p118 = scmp.eq.s32.totalorder %s23, 1
      %p119 = por %p117, %p118
      %p120 = scmp.ne.s32.totalorder %s109, %s110
      %p121 = scmp.eq.s32.totalorder %s23, 0
      %p122 = por %p120, %p121
      %p123 = scmp.ne.s32.totalorder %s109, %s110
      %p124 = scmp.eq.s32.totalorder %s24, 1
      %p125 = por %p123, %p124
      %p127 = scmp.ne.s32.totalorder %s110, %s126
      %p128 = scmp.eq.s32.totalorder %s24, 0
      %p129 = por %p127, %p128
      %s131 = sadd.s32 %s130, 1
      %p134 = scmp.eq.s32.totalorder %s18, 1
      %p135 = scmp.ne.s32.totalorder %s130, %s132
      %p136 = scmp.eq.s32.totalorder %s18, 0
      %p137 = por %p135, %p136
      %p138 = scmp.ne.s32.totalorder %s130, %s132
      %p139 = scmp.eq.s32.totalorder %s23, 1
      %p140 = por %p138, %p139
      %p141 = scmp.ne.s32.totalorder %s132, %s133
      %p142 = scmp.eq.s32.totalorder %s23, 0
      %p143 = por %p141, %p142
      %p144 = scmp.ne.s32.totalorder %s132, %s133
      %p145 = scmp.eq.s32.totalorder %s24, 1
      %p146 = por %p144, %p145
      %p148 = scmp.ne.s32.totalorder %s133, %s147
      %p149 = scmp.eq.s32.totalorder %s24, 0
      %p150 = por %p148, %p149
      %s152 = sadd.s32 %s151, 1
      %p155 = scmp.eq.s32.totalorder %s18, 1
      %p156 = scmp.ne.s32.totalorder %s151, %s153
      %p157 = scmp.eq.s32.totalorder %s18, 0
      %p158 = por %p156, %p157
      %p159 = scmp.ne.s32.totalorder %s151, %s153
      %p160 = scmp.eq.s32.totalorder %s23, 1
      %p161 = por %p159, %p160
      %p162 = scmp.ne.s32.totalorder %s153, %s154
      %p163 = scmp.eq.s32.totalorder %s23, 0
      %p164 = por %p162, %p163
      %p165 = scmp.ne.s32.totalorder %s153, %s154
      %p166 = scmp.eq.s32.totalorder %s24, 1
      %p167 = por %p165, %p166
      %p169 = scmp.ne.s32.totalorder %s154, %s168
      %p170 = scmp.eq.s32.totalorder %s24, 0
      %p171 = por %p169, %p170
      %s172 = ssub.s32 %s18, %s25
      %p173 = scmp.eq.s32.totalorder %s172, 0
      %s175 = sadd.s32 %s174, 1
      %s176 = scalar_select %p173, %s174, %s175
      %p179 = pneg %p173
      %p180 = scmp.eq.s32.totalorder %s18, 1
      %p181 = por %p179, %p180
      %p182 = scmp.ne.s32.totalorder %s174, %s177
      %p183 = scmp.eq.s32.totalorder %s18, 0
      %p184 = por %p182, %p183
      %p185 = scmp.ne.s32.totalorder %s174, %s177
      %p186 = scmp.eq.s32.totalorder %s23, 1
      %p187 = por %p185, %p186
      %p188 = scmp.ne.s32.totalorder %s177, %s178
      %p189 = scmp.eq.s32.totalorder %s23, 0
      %p190 = por %p188, %p189
      %p191 = scmp.ne.s32.totalorder %s177, %s178
      %p192 = scmp.eq.s32.totalorder %s24, 1
      %p193 = por %p191, %p192
      %p195 = scmp.ne.s32.totalorder %s178, %s194
      %p196 = scmp.eq.s32.totalorder %s24, 0
      %p197 = por %p195, %p196
      %s199 = sadd.s32 %s198, 1
      %p202 = scmp.eq.s32.totalorder %s18, 1
      %p203 = scmp.ne.s32.totalorder %s198, %s200
      %p204 = scmp.eq.s32.totalorder %s18, 0
      %p205 = por %p203, %p204
      %p206 = scmp.ne.s32.totalorder %s198, %s200
      %p207 = scmp.eq.s32.totalorder %s23, 1
      %p208 = por %p206, %p207
      %p209 = scmp.ne.s32.totalorder %s200, %s201
      %p210 = scmp.eq.s32.totalorder %s23, 0
      %p211 = por %p209, %p210
      %p212 = scmp.ne.s32.totalorder %s200, %s201
      %p213 = scmp.eq.s32.totalorder %s24, 1
      %p214 = por %p212, %p213
      %p216 = scmp.ne.s32.totalorder %s201, %s215
      %p217 = scmp.eq.s32.totalorder %s24, 0
      %p218 = por %p216, %p217
      %s220 = sadd.s32 %s219, 1
      %p223 = scmp.eq.s32.totalorder %s18, 1
      %p224 = scmp.ne.s32.totalorder %s219, %s221
      %p225 = scmp.eq.s32.totalorder %s18, 0
      %p226 = por %p224, %p225
      %p227 = scmp.ne.s32.totalorder %s219, %s221
      %p228 = scmp.eq.s32.totalorder %s23, 1
      %p229 = por %p227, %p228
      %p230 = scmp.ne.s32.totalorder %s221, %s222
      %p231 = scmp.eq.s32.totalorder %s23, 0
      %p232 = por %p230, %p231
      %p233 = scmp.ne.s32.totalorder %s221, %s222
      %p234 = scmp.eq.s32.totalorder %s24, 1
      %p235 = por %p233, %p234
      %p237 = scmp.ne.s32.totalorder %s222, %s236
      %p238 = scmp.eq.s32.totalorder %s24, 0
      %p239 = por %p237, %p238
      %s240 = ssub.s32 %s18, %s25
      %p241 = scmp.eq.s32.totalorder %s240, 0
      %s243 = sadd.s32 %s242, 1
      %s244 = scalar_select %p241, %s242, %s243
      %p247 = pneg %p241
      %p248 = scmp.eq.s32.totalorder %s18, 1
      %p249 = por %p247, %p248
      %p250 = scmp.ne.s32.totalorder %s242, %s245
      %p251 = scmp.eq.s32.totalorder %s18, 0
      %p252 = por %p250, %p251
      %p253 = scmp.ne.s32.totalorder %s242, %s245
      %p254 = scmp.eq.s32.totalorder %s23, 1
      %p255 = por %p253, %p254
      %p256 = scmp.ne.s32.totalorder %s245, %s246
      %p257 = scmp.eq.s32.totalorder %s23, 0
      %p258 = por %p256, %p257
      %p259 = scmp.ne.s32.totalorder %s245, %s246
      %p260 = scmp.eq.s32.totalorder %s24, 1
      %p261 = por %p259, %p260
      %p263 = scmp.ne.s32.totalorder %s246, %s262
      %p264 = scmp.eq.s32.totalorder %s24, 0
      %p265 = por %p263, %p264
      %p266 = scmp.le.s32.totalorder 1, %s18
      %p267 = scmp.lt.s32.totalorder %s18, 3
      %p268 = pnand %p266, %p267
      %p269 = pneg %p268
      // Predicated region
      $region9: #{attention_with_mediators_forward.1} parent=5 // pred_check
        _
      $region10: #{attention_with_mediators_forward.1} parent=5 // pred_check_branch
        %271 = sbr.rel (%p268) target = $region12
      $region11: #{attention_with_mediators_forward.1} parent=5 // pred_region
        %s272 = ssub.s32 %s18, 1
        // Predicated region
        $region13: #{attention_with_mediators_forward.1} parent=11 // pred_check
          %p273 = pneg %p143
        $region14: #{attention_with_mediators_forward.1} parent=11 // pred_check_branch
          %275 = sbr.rel (%p273) target = $region16
        $region15: #{attention_with_mediators_forward.1} parent=11 // pred_region
          _
        $region16: #{attention_with_mediators_forward.1} parent=11 // pred_fallthru
          _
        // Predicated region
        $region17: #{attention_with_mediators_forward.1} parent=11 // pred_check
          %p276 = pneg %p164
        $region18: #{attention_with_mediators_forward.1} parent=11 // pred_check_branch
          %278 = sbr.rel (%p276) target = $region20
        $region19: #{attention_with_mediators_forward.1} parent=11 // pred_region
          _
        $region20: #{attention_with_mediators_forward.1} parent=11 // pred_fallthru
          _
        // Predicated region
        $region21: #{attention_with_mediators_forward.1} parent=11 // pred_check
          %p279 = pneg %p211
        $region22: #{attention_with_mediators_forward.1} parent=11 // pred_check_branch
          %281 = sbr.rel (%p279) target = $region24
        $region23: #{attention_with_mediators_forward.1} parent=11 // pred_region
          _
        $region24: #{attention_with_mediators_forward.1} parent=11 // pred_fallthru
          _
        // Predicated region
        $region25: #{attention_with_mediators_forward.1} parent=11 // pred_check
          %p282 = pneg %p232
        $region26: #{attention_with_mediators_forward.1} parent=11 // pred_check_branch
          %284 = sbr.rel (%p282) target = $region28
        $region27: #{attention_with_mediators_forward.1} parent=11 // pred_region
          _
        $region28: #{attention_with_mediators_forward.1} parent=11 // pred_fallthru
          _
      $region12: #{attention_with_mediators_forward.1} parent=5 // pred_fallthru
        _
      %p285 = scmp.lt.s32.totalorder %s18, 2
      // Predicated region
      $region29: #{attention_with_mediators_forward.1} parent=5 // pred_check
        %p286 = pneg %p285
      $region30: #{attention_with_mediators_forward.1} parent=5 // pred_check_branch
        %288 = sbr.rel (%p286) target = $region32
      $region31: #{attention_with_mediators_forward.1} parent=5 // pred_region
        // Predicated region
        $region33: #{attention_with_mediators_forward.1} parent=31 // pred_check
          %p289 = pneg %p38
        $region34: #{attention_with_mediators_forward.1} parent=31 // pred_check_branch
          %291 = sbr.rel (%p289) target = $region36
        $region35: #{attention_with_mediators_forward.1} parent=31 // pred_region
          %p292 = scmp.lt.s32.totalorder %s18, 1
          %s293 = scalar_select %p292, %s18, 1
          %s294 = smul.addr %s293, 128
          %s295 = smul.addr %s294, 4
          %s296 = scalar_lea.vmem %s0, %s295
        $region36: #{attention_with_mediators_forward.1} parent=31 // pred_fallthru
          _
        // Predicated region
        $region37: #{attention_with_mediators_forward.1} parent=31 // pred_check
          %p297 = pneg %p64
        $region38: #{attention_with_mediators_forward.1} parent=31 // pred_check_branch
          %299 = sbr.rel (%p297) target = $region40
        $region39: #{attention_with_mediators_forward.1} parent=31 // pred_region
          %p300 = scmp.lt.s32.totalorder %s18, 1
          %s301 = scalar_select %p300, %s18, 1
          %s302 = smul.addr %s301, 128
          %s303 = smul.addr %s302, 4
          %s304 = scalar_lea.vmem %s1, %s303
        $region40: #{attention_with_mediators_forward.1} parent=31 // pred_fallthru
          _
        // Predicated region
        $region41: #{attention_with_mediators_forward.1} parent=31 // pred_check
          %p305 = pneg %p90
        $region42: #{attention_with_mediators_forward.1} parent=31 // pred_check_branch
          %307 = sbr.rel (%p305) target = $region44
        $region43: #{attention_with_mediators_forward.1} parent=31 // pred_region
          %p308 = scmp.lt.s32.totalorder %s18, 1
          %s309 = scalar_select %p308, %s18, 1
          %s310 = smul.addr %s309, 128
          %s311 = smul.addr %s310, 4
          %s312 = scalar_lea.vmem %s2, %s311
        $region44: #{attention_with_mediators_forward.1} parent=31 // pred_fallthru
          _
        // Predicated region
        $region45: #{attention_with_mediators_forward.1} parent=31 // pred_check
          %p313 = pneg %p116
        $region46: #{attention_with_mediators_forward.1} parent=31 // pred_check_branch
          %315 = sbr.rel (%p313) target = $region48
        $region47: #{attention_with_mediators_forward.1} parent=31 // pred_region
          %p316 = scmp.lt.s32.totalorder %s18, 1
          %s317 = scalar_select %p316, %s18, 1
          %s318 = smul.addr %s317, 32
          %s319 = smul.addr %s318, 4
          %s320 = scalar_lea.vmem %s3, %s319
        $region48: #{attention_with_mediators_forward.1} parent=31 // pred_fallthru
          _
        // Predicated region
        $region49: #{attention_with_mediators_forward.1} parent=31 // pred_check
          %p321 = pneg %p184
        $region50: #{attention_with_mediators_forward.1} parent=31 // pred_check_branch
          %323 = sbr.rel (%p321) target = $region52
        $region51: #{attention_with_mediators_forward.1} parent=31 // pred_region
          %p324 = scmp.lt.s32.totalorder %s18, 1
          %s325 = scalar_select %p324, %s18, 1
          %s326 = smul.addr %s325, 32
          %s327 = smul.addr %s326, 4
          %s328 = scalar_lea.vmem %s6, %s327
        $region52: #{attention_with_mediators_forward.1} parent=31 // pred_fallthru
          _
      $region32: #{attention_with_mediators_forward.1} parent=5 // pred_fallthru
        _
      %p329 = scmp.le.s32.totalorder 1, %s18
      %p330 = scmp.lt.s32.totalorder %s18, 3
      %p331 = pnand %p329, %p330
      %p332 = pneg %p331
      // Predicated region
      $region53: #{attention_with_mediators_forward.1} parent=5 // pred_check
        _
      $region54: #{attention_with_mediators_forward.1} parent=5 // pred_check_branch
        %334 = sbr.rel (%p331) target = $region56
      $region55: #{attention_with_mediators_forward.1} parent=5 // pred_region
        %s335 = ssub.s32 %s18, 1
        %p336 = scmp.lt.s32.totalorder %s23, 1
        %s337 = scalar_select %p336, %s23, 1
        %s338 = smul.addr %s337, 128
        %s339 = smul.addr %s338, 4
        %s340 = scalar_lea.vmem %s0, %s339
        %p341 = pneg %p44
        %p342 = pneg %p41
        %p343 = scmp.lt.s32.totalorder %s23, 1
        %s344 = scalar_select %p343, %s23, 1
        %s345 = smul.addr %s344, 128
        %s346 = smul.addr %s345, 4
        %s347 = scalar_lea.vmem %s1, %s346
        %p348 = pneg %p70
        %p349 = pneg %p67
        %p350 = scmp.lt.s32.totalorder %s23, 1
        %s351 = scalar_select %p350, %s23, 1
        %s352 = smul.addr %s351, 128
        %s353 = smul.addr %s352, 4
        %s354 = scalar_lea.vmem %s2, %s353
        %p355 = pneg %p96
        %p356 = pneg %p93
        %p357 = scmp.lt.s32.totalorder %s23, 1
        %s358 = scalar_select %p357, %s23, 1
        %s359 = smul.addr %s358, 32
        %s360 = smul.addr %s359, 4
        %s361 = scalar_lea.vmem %s3, %s360
        %p362 = pneg %p122
        %p363 = pneg %p119
        %p364 = pneg %p143
        %p365 = pneg %p140
        %p366 = pneg %p164
        %p367 = pneg %p161
        %p368 = scmp.lt.s32.totalorder %s23, 1
        %s369 = scalar_select %p368, %s23, 1
        %s370 = smul.addr %s369, 32
        %s371 = smul.addr %s370, 4
        %s372 = scalar_lea.vmem %s6, %s371
        %p373 = pneg %p190
        %p374 = pneg %p187
        %p375 = pneg %p211
        %p376 = pneg %p208
        %p377 = pneg %p232
        %p378 = pneg %p229
        %p379 = pneg %p258
        %p380 = pneg %p255
        %s381 = sand.u32 %s245, 1
        %s382 = scalar_lea.sflag [#allocation3], %s381
        %s383 = sand.u32 %s245, 1
        %s384 = smul.addr %s383, 256
        %s385 = scalar_lea.vmem [#allocation2], %s384
        %p386 = scmp.lt.s32.totalorder %s23, 1
        %s387 = scalar_select %p386, %s23, 1
        %s388 = smul.addr %s387, 128
        %s389 = smul.addr %s388, 4
        %s390 = scalar_lea.vmem %s0, %s389
        %p391 = scmp.lt.s32.totalorder %s23, 1
        %s392 = scalar_select %p391, %s23, 1
        %s393 = smul.addr %s392, 128
        %s394 = smul.addr %s393, 4
        %s395 = scalar_lea.vmem %s1, %s394
        %p396 = scmp.lt.s32.totalorder %s23, 1
        %s397 = scalar_select %p396, %s23, 1
        %s398 = smul.addr %s397, 128
        %s399 = smul.addr %s398, 4
        %s400 = scalar_lea.vmem %s2, %s399
        %p401 = scmp.lt.s32.totalorder %s23, 1
        %s402 = scalar_select %p401, %s23, 1
        %s403 = smul.addr %s402, 32
        %s404 = smul.addr %s403, 4
        %s405 = scalar_lea.vmem %s3, %s404
        %p406 = scmp.lt.s32.totalorder %s23, 1
        %s407 = scalar_select %p406, %s23, 1
        %s408 = smul.addr %s407, 32
        %s409 = smul.addr %s408, 4
        %s410 = scalar_lea.vmem %s6, %s409
        %v412 = vld [vmem:[%s7] sm:$0xf]
        %v413 = vld [vmem:[%s7 + $0x4] sm:$0xf]
        %v414 = vld [vmem:[%s7 + $0x8] sm:$0xf]
        %v415 = vld [vmem:[%s7 + $0xc] sm:$0xf]
        %v416 = vld [vmem:[%s7 + $0x10] sm:$0xf]
        %v417 = vld [vmem:[%s7 + $0x14] sm:$0xf]
        %v418 = vld [vmem:[%s7 + $0x18] sm:$0xf]
        %v419 = vld [vmem:[%s7 + $0x1c] sm:$0xf]
        %v420 = vld [vmem:[%s7 + $0x20] sm:$0xf]
        %v421 = vld [vmem:[%s7 + $0x24] sm:$0xf]
        %v422 = vld [vmem:[%s7 + $0x28] sm:$0xf]
        %v423 = vld [vmem:[%s7 + $0x2c] sm:$0xf]
        %v424 = vld [vmem:[%s7 + $0x30] sm:$0xf]
        %v425 = vld [vmem:[%s7 + $0x34] sm:$0xf]
        %v426 = vld [vmem:[%s7 + $0x38] sm:$0xf]
        %v427 = vld [vmem:[%s7 + $0x3c] sm:$0xf]
        %v428 = vld [vmem:[%s410] sm:$0xf]
        %v429 = vld [vmem:[%s410 + $0x4] sm:$0xf]
        %v430 = vld [vmem:[%s410 + $0x8] sm:$0xf]
        %v431 = vld [vmem:[%s410 + $0xc] sm:$0xf]
        %v432 = vld [vmem:[%s410 + $0x10] sm:$0xf]
        %v433 = vld [vmem:[%s410 + $0x14] sm:$0xf]
        %v434 = vld [vmem:[%s410 + $0x18] sm:$0xf]
        %v435 = vld [vmem:[%s410 + $0x1c] sm:$0xf]
        %v436 = vld [vmem:[%s410 + $0x20] sm:$0xf]
        %v437 = vld [vmem:[%s410 + $0x24] sm:$0xf]
        %v438 = vld [vmem:[%s410 + $0x28] sm:$0xf]
        %v439 = vld [vmem:[%s410 + $0x2c] sm:$0xf]
        %v440 = vld [vmem:[%s410 + $0x30] sm:$0xf]
        %v441 = vld [vmem:[%s410 + $0x34] sm:$0xf]
        %v442 = vld [vmem:[%s410 + $0x38] sm:$0xf]
        %v443 = vld [vmem:[%s410 + $0x3c] sm:$0xf]
        %v444 = vld [vmem:[%s410 + $0x40] sm:$0xf]
        %v445 = vld [vmem:[%s410 + $0x44] sm:$0xf]
        %v446 = vld [vmem:[%s410 + $0x48] sm:$0xf]
        %v447 = vld [vmem:[%s410 + $0x4c] sm:$0xf]
        %v448 = vld [vmem:[%s410 + $0x50] sm:$0xf]
        %v449 = vld [vmem:[%s410 + $0x54] sm:$0xf]
        %v450 = vld [vmem:[%s410 + $0x58] sm:$0xf]
        %v451 = vld [vmem:[%s410 + $0x5c] sm:$0xf]
        %v452 = vld [vmem:[%s410 + $0x60] sm:$0xf]
        %v453 = vld [vmem:[%s410 + $0x64] sm:$0xf]
        %v454 = vld [vmem:[%s410 + $0x68] sm:$0xf]
        %v455 = vld [vmem:[%s410 + $0x6c] sm:$0xf]
        %v456 = vld [vmem:[%s410 + $0x70] sm:$0xf]
        %v457 = vld [vmem:[%s410 + $0x74] sm:$0xf]
        %v458 = vld [vmem:[%s410 + $0x78] sm:$0xf]
        %v459 = vld [vmem:[%s410 + $0x7c] sm:$0xf]
        %v460 = vld [vmem:[%s8] sm:$0x1]
        %v462 = vlaneseq
        %v463 = vshrl.u32 %v462, 7
        %v464 = vsub.s32 0, %v463
        %v465 = vrot.slane %v460, %v464
        %v499 = vunpack.c.l.b16 %v428
        %v500 = vunpack.c.l.b16 %v429
        %v501 = vunpack.c.l.b16 %v430
        %v502 = vunpack.c.l.b16 %v431
        %v503 = vunpack.c.l.b16 %v432
        %v504 = vunpack.c.l.b16 %v433
        %v505 = vunpack.c.l.b16 %v434
        %v506 = vunpack.c.l.b16 %v435
        %v507 = vunpack.c.l.b16 %v436
        %v508 = vunpack.c.l.b16 %v437
        %v509 = vunpack.c.l.b16 %v438
        %v510 = vunpack.c.l.b16 %v439
        %v511 = vunpack.c.l.b16 %v440
        %v512 = vunpack.c.l.b16 %v441
        %v513 = vunpack.c.l.b16 %v442
        %v514 = vunpack.c.l.b16 %v443
        %v515 = vunpack.c.l.b16 %v444
        %v516 = vunpack.c.l.b16 %v445
        %v517 = vunpack.c.l.b16 %v446
        %v518 = vunpack.c.l.b16 %v447
        %v519 = vunpack.c.l.b16 %v448
        %v520 = vunpack.c.l.b16 %v449
        %v521 = vunpack.c.l.b16 %v450
        %v522 = vunpack.c.l.b16 %v451
        %v523 = vunpack.c.l.b16 %v452
        %v524 = vunpack.c.l.b16 %v453
        %v525 = vunpack.c.l.b16 %v454
        %v526 = vunpack.c.l.b16 %v455
        %v527 = vunpack.c.l.b16 %v456
        %v528 = vunpack.c.l.b16 %v457
        %v529 = vunpack.c.l.b16 %v458
        %v530 = vunpack.c.l.b16 %v459
        %v531 = vpack.c.b16 %v500, %v499
        %v532 = vpack.c.b16 %v502, %v501
        %v533 = vpack.c.b16 %v504, %v503
        %v534 = vpack.c.b16 %v506, %v505
        %v535 = vpack.c.b16 %v508, %v507
        %v536 = vpack.c.b16 %v510, %v509
        %v537 = vpack.c.b16 %v512, %v511
        %v538 = vpack.c.b16 %v514, %v513
        %v539 = vpack.c.b16 %v516, %v515
        %v540 = vpack.c.b16 %v518, %v517
        %v541 = vpack.c.b16 %v520, %v519
        %v542 = vpack.c.b16 %v522, %v521
        %v543 = vpack.c.b16 %v524, %v523
        %v544 = vpack.c.b16 %v526, %v525
        %v545 = vpack.c.b16 %v528, %v527
        %v546 = vpack.c.b16 %v530, %v529
        %v579 = vunpack.c.l.b16 %v412
        %v580 = vunpack.c.l.b16 %v413
        %v581 = vunpack.c.l.b16 %v414
        %v582 = vunpack.c.l.b16 %v415
        %v583 = vunpack.c.l.b16 %v416
        %v584 = vunpack.c.l.b16 %v417
        %v585 = vunpack.c.l.b16 %v418
        %v586 = vunpack.c.l.b16 %v419
        %v587 = vunpack.c.l.b16 %v420
        %v588 = vunpack.c.l.b16 %v421
        %v589 = vunpack.c.l.b16 %v422
        %v590 = vunpack.c.l.b16 %v423
        %v591 = vunpack.c.l.b16 %v424
        %v592 = vunpack.c.l.b16 %v425
        %v593 = vunpack.c.l.b16 %v426
        %v594 = vunpack.c.l.b16 %v427
        %v595 = vpack.c.b16 %v580, %v579
        %v596 = vpack.c.b16 %v582, %v581
        %v597 = vpack.c.b16 %v584, %v583
        %v598 = vpack.c.b16 %v586, %v585
        %v599 = vpack.c.b16 %v588, %v587
        %v600 = vpack.c.b16 %v590, %v589
        %v601 = vpack.c.b16 %v592, %v591
        %v602 = vpack.c.b16 %v594, %v593
        %611 = vmatprep.subr.bf16.mxu0 0
        %612 = vmatpush1.bf16.msra.mxu0 %v595
        %613 = vmatprep.subr.bf16.mxu0 0
        %614 = vmatpush1.bf16.msra.mxu0 %v596
        %615 = vmatprep.subr.bf16.mxu0 0
        %616 = vmatpush1.bf16.msra.mxu0 %v597
        %617 = vmatprep.subr.bf16.mxu0 0
        %618 = vmatpush1.bf16.msra.mxu0 %v598
        %619 = vmatprep.subr.bf16.mxu0 0
        %620 = vmatpush1.bf16.msra.mxu0 %v599
        %621 = vmatprep.subr.bf16.mxu0 0
        %622 = vmatpush1.bf16.msra.mxu0 %v600
        %623 = vmatprep.subr.bf16.mxu0 0
        %624 = vmatpush1.bf16.msra.mxu0 %v601
        %625 = vmatprep.subr.bf16.mxu0 0
        %626 = vmatpush1.bf16.msra.mxu0 %v602
        %627 = vmatprep.subr.bf16.mxu0 0
        %628 = vmatpush1.bf16.msra.mxu0 0
        %629 = vmatprep.subr.bf16.mxu0 0
        %630 = vmatpush1.bf16.msra.mxu0 0
        %631 = vmatprep.subr.bf16.mxu0 0
        %632 = vmatpush1.bf16.msra.mxu0 0
        %633 = vmatprep.subr.bf16.mxu0 0
        %634 = vmatpush1.bf16.msra.mxu0 0
        %635 = vmatprep.subr.bf16.mxu0 0
        %636 = vmatpush1.bf16.msra.mxu0 0
        %637 = vmatprep.subr.bf16.mxu0 0
        %638 = vmatpush1.bf16.msra.mxu0 0
        %639 = vmatprep.subr.bf16.mxu0 0
        %640 = vmatpush1.bf16.msra.mxu0 0
        %641 = vmatprep.subr.bf16.mxu0 0
        %642 = vmatpush1.bf16.msra.mxu0 0
        %643 = vmatprep.mubr.bf16.mxu0 0
        %644 = vmatmul.mubr.bf16.gmra.mrb[0].mxu0 %v531
        %v645 = vpop.f32.mrb[0].mxu0
        %v646 = vadd.f32 %v465, %v645
        %v647 = vpop.f32.mrb[0].mxu0
        %v648 = vpop.f32.mrb[0].mxu0
        %v649 = vadd.f32 %v465, %v648
        %v650 = vpop.f32.mrb[0].mxu0
        %651 = vmatprep.mubr.bf16.mxu0 0
        %652 = vmatmul.mubr.bf16.gmra.mrb[0].mxu0 %v532
        %v653 = vpop.f32.mrb[0].mxu0
        %v654 = vadd.f32 %v465, %v653
        %v655 = vpop.f32.mrb[0].mxu0
        %v656 = vpop.f32.mrb[0].mxu0
        %v657 = vadd.f32 %v465, %v656
        %v658 = vpop.f32.mrb[0].mxu0
        %659 = vmatprep.mubr.bf16.mxu0 0
        %660 = vmatmul.mubr.bf16.gmra.mrb[0].mxu0 %v533
        %v661 = vpop.f32.mrb[0].mxu0
        %v662 = vadd.f32 %v465, %v661
        %v663 = vpop.f32.mrb[0].mxu0
        %v664 = vpop.f32.mrb[0].mxu0
        %v665 = vadd.f32 %v465, %v664
        %v666 = vpop.f32.mrb[0].mxu0
        %667 = vmatprep.mubr.bf16.mxu0 0
        %668 = vmatmul.mubr.bf16.gmra.mrb[0].mxu0 %v534
        %v669 = vpop.f32.mrb[0].mxu0
        %v670 = vadd.f32 %v465, %v669
        %v671 = vpop.f32.mrb[0].mxu0
        %v672 = vpop.f32.mrb[0].mxu0
        %v673 = vadd.f32 %v465, %v672
        %v674 = vpop.f32.mrb[0].mxu0
        %675 = vmatprep.mubr.bf16.mxu0 0
        %676 = vmatmul.mubr.bf16.gmra.mrb[0].mxu0 %v535
        %v677 = vpop.f32.mrb[0].mxu0
        %v678 = vadd.f32 %v465, %v677
        %v679 = vpop.f32.mrb[0].mxu0
        %v680 = vpop.f32.mrb[0].mxu0
        %v681 = vadd.f32 %v465, %v680
        %v682 = vpop.f32.mrb[0].mxu0
        %683 = vmatprep.mubr.bf16.mxu0 0
        %684 = vmatmul.mubr.bf16.gmra.mrb[0].mxu0 %v536
        %v685 = vpop.f32.mrb[0].mxu0
        %v686 = vadd.f32 %v465, %v685
        %v687 = vpop.f32.mrb[0].mxu0
        %v688 = vpop.f32.mrb[0].mxu0
        %v689 = vadd.f32 %v465, %v688
        %v690 = vpop.f32.mrb[0].mxu0
        %691 = vmatprep.mubr.bf16.mxu0 0
        %692 = vmatmul.mubr.bf16.gmra.mrb[0].mxu0 %v537
        %v693 = vpop.f32.mrb[0].mxu0
        %v694 = vadd.f32 %v465, %v693
        %v695 = vpop.f32.mrb[0].mxu0
        %v696 = vpop.f32.mrb[0].mxu0
        %v697 = vadd.f32 %v465, %v696
        %v698 = vpop.f32.mrb[0].mxu0
        %699 = vmatprep.mubr.bf16.mxu0 0
        %700 = vmatmul.mubr.bf16.gmra.mrb[0].mxu0 %v538
        %v701 = vpop.f32.mrb[0].mxu0
        %v702 = vadd.f32 %v465, %v701
        %v703 = vpop.f32.mrb[0].mxu0
        %v704 = vpop.f32.mrb[0].mxu0
        %v705 = vadd.f32 %v465, %v704
        %v706 = vpop.f32.mrb[0].mxu0
        %707 = vmatprep.mubr.bf16.mxu0 0
        %708 = vmatmul.mubr.bf16.gmra.mrb[0].mxu0 %v539
        %v709 = vpop.f32.mrb[0].mxu0
        %v710 = vadd.f32 %v465, %v709
        %v711 = vpop.f32.mrb[0].mxu0
        %v712 = vpop.f32.mrb[0].mxu0
        %v713 = vadd.f32 %v465, %v712
        %v714 = vpop.f32.mrb[0].mxu0
        %715 = vmatprep.mubr.bf16.mxu0 0
        %716 = vmatmul.mubr.bf16.gmra.mrb[0].mxu0 %v540
        %v717 = vpop.f32.mrb[0].mxu0
        %v718 = vadd.f32 %v465, %v717
        %v719 = vpop.f32.mrb[0].mxu0
        %v720 = vpop.f32.mrb[0].mxu0
        %v721 = vadd.f32 %v465, %v720
        %v722 = vpop.f32.mrb[0].mxu0
        %723 = vmatprep.mubr.bf16.mxu0 0
        %724 = vmatmul.mubr.bf16.gmra.mrb[0].mxu0 %v541
        %v725 = vpop.f32.mrb[0].mxu0
        %v726 = vadd.f32 %v465, %v725
        %v727 = vpop.f32.mrb[0].mxu0
        %v728 = vpop.f32.mrb[0].mxu0
        %v729 = vadd.f32 %v465, %v728
        %v730 = vpop.f32.mrb[0].mxu0
        %731 = vmatprep.mubr.bf16.mxu0 0
        %732 = vmatmul.mubr.bf16.gmra.mrb[0].mxu0 %v542
        %v733 = vpop.f32.mrb[0].mxu0
        %v734 = vadd.f32 %v465, %v733
        %v735 = vpop.f32.mrb[0].mxu0
        %v736 = vpop.f32.mrb[0].mxu0
        %v737 = vadd.f32 %v465, %v736
        %v738 = vpop.f32.mrb[0].mxu0
        %739 = vmatprep.mubr.bf16.mxu0 0
        %740 = vmatmul.mubr.bf16.gmra.mrb[0].mxu0 %v543
        %v741 = vpop.f32.mrb[0].mxu0
        %v742 = vadd.f32 %v465, %v741
        %v743 = vpop.f32.mrb[0].mxu0
        %v744 = vpop.f32.mrb[0].mxu0
        %v745 = vadd.f32 %v465, %v744
        %v746 = vpop.f32.mrb[0].mxu0
        %747 = vmatprep.mubr.bf16.mxu0 0
        %748 = vmatmul.mubr.bf16.gmra.mrb[0].mxu0 %v544
        %v749 = vpop.f32.mrb[0].mxu0
        %v750 = vadd.f32 %v465, %v749
        %v751 = vpop.f32.mrb[0].mxu0
        %v752 = vpop.f32.mrb[0].mxu0
        %v753 = vadd.f32 %v465, %v752
        %v754 = vpop.f32.mrb[0].mxu0
        %755 = vmatprep.mubr.bf16.mxu0 0
        %756 = vmatmul.mubr.bf16.gmra.mrb[0].mxu0 %v545
        %v757 = vpop.f32.mrb[0].mxu0
        %v758 = vadd.f32 %v465, %v757
        %v759 = vpop.f32.mrb[0].mxu0
        %v760 = vpop.f32.mrb[0].mxu0
        %v761 = vadd.f32 %v465, %v760
        %v762 = vpop.f32.mrb[0].mxu0
        %763 = vmatprep.mubr.bf16.mxu0 0
        %764 = vmatmul.mubr.bf16.gmra.mrb[0].mxu0 %v546
        %v765 = vpop.f32.mrb[0].mxu0
        %v766 = vadd.f32 %v465, %v765
        %v767 = vpop.f32.mrb[0].mxu0
        %v768 = vpop.f32.mrb[0].mxu0
        %v769 = vadd.f32 %v465, %v768
        %v770 = vpop.f32.mrb[0].mxu0
        %771 = vdwg.mxu0
        %v772 = vld [vmem:[%s390] sm:$0xf]
        %v773 = vld [vmem:[%s390 + $0x4] sm:$0xf]
        %v774 = vld [vmem:[%s390 + $0x8] sm:$0xf]
        %v775 = vld [vmem:[%s390 + $0xc] sm:$0xf]
        %v776 = vld [vmem:[%s390 + $0x10] sm:$0xf]
        %v777 = vld [vmem:[%s390 + $0x14] sm:$0xf]
        %v778 = vld [vmem:[%s390 + $0x18] sm:$0xf]
        %v779 = vld [vmem:[%s390 + $0x1c] sm:$0xf]
        %v780 = vld [vmem:[%s390 + $0x20] sm:$0xf]
        %v781 = vld [vmem:[%s390 + $0x24] sm:$0xf]
        %v782 = vld [vmem:[%s390 + $0x28] sm:$0xf]
        %v783 = vld [vmem:[%s390 + $0x2c] sm:$0xf]
        %v784 = vld [vmem:[%s390 + $0x30] sm:$0xf]
        %v785 = vld [vmem:[%s390 + $0x34] sm:$0xf]
        %v786 = vld [vmem:[%s390 + $0x38] sm:$0xf]
        %v787 = vld [vmem:[%s390 + $0x3c] sm:$0xf]
        %v788 = vld [vmem:[%s390 + $0x40] sm:$0xf]
        %v789 = vld [vmem:[%s390 + $0x44] sm:$0xf]
        %v790 = vld [vmem:[%s390 + $0x48] sm:$0xf]
        %v791 = vld [vmem:[%s390 + $0x4c] sm:$0xf]
        %v792 = vld [vmem:[%s390 + $0x50] sm:$0xf]
        %v793 = vld [vmem:[%s390 + $0x54] sm:$0xf]
        %v794 = vld [vmem:[%s390 + $0x58] sm:$0xf]
        %v795 = vld [vmem:[%s390 + $0x5c] sm:$0xf]
        %v796 = vld [vmem:[%s390 + $0x60] sm:$0xf]
        %v797 = vld [vmem:[%s390 + $0x64] sm:$0xf]
        %v798 = vld [vmem:[%s390 + $0x68] sm:$0xf]
        %v799 = vld [vmem:[%s390 + $0x6c] sm:$0xf]
        %v800 = vld [vmem:[%s390 + $0x70] sm:$0xf]
        %v801 = vld [vmem:[%s390 + $0x74] sm:$0xf]
        %v802 = vld [vmem:[%s390 + $0x78] sm:$0xf]
        %v803 = vld [vmem:[%s390 + $0x7c] sm:$0xf]
        %v804 = vld [vmem:[%s395] sm:$0xf]
        %v805 = vld [vmem:[%s395 + $0x4] sm:$0xf]
        %v806 = vld [vmem:[%s395 + $0x8] sm:$0xf]
        %v807 = vld [vmem:[%s395 + $0xc] sm:$0xf]
        %v808 = vld [vmem:[%s395 + $0x10] sm:$0xf]
        %v809 = vld [vmem:[%s395 + $0x14] sm:$0xf]
        %v810 = vld [vmem:[%s395 + $0x18] sm:$0xf]
        %v811 = vld [vmem:[%s395 + $0x1c] sm:$0xf]
        %v812 = vld [vmem:[%s395 + $0x20] sm:$0xf]
        %v813 = vld [vmem:[%s395 + $0x24] sm:$0xf]
        %v814 = vld [vmem:[%s395 + $0x28] sm:$0xf]
        %v815 = vld [vmem:[%s395 + $0x2c] sm:$0xf]
        %v816 = vld [vmem:[%s395 + $0x30] sm:$0xf]
        %v817 = vld [vmem:[%s395 + $0x34] sm:$0xf]
        %v818 = vld [vmem:[%s395 + $0x38] sm:$0xf]
        %v819 = vld [vmem:[%s395 + $0x3c] sm:$0xf]
        %v820 = vld [vmem:[%s395 + $0x40] sm:$0xf]
        %v821 = vld [vmem:[%s395 + $0x44] sm:$0xf]
        %v822 = vld [vmem:[%s395 + $0x48] sm:$0xf]
        %v823 = vld [vmem:[%s395 + $0x4c] sm:$0xf]
        %v824 = vld [vmem:[%s395 + $0x50] sm:$0xf]
        %v825 = vld [vmem:[%s395 + $0x54] sm:$0xf]
        %v826 = vld [vmem:[%s395 + $0x58] sm:$0xf]
        %v827 = vld [vmem:[%s395 + $0x5c] sm:$0xf]
        %v828 = vld [vmem:[%s395 + $0x60] sm:$0xf]
        %v829 = vld [vmem:[%s395 + $0x64] sm:$0xf]
        %v830 = vld [vmem:[%s395 + $0x68] sm:$0xf]
        %v831 = vld [vmem:[%s395 + $0x6c] sm:$0xf]
        %v832 = vld [vmem:[%s395 + $0x70] sm:$0xf]
        %v833 = vld [vmem:[%s395 + $0x74] sm:$0xf]
        %v834 = vld [vmem:[%s395 + $0x78] sm:$0xf]
        %v835 = vld [vmem:[%s395 + $0x7c] sm:$0xf]
        %v836 = vld [vmem:[%s400] sm:$0xf]
        %v837 = vld [vmem:[%s400 + $0x4] sm:$0xf]
        %v838 = vld [vmem:[%s400 + $0x8] sm:$0xf]
        %v839 = vld [vmem:[%s400 + $0xc] sm:$0xf]
        %v840 = vld [vmem:[%s400 + $0x10] sm:$0xf]
        %v841 = vld [vmem:[%s400 + $0x14] sm:$0xf]
        %v842 = vld [vmem:[%s400 + $0x18] sm:$0xf]
        %v843 = vld [vmem:[%s400 + $0x1c] sm:$0xf]
        %v844 = vld [vmem:[%s400 + $0x20] sm:$0xf]
        %v845 = vld [vmem:[%s400 + $0x24] sm:$0xf]
        %v846 = vld [vmem:[%s400 + $0x28] sm:$0xf]
        %v847 = vld [vmem:[%s400 + $0x2c] sm:$0xf]
        %v848 = vld [vmem:[%s400 + $0x30] sm:$0xf]
        %v849 = vld [vmem:[%s400 + $0x34] sm:$0xf]
        %v850 = vld [vmem:[%s400 + $0x38] sm:$0xf]
        %v851 = vld [vmem:[%s400 + $0x3c] sm:$0xf]
        %v852 = vld [vmem:[%s400 + $0x40] sm:$0xf]
        %v853 = vld [vmem:[%s400 + $0x44] sm:$0xf]
        %v854 = vld [vmem:[%s400 + $0x48] sm:$0xf]
        %v855 = vld [vmem:[%s400 + $0x4c] sm:$0xf]
        %v856 = vld [vmem:[%s400 + $0x50] sm:$0xf]
        %v857 = vld [vmem:[%s400 + $0x54] sm:$0xf]
        %v858 = vld [vmem:[%s400 + $0x58] sm:$0xf]
        %v859 = vld [vmem:[%s400 + $0x5c] sm:$0xf]
        %v860 = vld [vmem:[%s400 + $0x60] sm:$0xf]
        %v861 = vld [vmem:[%s400 + $0x64] sm:$0xf]
        %v862 = vld [vmem:[%s400 + $0x68] sm:$0xf]
        %v863 = vld [vmem:[%s400 + $0x6c] sm:$0xf]
        %v864 = vld [vmem:[%s400 + $0x70] sm:$0xf]
        %v865 = vld [vmem:[%s400 + $0x74] sm:$0xf]
        %v866 = vld [vmem:[%s400 + $0x78] sm:$0xf]
        %v867 = vld [vmem:[%s400 + $0x7c] sm:$0xf]
        %v868 = vld [vmem:[%s405] sm:$0xf]
        %v869 = vld [vmem:[%s405 + $0x4] sm:$0xf]
        %v870 = vld [vmem:[%s405 + $0x8] sm:$0xf]
        %v871 = vld [vmem:[%s405 + $0xc] sm:$0xf]
        %v872 = vld [vmem:[%s405 + $0x10] sm:$0xf]
        %v873 = vld [vmem:[%s405 + $0x14] sm:$0xf]
        %v874 = vld [vmem:[%s405 + $0x18] sm:$0xf]
        %v875 = vld [vmem:[%s405 + $0x1c] sm:$0xf]
        %v884 = vunpack.c.l.b16 %v868
        %v885 = vunpack.c.l.b16 %v869
        %v886 = vunpack.c.l.b16 %v870
        %v887 = vunpack.c.l.b16 %v871
        %v888 = vunpack.c.l.b16 %v872
        %v889 = vunpack.c.l.b16 %v873
        %v890 = vunpack.c.l.b16 %v874
        %v891 = vunpack.c.l.b16 %v875
        %v892 = vpack.c.b16 %v885, %v884
        %v893 = vpack.c.b16 %v887, %v886
        %v894 = vpack.c.b16 %v889, %v888
        %v895 = vpack.c.b16 %v891, %v890
        %v928 = vunpack.c.l.b16 %v804
        %v929 = vunpack.c.l.b16 %v805
        %v930 = vunpack.c.l.b16 %v806
        %v931 = vunpack.c.l.b16 %v807
        %v932 = vunpack.c.l.b16 %v808
        %v933 = vunpack.c.l.b16 %v809
        %v934 = vunpack.c.l.b16 %v810
        %v935 = vunpack.c.l.b16 %v811
        %v936 = vunpack.c.l.b16 %v812
        %v937 = vunpack.c.l.b16 %v813
        %v938 = vunpack.c.l.b16 %v814
        %v939 = vunpack.c.l.b16 %v815
        %v940 = vunpack.c.l.b16 %v816
        %v941 = vunpack.c.l.b16 %v817
        %v942 = vunpack.c.l.b16 %v818
        %v943 = vunpack.c.l.b16 %v819
        %v944 = vunpack.c.l.b16 %v820
        %v945 = vunpack.c.l.b16 %v821
        %v946 = vunpack.c.l.b16 %v822
        %v947 = vunpack.c.l.b16 %v823
        %v948 = vunpack.c.l.b16 %v824
        %v949 = vunpack.c.l.b16 %v825
        %v950 = vunpack.c.l.b16 %v826
        %v951 = vunpack.c.l.b16 %v827
        %v952 = vunpack.c.l.b16 %v828
        %v953 = vunpack.c.l.b16 %v829
        %v954 = vunpack.c.l.b16 %v830
        %v955 = vunpack.c.l.b16 %v831
        %v956 = vunpack.c.l.b16 %v832
        %v957 = vunpack.c.l.b16 %v833
        %v958 = vunpack.c.l.b16 %v834
        %v959 = vunpack.c.l.b16 %v835
        %v960 = vpack.c.b16 %v929, %v928
        %v961 = vpack.c.b16 %v931, %v930
        %v962 = vpack.c.b16 %v933, %v932
        %v963 = vpack.c.b16 %v935, %v934
        %v964 = vpack.c.b16 %v937, %v936
        %v965 = vpack.c.b16 %v939, %v938
        %v966 = vpack.c.b16 %v941, %v940
        %v967 = vpack.c.b16 %v943, %v942
        %v968 = vpack.c.b16 %v945, %v944
        %v969 = vpack.c.b16 %v947, %v946
        %v970 = vpack.c.b16 %v949, %v948
        %v971 = vpack.c.b16 %v951, %v950
        %v972 = vpack.c.b16 %v953, %v952
        %v973 = vpack.c.b16 %v955, %v954
        %v974 = vpack.c.b16 %v957, %v956
        %v975 = vpack.c.b16 %v959, %v958
        %vm976 = vcmask 261120
        %v978 = vsel %vm976, %v892, 0
        %v981 = vsel %vm976, %v893, 0
        %v984 = vsel %vm976, %v894, 0
        %v987 = vsel %vm976, %v895, 0
        %v990 = vsel %vm976, %v960, 0
        %v993 = vsel %vm976, %v961, 0
        %v996 = vsel %vm976, %v962, 0
        %v999 = vsel %vm976, %v963, 0
        %v1002 = vsel %vm976, %v964, 0
        %v1005 = vsel %vm976, %v965, 0
        %v1008 = vsel %vm976, %v966, 0
        %v1011 = vsel %vm976, %v967, 0
        %v1014 = vsel %vm976, %v968, 0
        %v1017 = vsel %vm976, %v969, 0
        %v1020 = vsel %vm976, %v970, 0
        %v1023 = vsel %vm976, %v971, 0
        %v1026 = vsel %vm976, %v972, 0
        %v1029 = vsel %vm976, %v973, 0
        %v1032 = vsel %vm976, %v974, 0
        %v1035 = vsel %vm976, %v975, 0
        %1037 = vmatprep.subr.bf16.mxu0 0
        %1038 = vmatpush1.bf16.xpose.msra.mxu0 %v990
        %1039 = vmatprep.subr.bf16.mxu0 0
        %1040 = vmatpush1.bf16.xpose.msra.mxu0 %v993
        %1041 = vmatprep.subr.bf16.mxu0 0
        %1042 = vmatpush1.bf16.xpose.msra.mxu0 %v996
        %1043 = vmatprep.subr.bf16.mxu0 0
        %1044 = vmatpush1.bf16.xpose.msra.mxu0 %v999
        %1045 = vmatprep.subr.bf16.mxu0 0
        %1046 = vmatpush1.bf16.xpose.msra.mxu0 %v1002
        %1047 = vmatprep.subr.bf16.mxu0 0
        %1048 = vmatpush1.bf16.xpose.msra.mxu0 %v1005
        %1049 = vmatprep.subr.bf16.mxu0 0
        %1050 = vmatpush1.bf16.xpose.msra.mxu0 %v1008
        %1051 = vmatprep.subr.bf16.mxu0 0
        %1052 = vmatpush1.bf16.xpose.msra.mxu0 %v1011
        %1053 = vmatprep.subr.bf16.mxu0 0
        %1054 = vmatpush1.bf16.xpose.msra.mxu0 %v1014
        %1055 = vmatprep.subr.bf16.mxu0 0
        %1056 = vmatpush1.bf16.xpose.msra.mxu0 %v1017
        %1057 = vmatprep.subr.bf16.mxu0 0
        %1058 = vmatpush1.bf16.xpose.msra.mxu0 %v1020
        %1059 = vmatprep.subr.bf16.mxu0 0
        %1060 = vmatpush1.bf16.xpose.msra.mxu0 %v1023
        %1061 = vmatprep.subr.bf16.mxu0 0
        %1062 = vmatpush1.bf16.xpose.msra.mxu0 %v1026
        %1063 = vmatprep.subr.bf16.mxu0 0
        %1064 = vmatpush1.bf16.xpose.msra.mxu0 %v1029
        %1065 = vmatprep.subr.bf16.mxu0 0
        %1066 = vmatpush1.bf16.xpose.msra.mxu0 %v1032
        %1067 = vmatprep.subr.bf16.mxu0 0
        %1068 = vmatpush1.bf16.xpose.msra.mxu0 %v1035
        %1069 = vmatprep.mubr.bf16.mxu0 0
        %1070 = vmatmul.mubr.bf16.gmra.mrb[0].mxu0 %v978
        %v1071 = vpop.f32.mrb[0].mxu0
        %v1072 = vadd.f32 0.0, %v1071
        %v1073 = vpop.f32.mrb[0].mxu0
        %v1074 = vadd.f32 0.0, %v1073
        %v1075 = vpop.f32.mrb[0].mxu0
        %v1076 = vadd.f32 0.0, %v1075
        %v1077 = vpop.f32.mrb[0].mxu0
        %v1078 = vadd.f32 0.0, %v1077
        %1079 = vmatprep.mubr.bf16.mxu0 0
        %1080 = vmatmul.mubr.bf16.gmra.mrb[0].mxu0 %v981
        %v1081 = vpop.f32.mrb[0].mxu0
        %v1082 = vadd.f32 0.0, %v1081
        %v1083 = vpop.f32.mrb[0].mxu0
        %v1084 = vadd.f32 0.0, %v1083
        %v1085 = vpop.f32.mrb[0].mxu0
        %v1086 = vadd.f32 0.0, %v1085
        %v1087 = vpop.f32.mrb[0].mxu0
        %v1088 = vadd.f32 0.0, %v1087
        %1089 = vmatprep.mubr.bf16.mxu0 0
        %1090 = vmatmul.mubr.bf16.gmra.mrb[0].mxu0 %v984
        %v1091 = vpop.f32.mrb[0].mxu0
        %v1092 = vadd.f32 0.0, %v1091
        %v1093 = vpop.f32.mrb[0].mxu0
        %v1094 = vadd.f32 0.0, %v1093
        %v1095 = vpop.f32.mrb[0].mxu0
        %v1096 = vadd.f32 0.0, %v1095
        %v1097 = vpop.f32.mrb[0].mxu0
        %v1098 = vadd.f32 0.0, %v1097
        %1099 = vmatprep.mubr.bf16.mxu0 0
        %1100 = vmatmul.mubr.bf16.gmra.mrb[0].mxu0 %v987
        %v1101 = vpop.f32.mrb[0].mxu0
        %v1102 = vadd.f32 0.0, %v1101
        %v1103 = vpop.f32.mrb[0].mxu0
        %v1104 = vadd.f32 0.0, %v1103
        %v1105 = vpop.f32.mrb[0].mxu0
        %v1106 = vadd.f32 0.0, %v1105
        %v1107 = vpop.f32.mrb[0].mxu0
        %v1108 = vadd.f32 0.0, %v1107
        %1109 = vdwg.mxu0
        %v1110 = vmul.f32 %v1072, 0.17677669
        %v1111 = vmul.f32 %v1074, 0.17677669
        %v1112 = vmul.f32 %v1076, 0.17677669
        %v1113 = vmul.f32 %v1078, 0.17677669
        %v1114 = vmul.f32 %v1082, 0.17677669
        %v1115 = vmul.f32 %v1084, 0.17677669
        %v1116 = vmul.f32 %v1086, 0.17677669
        %v1117 = vmul.f32 %v1088, 0.17677669
        %v1118 = vmul.f32 %v1092, 0.17677669
        %v1119 = vmul.f32 %v1094, 0.17677669
        %v1120 = vmul.f32 %v1096, 0.17677669
        %v1121 = vmul.f32 %v1098, 0.17677669
        %v1122 = vmul.f32 %v1102, 0.17677669
        %v1123 = vmul.f32 %v1104, 0.17677669
        %v1124 = vmul.f32 %v1106, 0.17677669
        %v1125 = vmul.f32 %v1108, 0.17677669
        %v1126 = vld [vmem:[%s4] sm:$0xff]
        %v1127 = vld [vmem:[%s4 + $0x8] sm:$0xff]
        %v1128 = vld [vmem:[%s4 + $0x10] sm:$0xff]
        %v1129 = vld [vmem:[%s4 + $0x18] sm:$0xff]
        %v1130 = vld [vmem:[%s4 + $0x20] sm:$0xff]
        %v1131 = vld [vmem:[%s4 + $0x28] sm:$0xff]
        %v1132 = vld [vmem:[%s4 + $0x30] sm:$0xff]
        %v1133 = vld [vmem:[%s4 + $0x38] sm:$0xff]
        %v1134 = vld [vmem:[%s4 + $0x40] sm:$0xff]
        %v1135 = vld [vmem:[%s4 + $0x48] sm:$0xff]
        %v1136 = vld [vmem:[%s4 + $0x50] sm:$0xff]
        %v1137 = vld [vmem:[%s4 + $0x58] sm:$0xff]
        %v1138 = vld [vmem:[%s4 + $0x60] sm:$0xff]
        %v1139 = vld [vmem:[%s4 + $0x68] sm:$0xff]
        %v1140 = vld [vmem:[%s4 + $0x70] sm:$0xff]
        %v1141 = vld [vmem:[%s4 + $0x78] sm:$0xff]
        %v1142 = vadd.f32 %v1110, %v1126
        %v1143 = vadd.f32 %v1111, %v1127
        %v1144 = vadd.f32 %v1112, %v1128
        %v1145 = vadd.f32 %v1113, %v1129
        %v1146 = vadd.f32 %v1114, %v1130
        %v1147 = vadd.f32 %v1115, %v1131
        %v1148 = vadd.f32 %v1116, %v1132
        %v1149 = vadd.f32 %v1117, %v1133
        %v1150 = vadd.f32 %v1118, %v1134
        %v1151 = vadd.f32 %v1119, %v1135
        %v1152 = vadd.f32 %v1120, %v1136
        %v1153 = vadd.f32 %v1121, %v1137
        %v1154 = vadd.f32 %v1122, %v1138
        %v1155 = vadd.f32 %v1123, %v1139
        %v1156 = vadd.f32 %v1124, %v1140
        %v1157 = vadd.f32 %v1125, %v1141
        %v1158 = vmax.f32 %v1142, %v1143
        %1159 = vmax.xlane.f32.xlu0 %v1158
        %v1160 = vpop.xlane.xlu0 %1159
        %v1161 = vmax.f32 %v1144, %v1145
        %1162 = vmax.xlane.f32.xlu0 %v1161
        %v1163 = vpop.xlane.xlu0 %1162
        %v1164 = vmax.f32 %v1146, %v1147
        %1165 = vmax.xlane.f32.xlu0 %v1164
        %v1166 = vpop.xlane.xlu0 %1165
        %v1167 = vmax.f32 %v1148, %v1149
        %1168 = vmax.xlane.f32.xlu0 %v1167
        %v1169 = vpop.xlane.xlu0 %1168
        %v1170 = vmax.f32 %v1150, %v1151
        %1171 = vmax.xlane.f32.xlu0 %v1170
        %v1172 = vpop.xlane.xlu0 %1171
        %v1173 = vmax.f32 %v1152, %v1153
        %1174 = vmax.xlane.f32.xlu0 %v1173
        %v1175 = vpop.xlane.xlu0 %1174
        %v1176 = vmax.f32 %v1154, %v1155
        %1177 = vmax.xlane.f32.xlu0 %v1176
        %v1178 = vpop.xlane.xlu0 %1177
        %v1179 = vmax.f32 %v1156, %v1157
        %1180 = vmax.xlane.f32.xlu0 %v1179
        %v1181 = vpop.xlane.xlu0 %1180
        %v1182 = vsub.f32 %v1142, %v1160
        %v1183 = vsub.f32 %v1143, %v1160
        %v1184 = vsub.f32 %v1144, %v1163
        %v1185 = vsub.f32 %v1145, %v1163
        %v1186 = vsub.f32 %v1146, %v1166
        %v1187 = vsub.f32 %v1147, %v1166
        %v1188 = vsub.f32 %v1148, %v1169
        %v1189 = vsub.f32 %v1149, %v1169
        %v1190 = vsub.f32 %v1150, %v1172
        %v1191 = vsub.f32 %v1151, %v1172
        %v1192 = vsub.f32 %v1152, %v1175
        %v1193 = vsub.f32 %v1153, %v1175
        %v1194 = vsub.f32 %v1154, %v1178
        %v1195 = vsub.f32 %v1155, %v1178
        %v1196 = vsub.f32 %v1156, %v1181
        %v1197 = vsub.f32 %v1157, %v1181
        %v1198 = vmul.f32 %v1182, 1.442695
        %v1199 = vpow.pop %v1198
        %v1200 = vmul.f32 %v1183, 1.442695
        %v1201 = vpow.pop %v1200
        %v1202 = vmul.f32 %v1184, 1.442695
        %v1203 = vpow.pop %v1202
        %v1204 = vmul.f32 %v1185, 1.442695
        %v1205 = vpow.pop %v1204
        %v1206 = vmul.f32 %v1186, 1.442695
        %v1207 = vpow.pop %v1206
        %v1208 = vmul.f32 %v1187, 1.442695
        %v1209 = vpow.pop %v1208
        %v1210 = vmul.f32 %v1188, 1.442695
        %v1211 = vpow.pop %v1210
        %v1212 = vmul.f32 %v1189, 1.442695
        %v1213 = vpow.pop %v1212
        %v1214 = vmul.f32 %v1190, 1.442695
        %v1215 = vpow.pop %v1214
        %v1216 = vmul.f32 %v1191, 1.442695
        %v1217 = vpow.pop %v1216
        %v1218 = vmul.f32 %v1192, 1.442695
        %v1219 = vpow.pop %v1218
        %v1220 = vmul.f32 %v1193, 1.442695
        %v1221 = vpow.pop %v1220
        %v1222 = vmul.f32 %v1194, 1.442695
        %v1223 = vpow.pop %v1222
        %v1224 = vmul.f32 %v1195, 1.442695
        %v1225 = vpow.pop %v1224
        %v1226 = vmul.f32 %v1196, 1.442695
        %v1227 = vpow.pop %v1226
        %v1228 = vmul.f32 %v1197, 1.442695
        %v1229 = vpow.pop %v1228
        %v1230 = vadd.f32 %v1199, %v1201
        %1231 = vadd.xlane.f32.xlu0 %v1230
        %v1232 = vpop.xlane.xlu0 %1231
        %v1233 = vadd.f32 %v1203, %v1205
        %1234 = vadd.xlane.f32.xlu0 %v1233
        %v1235 = vpop.xlane.xlu0 %1234
        %v1236 = vadd.f32 %v1207, %v1209
        %1237 = vadd.xlane.f32.xlu0 %v1236
        %v1238 = vpop.xlane.xlu0 %1237
        %v1239 = vadd.f32 %v1211, %v1213
        %1240 = vadd.xlane.f32.xlu0 %v1239
        %v1241 = vpop.xlane.xlu0 %1240
        %v1242 = vadd.f32 %v1215, %v1217
        %1243 = vadd.xlane.f32.xlu0 %v1242
        %v1244 = vpop.xlane.xlu0 %1243
        %v1245 = vadd.f32 %v1219, %v1221
        %1246 = vadd.xlane.f32.xlu0 %v1245
        %v1247 = vpop.xlane.xlu0 %1246
        %v1248 = vadd.f32 %v1223, %v1225
        %1249 = vadd.xlane.f32.xlu0 %v1248
        %v1250 = vpop.xlane.xlu0 %1249
        %v1251 = vadd.f32 %v1227, %v1229
        %1252 = vadd.xlane.f32.xlu0 %v1251
        %v1253 = vpop.xlane.xlu0 %1252
        %v1254 = vrcp.pop %v1232
        %v1255 = vrcp.pop %v1235
        %v1256 = vrcp.pop %v1238
        %v1257 = vrcp.pop %v1241
        %v1258 = vrcp.pop %v1244
        %v1259 = vrcp.pop %v1247
        %v1260 = vrcp.pop %v1250
        %v1261 = vrcp.pop %v1253
        %v1262 = vmul.f32 %v1199, %v1254
        %v1263 = vmul.f32 %v1201, %v1254
        %v1264 = vmul.f32 %v1203, %v1255
        %v1265 = vmul.f32 %v1205, %v1255
        %v1266 = vmul.f32 %v1207, %v1256
        %v1267 = vmul.f32 %v1209, %v1256
        %v1268 = vmul.f32 %v1211, %v1257
        %v1269 = vmul.f32 %v1213, %v1257
        %v1270 = vmul.f32 %v1215, %v1258
        %v1271 = vmul.f32 %v1217, %v1258
        %v1272 = vmul.f32 %v1219, %v1259
        %v1273 = vmul.f32 %v1221, %v1259
        %v1274 = vmul.f32 %v1223, %v1260
        %v1275 = vmul.f32 %v1225, %v1260
        %v1276 = vmul.f32 %v1227, %v1261
        %v1277 = vmul.f32 %v1229, %v1261
        %v1278 = vpack.c.bf16 %v1264, %v1262
        %v1279 = vpack.c.bf16 %v1265, %v1263
        %v1280 = vpack.c.bf16 %v1268, %v1266
        %v1281 = vpack.c.bf16 %v1269, %v1267
        %v1282 = vpack.c.bf16 %v1272, %v1270
        %v1283 = vpack.c.bf16 %v1273, %v1271
        %v1284 = vpack.c.bf16 %v1276, %v1274
        %v1285 = vpack.c.bf16 %v1277, %v1275
        %v1318 = vunpack.c.l.b16 %v836
        %v1319 = vunpack.c.l.b16 %v837
        %v1320 = vunpack.c.l.b16 %v838
        %v1321 = vunpack.c.l.b16 %v839
        %v1322 = vunpack.c.l.b16 %v840
        %v1323 = vunpack.c.l.b16 %v841
        %v1324 = vunpack.c.l.b16 %v842
        %v1325 = vunpack.c.l.b16 %v843
        %v1326 = vunpack.c.l.b16 %v844
        %v1327 = vunpack.c.l.b16 %v845
        %v1328 = vunpack.c.l.b16 %v846
        %v1329 = vunpack.c.l.b16 %v847
        %v1330 = vunpack.c.l.b16 %v848
        %v1331 = vunpack.c.l.b16 %v849
        %v1332 = vunpack.c.l.b16 %v850
        %v1333 = vunpack.c.l.b16 %v851
        %v1334 = vunpack.c.l.b16 %v852
        %v1335 = vunpack.c.l.b16 %v853
        %v1336 = vunpack.c.l.b16 %v854
        %v1337 = vunpack.c.l.b16 %v855
        %v1338 = vunpack.c.l.b16 %v856
        %v1339 = vunpack.c.l.b16 %v857
        %v1340 = vunpack.c.l.b16 %v858
        %v1341 = vunpack.c.l.b16 %v859
        %v1342 = vunpack.c.l.b16 %v860
        %v1343 = vunpack.c.l.b16 %v861
        %v1344 = vunpack.c.l.b16 %v862
        %v1345 = vunpack.c.l.b16 %v863
        %v1346 = vunpack.c.l.b16 %v864
        %v1347 = vunpack.c.l.b16 %v865
        %v1348 = vunpack.c.l.b16 %v866
        %v1349 = vunpack.c.l.b16 %v867
        %v1350 = vpack.c.b16 %v1319, %v1318
        %v1351 = vpack.c.b16 %v1321, %v1320
        %v1352 = vpack.c.b16 %v1323, %v1322
        %v1353 = vpack.c.b16 %v1325, %v1324
        %v1354 = vpack.c.b16 %v1327, %v1326
        %v1355 = vpack.c.b16 %v1329, %v1328
        %v1356 = vpack.c.b16 %v1331, %v1330
        %v1357 = vpack.c.b16 %v1333, %v1332
        %v1358 = vpack.c.b16 %v1335, %v1334
        %v1359 = vpack.c.b16 %v1337, %v1336
        %v1360 = vpack.c.b16 %v1339, %v1338
        %v1361 = vpack.c.b16 %v1341, %v1340
        %v1362 = vpack.c.b16 %v1343, %v1342
        %v1363 = vpack.c.b16 %v1345, %v1344
        %v1364 = vpack.c.b16 %v1347, %v1346
        %v1365 = vpack.c.b16 %v1349, %v1348
        %1382 = vmatprep.subr.bf16.mxu0 0
        %1383 = vmatpush1.bf16.msra.mxu0 %v1350
        %1384 = vmatprep.subr.bf16.mxu0 0
        %1385 = vmatpush1.bf16.msra.mxu0 %v1351
        %1386 = vmatprep.subr.bf16.mxu0 0
        %1387 = vmatpush1.bf16.msra.mxu0 %v1352
        %1388 = vmatprep.subr.bf16.mxu0 0
        %1389 = vmatpush1.bf16.msra.mxu0 %v1353
        %1390 = vmatprep.subr.bf16.mxu0 0
        %1391 = vmatpush1.bf16.msra.mxu0 %v1354
        %1392 = vmatprep.subr.bf16.mxu0 0
        %1393 = vmatpush1.bf16.msra.mxu0 %v1355
        %1394 = vmatprep.subr.bf16.mxu0 0
        %1395 = vmatpush1.bf16.msra.mxu0 %v1356
        %1396 = vmatprep.subr.bf16.mxu0 0
        %1397 = vmatpush1.bf16.msra.mxu0 %v1357
        %1398 = vmatprep.subr.bf16.mxu0 0
        %1399 = vmatpush1.bf16.msra.mxu0 %v1358
        %1400 = vmatprep.subr.bf16.mxu0 0
        %1401 = vmatpush1.bf16.msra.mxu0 %v1359
        %1402 = vmatprep.subr.bf16.mxu0 0
        %1403 = vmatpush1.bf16.msra.mxu0 %v1360
        %1404 = vmatprep.subr.bf16.mxu0 0
        %1405 = vmatpush1.bf16.msra.mxu0 %v1361
        %1406 = vmatprep.subr.bf16.mxu0 0
        %1407 = vmatpush1.bf16.msra.mxu0 %v1362
        %1408 = vmatprep.subr.bf16.mxu0 0
        %1409 = vmatpush1.bf16.msra.mxu0 %v1363
        %1410 = vmatprep.subr.bf16.mxu0 0
        %1411 = vmatpush1.bf16.msra.mxu0 %v1364
        %1412 = vmatprep.subr.bf16.mxu0 0
        %1413 = vmatpush1.bf16.msra.mxu0 %v1365
        %1414 = vmatprep.mubr.bf16.mxu0 %v1279
        %1415 = vmatmul.mubr.bf16.gmra.mrb[0].mxu0 %v1278
        %v1416 = vpop.f32.mrb[0].mxu0
        %v1417 = vadd.f32 0.0, %v1416
        %v1418 = vpop.f32.mrb[0].mxu0
        %v1419 = vpop.f32.mrb[0].mxu0
        %v1420 = vadd.f32 0.0, %v1419
        %v1421 = vpop.f32.mrb[0].mxu0
        %1422 = vmatprep.mubr.bf16.mxu0 %v1281
        %1423 = vmatmul.mubr.bf16.gmra.mrb[0].mxu0 %v1280
        %v1424 = vpop.f32.mrb[0].mxu0
        %v1425 = vadd.f32 0.0, %v1424
        %v1426 = vpop.f32.mrb[0].mxu0
        %v1427 = vpop.f32.mrb[0].mxu0
        %v1428 = vadd.f32 0.0, %v1427
        %v1429 = vpop.f32.mrb[0].mxu0
        %1430 = vmatprep.mubr.bf16.mxu0 %v1283
        %1431 = vmatmul.mubr.bf16.gmra.mrb[0].mxu0 %v1282
        %v1432 = vpop.f32.mrb[0].mxu0
        %v1433 = vadd.f32 0.0, %v1432
        %v1434 = vpop.f32.mrb[0].mxu0
        %v1435 = vpop.f32.mrb[0].mxu0
        %v1436 = vadd.f32 0.0, %v1435
        %v1437 = vpop.f32.mrb[0].mxu0
        %1438 = vmatprep.mubr.bf16.mxu0 %v1285
        %1439 = vmatmul.mubr.bf16.gmra.mrb[0].mxu0 %v1284
        %v1440 = vpop.f32.mrb[0].mxu0
        %v1441 = vadd.f32 0.0, %v1440
        %v1442 = vpop.f32.mrb[0].mxu0
        %v1443 = vpop.f32.mrb[0].mxu0
        %v1444 = vadd.f32 0.0, %v1443
        %v1445 = vpop.f32.mrb[0].mxu0
        %1446 = vdwg.mxu0
        %v1479 = vunpack.c.l.b16 %v772
        %v1480 = vunpack.c.l.b16 %v773
        %v1481 = vunpack.c.l.b16 %v774
        %v1482 = vunpack.c.l.b16 %v775
        %v1483 = vunpack.c.l.b16 %v776
        %v1484 = vunpack.c.l.b16 %v777
        %v1485 = vunpack.c.l.b16 %v778
        %v1486 = vunpack.c.l.b16 %v779
        %v1487 = vunpack.c.l.b16 %v780
        %v1488 = vunpack.c.l.b16 %v781
        %v1489 = vunpack.c.l.b16 %v782
        %v1490 = vunpack.c.l.b16 %v783
        %v1491 = vunpack.c.l.b16 %v784
        %v1492 = vunpack.c.l.b16 %v785
        %v1493 = vunpack.c.l.b16 %v786
        %v1494 = vunpack.c.l.b16 %v787
        %v1495 = vunpack.c.l.b16 %v788
        %v1496 = vunpack.c.l.b16 %v789
        %v1497 = vunpack.c.l.b16 %v790
        %v1498 = vunpack.c.l.b16 %v791
        %v1499 = vunpack.c.l.b16 %v792
        %v1500 = vunpack.c.l.b16 %v793
        %v1501 = vunpack.c.l.b16 %v794
        %v1502 = vunpack.c.l.b16 %v795
        %v1503 = vunpack.c.l.b16 %v796
        %v1504 = vunpack.c.l.b16 %v797
        %v1505 = vunpack.c.l.b16 %v798
        %v1506 = vunpack.c.l.b16 %v799
        %v1507 = vunpack.c.l.b16 %v800
        %v1508 = vunpack.c.l.b16 %v801
        %v1509 = vunpack.c.l.b16 %v802
        %v1510 = vunpack.c.l.b16 %v803
        %v1511 = vpack.c.b16 %v1480, %v1479
        %v1512 = vpack.c.b16 %v1482, %v1481
        %v1513 = vpack.c.b16 %v1484, %v1483
        %v1514 = vpack.c.b16 %v1486, %v1485
        %v1515 = vpack.c.b16 %v1488, %v1487
        %v1516 = vpack.c.b16 %v1490, %v1489
        %v1517 = vpack.c.b16 %v1492, %v1491
        %v1518 = vpack.c.b16 %v1494, %v1493
        %v1519 = vpack.c.b16 %v1496, %v1495
        %v1520 = vpack.c.b16 %v1498, %v1497
        %v1521 = vpack.c.b16 %v1500, %v1499
        %v1522 = vpack.c.b16 %v1502, %v1501
        %v1523 = vpack.c.b16 %v1504, %v1503
        %v1524 = vpack.c.b16 %v1506, %v1505
        %v1525 = vpack.c.b16 %v1508, %v1507
        %v1526 = vpack.c.b16 %v1510, %v1509
        %v1528 = vsel %vm976, %v1511, 0
        %v1531 = vsel %vm976, %v1512, 0
        %v1534 = vsel %vm976, %v1513, 0
        %v1537 = vsel %vm976, %v1514, 0
        %v1540 = vsel %vm976, %v1515, 0
        %v1543 = vsel %vm976, %v1516, 0
        %v1546 = vsel %vm976, %v1517, 0
        %v1549 = vsel %vm976, %v1518, 0
        %v1552 = vsel %vm976, %v1519, 0
        %v1555 = vsel %vm976, %v1520, 0
        %v1558 = vsel %vm976, %v1521, 0
        %v1561 = vsel %vm976, %v1522, 0
        %v1564 = vsel %vm976, %v1523, 0
        %v1567 = vsel %vm976, %v1524, 0
        %v1570 = vsel %vm976, %v1525, 0
        %v1573 = vsel %vm976, %v1526, 0
        %1575 = vmatprep.subr.bf16.mxu0 0
        %1576 = vmatpush1.bf16.xpose.msra.mxu0 %v978
        %1577 = vmatprep.subr.bf16.mxu0 0
        %1578 = vmatpush1.bf16.xpose.msra.mxu0 %v981
        %1579 = vmatprep.subr.bf16.mxu0 0
        %1580 = vmatpush1.bf16.xpose.msra.mxu0 %v984
        %1581 = vmatprep.subr.bf16.mxu0 0
        %1582 = vmatpush1.bf16.xpose.msra.mxu0 %v987
        %1583 = vmatprep.subr.bf16.mxu0 0
        %1584 = vmatpush1.bf16.xpose.msra.mxu0 0
        %1585 = vmatprep.subr.bf16.mxu0 0
        %1586 = vmatpush1.bf16.xpose.msra.mxu0 0
        %1587 = vmatprep.subr.bf16.mxu0 0
        %1588 = vmatpush1.bf16.xpose.msra.mxu0 0
        %1589 = vmatprep.subr.bf16.mxu0 0
        %1590 = vmatpush1.bf16.xpose.msra.mxu0 0
        %1591 = vmatprep.subr.bf16.mxu0 0
        %1592 = vmatpush1.bf16.xpose.msra.mxu0 0
        %1593 = vmatprep.subr.bf16.mxu0 0
        %1594 = vmatpush1.bf16.xpose.msra.mxu0 0
        %1595 = vmatprep.subr.bf16.mxu0 0
        %1596 = vmatpush1.bf16.xpose.msra.mxu0 0
        %1597 = vmatprep.subr.bf16.mxu0 0
        %1598 = vmatpush1.bf16.xpose.msra.mxu0 0
        %1599 = vmatprep.subr.bf16.mxu0 0
        %1600 = vmatpush1.bf16.xpose.msra.mxu0 0
        %1601 = vmatprep.subr.bf16.mxu0 0
        %1602 = vmatpush1.bf16.xpose.msra.mxu0 0
        %1603 = vmatprep.subr.bf16.mxu0 0
        %1604 = vmatpush1.bf16.xpose.msra.mxu0 0
        %1605 = vmatprep.subr.bf16.mxu0 0
        %1606 = vmatpush1.bf16.xpose.msra.mxu0 0
        %1607 = vmatprep.mubr.bf16.mxu0 0
        %1608 = vmatmul.mubr.bf16.gmra.mrb[0].mxu0 %v1528
        %v1609 = vpop.f32.mrb[0].mxu0
        %v1610 = vadd.f32 0.0, %v1609
        %v1611 = vpop.f32.mrb[0].mxu0
        %v1612 = vpop.f32.mrb[0].mxu0
        %v1613 = vadd.f32 0.0, %v1612
        %v1614 = vpop.f32.mrb[0].mxu0
        %1615 = vmatprep.mubr.bf16.mxu0 0
        %1616 = vmatmul.mubr.bf16.gmra.mrb[0].mxu0 %v1531
        %v1617 = vpop.f32.mrb[0].mxu0
        %v1618 = vadd.f32 0.0, %v1617
        %v1619 = vpop.f32.mrb[0].mxu0
        %v1620 = vpop.f32.mrb[0].mxu0
        %v1621 = vadd.f32 0.0, %v1620
        %v1622 = vpop.f32.mrb[0].mxu0
        %1623 = vmatprep.mubr.bf16.mxu0 0
        %1624 = vmatmul.mubr.bf16.gmra.mrb[0].mxu0 %v1534
        %v1625 = vpop.f32.mrb[0].mxu0
        %v1626 = vadd.f32 0.0, %v1625
        %v1627 = vpop.f32.mrb[0].mxu0
        %v1628 = vpop.f32.mrb[0].mxu0
        %v1629 = vadd.f32 0.0, %v1628
        %v1630 = vpop.f32.mrb[0].mxu0
        %1631 = vmatprep.mubr.bf16.mxu0 0
        %1632 = vmatmul.mubr.bf16.gmra.mrb[0].mxu0 %v1537
        %v1633 = vpop.f32.mrb[0].mxu0
        %v1634 = vadd.f32 0.0, %v1633
        %v1635 = vpop.f32.mrb[0].mxu0
        %v1636 = vpop.f32.mrb[0].mxu0
        %v1637 = vadd.f32 0.0, %v1636
        %v1638 = vpop.f32.mrb[0].mxu0
        %1639 = vmatprep.mubr.bf16.mxu0 0
        %1640 = vmatmul.mubr.bf16.gmra.mrb[0].mxu0 %v1540
        %v1641 = vpop.f32.mrb[0].mxu0
        %v1642 = vadd.f32 0.0, %v1641
        %v1643 = vpop.f32.mrb[0].mxu0
        %v1644 = vpop.f32.mrb[0].mxu0
        %v1645 = vadd.f32 0.0, %v1644
        %v1646 = vpop.f32.mrb[0].mxu0
        %1647 = vmatprep.mubr.bf16.mxu0 0
        %1648 = vmatmul.mubr.bf16.gmra.mrb[0].mxu0 %v1543
        %v1649 = vpop.f32.mrb[0].mxu0
        %v1650 = vadd.f32 0.0, %v1649
        %v1651 = vpop.f32.mrb[0].mxu0
        %v1652 = vpop.f32.mrb[0].mxu0
        %v1653 = vadd.f32 0.0, %v1652
        %v1654 = vpop.f32.mrb[0].mxu0
        %1655 = vmatprep.mubr.bf16.mxu0 0
        %1656 = vmatmul.mubr.bf16.gmra.mrb[0].mxu0 %v1546
        %v1657 = vpop.f32.mrb[0].mxu0
        %v1658 = vadd.f32 0.0, %v1657
        %v1659 = vpop.f32.mrb[0].mxu0
        %v1660 = vpop.f32.mrb[0].mxu0
        %v1661 = vadd.f32 0.0, %v1660
        %v1662 = vpop.f32.mrb[0].mxu0
        %1663 = vmatprep.mubr.bf16.mxu0 0
        %1664 = vmatmul.mubr.bf16.gmra.mrb[0].mxu0 %v1549
        %v1665 = vpop.f32.mrb[0].mxu0
        %v1666 = vadd.f32 0.0, %v1665
        %v1667 = vpop.f32.mrb[0].mxu0
        %v1668 = vpop.f32.mrb[0].mxu0
        %v1669 = vadd.f32 0.0, %v1668
        %v1670 = vpop.f32.mrb[0].mxu0
        %1671 = vmatprep.mubr.bf16.mxu0 0
        %1672 = vmatmul.mubr.bf16.gmra.mrb[0].mxu0 %v1552
        %v1673 = vpop.f32.mrb[0].mxu0
        %v1674 = vadd.f32 0.0, %v1673
        %v1675 = vpop.f32.mrb[0].mxu0
        %v1676 = vpop.f32.mrb[0].mxu0
        %v1677 = vadd.f32 0.0, %v1676
        %v1678 = vpop.f32.mrb[0].mxu0
        %1679 = vmatprep.mubr.bf16.mxu0 0
        %1680 = vmatmul.mubr.bf16.gmra.mrb[0].mxu0 %v1555
        %v1681 = vpop.f32.mrb[0].mxu0
        %v1682 = vadd.f32 0.0, %v1681
        %v1683 = vpop.f32.mrb[0].mxu0
        %v1684 = vpop.f32.mrb[0].mxu0
        %v1685 = vadd.f32 0.0, %v1684
        %v1686 = vpop.f32.mrb[0].mxu0
        %1687 = vmatprep.mubr.bf16.mxu0 0
        %1688 = vmatmul.mubr.bf16.gmra.mrb[0].mxu0 %v1558
        %v1689 = vpop.f32.mrb[0].mxu0
        %v1690 = vadd.f32 0.0, %v1689
        %v1691 = vpop.f32.mrb[0].mxu0
        %v1692 = vpop.f32.mrb[0].mxu0
        %v1693 = vadd.f32 0.0, %v1692
        %v1694 = vpop.f32.mrb[0].mxu0
        %1695 = vmatprep.mubr.bf16.mxu0 0
        %1696 = vmatmul.mubr.bf16.gmra.mrb[0].mxu0 %v1561
        %v1697 = vpop.f32.mrb[0].mxu0
        %v1698 = vadd.f32 0.0, %v1697
        %v1699 = vpop.f32.mrb[0].mxu0
        %v1700 = vpop.f32.mrb[0].mxu0
        %v1701 = vadd.f32 0.0, %v1700
        %v1702 = vpop.f32.mrb[0].mxu0
        %1703 = vmatprep.mubr.bf16.mxu0 0
        %1704 = vmatmul.mubr.bf16.gmra.mrb[0].mxu0 %v1564
        %v1705 = vpop.f32.mrb[0].mxu0
        %v1706 = vadd.f32 0.0, %v1705
        %v1707 = vpop.f32.mrb[0].mxu0
        %v1708 = vpop.f32.mrb[0].mxu0
        %v1709 = vadd.f32 0.0, %v1708
        %v1710 = vpop.f32.mrb[0].mxu0
        %1711 = vmatprep.mubr.bf16.mxu0 0
        %1712 = vmatmul.mubr.bf16.gmra.mrb[0].mxu0 %v1567
        %v1713 = vpop.f32.mrb[0].mxu0
        %v1714 = vadd.f32 0.0, %v1713
        %v1715 = vpop.f32.mrb[0].mxu0
        %v1716 = vpop.f32.mrb[0].mxu0
        %v1717 = vadd.f32 0.0, %v1716
        %v1718 = vpop.f32.mrb[0].mxu0
        %1719 = vmatprep.mubr.bf16.mxu0 0
        %1720 = vmatmul.mubr.bf16.gmra.mrb[0].mxu0 %v1570
        %v1721 = vpop.f32.mrb[0].mxu0
        %v1722 = vadd.f32 0.0, %v1721
        %v1723 = vpop.f32.mrb[0].mxu0
        %v1724 = vpop.f32.mrb[0].mxu0
        %v1725 = vadd.f32 0.0, %v1724
        %v1726 = vpop.f32.mrb[0].mxu0
        %1727 = vmatprep.mubr.bf16.mxu0 0
        %1728 = vmatmul.mubr.bf16.gmra.mrb[0].mxu0 %v1573
        %v1729 = vpop.f32.mrb[0].mxu0
        %v1730 = vadd.f32 0.0, %v1729
        %v1731 = vpop.f32.mrb[0].mxu0
        %v1732 = vpop.f32.mrb[0].mxu0
        %v1733 = vadd.f32 0.0, %v1732
        %v1734 = vpop.f32.mrb[0].mxu0
        %1735 = vdwg.mxu0
        %v1736 = vmul.f32 %v1610, 0.17677669
        %v1737 = vmul.f32 %v1613, 0.17677669
        %v1738 = vmul.f32 %v1618, 0.17677669
        %v1739 = vmul.f32 %v1621, 0.17677669
        %v1740 = vmul.f32 %v1626, 0.17677669
        %v1741 = vmul.f32 %v1629, 0.17677669
        %v1742 = vmul.f32 %v1634, 0.17677669
        %v1743 = vmul.f32 %v1637, 0.17677669
        %v1744 = vmul.f32 %v1642, 0.17677669
        %v1745 = vmul.f32 %v1645, 0.17677669
        %v1746 = vmul.f32 %v1650, 0.17677669
        %v1747 = vmul.f32 %v1653, 0.17677669
        %v1748 = vmul.f32 %v1658, 0.17677669
        %v1749 = vmul.f32 %v1661, 0.17677669
        %v1750 = vmul.f32 %v1666, 0.17677669
        %v1751 = vmul.f32 %v1669, 0.17677669
        %v1752 = vmul.f32 %v1674, 0.17677669
        %v1753 = vmul.f32 %v1677, 0.17677669
        %v1754 = vmul.f32 %v1682, 0.17677669
        %v1755 = vmul.f32 %v1685, 0.17677669
        %v1756 = vmul.f32 %v1690, 0.17677669
        %v1757 = vmul.f32 %v1693, 0.17677669
        %v1758 = vmul.f32 %v1698, 0.17677669
        %v1759 = vmul.f32 %v1701, 0.17677669
        %v1760 = vmul.f32 %v1706, 0.17677669
        %v1761 = vmul.f32 %v1709, 0.17677669
        %v1762 = vmul.f32 %v1714, 0.17677669
        %v1763 = vmul.f32 %v1717, 0.17677669
        %v1764 = vmul.f32 %v1722, 0.17677669
        %v1765 = vmul.f32 %v1725, 0.17677669
        %v1766 = vmul.f32 %v1730, 0.17677669
        %v1767 = vmul.f32 %v1733, 0.17677669
        %v1768 = vld [vmem:[%s5] sm:$0xff]
        %v1769 = vld [vmem:[%s5 + $0x8] sm:$0xff]
        %v1770 = vld [vmem:[%s5 + $0x10] sm:$0xff]
        %v1771 = vld [vmem:[%s5 + $0x18] sm:$0xff]
        %v1772 = vld [vmem:[%s5 + $0x20] sm:$0xff]
        %v1773 = vld [vmem:[%s5 + $0x28] sm:$0xff]
        %v1774 = vld [vmem:[%s5 + $0x30] sm:$0xff]
        %v1775 = vld [vmem:[%s5 + $0x38] sm:$0xff]
        %v1776 = vld [vmem:[%s5 + $0x40] sm:$0xff]
        %v1777 = vld [vmem:[%s5 + $0x48] sm:$0xff]
        %v1778 = vld [vmem:[%s5 + $0x50] sm:$0xff]
        %v1779 = vld [vmem:[%s5 + $0x58] sm:$0xff]
        %v1780 = vld [vmem:[%s5 + $0x60] sm:$0xff]
        %v1781 = vld [vmem:[%s5 + $0x68] sm:$0xff]
        %v1782 = vld [vmem:[%s5 + $0x70] sm:$0xff]
        %v1783 = vld [vmem:[%s5 + $0x78] sm:$0xff]
        %v1784 = vld [vmem:[%s5 + $0x80] sm:$0xff]
        %v1785 = vld [vmem:[%s5 + $0x88] sm:$0xff]
        %v1786 = vld [vmem:[%s5 + $0x90] sm:$0xff]
        %v1787 = vld [vmem:[%s5 + $0x98] sm:$0xff]
        %v1788 = vld [vmem:[%s5 + $0xa0] sm:$0xff]
        %v1789 = vld [vmem:[%s5 + $0xa8] sm:$0xff]
        %v1790 = vld [vmem:[%s5 + $0xb0] sm:$0xff]
        %v1791 = vld [vmem:[%s5 + $0xb8] sm:$0xff]
        %v1792 = vld [vmem:[%s5 + $0xc0] sm:$0xff]
        %v1793 = vld [vmem:[%s5 + $0xc8] sm:$0xff]
        %v1794 = vld [vmem:[%s5 + $0xd0] sm:$0xff]
        %v1795 = vld [vmem:[%s5 + $0xd8] sm:$0xff]
        %v1796 = vld [vmem:[%s5 + $0xe0] sm:$0xff]
        %v1797 = vld [vmem:[%s5 + $0xe8] sm:$0xff]
        %v1798 = vld [vmem:[%s5 + $0xf0] sm:$0xff]
        %v1799 = vld [vmem:[%s5 + $0xf8] sm:$0xff]
        %v1800 = vadd.f32 %v1736, %v1768
        %v1801 = vadd.f32 %v1737, %v1769
        %v1802 = vadd.f32 %v1738, %v1770
        %v1803 = vadd.f32 %v1739, %v1771
        %v1804 = vadd.f32 %v1740, %v1772
        %v1805 = vadd.f32 %v1741, %v1773
        %v1806 = vadd.f32 %v1742, %v1774
        %v1807 = vadd.f32 %v1743, %v1775
        %v1808 = vadd.f32 %v1744, %v1776
        %v1809 = vadd.f32 %v1745, %v1777
        %v1810 = vadd.f32 %v1746, %v1778
        %v1811 = vadd.f32 %v1747, %v1779
        %v1812 = vadd.f32 %v1748, %v1780
        %v1813 = vadd.f32 %v1749, %v1781
        %v1814 = vadd.f32 %v1750, %v1782
        %v1815 = vadd.f32 %v1751, %v1783
        %v1816 = vadd.f32 %v1752, %v1784
        %v1817 = vadd.f32 %v1753, %v1785
        %v1818 = vadd.f32 %v1754, %v1786
        %v1819 = vadd.f32 %v1755, %v1787
        %v1820 = vadd.f32 %v1756, %v1788
        %v1821 = vadd.f32 %v1757, %v1789
        %v1822 = vadd.f32 %v1758, %v1790
        %v1823 = vadd.f32 %v1759, %v1791
        %v1824 = vadd.f32 %v1760, %v1792
        %v1825 = vadd.f32 %v1761, %v1793
        %v1826 = vadd.f32 %v1762, %v1794
        %v1827 = vadd.f32 %v1763, %v1795
        %v1828 = vadd.f32 %v1764, %v1796
        %v1829 = vadd.f32 %v1765, %v1797
        %v1830 = vadd.f32 %v1766, %v1798
        %v1831 = vadd.f32 %v1767, %v1799
        %vm1832 = vcmask 523264
        %v1833 = vsel %vm1832, %v1800, -inf
        %1834 = vmax.xlane.f32.xlu0 %v1833
        %v1835 = vpop.xlane.xlu0 %1834
        %v1836 = vsel %vm1832, %v1801, -inf
        %1837 = vmax.xlane.f32.xlu0 %v1836
        %v1838 = vpop.xlane.xlu0 %1837
        %v1839 = vsel %vm1832, %v1802, -inf
        %1840 = vmax.xlane.f32.xlu0 %v1839
        %v1841 = vpop.xlane.xlu0 %1840
        %v1842 = vsel %vm1832, %v1803, -inf
        %1843 = vmax.xlane.f32.xlu0 %v1842
        %v1844 = vpop.xlane.xlu0 %1843
        %v1845 = vsel %vm1832, %v1804, -inf
        %1846 = vmax.xlane.f32.xlu0 %v1845
        %v1847 = vpop.xlane.xlu0 %1846
        %v1848 = vsel %vm1832, %v1805, -inf
        %1849 = vmax.xlane.f32.xlu0 %v1848
        %v1850 = vpop.xlane.xlu0 %1849
        %v1851 = vsel %vm1832, %v1806, -inf
        %1852 = vmax.xlane.f32.xlu0 %v1851
        %v1853 = vpop.xlane.xlu0 %1852
        %v1854 = vsel %vm1832, %v1807, -inf
        %1855 = vmax.xlane.f32.xlu0 %v1854
        %v1856 = vpop.xlane.xlu0 %1855
        %v1857 = vsel %vm1832, %v1808, -inf
        %1858 = vmax.xlane.f32.xlu0 %v1857
        %v1859 = vpop.xlane.xlu0 %1858
        %v1860 = vsel %vm1832, %v1809, -inf
        %1861 = vmax.xlane.f32.xlu0 %v1860
        %v1862 = vpop.xlane.xlu0 %1861
        %v1863 = vsel %vm1832, %v1810, -inf
        %1864 = vmax.xlane.f32.xlu0 %v1863
        %v1865 = vpop.xlane.xlu0 %1864
        %v1866 = vsel %vm1832, %v1811, -inf
        %1867 = vmax.xlane.f32.xlu0 %v1866
        %v1868 = vpop.xlane.xlu0 %1867
        %v1869 = vsel %vm1832, %v1812, -inf
        %1870 = vmax.xlane.f32.xlu0 %v1869
        %v1871 = vpop.xlane.xlu0 %1870
        %v1872 = vsel %vm1832, %v1813, -inf
        %1873 = vmax.xlane.f32.xlu0 %v1872
        %v1874 = vpop.xlane.xlu0 %1873
        %v1875 = vsel %vm1832, %v1814, -inf
        %1876 = vmax.xlane.f32.xlu0 %v1875
        %v1877 = vpop.xlane.xlu0 %1876
        %v1878 = vsel %vm1832, %v1815, -inf
        %1879 = vmax.xlane.f32.xlu0 %v1878
        %v1880 = vpop.xlane.xlu0 %1879
        %v1881 = vsel %vm1832, %v1816, -inf
        %1882 = vmax.xlane.f32.xlu0 %v1881
        %v1883 = vpop.xlane.xlu0 %1882
        %v1884 = vsel %vm1832, %v1817, -inf
        %1885 = vmax.xlane.f32.xlu0 %v1884
        %v1886 = vpop.xlane.xlu0 %1885
        %v1887 = vsel %vm1832, %v1818, -inf
        %1888 = vmax.xlane.f32.xlu0 %v1887
        %v1889 = vpop.xlane.xlu0 %1888
        %v1890 = vsel %vm1832, %v1819, -inf
        %1891 = vmax.xlane.f32.xlu0 %v1890
        %v1892 = vpop.xlane.xlu0 %1891
        %v1893 = vsel %vm1832, %v1820, -inf
        %1894 = vmax.xlane.f32.xlu0 %v1893
        %v1895 = vpop.xlane.xlu0 %1894
        %v1896 = vsel %vm1832, %v1821, -inf
        %1897 = vmax.xlane.f32.xlu0 %v1896
        %v1898 = vpop.xlane.xlu0 %1897
        %v1899 = vsel %vm1832, %v1822, -inf
        %1900 = vmax.xlane.f32.xlu0 %v1899
        %v1901 = vpop.xlane.xlu0 %1900
        %v1902 = vsel %vm1832, %v1823, -inf
        %1903 = vmax.xlane.f32.xlu0 %v1902
        %v1904 = vpop.xlane.xlu0 %1903
        %v1905 = vsel %vm1832, %v1824, -inf
        %1906 = vmax.xlane.f32.xlu0 %v1905
        %v1907 = vpop.xlane.xlu0 %1906
        %v1908 = vsel %vm1832, %v1825, -inf
        %1909 = vmax.xlane.f32.xlu0 %v1908
        %v1910 = vpop.xlane.xlu0 %1909
        %v1911 = vsel %vm1832, %v1826, -inf
        %1912 = vmax.xlane.f32.xlu0 %v1911
        %v1913 = vpop.xlane.xlu0 %1912
        %v1914 = vsel %vm1832, %v1827, -inf
        %1915 = vmax.xlane.f32.xlu0 %v1914
        %v1916 = vpop.xlane.xlu0 %1915
        %v1917 = vsel %vm1832, %v1828, -inf
        %1918 = vmax.xlane.f32.xlu0 %v1917
        %v1919 = vpop.xlane.xlu0 %1918
        %v1920 = vsel %vm1832, %v1829, -inf
        %1921 = vmax.xlane.f32.xlu0 %v1920
        %v1922 = vpop.xlane.xlu0 %1921
        %v1923 = vsel %vm1832, %v1830, -inf
        %1924 = vmax.xlane.f32.xlu0 %v1923
        %v1925 = vpop.xlane.xlu0 %1924
        %v1926 = vsel %vm1832, %v1831, -inf
        %1927 = vmax.xlane.f32.xlu0 %v1926
        %v1928 = vpop.xlane.xlu0 %1927
        %v1929 = vsub.f32 %v1800, %v1835
        %v1930 = vsub.f32 %v1801, %v1838
        %v1931 = vsub.f32 %v1802, %v1841
        %v1932 = vsub.f32 %v1803, %v1844
        %v1933 = vsub.f32 %v1804, %v1847
        %v1934 = vsub.f32 %v1805, %v1850
        %v1935 = vsub.f32 %v1806, %v1853
        %v1936 = vsub.f32 %v1807, %v1856
        %v1937 = vsub.f32 %v1808, %v1859
        %v1938 = vsub.f32 %v1809, %v1862
        %v1939 = vsub.f32 %v1810, %v1865
        %v1940 = vsub.f32 %v1811, %v1868
        %v1941 = vsub.f32 %v1812, %v1871
        %v1942 = vsub.f32 %v1813, %v1874
        %v1943 = vsub.f32 %v1814, %v1877
        %v1944 = vsub.f32 %v1815, %v1880
        %v1945 = vsub.f32 %v1816, %v1883
        %v1946 = vsub.f32 %v1817, %v1886
        %v1947 = vsub.f32 %v1818, %v1889
        %v1948 = vsub.f32 %v1819, %v1892
        %v1949 = vsub.f32 %v1820, %v1895
        %v1950 = vsub.f32 %v1821, %v1898
        %v1951 = vsub.f32 %v1822, %v1901
        %v1952 = vsub.f32 %v1823, %v1904
        %v1953 = vsub.f32 %v1824, %v1907
        %v1954 = vsub.f32 %v1825, %v1910
        %v1955 = vsub.f32 %v1826, %v1913
        %v1956 = vsub.f32 %v1827, %v1916
        %v1957 = vsub.f32 %v1828, %v1919
        %v1958 = vsub.f32 %v1829, %v1922
        %v1959 = vsub.f32 %v1830, %v1925
        %v1960 = vsub.f32 %v1831, %v1928
        %v1961 = vmul.f32 %v1929, 1.442695
        %v1962 = vpow.pop %v1961
        %v1963 = vmul.f32 %v1930, 1.442695
        %v1964 = vpow.pop %v1963
        %v1965 = vmul.f32 %v1931, 1.442695
        %v1966 = vpow.pop %v1965
        %v1967 = vmul.f32 %v1932, 1.442695
        %v1968 = vpow.pop %v1967
        %v1969 = vmul.f32 %v1933, 1.442695
        %v1970 = vpow.pop %v1969
        %v1971 = vmul.f32 %v1934, 1.442695
        %v1972 = vpow.pop %v1971
        %v1973 = vmul.f32 %v1935, 1.442695
        %v1974 = vpow.pop %v1973
        %v1975 = vmul.f32 %v1936, 1.442695
        %v1976 = vpow.pop %v1975
        %v1977 = vmul.f32 %v1937, 1.442695
        %v1978 = vpow.pop %v1977
        %v1979 = vmul.f32 %v1938, 1.442695
        %v1980 = vpow.pop %v1979
        %v1981 = vmul.f32 %v1939, 1.442695
        %v1982 = vpow.pop %v1981
        %v1983 = vmul.f32 %v1940, 1.442695
        %v1984 = vpow.pop %v1983
        %v1985 = vmul.f32 %v1941, 1.442695
        %v1986 = vpow.pop %v1985
        %v1987 = vmul.f32 %v1942, 1.442695
        %v1988 = vpow.pop %v1987
        %v1989 = vmul.f32 %v1943, 1.442695
        %v1990 = vpow.pop %v1989
        %v1991 = vmul.f32 %v1944, 1.442695
        %v1992 = vpow.pop %v1991
        %v1993 = vmul.f32 %v1945, 1.442695
        %v1994 = vpow.pop %v1993
        %v1995 = vmul.f32 %v1946, 1.442695
        %v1996 = vpow.pop %v1995
        %v1997 = vmul.f32 %v1947, 1.442695
        %v1998 = vpow.pop %v1997
        %v1999 = vmul.f32 %v1948, 1.442695
        %v2000 = vpow.pop %v1999
        %v2001 = vmul.f32 %v1949, 1.442695
        %v2002 = vpow.pop %v2001
        %v2003 = vmul.f32 %v1950, 1.442695
        %v2004 = vpow.pop %v2003
        %v2005 = vmul.f32 %v1951, 1.442695
        %v2006 = vpow.pop %v2005
        %v2007 = vmul.f32 %v1952, 1.442695
        %v2008 = vpow.pop %v2007
        %v2009 = vmul.f32 %v1953, 1.442695
        %v2010 = vpow.pop %v2009
        %v2011 = vmul.f32 %v1954, 1.442695
        %v2012 = vpow.pop %v2011
        %v2013 = vmul.f32 %v1955, 1.442695
        %v2014 = vpow.pop %v2013
        %v2015 = vmul.f32 %v1956, 1.442695
        %v2016 = vpow.pop %v2015
        %v2017 = vmul.f32 %v1957, 1.442695
        %v2018 = vpow.pop %v2017
        %v2019 = vmul.f32 %v1958, 1.442695
        %v2020 = vpow.pop %v2019
        %v2021 = vmul.f32 %v1959, 1.442695
        %v2022 = vpow.pop %v2021
        %v2023 = vmul.f32 %v1960, 1.442695
        %v2024 = vpow.pop %v2023
        %v2025 = vsel %vm1832, %v1962, 0.0
        %2026 = vadd.xlane.f32.xlu0 %v2025
        %v2027 = vpop.xlane.xlu0 %2026
        %v2028 = vsel %vm1832, %v1964, 0.0
        %2029 = vadd.xlane.f32.xlu0 %v2028
        %v2030 = vpop.xlane.xlu0 %2029
        %v2031 = vsel %vm1832, %v1966, 0.0
        %2032 = vadd.xlane.f32.xlu0 %v2031
        %v2033 = vpop.xlane.xlu0 %2032
        %v2034 = vsel %vm1832, %v1968, 0.0
        %2035 = vadd.xlane.f32.xlu0 %v2034
        %v2036 = vpop.xlane.xlu0 %2035
        %v2037 = vsel %vm1832, %v1970, 0.0
        %2038 = vadd.xlane.f32.xlu0 %v2037
        %v2039 = vpop.xlane.xlu0 %2038
        %v2040 = vsel %vm1832, %v1972, 0.0
        %2041 = vadd.xlane.f32.xlu0 %v2040
        %v2042 = vpop.xlane.xlu0 %2041
        %v2043 = vsel %vm1832, %v1974, 0.0
        %2044 = vadd.xlane.f32.xlu0 %v2043
        %v2045 = vpop.xlane.xlu0 %2044
        %v2046 = vsel %vm1832, %v1976, 0.0
        %2047 = vadd.xlane.f32.xlu0 %v2046
        %v2048 = vpop.xlane.xlu0 %2047
        %v2049 = vsel %vm1832, %v1978, 0.0
        %2050 = vadd.xlane.f32.xlu0 %v2049
        %v2051 = vpop.xlane.xlu0 %2050
        %v2052 = vsel %vm1832, %v1980, 0.0
        %2053 = vadd.xlane.f32.xlu0 %v2052
        %v2054 = vpop.xlane.xlu0 %2053
        %v2055 = vsel %vm1832, %v1982, 0.0
        %2056 = vadd.xlane.f32.xlu0 %v2055
        %v2057 = vpop.xlane.xlu0 %2056
        %v2058 = vsel %vm1832, %v1984, 0.0
        %2059 = vadd.xlane.f32.xlu0 %v2058
        %v2060 = vpop.xlane.xlu0 %2059
        %v2061 = vsel %vm1832, %v1986, 0.0
        %2062 = vadd.xlane.f32.xlu0 %v2061
        %v2063 = vpop.xlane.xlu0 %2062
        %v2064 = vsel %vm1832, %v1988, 0.0
        %2065 = vadd.xlane.f32.xlu0 %v2064
        %v2066 = vpop.xlane.xlu0 %2065
        %v2067 = vsel %vm1832, %v1990, 0.0
        %2068 = vadd.xlane.f32.xlu0 %v2067
        %v2069 = vpop.xlane.xlu0 %2068
        %v2070 = vsel %vm1832, %v1992, 0.0
        %2071 = vadd.xlane.f32.xlu0 %v2070
        %v2072 = vpop.xlane.xlu0 %2071
        %v2073 = vsel %vm1832, %v1994, 0.0
        %2074 = vadd.xlane.f32.xlu0 %v2073
        %v2075 = vpop.xlane.xlu0 %2074
        %v2076 = vsel %vm1832, %v1996, 0.0
        %2077 = vadd.xlane.f32.xlu0 %v2076
        %v2078 = vpop.xlane.xlu0 %2077
        %v2079 = vsel %vm1832, %v1998, 0.0
        %2080 = vadd.xlane.f32.xlu0 %v2079
        %v2081 = vpop.xlane.xlu0 %2080
        %v2082 = vsel %vm1832, %v2000, 0.0
        %2083 = vadd.xlane.f32.xlu0 %v2082
        %v2084 = vpop.xlane.xlu0 %2083
        %v2085 = vsel %vm1832, %v2002, 0.0
        %2086 = vadd.xlane.f32.xlu0 %v2085
        %v2087 = vpop.xlane.xlu0 %2086
        %v2088 = vsel %vm1832, %v2004, 0.0
        %2089 = vadd.xlane.f32.xlu0 %v2088
        %v2090 = vpop.xlane.xlu0 %2089
        %v2091 = vsel %vm1832, %v2006, 0.0
        %2092 = vadd.xlane.f32.xlu0 %v2091
        %v2093 = vpop.xlane.xlu0 %2092
        %v2094 = vsel %vm1832, %v2008, 0.0
        %2095 = vadd.xlane.f32.xlu0 %v2094
        %v2096 = vpop.xlane.xlu0 %2095
        %v2097 = vsel %vm1832, %v2010, 0.0
        %2098 = vadd.xlane.f32.xlu0 %v2097
        %v2099 = vpop.xlane.xlu0 %2098
        %v2100 = vsel %vm1832, %v2012, 0.0
        %2101 = vadd.xlane.f32.xlu0 %v2100
        %v2102 = vpop.xlane.xlu0 %2101
        %v2103 = vsel %vm1832, %v2014, 0.0
        %2104 = vadd.xlane.f32.xlu0 %v2103
        %v2105 = vpop.xlane.xlu0 %2104
        %v2106 = vsel %vm1832, %v2016, 0.0
        %2107 = vadd.xlane.f32.xlu0 %v2106
        %v2108 = vpop.xlane.xlu0 %2107
        %v2109 = vsel %vm1832, %v2018, 0.0
        %2110 = vadd.xlane.f32.xlu0 %v2109
        %v2111 = vpop.xlane.xlu0 %2110
        %v2112 = vsel %vm1832, %v2020, 0.0
        %2113 = vadd.xlane.f32.xlu0 %v2112
        %v2114 = vpop.xlane.xlu0 %2113
        %v2115 = vsel %vm1832, %v2022, 0.0
        %2116 = vadd.xlane.f32.xlu0 %v2115
        %v2117 = vpop.xlane.xlu0 %2116
        %v2118 = vsel %vm1832, %v2024, 0.0
        %2119 = vadd.xlane.f32.xlu0 %v2118
        %v2120 = vpop.xlane.xlu0 %2119
        %v2121 = vrcp.pop %v2027
        %v2122 = vrcp.pop %v2030
        %v2123 = vrcp.pop %v2033
        %v2124 = vrcp.pop %v2036
        %v2125 = vrcp.pop %v2039
        %v2126 = vrcp.pop %v2042
        %v2127 = vrcp.pop %v2045
        %v2128 = vrcp.pop %v2048
        %v2129 = vrcp.pop %v2051
        %v2130 = vrcp.pop %v2054
        %v2131 = vrcp.pop %v2057
        %v2132 = vrcp.pop %v2060
        %v2133 = vrcp.pop %v2063
        %v2134 = vrcp.pop %v2066
        %v2135 = vrcp.pop %v2069
        %v2136 = vrcp.pop %v2072
        %v2137 = vrcp.pop %v2075
        %v2138 = vrcp.pop %v2078
        %v2139 = vrcp.pop %v2081
        %v2140 = vrcp.pop %v2084
        %v2141 = vrcp.pop %v2087
        %v2142 = vrcp.pop %v2090
        %v2143 = vrcp.pop %v2093
        %v2144 = vrcp.pop %v2096
        %v2145 = vrcp.pop %v2099
        %v2146 = vrcp.pop %v2102
        %v2147 = vrcp.pop %v2105
        %v2148 = vrcp.pop %v2108
        %v2149 = vrcp.pop %v2111
        %v2150 = vrcp.pop %v2114
        %v2151 = vrcp.pop %v2117
        %v2152 = vrcp.pop %v2120
        %v2153 = vmul.f32 %v1962, %v2121
        %v2154 = vmul.f32 %v1964, %v2122
        %v2155 = vmul.f32 %v1966, %v2123
        %v2156 = vmul.f32 %v1968, %v2124
        %v2157 = vmul.f32 %v1970, %v2125
        %v2158 = vmul.f32 %v1972, %v2126
        %v2159 = vmul.f32 %v1974, %v2127
        %v2160 = vmul.f32 %v1976, %v2128
        %v2161 = vmul.f32 %v1978, %v2129
        %v2162 = vmul.f32 %v1980, %v2130
        %v2163 = vmul.f32 %v1982, %v2131
        %v2164 = vmul.f32 %v1984, %v2132
        %v2165 = vmul.f32 %v1986, %v2133
        %v2166 = vmul.f32 %v1988, %v2134
        %v2167 = vmul.f32 %v1990, %v2135
        %v2168 = vmul.f32 %v1992, %v2136
        %v2169 = vmul.f32 %v1994, %v2137
        %v2170 = vmul.f32 %v1996, %v2138
        %v2171 = vmul.f32 %v1998, %v2139
        %v2172 = vmul.f32 %v2000, %v2140
        %v2173 = vmul.f32 %v2002, %v2141
        %v2174 = vmul.f32 %v2004, %v2142
        %v2175 = vmul.f32 %v2006, %v2143
        %v2176 = vmul.f32 %v2008, %v2144
        %v2177 = vmul.f32 %v2010, %v2145
        %v2178 = vmul.f32 %v2012, %v2146
        %v2179 = vmul.f32 %v2014, %v2147
        %v2180 = vmul.f32 %v2016, %v2148
        %v2181 = vmul.f32 %v2018, %v2149
        %v2182 = vmul.f32 %v2020, %v2150
        %v2183 = vmul.f32 %v2022, %v2151
        %v2184 = vmul.f32 %v2024, %v2152
        %v2185 = vpack.c.bf16 %v2154, %v2153
        %v2186 = vpack.c.bf16 %v2156, %v2155
        %v2187 = vpack.c.bf16 %v2158, %v2157
        %v2188 = vpack.c.bf16 %v2160, %v2159
        %v2189 = vpack.c.bf16 %v2162, %v2161
        %v2190 = vpack.c.bf16 %v2164, %v2163
        %v2191 = vpack.c.bf16 %v2166, %v2165
        %v2192 = vpack.c.bf16 %v2168, %v2167
        %v2193 = vpack.c.bf16 %v2170, %v2169
        %v2194 = vpack.c.bf16 %v2172, %v2171
        %v2195 = vpack.c.bf16 %v2174, %v2173
        %v2196 = vpack.c.bf16 %v2176, %v2175
        %v2197 = vpack.c.bf16 %v2178, %v2177
        %v2198 = vpack.c.bf16 %v2180, %v2179
        %v2199 = vpack.c.bf16 %v2182, %v2181
        %v2200 = vpack.c.bf16 %v2184, %v2183
        %v2201 = vpack.c.bf16 %v1420, %v1417
        %v2202 = vpack.c.bf16 %v1428, %v1425
        %v2203 = vpack.c.bf16 %v1436, %v1433
        %v2204 = vpack.c.bf16 %v1444, %v1441
        %v2206 = vsel %vm1832, %v2185, 0
        %v2209 = vsel %vm1832, %v2186, 0
        %v2212 = vsel %vm1832, %v2187, 0
        %v2215 = vsel %vm1832, %v2188, 0
        %v2218 = vsel %vm1832, %v2189, 0
        %v2221 = vsel %vm1832, %v2190, 0
        %v2224 = vsel %vm1832, %v2191, 0
        %v2227 = vsel %vm1832, %v2192, 0
        %v2230 = vsel %vm1832, %v2193, 0
        %v2233 = vsel %vm1832, %v2194, 0
        %v2236 = vsel %vm1832, %v2195, 0
        %v2239 = vsel %vm1832, %v2196, 0
        %v2242 = vsel %vm1832, %v2197, 0
        %v2245 = vsel %vm1832, %v2198, 0
        %v2248 = vsel %vm1832, %v2199, 0
        %v2251 = vsel %vm1832, %v2200, 0
        %2253 = vmatprep.subr.bf16.mxu0 0
        %2254 = vmatpush1.bf16.msra.mxu0 %v2201
        %2255 = vmatprep.subr.bf16.mxu0 0
        %2256 = vmatpush1.bf16.msra.mxu0 %v2202
        %2257 = vmatprep.subr.bf16.mxu0 0
        %2258 = vmatpush1.bf16.msra.mxu0 %v2203
        %2259 = vmatprep.subr.bf16.mxu0 0
        %2260 = vmatpush1.bf16.msra.mxu0 %v2204
        %2261 = vmatprep.subr.bf16.mxu0 0
        %2262 = vmatpush1.bf16.msra.mxu0 0
        %2263 = vmatprep.subr.bf16.mxu0 0
        %2264 = vmatpush1.bf16.msra.mxu0 0
        %2265 = vmatprep.subr.bf16.mxu0 0
        %2266 = vmatpush1.bf16.msra.mxu0 0
        %2267 = vmatprep.subr.bf16.mxu0 0
        %2268 = vmatpush1.bf16.msra.mxu0 0
        %2269 = vmatprep.subr.bf16.mxu0 0
        %2270 = vmatpush1.bf16.msra.mxu0 0
        %2271 = vmatprep.subr.bf16.mxu0 0
        %2272 = vmatpush1.bf16.msra.mxu0 0
        %2273 = vmatprep.subr.bf16.mxu0 0
        %2274 = vmatpush1.bf16.msra.mxu0 0
        %2275 = vmatprep.subr.bf16.mxu0 0
        %2276 = vmatpush1.bf16.msra.mxu0 0
        %2277 = vmatprep.subr.bf16.mxu0 0
        %2278 = vmatpush1.bf16.msra.mxu0 0
        %2279 = vmatprep.subr.bf16.mxu0 0
        %2280 = vmatpush1.bf16.msra.mxu0 0
        %2281 = vmatprep.subr.bf16.mxu0 0
        %2282 = vmatpush1.bf16.msra.mxu0 0
        %2283 = vmatprep.subr.bf16.mxu0 0
        %2284 = vmatpush1.bf16.msra.mxu0 0
        %2285 = vmatprep.mubr.bf16.mxu0 0
        %2286 = vmatmul.mubr.bf16.gmra.mrb[0].mxu0 %v2206
        %v2287 = vpop.f32.mrb[0].mxu0
        %v2288 = vadd.f32 0.0, %v2287
        %v2289 = vpop.f32.mrb[0].mxu0
        %v2290 = vpop.f32.mrb[0].mxu0
        %v2291 = vadd.f32 0.0, %v2290
        %v2292 = vpop.f32.mrb[0].mxu0
        %2293 = vmatprep.mubr.bf16.mxu0 0
        %2294 = vmatmul.mubr.bf16.gmra.mrb[0].mxu0 %v2209
        %v2295 = vpop.f32.mrb[0].mxu0
        %v2296 = vadd.f32 0.0, %v2295
        %v2297 = vpop.f32.mrb[0].mxu0
        %v2298 = vpop.f32.mrb[0].mxu0
        %v2299 = vadd.f32 0.0, %v2298
        %v2300 = vpop.f32.mrb[0].mxu0
        %2301 = vmatprep.mubr.bf16.mxu0 0
        %2302 = vmatmul.mubr.bf16.gmra.mrb[0].mxu0 %v2212
        %v2303 = vpop.f32.mrb[0].mxu0
        %v2304 = vadd.f32 0.0, %v2303
        %v2305 = vpop.f32.mrb[0].mxu0
        %v2306 = vpop.f32.mrb[0].mxu0
        %v2307 = vadd.f32 0.0, %v2306
        %v2308 = vpop.f32.mrb[0].mxu0
        %2309 = vmatprep.mubr.bf16.mxu0 0
        %2310 = vmatmul.mubr.bf16.gmra.mrb[0].mxu0 %v2215
        %v2311 = vpop.f32.mrb[0].mxu0
        %v2312 = vadd.f32 0.0, %v2311
        %v2313 = vpop.f32.mrb[0].mxu0
        %v2314 = vpop.f32.mrb[0].mxu0
        %v2315 = vadd.f32 0.0, %v2314
        %v2316 = vpop.f32.mrb[0].mxu0
        %2317 = vmatprep.mubr.bf16.mxu0 0
        %2318 = vmatmul.mubr.bf16.gmra.mrb[0].mxu0 %v2218
        %v2319 = vpop.f32.mrb[0].mxu0
        %v2320 = vadd.f32 0.0, %v2319
        %v2321 = vpop.f32.mrb[0].mxu0
        %v2322 = vpop.f32.mrb[0].mxu0
        %v2323 = vadd.f32 0.0, %v2322
        %v2324 = vpop.f32.mrb[0].mxu0
        %2325 = vmatprep.mubr.bf16.mxu0 0
        %2326 = vmatmul.mubr.bf16.gmra.mrb[0].mxu0 %v2221
        %v2327 = vpop.f32.mrb[0].mxu0
        %v2328 = vadd.f32 0.0, %v2327
        %v2329 = vpop.f32.mrb[0].mxu0
        %v2330 = vpop.f32.mrb[0].mxu0
        %v2331 = vadd.f32 0.0, %v2330
        %v2332 = vpop.f32.mrb[0].mxu0
        %2333 = vmatprep.mubr.bf16.mxu0 0
        %2334 = vmatmul.mubr.bf16.gmra.mrb[0].mxu0 %v2224
        %v2335 = vpop.f32.mrb[0].mxu0
        %v2336 = vadd.f32 0.0, %v2335
        %v2337 = vpop.f32.mrb[0].mxu0
        %v2338 = vpop.f32.mrb[0].mxu0
        %v2339 = vadd.f32 0.0, %v2338
        %v2340 = vpop.f32.mrb[0].mxu0
        %2341 = vmatprep.mubr.bf16.mxu0 0
        %2342 = vmatmul.mubr.bf16.gmra.mrb[0].mxu0 %v2227
        %v2343 = vpop.f32.mrb[0].mxu0
        %v2344 = vadd.f32 0.0, %v2343
        %v2345 = vpop.f32.mrb[0].mxu0
        %v2346 = vpop.f32.mrb[0].mxu0
        %v2347 = vadd.f32 0.0, %v2346
        %v2348 = vpop.f32.mrb[0].mxu0
        %2349 = vmatprep.mubr.bf16.mxu0 0
        %2350 = vmatmul.mubr.bf16.gmra.mrb[0].mxu0 %v2230
        %v2351 = vpop.f32.mrb[0].mxu0
        %v2352 = vadd.f32 0.0, %v2351
        %v2353 = vpop.f32.mrb[0].mxu0
        %v2354 = vpop.f32.mrb[0].mxu0
        %v2355 = vadd.f32 0.0, %v2354
        %v2356 = vpop.f32.mrb[0].mxu0
        %2357 = vmatprep.mubr.bf16.mxu0 0
        %2358 = vmatmul.mubr.bf16.gmra.mrb[0].mxu0 %v2233
        %v2359 = vpop.f32.mrb[0].mxu0
        %v2360 = vadd.f32 0.0, %v2359
        %v2361 = vpop.f32.mrb[0].mxu0
        %v2362 = vpop.f32.mrb[0].mxu0
        %v2363 = vadd.f32 0.0, %v2362
        %v2364 = vpop.f32.mrb[0].mxu0
        %2365 = vmatprep.mubr.bf16.mxu0 0
        %2366 = vmatmul.mubr.bf16.gmra.mrb[0].mxu0 %v2236
        %v2367 = vpop.f32.mrb[0].mxu0
        %v2368 = vadd.f32 0.0, %v2367
        %v2369 = vpop.f32.mrb[0].mxu0
        %v2370 = vpop.f32.mrb[0].mxu0
        %v2371 = vadd.f32 0.0, %v2370
        %v2372 = vpop.f32.mrb[0].mxu0
        %2373 = vmatprep.mubr.bf16.mxu0 0
        %2374 = vmatmul.mubr.bf16.gmra.mrb[0].mxu0 %v2239
        %v2375 = vpop.f32.mrb[0].mxu0
        %v2376 = vadd.f32 0.0, %v2375
        %v2377 = vpop.f32.mrb[0].mxu0
        %v2378 = vpop.f32.mrb[0].mxu0
        %v2379 = vadd.f32 0.0, %v2378
        %v2380 = vpop.f32.mrb[0].mxu0
        %2381 = vmatprep.mubr.bf16.mxu0 0
        %2382 = vmatmul.mubr.bf16.gmra.mrb[0].mxu0 %v2242
        %v2383 = vpop.f32.mrb[0].mxu0
        %v2384 = vadd.f32 0.0, %v2383
        %v2385 = vpop.f32.mrb[0].mxu0
        %v2386 = vpop.f32.mrb[0].mxu0
        %v2387 = vadd.f32 0.0, %v2386
        %v2388 = vpop.f32.mrb[0].mxu0
        %2389 = vmatprep.mubr.bf16.mxu0 0
        %2390 = vmatmul.mubr.bf16.gmra.mrb[0].mxu0 %v2245
        %v2391 = vpop.f32.mrb[0].mxu0
        %v2392 = vadd.f32 0.0, %v2391
        %v2393 = vpop.f32.mrb[0].mxu0
        %v2394 = vpop.f32.mrb[0].mxu0
        %v2395 = vadd.f32 0.0, %v2394
        %v2396 = vpop.f32.mrb[0].mxu0
        %2397 = vmatprep.mubr.bf16.mxu0 0
        %2398 = vmatmul.mubr.bf16.gmra.mrb[0].mxu0 %v2248
        %v2399 = vpop.f32.mrb[0].mxu0
        %v2400 = vadd.f32 0.0, %v2399
        %v2401 = vpop.f32.mrb[0].mxu0
        %v2402 = vpop.f32.mrb[0].mxu0
        %v2403 = vadd.f32 0.0, %v2402
        %v2404 = vpop.f32.mrb[0].mxu0
        %2405 = vmatprep.mubr.bf16.mxu0 0
        %2406 = vmatmul.mubr.bf16.gmra.mrb[0].mxu0 %v2251
        %v2407 = vpop.f32.mrb[0].mxu0
        %v2408 = vadd.f32 0.0, %v2407
        %v2409 = vpop.f32.mrb[0].mxu0
        %v2410 = vpop.f32.mrb[0].mxu0
        %v2411 = vadd.f32 0.0, %v2410
        %v2412 = vpop.f32.mrb[0].mxu0
        %2413 = vdwg.mxu0
        %v2414 = vpack.c.bf16 %v2291, %v2288
        %v2415 = vpack.c.bf16 %v2299, %v2296
        %v2416 = vpack.c.bf16 %v2307, %v2304
        %v2417 = vpack.c.bf16 %v2315, %v2312
        %v2418 = vpack.c.bf16 %v2323, %v2320
        %v2419 = vpack.c.bf16 %v2331, %v2328
        %v2420 = vpack.c.bf16 %v2339, %v2336
        %v2421 = vpack.c.bf16 %v2347, %v2344
        %v2422 = vpack.c.bf16 %v2355, %v2352
        %v2423 = vpack.c.bf16 %v2363, %v2360
        %v2424 = vpack.c.bf16 %v2371, %v2368
        %v2425 = vpack.c.bf16 %v2379, %v2376
        %v2426 = vpack.c.bf16 %v2387, %v2384
        %v2427 = vpack.c.bf16 %v2395, %v2392
        %v2428 = vpack.c.bf16 %v2403, %v2400
        %v2429 = vpack.c.bf16 %v2411, %v2408
        %v2431 = vsel %vm976, %v2414, 0
        %v2434 = vsel %vm976, %v2415, 0
        %v2437 = vsel %vm976, %v2416, 0
        %v2440 = vsel %vm976, %v2417, 0
        %v2443 = vsel %vm976, %v2418, 0
        %v2446 = vsel %vm976, %v2419, 0
        %v2449 = vsel %vm976, %v2420, 0
        %v2452 = vsel %vm976, %v2421, 0
        %v2455 = vsel %vm976, %v2422, 0
        %v2458 = vsel %vm976, %v2423, 0
        %v2461 = vsel %vm976, %v2424, 0
        %v2464 = vsel %vm976, %v2425, 0
        %v2467 = vsel %vm976, %v2426, 0
        %v2470 = vsel %vm976, %v2427, 0
        %v2473 = vsel %vm976, %v2428, 0
        %v2476 = vsel %vm976, %v2429, 0
        %2478 = vmatprep.subr.bf16.mxu0 0
        %2479 = vmatpush1.bf16.msra.mxu0 %v595
        %2480 = vmatprep.subr.bf16.mxu0 0
        %2481 = vmatpush1.bf16.msra.mxu0 %v596
        %2482 = vmatprep.subr.bf16.mxu0 0
        %2483 = vmatpush1.bf16.msra.mxu0 0
        %2484 = vmatprep.subr.bf16.mxu0 0
        %2485 = vmatpush1.bf16.msra.mxu0 0
        %2486 = vmatprep.subr.bf16.mxu0 0
        %2487 = vmatpush1.bf16.msra.mxu0 0
        %2488 = vmatprep.subr.bf16.mxu0 0
        %2489 = vmatpush1.bf16.msra.mxu0 0
        %2490 = vmatprep.subr.bf16.mxu0 0
        %2491 = vmatpush1.bf16.msra.mxu0 0
        %2492 = vmatprep.subr.bf16.mxu0 0
        %2493 = vmatpush1.bf16.msra.mxu0 0
        %2494 = vmatprep.subr.bf16.mxu0 0
        %2495 = vmatpush1.bf16.msra.mxu0 0
        %2496 = vmatprep.subr.bf16.mxu0 0
        %2497 = vmatpush1.bf16.msra.mxu0 0
        %2498 = vmatprep.subr.bf16.mxu0 0
        %2499 = vmatpush1.bf16.msra.mxu0 0
        %2500 = vmatprep.subr.bf16.mxu0 0
        %2501 = vmatpush1.bf16.msra.mxu0 0
        %2502 = vmatprep.subr.bf16.mxu0 0
        %2503 = vmatpush1.bf16.msra.mxu0 0
        %2504 = vmatprep.subr.bf16.mxu0 0
        %2505 = vmatpush1.bf16.msra.mxu0 0
        %2506 = vmatprep.subr.bf16.mxu0 0
        %2507 = vmatpush1.bf16.msra.mxu0 0
        %2508 = vmatprep.subr.bf16.mxu0 0
        %2509 = vmatpush1.bf16.msra.mxu0 0
        %2510 = vmatprep.mubr.bf16.mxu0 0
        %2511 = vmatmul.mubr.bf16.gmra.mrb[0].mxu0 %v2431
        %v2512 = vpop.f32.mrb[0].mxu0
        %v2513 = vadd.f32 0.0, %v2512
        %v2514 = vpop.f32.mrb[0].mxu0
        %v2515 = vpop.f32.mrb[0].mxu0
        %v2516 = vadd.f32 0.0, %v2515
        %v2517 = vpop.f32.mrb[0].mxu0
        %2518 = vmatprep.mubr.bf16.mxu0 0
        %2519 = vmatmul.mubr.bf16.gmra.mrb[0].mxu0 %v2434
        %v2520 = vpop.f32.mrb[0].mxu0
        %v2521 = vadd.f32 0.0, %v2520
        %v2522 = vpop.f32.mrb[0].mxu0
        %v2523 = vpop.f32.mrb[0].mxu0
        %v2524 = vadd.f32 0.0, %v2523
        %v2525 = vpop.f32.mrb[0].mxu0
        %2526 = vmatprep.mubr.bf16.mxu0 0
        %2527 = vmatmul.mubr.bf16.gmra.mrb[0].mxu0 %v2437
        %v2528 = vpop.f32.mrb[0].mxu0
        %v2529 = vadd.f32 0.0, %v2528
        %v2530 = vpop.f32.mrb[0].mxu0
        %v2531 = vpop.f32.mrb[0].mxu0
        %v2532 = vadd.f32 0.0, %v2531
        %v2533 = vpop.f32.mrb[0].mxu0
        %2534 = vmatprep.mubr.bf16.mxu0 0
        %2535 = vmatmul.mubr.bf16.gmra.mrb[0].mxu0 %v2440
        %v2536 = vpop.f32.mrb[0].mxu0
        %v2537 = vadd.f32 0.0, %v2536
        %v2538 = vpop.f32.mrb[0].mxu0
        %v2539 = vpop.f32.mrb[0].mxu0
        %v2540 = vadd.f32 0.0, %v2539
        %v2541 = vpop.f32.mrb[0].mxu0
        %2542 = vmatprep.mubr.bf16.mxu0 0
        %2543 = vmatmul.mubr.bf16.gmra.mrb[0].mxu0 %v2443
        %v2544 = vpop.f32.mrb[0].mxu0
        %v2545 = vadd.f32 0.0, %v2544
        %v2546 = vpop.f32.mrb[0].mxu0
        %v2547 = vpop.f32.mrb[0].mxu0
        %v2548 = vadd.f32 0.0, %v2547
        %v2549 = vpop.f32.mrb[0].mxu0
        %2550 = vmatprep.mubr.bf16.mxu0 0
        %2551 = vmatmul.mubr.bf16.gmra.mrb[0].mxu0 %v2446
        %v2552 = vpop.f32.mrb[0].mxu0
        %v2553 = vadd.f32 0.0, %v2552
        %v2554 = vpop.f32.mrb[0].mxu0
        %v2555 = vpop.f32.mrb[0].mxu0
        %v2556 = vadd.f32 0.0, %v2555
        %v2557 = vpop.f32.mrb[0].mxu0
        %2558 = vmatprep.mubr.bf16.mxu0 0
        %2559 = vmatmul.mubr.bf16.gmra.mrb[0].mxu0 %v2449
        %v2560 = vpop.f32.mrb[0].mxu0
        %v2561 = vadd.f32 0.0, %v2560
        %v2562 = vpop.f32.mrb[0].mxu0
        %v2563 = vpop.f32.mrb[0].mxu0
        %v2564 = vadd.f32 0.0, %v2563
        %v2565 = vpop.f32.mrb[0].mxu0
        %2566 = vmatprep.mubr.bf16.mxu0 0
        %2567 = vmatmul.mubr.bf16.gmra.mrb[0].mxu0 %v2452
        %v2568 = vpop.f32.mrb[0].mxu0
        %v2569 = vadd.f32 0.0, %v2568
        %v2570 = vpop.f32.mrb[0].mxu0
        %v2571 = vpop.f32.mrb[0].mxu0
        %v2572 = vadd.f32 0.0, %v2571
        %v2573 = vpop.f32.mrb[0].mxu0
        %2574 = vmatprep.mubr.bf16.mxu0 0
        %2575 = vmatmul.mubr.bf16.gmra.mrb[0].mxu0 %v2455
        %v2576 = vpop.f32.mrb[0].mxu0
        %v2577 = vadd.f32 0.0, %v2576
        %v2578 = vpop.f32.mrb[0].mxu0
        %v2579 = vpop.f32.mrb[0].mxu0
        %v2580 = vadd.f32 0.0, %v2579
        %v2581 = vpop.f32.mrb[0].mxu0
        %2582 = vmatprep.mubr.bf16.mxu0 0
        %2583 = vmatmul.mubr.bf16.gmra.mrb[0].mxu0 %v2458
        %v2584 = vpop.f32.mrb[0].mxu0
        %v2585 = vadd.f32 0.0, %v2584
        %v2586 = vpop.f32.mrb[0].mxu0
        %v2587 = vpop.f32.mrb[0].mxu0
        %v2588 = vadd.f32 0.0, %v2587
        %v2589 = vpop.f32.mrb[0].mxu0
        %2590 = vmatprep.mubr.bf16.mxu0 0
        %2591 = vmatmul.mubr.bf16.gmra.mrb[0].mxu0 %v2461
        %v2592 = vpop.f32.mrb[0].mxu0
        %v2593 = vadd.f32 0.0, %v2592
        %v2594 = vpop.f32.mrb[0].mxu0
        %v2595 = vpop.f32.mrb[0].mxu0
        %v2596 = vadd.f32 0.0, %v2595
        %v2597 = vpop.f32.mrb[0].mxu0
        %2598 = vmatprep.mubr.bf16.mxu0 0
        %2599 = vmatmul.mubr.bf16.gmra.mrb[0].mxu0 %v2464
        %v2600 = vpop.f32.mrb[0].mxu0
        %v2601 = vadd.f32 0.0, %v2600
        %v2602 = vpop.f32.mrb[0].mxu0
        %v2603 = vpop.f32.mrb[0].mxu0
        %v2604 = vadd.f32 0.0, %v2603
        %v2605 = vpop.f32.mrb[0].mxu0
        %2606 = vmatprep.mubr.bf16.mxu0 0
        %2607 = vmatmul.mubr.bf16.gmra.mrb[0].mxu0 %v2467
        %v2608 = vpop.f32.mrb[0].mxu0
        %v2609 = vadd.f32 0.0, %v2608
        %v2610 = vpop.f32.mrb[0].mxu0
        %v2611 = vpop.f32.mrb[0].mxu0
        %v2612 = vadd.f32 0.0, %v2611
        %v2613 = vpop.f32.mrb[0].mxu0
        %2614 = vmatprep.mubr.bf16.mxu0 0
        %2615 = vmatmul.mubr.bf16.gmra.mrb[0].mxu0 %v2470
        %v2616 = vpop.f32.mrb[0].mxu0
        %v2617 = vadd.f32 0.0, %v2616
        %v2618 = vpop.f32.mrb[0].mxu0
        %v2619 = vpop.f32.mrb[0].mxu0
        %v2620 = vadd.f32 0.0, %v2619
        %v2621 = vpop.f32.mrb[0].mxu0
        %2622 = vmatprep.mubr.bf16.mxu0 0
        %2623 = vmatmul.mubr.bf16.gmra.mrb[0].mxu0 %v2473
        %v2624 = vpop.f32.mrb[0].mxu0
        %v2625 = vadd.f32 0.0, %v2624
        %v2626 = vpop.f32.mrb[0].mxu0
        %v2627 = vpop.f32.mrb[0].mxu0
        %v2628 = vadd.f32 0.0, %v2627
        %v2629 = vpop.f32.mrb[0].mxu0
        %2630 = vmatprep.mubr.bf16.mxu0 0
        %2631 = vmatmul.mubr.bf16.gmra.mrb[0].mxu0 %v2476
        %v2632 = vpop.f32.mrb[0].mxu0
        %v2633 = vadd.f32 0.0, %v2632
        %v2634 = vpop.f32.mrb[0].mxu0
        %v2635 = vpop.f32.mrb[0].mxu0
        %v2636 = vadd.f32 0.0, %v2635
        %v2637 = vpop.f32.mrb[0].mxu0
        %2638 = vdwg.mxu0
        %v2639 = vadd.f32 %v646, %v2513
        %v2640 = vadd.f32 %v649, %v2516
        %v2641 = vadd.f32 %v654, %v2521
        %v2642 = vadd.f32 %v657, %v2524
        %v2643 = vadd.f32 %v662, %v2529
        %v2644 = vadd.f32 %v665, %v2532
        %v2645 = vadd.f32 %v670, %v2537
        %v2646 = vadd.f32 %v673, %v2540
        %v2647 = vadd.f32 %v678, %v2545
        %v2648 = vadd.f32 %v681, %v2548
        %v2649 = vadd.f32 %v686, %v2553
        %v2650 = vadd.f32 %v689, %v2556
        %v2651 = vadd.f32 %v694, %v2561
        %v2652 = vadd.f32 %v697, %v2564
        %v2653 = vadd.f32 %v702, %v2569
        %v2654 = vadd.f32 %v705, %v2572
        %v2655 = vadd.f32 %v710, %v2577
        %v2656 = vadd.f32 %v713, %v2580
        %v2657 = vadd.f32 %v718, %v2585
        %v2658 = vadd.f32 %v721, %v2588
        %v2659 = vadd.f32 %v726, %v2593
        %v2660 = vadd.f32 %v729, %v2596
        %v2661 = vadd.f32 %v734, %v2601
        %v2662 = vadd.f32 %v737, %v2604
        %v2663 = vadd.f32 %v742, %v2609
        %v2664 = vadd.f32 %v745, %v2612
        %v2665 = vadd.f32 %v750, %v2617
        %v2666 = vadd.f32 %v753, %v2620
        %v2667 = vadd.f32 %v758, %v2625
        %v2668 = vadd.f32 %v761, %v2628
        %v2669 = vadd.f32 %v766, %v2633
        %v2670 = vadd.f32 %v769, %v2636
        %s2671 = scalar_lea.vmem %s390, 128
        %v2672 = vld [vmem:[%s2671] sm:$0xf]
        %v2673 = vld [vmem:[%s2671 + $0x4] sm:$0xf]
        %v2674 = vld [vmem:[%s2671 + $0x8] sm:$0xf]
        %v2675 = vld [vmem:[%s2671 + $0xc] sm:$0xf]
        %v2676 = vld [vmem:[%s2671 + $0x10] sm:$0xf]
        %v2677 = vld [vmem:[%s2671 + $0x14] sm:$0xf]
        %v2678 = vld [vmem:[%s2671 + $0x18] sm:$0xf]
        %v2679 = vld [vmem:[%s2671 + $0x1c] sm:$0xf]
        %v2680 = vld [vmem:[%s2671 + $0x20] sm:$0xf]
        %v2681 = vld [vmem:[%s2671 + $0x24] sm:$0xf]
        %v2682 = vld [vmem:[%s2671 + $0x28] sm:$0xf]
        %v2683 = vld [vmem:[%s2671 + $0x2c] sm:$0xf]
        %v2684 = vld [vmem:[%s2671 + $0x30] sm:$0xf]
        %v2685 = vld [vmem:[%s2671 + $0x34] sm:$0xf]
        %v2686 = vld [vmem:[%s2671 + $0x38] sm:$0xf]
        %v2687 = vld [vmem:[%s2671 + $0x3c] sm:$0xf]
        %v2688 = vld [vmem:[%s2671 + $0x40] sm:$0xf]
        %v2689 = vld [vmem:[%s2671 + $0x44] sm:$0xf]
        %v2690 = vld [vmem:[%s2671 + $0x48] sm:$0xf]
        %v2691 = vld [vmem:[%s2671 + $0x4c] sm:$0xf]
        %v2692 = vld [vmem:[%s2671 + $0x50] sm:$0xf]
        %v2693 = vld [vmem:[%s2671 + $0x54] sm:$0xf]
        %v2694 = vld [vmem:[%s2671 + $0x58] sm:$0xf]
        %v2695 = vld [vmem:[%s2671 + $0x5c] sm:$0xf]
        %v2696 = vld [vmem:[%s2671 + $0x60] sm:$0xf]
        %v2697 = vld [vmem:[%s2671 + $0x64] sm:$0xf]
        %v2698 = vld [vmem:[%s2671 + $0x68] sm:$0xf]
        %v2699 = vld [vmem:[%s2671 + $0x6c] sm:$0xf]
        %v2700 = vld [vmem:[%s2671 + $0x70] sm:$0xf]
        %v2701 = vld [vmem:[%s2671 + $0x74] sm:$0xf]
        %v2702 = vld [vmem:[%s2671 + $0x78] sm:$0xf]
        %v2703 = vld [vmem:[%s2671 + $0x7c] sm:$0xf]
        %s2704 = scalar_lea.vmem %s395, 128
        %v2705 = vld [vmem:[%s2704] sm:$0xf]
        %v2706 = vld [vmem:[%s2704 + $0x4] sm:$0xf]
        %v2707 = vld [vmem:[%s2704 + $0x8] sm:$0xf]
        %v2708 = vld [vmem:[%s2704 + $0xc] sm:$0xf]
        %v2709 = vld [vmem:[%s2704 + $0x10] sm:$0xf]
        %v2710 = vld [vmem:[%s2704 + $0x14] sm:$0xf]
        %v2711 = vld [vmem:[%s2704 + $0x18] sm:$0xf]
        %v2712 = vld [vmem:[%s2704 + $0x1c] sm:$0xf]
        %v2713 = vld [vmem:[%s2704 + $0x20] sm:$0xf]
        %v2714 = vld [vmem:[%s2704 + $0x24] sm:$0xf]
        %v2715 = vld [vmem:[%s2704 + $0x28] sm:$0xf]
        %v2716 = vld [vmem:[%s2704 + $0x2c] sm:$0xf]
        %v2717 = vld [vmem:[%s2704 + $0x30] sm:$0xf]
        %v2718 = vld [vmem:[%s2704 + $0x34] sm:$0xf]
        %v2719 = vld [vmem:[%s2704 + $0x38] sm:$0xf]
        %v2720 = vld [vmem:[%s2704 + $0x3c] sm:$0xf]
        %v2721 = vld [vmem:[%s2704 + $0x40] sm:$0xf]
        %v2722 = vld [vmem:[%s2704 + $0x44] sm:$0xf]
        %v2723 = vld [vmem:[%s2704 + $0x48] sm:$0xf]
        %v2724 = vld [vmem:[%s2704 + $0x4c] sm:$0xf]
        %v2725 = vld [vmem:[%s2704 + $0x50] sm:$0xf]
        %v2726 = vld [vmem:[%s2704 + $0x54] sm:$0xf]
        %v2727 = vld [vmem:[%s2704 + $0x58] sm:$0xf]
        %v2728 = vld [vmem:[%s2704 + $0x5c] sm:$0xf]
        %v2729 = vld [vmem:[%s2704 + $0x60] sm:$0xf]
        %v2730 = vld [vmem:[%s2704 + $0x64] sm:$0xf]
        %v2731 = vld [vmem:[%s2704 + $0x68] sm:$0xf]
        %v2732 = vld [vmem:[%s2704 + $0x6c] sm:$0xf]
        %v2733 = vld [vmem:[%s2704 + $0x70] sm:$0xf]
        %v2734 = vld [vmem:[%s2704 + $0x74] sm:$0xf]
        %v2735 = vld [vmem:[%s2704 + $0x78] sm:$0xf]
        %v2736 = vld [vmem:[%s2704 + $0x7c] sm:$0xf]
        %s2737 = scalar_lea.vmem %s400, 128
        %v2738 = vld [vmem:[%s2737] sm:$0xf]
        %v2739 = vld [vmem:[%s2737 + $0x4] sm:$0xf]
        %v2740 = vld [vmem:[%s2737 + $0x8] sm:$0xf]
        %v2741 = vld [vmem:[%s2737 + $0xc] sm:$0xf]
        %v2742 = vld [vmem:[%s2737 + $0x10] sm:$0xf]
        %v2743 = vld [vmem:[%s2737 + $0x14] sm:$0xf]
        %v2744 = vld [vmem:[%s2737 + $0x18] sm:$0xf]
        %v2745 = vld [vmem:[%s2737 + $0x1c] sm:$0xf]
        %v2746 = vld [vmem:[%s2737 + $0x20] sm:$0xf]
        %v2747 = vld [vmem:[%s2737 + $0x24] sm:$0xf]
        %v2748 = vld [vmem:[%s2737 + $0x28] sm:$0xf]
        %v2749 = vld [vmem:[%s2737 + $0x2c] sm:$0xf]
        %v2750 = vld [vmem:[%s2737 + $0x30] sm:$0xf]
        %v2751 = vld [vmem:[%s2737 + $0x34] sm:$0xf]
        %v2752 = vld [vmem:[%s2737 + $0x38] sm:$0xf]
        %v2753 = vld [vmem:[%s2737 + $0x3c] sm:$0xf]
        %v2754 = vld [vmem:[%s2737 + $0x40] sm:$0xf]
        %v2755 = vld [vmem:[%s2737 + $0x44] sm:$0xf]
        %v2756 = vld [vmem:[%s2737 + $0x48] sm:$0xf]
        %v2757 = vld [vmem:[%s2737 + $0x4c] sm:$0xf]
        %v2758 = vld [vmem:[%s2737 + $0x50] sm:$0xf]
        %v2759 = vld [vmem:[%s2737 + $0x54] sm:$0xf]
        %v2760 = vld [vmem:[%s2737 + $0x58] sm:$0xf]
        %v2761 = vld [vmem:[%s2737 + $0x5c] sm:$0xf]
        %v2762 = vld [vmem:[%s2737 + $0x60] sm:$0xf]
        %v2763 = vld [vmem:[%s2737 + $0x64] sm:$0xf]
        %v2764 = vld [vmem:[%s2737 + $0x68] sm:$0xf]
        %v2765 = vld [vmem:[%s2737 + $0x6c] sm:$0xf]
        %v2766 = vld [vmem:[%s2737 + $0x70] sm:$0xf]
        %v2767 = vld [vmem:[%s2737 + $0x74] sm:$0xf]
        %v2768 = vld [vmem:[%s2737 + $0x78] sm:$0xf]
        %v2769 = vld [vmem:[%s2737 + $0x7c] sm:$0xf]
        %s2770 = scalar_lea.vmem %s405, 32
        %v2771 = vld [vmem:[%s2770] sm:$0xf]
        %v2772 = vld [vmem:[%s2770 + $0x4] sm:$0xf]
        %v2773 = vld [vmem:[%s2770 + $0x8] sm:$0xf]
        %v2774 = vld [vmem:[%s2770 + $0xc] sm:$0xf]
        %v2775 = vld [vmem:[%s2770 + $0x10] sm:$0xf]
        %v2776 = vld [vmem:[%s2770 + $0x14] sm:$0xf]
        %v2777 = vld [vmem:[%s2770 + $0x18] sm:$0xf]
        %v2778 = vld [vmem:[%s2770 + $0x1c] sm:$0xf]
        %v2787 = vunpack.c.l.b16 %v2771
        %v2788 = vunpack.c.l.b16 %v2772
        %v2789 = vunpack.c.l.b16 %v2773
        %v2790 = vunpack.c.l.b16 %v2774
        %v2791 = vunpack.c.l.b16 %v2775
        %v2792 = vunpack.c.l.b16 %v2776
        %v2793 = vunpack.c.l.b16 %v2777
        %v2794 = vunpack.c.l.b16 %v2778
        %v2795 = vpack.c.b16 %v2788, %v2787
        %v2796 = vpack.c.b16 %v2790, %v2789
        %v2797 = vpack.c.b16 %v2792, %v2791
        %v2798 = vpack.c.b16 %v2794, %v2793
        %v2831 = vunpack.c.l.b16 %v2705
        %v2832 = vunpack.c.l.b16 %v2706
        %v2833 = vunpack.c.l.b16 %v2707
        %v2834 = vunpack.c.l.b16 %v2708
        %v2835 = vunpack.c.l.b16 %v2709
        %v2836 = vunpack.c.l.b16 %v2710
        %v2837 = vunpack.c.l.b16 %v2711
        %v2838 = vunpack.c.l.b16 %v2712
        %v2839 = vunpack.c.l.b16 %v2713
        %v2840 = vunpack.c.l.b16 %v2714
        %v2841 = vunpack.c.l.b16 %v2715
        %v2842 = vunpack.c.l.b16 %v2716
        %v2843 = vunpack.c.l.b16 %v2717
        %v2844 = vunpack.c.l.b16 %v2718
        %v2845 = vunpack.c.l.b16 %v2719
        %v2846 = vunpack.c.l.b16 %v2720
        %v2847 = vunpack.c.l.b16 %v2721
        %v2848 = vunpack.c.l.b16 %v2722
        %v2849 = vunpack.c.l.b16 %v2723
        %v2850 = vunpack.c.l.b16 %v2724
        %v2851 = vunpack.c.l.b16 %v2725
        %v2852 = vunpack.c.l.b16 %v2726
        %v2853 = vunpack.c.l.b16 %v2727
        %v2854 = vunpack.c.l.b16 %v2728
        %v2855 = vunpack.c.l.b16 %v2729
        %v2856 = vunpack.c.l.b16 %v2730
        %v2857 = vunpack.c.l.b16 %v2731
        %v2858 = vunpack.c.l.b16 %v2732
        %v2859 = vunpack.c.l.b16 %v2733
        %v2860 = vunpack.c.l.b16 %v2734
        %v2861 = vunpack.c.l.b16 %v2735
        %v2862 = vunpack.c.l.b16 %v2736
        %v2863 = vpack.c.b16 %v2832, %v2831
        %v2864 = vpack.c.b16 %v2834, %v2833
        %v2865 = vpack.c.b16 %v2836, %v2835
        %v2866 = vpack.c.b16 %v2838, %v2837
        %v2867 = vpack.c.b16 %v2840, %v2839
        %v2868 = vpack.c.b16 %v2842, %v2841
        %v2869 = vpack.c.b16 %v2844, %v2843
        %v2870 = vpack.c.b16 %v2846, %v2845
        %v2871 = vpack.c.b16 %v2848, %v2847
        %v2872 = vpack.c.b16 %v2850, %v2849
        %v2873 = vpack.c.b16 %v2852, %v2851
        %v2874 = vpack.c.b16 %v2854, %v2853
        %v2875 = vpack.c.b16 %v2856, %v2855
        %v2876 = vpack.c.b16 %v2858, %v2857
        %v2877 = vpack.c.b16 %v2860, %v2859
        %v2878 = vpack.c.b16 %v2862, %v2861
        %v2880 = vsel %vm976, %v2795, 0
        %v2883 = vsel %vm976, %v2796, 0
        %v2886 = vsel %vm976, %v2797, 0
        %v2889 = vsel %vm976, %v2798, 0
        %v2892 = vsel %vm976, %v2863, 0
        %v2895 = vsel %vm976, %v2864, 0
        %v2898 = vsel %vm976, %v2865, 0
        %v2901 = vsel %vm976, %v2866, 0
        %v2904 = vsel %vm976, %v2867, 0
        %v2907 = vsel %vm976, %v2868, 0
        %v2910 = vsel %vm976, %v2869, 0
        %v2913 = vsel %vm976, %v2870, 0
        %v2916 = vsel %vm976, %v2871, 0
        %v2919 = vsel %vm976, %v2872, 0
        %v2922 = vsel %vm976, %v2873, 0
        %v2925 = vsel %vm976, %v2874, 0
        %v2928 = vsel %vm976, %v2875, 0
        %v2931 = vsel %vm976, %v2876, 0
        %v2934 = vsel %vm976, %v2877, 0
        %v2937 = vsel %vm976, %v2878, 0
        %2939 = vmatprep.subr.bf16.mxu0 0
        %2940 = vmatpush1.bf16.xpose.msra.mxu0 %v2892
        %2941 = vmatprep.subr.bf16.mxu0 0
        %2942 = vmatpush1.bf16.xpose.msra.mxu0 %v2895
        %2943 = vmatprep.subr.bf16.mxu0 0
        %2944 = vmatpush1.bf16.xpose.msra.mxu0 %v2898
        %2945 = vmatprep.subr.bf16.mxu0 0
        %2946 = vmatpush1.bf16.xpose.msra.mxu0 %v2901
        %2947 = vmatprep.subr.bf16.mxu0 0
        %2948 = vmatpush1.bf16.xpose.msra.mxu0 %v2904
        %2949 = vmatprep.subr.bf16.mxu0 0
        %2950 = vmatpush1.bf16.xpose.msra.mxu0 %v2907
        %2951 = vmatprep.subr.bf16.mxu0 0
        %2952 = vmatpush1.bf16.xpose.msra.mxu0 %v2910
        %2953 = vmatprep.subr.bf16.mxu0 0
        %2954 = vmatpush1.bf16.xpose.msra.mxu0 %v2913
        %2955 = vmatprep.subr.bf16.mxu0 0
        %2956 = vmatpush1.bf16.xpose.msra.mxu0 %v2916
        %2957 = vmatprep.subr.bf16.mxu0 0
        %2958 = vmatpush1.bf16.xpose.msra.mxu0 %v2919
        %2959 = vmatprep.subr.bf16.mxu0 0
        %2960 = vmatpush1.bf16.xpose.msra.mxu0 %v2922
        %2961 = vmatprep.subr.bf16.mxu0 0
        %2962 = vmatpush1.bf16.xpose.msra.mxu0 %v2925
        %2963 = vmatprep.subr.bf16.mxu0 0
        %2964 = vmatpush1.bf16.xpose.msra.mxu0 %v2928
        %2965 = vmatprep.subr.bf16.mxu0 0
        %2966 = vmatpush1.bf16.xpose.msra.mxu0 %v2931
        %2967 = vmatprep.subr.bf16.mxu0 0
        %2968 = vmatpush1.bf16.xpose.msra.mxu0 %v2934
        %2969 = vmatprep.subr.bf16.mxu0 0
        %2970 = vmatpush1.bf16.xpose.msra.mxu0 %v2937
        %2971 = vmatprep.mubr.bf16.mxu0 0
        %2972 = vmatmul.mubr.bf16.gmra.mrb[0].mxu0 %v2880
        %v2973 = vpop.f32.mrb[0].mxu0
        %v2974 = vadd.f32 0.0, %v2973
        %v2975 = vpop.f32.mrb[0].mxu0
        %v2976 = vadd.f32 0.0, %v2975
        %v2977 = vpop.f32.mrb[0].mxu0
        %v2978 = vadd.f32 0.0, %v2977
        %v2979 = vpop.f32.mrb[0].mxu0
        %v2980 = vadd.f32 0.0, %v2979
        %2981 = vmatprep.mubr.bf16.mxu0 0
        %2982 = vmatmul.mubr.bf16.gmra.mrb[0].mxu0 %v2883
        %v2983 = vpop.f32.mrb[0].mxu0
        %v2984 = vadd.f32 0.0, %v2983
        %v2985 = vpop.f32.mrb[0].mxu0
        %v2986 = vadd.f32 0.0, %v2985
        %v2987 = vpop.f32.mrb[0].mxu0
        %v2988 = vadd.f32 0.0, %v2987
        %v2989 = vpop.f32.mrb[0].mxu0
        %v2990 = vadd.f32 0.0, %v2989
        %2991 = vmatprep.mubr.bf16.mxu0 0
        %2992 = vmatmul.mubr.bf16.gmra.mrb[0].mxu0 %v2886
        %v2993 = vpop.f32.mrb[0].mxu0
        %v2994 = vadd.f32 0.0, %v2993
        %v2995 = vpop.f32.mrb[0].mxu0
        %v2996 = vadd.f32 0.0, %v2995
        %v2997 = vpop.f32.mrb[0].mxu0
        %v2998 = vadd.f32 0.0, %v2997
        %v2999 = vpop.f32.mrb[0].mxu0
        %v3000 = vadd.f32 0.0, %v2999
        %3001 = vmatprep.mubr.bf16.mxu0 0
        %3002 = vmatmul.mubr.bf16.gmra.mrb[0].mxu0 %v2889
        %v3003 = vpop.f32.mrb[0].mxu0
        %v3004 = vadd.f32 0.0, %v3003
        %v3005 = vpop.f32.mrb[0].mxu0
        %v3006 = vadd.f32 0.0, %v3005
        %v3007 = vpop.f32.mrb[0].mxu0
        %v3008 = vadd.f32 0.0, %v3007
        %v3009 = vpop.f32.mrb[0].mxu0
        %v3010 = vadd.f32 0.0, %v3009
        %3011 = vdwg.mxu0
        %v3012 = vmul.f32 %v2974, 0.17677669
        %v3013 = vmul.f32 %v2976, 0.17677669
        %v3014 = vmul.f32 %v2978, 0.17677669
        %v3015 = vmul.f32 %v2980, 0.17677669
        %v3016 = vmul.f32 %v2984, 0.17677669
        %v3017 = vmul.f32 %v2986, 0.17677669
        %v3018 = vmul.f32 %v2988, 0.17677669
        %v3019 = vmul.f32 %v2990, 0.17677669
        %v3020 = vmul.f32 %v2994, 0.17677669
        %v3021 = vmul.f32 %v2996, 0.17677669
        %v3022 = vmul.f32 %v2998, 0.17677669
        %v3023 = vmul.f32 %v3000, 0.17677669
        %v3024 = vmul.f32 %v3004, 0.17677669
        %v3025 = vmul.f32 %v3006, 0.17677669
        %v3026 = vmul.f32 %v3008, 0.17677669
        %v3027 = vmul.f32 %v3010, 0.17677669
        %s3028 = scalar_lea.vmem %s4, 128
        %v3029 = vld [vmem:[%s3028] sm:$0xff]
        %v3030 = vld [vmem:[%s3028 + $0x8] sm:$0xff]
        %v3031 = vld [vmem:[%s3028 + $0x10] sm:$0xff]
        %v3032 = vld [vmem:[%s3028 + $0x18] sm:$0xff]
        %v3033 = vld [vmem:[%s3028 + $0x20] sm:$0xff]
        %v3034 = vld [vmem:[%s3028 + $0x28] sm:$0xff]
        %v3035 = vld [vmem:[%s3028 + $0x30] sm:$0xff]
        %v3036 = vld [vmem:[%s3028 + $0x38] sm:$0xff]
        %v3037 = vld [vmem:[%s3028 + $0x40] sm:$0xff]
        %v3038 = vld [vmem:[%s3028 + $0x48] sm:$0xff]
        %v3039 = vld [vmem:[%s3028 + $0x50] sm:$0xff]
        %v3040 = vld [vmem:[%s3028 + $0x58] sm:$0xff]
        %v3041 = vld [vmem:[%s3028 + $0x60] sm:$0xff]
        %v3042 = vld [vmem:[%s3028 + $0x68] sm:$0xff]
        %v3043 = vld [vmem:[%s3028 + $0x70] sm:$0xff]
        %v3044 = vld [vmem:[%s3028 + $0x78] sm:$0xff]
        %v3045 = vadd.f32 %v3012, %v3029
        %v3046 = vadd.f32 %v3013, %v3030
        %v3047 = vadd.f32 %v3014, %v3031
        %v3048 = vadd.f32 %v3015, %v3032
        %v3049 = vadd.f32 %v3016, %v3033
        %v3050 = vadd.f32 %v3017, %v3034
        %v3051 = vadd.f32 %v3018, %v3035
        %v3052 = vadd.f32 %v3019, %v3036
        %v3053 = vadd.f32 %v3020, %v3037
        %v3054 = vadd.f32 %v3021, %v3038
        %v3055 = vadd.f32 %v3022, %v3039
        %v3056 = vadd.f32 %v3023, %v3040
        %v3057 = vadd.f32 %v3024, %v3041
        %v3058 = vadd.f32 %v3025, %v3042
        %v3059 = vadd.f32 %v3026, %v3043
        %v3060 = vadd.f32 %v3027, %v3044
        %v3061 = vmax.f32 %v3045, %v3046
        %3062 = vmax.xlane.f32.xlu0 %v3061
        %v3063 = vpop.xlane.xlu0 %3062
        %v3064 = vmax.f32 %v3047, %v3048
        %3065 = vmax.xlane.f32.xlu0 %v3064
        %v3066 = vpop.xlane.xlu0 %3065
        %v3067 = vmax.f32 %v3049, %v3050
        %3068 = vmax.xlane.f32.xlu0 %v3067
        %v3069 = vpop.xlane.xlu0 %3068
        %v3070 = vmax.f32 %v3051, %v3052
        %3071 = vmax.xlane.f32.xlu0 %v3070
        %v3072 = vpop.xlane.xlu0 %3071
        %v3073 = vmax.f32 %v3053, %v3054
        %3074 = vmax.xlane.f32.xlu0 %v3073
        %v3075 = vpop.xlane.xlu0 %3074
        %v3076 = vmax.f32 %v3055, %v3056
        %3077 = vmax.xlane.f32.xlu0 %v3076
        %v3078 = vpop.xlane.xlu0 %3077
        %v3079 = vmax.f32 %v3057, %v3058
        %3080 = vmax.xlane.f32.xlu0 %v3079
        %v3081 = vpop.xlane.xlu0 %3080
        %v3082 = vmax.f32 %v3059, %v3060
        %3083 = vmax.xlane.f32.xlu0 %v3082
        %v3084 = vpop.xlane.xlu0 %3083
        %v3085 = vsub.f32 %v3045, %v3063
        %v3086 = vsub.f32 %v3046, %v3063
        %v3087 = vsub.f32 %v3047, %v3066
        %v3088 = vsub.f32 %v3048, %v3066
        %v3089 = vsub.f32 %v3049, %v3069
        %v3090 = vsub.f32 %v3050, %v3069
        %v3091 = vsub.f32 %v3051, %v3072
        %v3092 = vsub.f32 %v3052, %v3072
        %v3093 = vsub.f32 %v3053, %v3075
        %v3094 = vsub.f32 %v3054, %v3075
        %v3095 = vsub.f32 %v3055, %v3078
        %v3096 = vsub.f32 %v3056, %v3078
        %v3097 = vsub.f32 %v3057, %v3081
        %v3098 = vsub.f32 %v3058, %v3081
        %v3099 = vsub.f32 %v3059, %v3084
        %v3100 = vsub.f32 %v3060, %v3084
        %v3101 = vmul.f32 %v3085, 1.442695
        %v3102 = vpow.pop %v3101
        %v3103 = vmul.f32 %v3086, 1.442695
        %v3104 = vpow.pop %v3103
        %v3105 = vmul.f32 %v3087, 1.442695
        %v3106 = vpow.pop %v3105
        %v3107 = vmul.f32 %v3088, 1.442695
        %v3108 = vpow.pop %v3107
        %v3109 = vmul.f32 %v3089, 1.442695
        %v3110 = vpow.pop %v3109
        %v3111 = vmul.f32 %v3090, 1.442695
        %v3112 = vpow.pop %v3111
        %v3113 = vmul.f32 %v3091, 1.442695
        %v3114 = vpow.pop %v3113
        %v3115 = vmul.f32 %v3092, 1.442695
        %v3116 = vpow.pop %v3115
        %v3117 = vmul.f32 %v3093, 1.442695
        %v3118 = vpow.pop %v3117
        %v3119 = vmul.f32 %v3094, 1.442695
        %v3120 = vpow.pop %v3119
        %v3121 = vmul.f32 %v3095, 1.442695
        %v3122 = vpow.pop %v3121
        %v3123 = vmul.f32 %v3096, 1.442695
        %v3124 = vpow.pop %v3123
        %v3125 = vmul.f32 %v3097, 1.442695
        %v3126 = vpow.pop %v3125
        %v3127 = vmul.f32 %v3098, 1.442695
        %v3128 = vpow.pop %v3127
        %v3129 = vmul.f32 %v3099, 1.442695
        %v3130 = vpow.pop %v3129
        %v3131 = vmul.f32 %v3100, 1.442695
        %v3132 = vpow.pop %v3131
        %v3133 = vadd.f32 %v3102, %v3104
        %3134 = vadd.xlane.f32.xlu0 %v3133
        %v3135 = vpop.xlane.xlu0 %3134
        %v3136 = vadd.f32 %v3106, %v3108
        %3137 = vadd.xlane.f32.xlu0 %v3136
        %v3138 = vpop.xlane.xlu0 %3137
        %v3139 = vadd.f32 %v3110, %v3112
        %3140 = vadd.xlane.f32.xlu0 %v3139
        %v3141 = vpop.xlane.xlu0 %3140
        %v3142 = vadd.f32 %v3114, %v3116
        %3143 = vadd.xlane.f32.xlu0 %v3142
        %v3144 = vpop.xlane.xlu0 %3143
        %v3145 = vadd.f32 %v3118, %v3120
        %3146 = vadd.xlane.f32.xlu0 %v3145
        %v3147 = vpop.xlane.xlu0 %3146
        %v3148 = vadd.f32 %v3122, %v3124
        %3149 = vadd.xlane.f32.xlu0 %v3148
        %v3150 = vpop.xlane.xlu0 %3149
        %v3151 = vadd.f32 %v3126, %v3128
        %3152 = vadd.xlane.f32.xlu0 %v3151
        %v3153 = vpop.xlane.xlu0 %3152
        %v3154 = vadd.f32 %v3130, %v3132
        %3155 = vadd.xlane.f32.xlu0 %v3154
        %v3156 = vpop.xlane.xlu0 %3155
        %v3157 = vrcp.pop %v3135
        %v3158 = vrcp.pop %v3138
        %v3159 = vrcp.pop %v3141
        %v3160 = vrcp.pop %v3144
        %v3161 = vrcp.pop %v3147
        %v3162 = vrcp.pop %v3150
        %v3163 = vrcp.pop %v3153
        %v3164 = vrcp.pop %v3156
        %v3165 = vmul.f32 %v3102, %v3157
        %v3166 = vmul.f32 %v3104, %v3157
        %v3167 = vmul.f32 %v3106, %v3158
        %v3168 = vmul.f32 %v3108, %v3158
        %v3169 = vmul.f32 %v3110, %v3159
        %v3170 = vmul.f32 %v3112, %v3159
        %v3171 = vmul.f32 %v3114, %v3160
        %v3172 = vmul.f32 %v3116, %v3160
        %v3173 = vmul.f32 %v3118, %v3161
        %v3174 = vmul.f32 %v3120, %v3161
        %v3175 = vmul.f32 %v3122, %v3162
        %v3176 = vmul.f32 %v3124, %v3162
        %v3177 = vmul.f32 %v3126, %v3163
        %v3178 = vmul.f32 %v3128, %v3163
        %v3179 = vmul.f32 %v3130, %v3164
        %v3180 = vmul.f32 %v3132, %v3164
        %v3181 = vpack.c.bf16 %v3167, %v3165
        %v3182 = vpack.c.bf16 %v3168, %v3166
        %v3183 = vpack.c.bf16 %v3171, %v3169
        %v3184 = vpack.c.bf16 %v3172, %v3170
        %v3185 = vpack.c.bf16 %v3175, %v3173
        %v3186 = vpack.c.bf16 %v3176, %v3174
        %v3187 = vpack.c.bf16 %v3179, %v3177
        %v3188 = vpack.c.bf16 %v3180, %v3178
        %v3221 = vunpack.c.l.b16 %v2738
        %v3222 = vunpack.c.l.b16 %v2739
        %v3223 = vunpack.c.l.b16 %v2740
        %v3224 = vunpack.c.l.b16 %v2741
        %v3225 = vunpack.c.l.b16 %v2742
        %v3226 = vunpack.c.l.b16 %v2743
        %v3227 = vunpack.c.l.b16 %v2744
        %v3228 = vunpack.c.l.b16 %v2745
        %v3229 = vunpack.c.l.b16 %v2746
        %v3230 = vunpack.c.l.b16 %v2747
        %v3231 = vunpack.c.l.b16 %v2748
        %v3232 = vunpack.c.l.b16 %v2749
        %v3233 = vunpack.c.l.b16 %v2750
        %v3234 = vunpack.c.l.b16 %v2751
        %v3235 = vunpack.c.l.b16 %v2752
        %v3236 = vunpack.c.l.b16 %v2753
        %v3237 = vunpack.c.l.b16 %v2754
        %v3238 = vunpack.c.l.b16 %v2755
        %v3239 = vunpack.c.l.b16 %v2756
        %v3240 = vunpack.c.l.b16 %v2757
        %v3241 = vunpack.c.l.b16 %v2758
        %v3242 = vunpack.c.l.b16 %v2759
        %v3243 = vunpack.c.l.b16 %v2760
        %v3244 = vunpack.c.l.b16 %v2761
        %v3245 = vunpack.c.l.b16 %v2762
        %v3246 = vunpack.c.l.b16 %v2763
        %v3247 = vunpack.c.l.b16 %v2764
        %v3248 = vunpack.c.l.b16 %v2765
        %v3249 = vunpack.c.l.b16 %v2766
        %v3250 = vunpack.c.l.b16 %v2767
        %v3251 = vunpack.c.l.b16 %v2768
        %v3252 = vunpack.c.l.b16 %v2769
        %v3253 = vpack.c.b16 %v3222, %v3221
        %v3254 = vpack.c.b16 %v3224, %v3223
        %v3255 = vpack.c.b16 %v3226, %v3225
        %v3256 = vpack.c.b16 %v3228, %v3227
        %v3257 = vpack.c.b16 %v3230, %v3229
        %v3258 = vpack.c.b16 %v3232, %v3231
        %v3259 = vpack.c.b16 %v3234, %v3233
        %v3260 = vpack.c.b16 %v3236, %v3235
        %v3261 = vpack.c.b16 %v3238, %v3237
        %v3262 = vpack.c.b16 %v3240, %v3239
        %v3263 = vpack.c.b16 %v3242, %v3241
        %v3264 = vpack.c.b16 %v3244, %v3243
        %v3265 = vpack.c.b16 %v3246, %v3245
        %v3266 = vpack.c.b16 %v3248, %v3247
        %v3267 = vpack.c.b16 %v3250, %v3249
        %v3268 = vpack.c.b16 %v3252, %v3251
        %3285 = vmatprep.subr.bf16.mxu0 0
        %3286 = vmatpush1.bf16.msra.mxu0 %v3253
        %3287 = vmatprep.subr.bf16.mxu0 0
        %3288 = vmatpush1.bf16.msra.mxu0 %v3254
        %3289 = vmatprep.subr.bf16.mxu0 0
        %3290 = vmatpush1.bf16.msra.mxu0 %v3255
        %3291 = vmatprep.subr.bf16.mxu0 0
        %3292 = vmatpush1.bf16.msra.mxu0 %v3256
        %3293 = vmatprep.subr.bf16.mxu0 0
        %3294 = vmatpush1.bf16.msra.mxu0 %v3257
        %3295 = vmatprep.subr.bf16.mxu0 0
        %3296 = vmatpush1.bf16.msra.mxu0 %v3258
        %3297 = vmatprep.subr.bf16.mxu0 0
        %3298 = vmatpush1.bf16.msra.mxu0 %v3259
        %3299 = vmatprep.subr.bf16.mxu0 0
        %3300 = vmatpush1.bf16.msra.mxu0 %v3260
        %3301 = vmatprep.subr.bf16.mxu0 0
        %3302 = vmatpush1.bf16.msra.mxu0 %v3261
        %3303 = vmatprep.subr.bf16.mxu0 0
        %3304 = vmatpush1.bf16.msra.mxu0 %v3262
        %3305 = vmatprep.subr.bf16.mxu0 0
        %3306 = vmatpush1.bf16.msra.mxu0 %v3263
        %3307 = vmatprep.subr.bf16.mxu0 0
        %3308 = vmatpush1.bf16.msra.mxu0 %v3264
        %3309 = vmatprep.subr.bf16.mxu0 0
        %3310 = vmatpush1.bf16.msra.mxu0 %v3265
        %3311 = vmatprep.subr.bf16.mxu0 0
        %3312 = vmatpush1.bf16.msra.mxu0 %v3266
        %3313 = vmatprep.subr.bf16.mxu0 0
        %3314 = vmatpush1.bf16.msra.mxu0 %v3267
        %3315 = vmatprep.subr.bf16.mxu0 0
        %3316 = vmatpush1.bf16.msra.mxu0 %v3268
        %3317 = vmatprep.mubr.bf16.mxu0 %v3182
        %3318 = vmatmul.mubr.bf16.gmra.mrb[0].mxu0 %v3181
        %v3319 = vpop.f32.mrb[0].mxu0
        %v3320 = vadd.f32 0.0, %v3319
        %v3321 = vpop.f32.mrb[0].mxu0
        %v3322 = vpop.f32.mrb[0].mxu0
        %v3323 = vadd.f32 0.0, %v3322
        %v3324 = vpop.f32.mrb[0].mxu0
        %3325 = vmatprep.mubr.bf16.mxu0 %v3184
        %3326 = vmatmul.mubr.bf16.gmra.mrb[0].mxu0 %v3183
        %v3327 = vpop.f32.mrb[0].mxu0
        %v3328 = vadd.f32 0.0, %v3327
        %v3329 = vpop.f32.mrb[0].mxu0
        %v3330 = vpop.f32.mrb[0].mxu0
        %v3331 = vadd.f32 0.0, %v3330
        %v3332 = vpop.f32.mrb[0].mxu0
        %3333 = vmatprep.mubr.bf16.mxu0 %v3186
        %3334 = vmatmul.mubr.bf16.gmra.mrb[0].mxu0 %v3185
        %v3335 = vpop.f32.mrb[0].mxu0
        %v3336 = vadd.f32 0.0, %v3335
        %v3337 = vpop.f32.mrb[0].mxu0
        %v3338 = vpop.f32.mrb[0].mxu0
        %v3339 = vadd.f32 0.0, %v3338
        %v3340 = vpop.f32.mrb[0].mxu0
        %3341 = vmatprep.mubr.bf16.mxu0 %v3188
        %3342 = vmatmul.mubr.bf16.gmra.mrb[0].mxu0 %v3187
        %v3343 = vpop.f32.mrb[0].mxu0
        %v3344 = vadd.f32 0.0, %v3343
        %v3345 = vpop.f32.mrb[0].mxu0
        %v3346 = vpop.f32.mrb[0].mxu0
        %v3347 = vadd.f32 0.0, %v3346
        %v3348 = vpop.f32.mrb[0].mxu0
        %3349 = vdwg.mxu0
        %v3382 = vunpack.c.l.b16 %v2672
        %v3383 = vunpack.c.l.b16 %v2673
        %v3384 = vunpack.c.l.b16 %v2674
        %v3385 = vunpack.c.l.b16 %v2675
        %v3386 = vunpack.c.l.b16 %v2676
        %v3387 = vunpack.c.l.b16 %v2677
        %v3388 = vunpack.c.l.b16 %v2678
        %v3389 = vunpack.c.l.b16 %v2679
        %v3390 = vunpack.c.l.b16 %v2680
        %v3391 = vunpack.c.l.b16 %v2681
        %v3392 = vunpack.c.l.b16 %v2682
        %v3393 = vunpack.c.l.b16 %v2683
        %v3394 = vunpack.c.l.b16 %v2684
        %v3395 = vunpack.c.l.b16 %v2685
        %v3396 = vunpack.c.l.b16 %v2686
        %v3397 = vunpack.c.l.b16 %v2687
        %v3398 = vunpack.c.l.b16 %v2688
        %v3399 = vunpack.c.l.b16 %v2689
        %v3400 = vunpack.c.l.b16 %v2690
        %v3401 = vunpack.c.l.b16 %v2691
        %v3402 = vunpack.c.l.b16 %v2692
        %v3403 = vunpack.c.l.b16 %v2693
        %v3404 = vunpack.c.l.b16 %v2694
        %v3405 = vunpack.c.l.b16 %v2695
        %v3406 = vunpack.c.l.b16 %v2696
        %v3407 = vunpack.c.l.b16 %v2697
        %v3408 = vunpack.c.l.b16 %v2698
        %v3409 = vunpack.c.l.b16 %v2699
        %v3410 = vunpack.c.l.b16 %v2700
        %v3411 = vunpack.c.l.b16 %v2701
        %v3412 = vunpack.c.l.b16 %v2702
        %v3413 = vunpack.c.l.b16 %v2703
        %v3414 = vpack.c.b16 %v3383, %v3382
        %v3415 = vpack.c.b16 %v3385, %v3384
        %v3416 = vpack.c.b16 %v3387, %v3386
        %v3417 = vpack.c.b16 %v3389, %v3388
        %v3418 = vpack.c.b16 %v3391, %v3390
        %v3419 = vpack.c.b16 %v3393, %v3392
        %v3420 = vpack.c.b16 %v3395, %v3394
        %v3421 = vpack.c.b16 %v3397, %v3396
        %v3422 = vpack.c.b16 %v3399, %v3398
        %v3423 = vpack.c.b16 %v3401, %v3400
        %v3424 = vpack.c.b16 %v3403, %v3402
        %v3425 = vpack.c.b16 %v3405, %v3404
        %v3426 = vpack.c.b16 %v3407, %v3406
        %v3427 = vpack.c.b16 %v3409, %v3408
        %v3428 = vpack.c.b16 %v3411, %v3410
        %v3429 = vpack.c.b16 %v3413, %v3412
        %v3431 = vsel %vm976, %v3414, 0
        %v3434 = vsel %vm976, %v3415, 0
        %v3437 = vsel %vm976, %v3416, 0
        %v3440 = vsel %vm976, %v3417, 0
        %v3443 = vsel %vm976, %v3418, 0
        %v3446 = vsel %vm976, %v3419, 0
        %v3449 = vsel %vm976, %v3420, 0
        %v3452 = vsel %vm976, %v3421, 0
        %v3455 = vsel %vm976, %v3422, 0
        %v3458 = vsel %vm976, %v3423, 0
        %v3461 = vsel %vm976, %v3424, 0
        %v3464 = vsel %vm976, %v3425, 0
        %v3467 = vsel %vm976, %v3426, 0
        %v3470 = vsel %vm976, %v3427, 0
        %v3473 = vsel %vm976, %v3428, 0
        %v3476 = vsel %vm976, %v3429, 0
        %3478 = vmatprep.subr.bf16.mxu0 0
        %3479 = vmatpush1.bf16.xpose.msra.mxu0 %v2880
        %3480 = vmatprep.subr.bf16.mxu0 0
        %3481 = vmatpush1.bf16.xpose.msra.mxu0 %v2883
        %3482 = vmatprep.subr.bf16.mxu0 0
        %3483 = vmatpush1.bf16.xpose.msra.mxu0 %v2886
        %3484 = vmatprep.subr.bf16.mxu0 0
        %3485 = vmatpush1.bf16.xpose.msra.mxu0 %v2889
        %3486 = vmatprep.subr.bf16.mxu0 0
        %3487 = vmatpush1.bf16.xpose.msra.mxu0 0
        %3488 = vmatprep.subr.bf16.mxu0 0
        %3489 = vmatpush1.bf16.xpose.msra.mxu0 0
        %3490 = vmatprep.subr.bf16.mxu0 0
        %3491 = vmatpush1.bf16.xpose.msra.mxu0 0
        %3492 = vmatprep.subr.bf16.mxu0 0
        %3493 = vmatpush1.bf16.xpose.msra.mxu0 0
        %3494 = vmatprep.subr.bf16.mxu0 0
        %3495 = vmatpush1.bf16.xpose.msra.mxu0 0
        %3496 = vmatprep.subr.bf16.mxu0 0
        %3497 = vmatpush1.bf16.xpose.msra.mxu0 0
        %3498 = vmatprep.subr.bf16.mxu0 0
        %3499 = vmatpush1.bf16.xpose.msra.mxu0 0
        %3500 = vmatprep.subr.bf16.mxu0 0
        %3501 = vmatpush1.bf16.xpose.msra.mxu0 0
        %3502 = vmatprep.subr.bf16.mxu0 0
        %3503 = vmatpush1.bf16.xpose.msra.mxu0 0
        %3504 = vmatprep.subr.bf16.mxu0 0
        %3505 = vmatpush1.bf16.xpose.msra.mxu0 0
        %3506 = vmatprep.subr.bf16.mxu0 0
        %3507 = vmatpush1.bf16.xpose.msra.mxu0 0
        %3508 = vmatprep.subr.bf16.mxu0 0
        %3509 = vmatpush1.bf16.xpose.msra.mxu0 0
        %3510 = vmatprep.mubr.bf16.mxu0 0
        %3511 = vmatmul.mubr.bf16.gmra.mrb[0].mxu0 %v3431
        %v3512 = vpop.f32.mrb[0].mxu0
        %v3513 = vadd.f32 0.0, %v3512
        %v3514 = vpop.f32.mrb[0].mxu0
        %v3515 = vpop.f32.mrb[0].mxu0
        %v3516 = vadd.f32 0.0, %v3515
        %v3517 = vpop.f32.mrb[0].mxu0
        %3518 = vmatprep.mubr.bf16.mxu0 0
        %3519 = vmatmul.mubr.bf16.gmra.mrb[0].mxu0 %v3434
        %v3520 = vpop.f32.mrb[0].mxu0
        %v3521 = vadd.f32 0.0, %v3520
        %v3522 = vpop.f32.mrb[0].mxu0
        %v3523 = vpop.f32.mrb[0].mxu0
        %v3524 = vadd.f32 0.0, %v3523
        %v3525 = vpop.f32.mrb[0].mxu0
        %3526 = vmatprep.mubr.bf16.mxu0 0
        %3527 = vmatmul.mubr.bf16.gmra.mrb[0].mxu0 %v3437
        %v3528 = vpop.f32.mrb[0].mxu0
        %v3529 = vadd.f32 0.0, %v3528
        %v3530 = vpop.f32.mrb[0].mxu0
        %v3531 = vpop.f32.mrb[0].mxu0
        %v3532 = vadd.f32 0.0, %v3531
        %v3533 = vpop.f32.mrb[0].mxu0
        %3534 = vmatprep.mubr.bf16.mxu0 0
        %3535 = vmatmul.mubr.bf16.gmra.mrb[0].mxu0 %v3440
        %v3536 = vpop.f32.mrb[0].mxu0
        %v3537 = vadd.f32 0.0, %v3536
        %v3538 = vpop.f32.mrb[0].mxu0
        %v3539 = vpop.f32.mrb[0].mxu0
        %v3540 = vadd.f32 0.0, %v3539
        %v3541 = vpop.f32.mrb[0].mxu0
        %3542 = vmatprep.mubr.bf16.mxu0 0
        %3543 = vmatmul.mubr.bf16.gmra.mrb[0].mxu0 %v3443
        %v3544 = vpop.f32.mrb[0].mxu0
        %v3545 = vadd.f32 0.0, %v3544
        %v3546 = vpop.f32.mrb[0].mxu0
        %v3547 = vpop.f32.mrb[0].mxu0
        %v3548 = vadd.f32 0.0, %v3547
        %v3549 = vpop.f32.mrb[0].mxu0
        %3550 = vmatprep.mubr.bf16.mxu0 0
        %3551 = vmatmul.mubr.bf16.gmra.mrb[0].mxu0 %v3446
        %v3552 = vpop.f32.mrb[0].mxu0
        %v3553 = vadd.f32 0.0, %v3552
        %v3554 = vpop.f32.mrb[0].mxu0
        %v3555 = vpop.f32.mrb[0].mxu0
        %v3556 = vadd.f32 0.0, %v3555
        %v3557 = vpop.f32.mrb[0].mxu0
        %3558 = vmatprep.mubr.bf16.mxu0 0
        %3559 = vmatmul.mubr.bf16.gmra.mrb[0].mxu0 %v3449
        %v3560 = vpop.f32.mrb[0].mxu0
        %v3561 = vadd.f32 0.0, %v3560
        %v3562 = vpop.f32.mrb[0].mxu0
        %v3563 = vpop.f32.mrb[0].mxu0
        %v3564 = vadd.f32 0.0, %v3563
        %v3565 = vpop.f32.mrb[0].mxu0
        %3566 = vmatprep.mubr.bf16.mxu0 0
        %3567 = vmatmul.mubr.bf16.gmra.mrb[0].mxu0 %v3452
        %v3568 = vpop.f32.mrb[0].mxu0
        %v3569 = vadd.f32 0.0, %v3568
        %v3570 = vpop.f32.mrb[0].mxu0
        %v3571 = vpop.f32.mrb[0].mxu0
        %v3572 = vadd.f32 0.0, %v3571
        %v3573 = vpop.f32.mrb[0].mxu0
        %3574 = vmatprep.mubr.bf16.mxu0 0
        %3575 = vmatmul.mubr.bf16.gmra.mrb[0].mxu0 %v3455
        %v3576 = vpop.f32.mrb[0].mxu0
        %v3577 = vadd.f32 0.0, %v3576
        %v3578 = vpop.f32.mrb[0].mxu0
        %v3579 = vpop.f32.mrb[0].mxu0
        %v3580 = vadd.f32 0.0, %v3579
        %v3581 = vpop.f32.mrb[0].mxu0
        %3582 = vmatprep.mubr.bf16.mxu0 0
        %3583 = vmatmul.mubr.bf16.gmra.mrb[0].mxu0 %v3458
        %v3584 = vpop.f32.mrb[0].mxu0
        %v3585 = vadd.f32 0.0, %v3584
        %v3586 = vpop.f32.mrb[0].mxu0
        %v3587 = vpop.f32.mrb[0].mxu0
        %v3588 = vadd.f32 0.0, %v3587
        %v3589 = vpop.f32.mrb[0].mxu0
        %3590 = vmatprep.mubr.bf16.mxu0 0
        %3591 = vmatmul.mubr.bf16.gmra.mrb[0].mxu0 %v3461
        %v3592 = vpop.f32.mrb[0].mxu0
        %v3593 = vadd.f32 0.0, %v3592
        %v3594 = vpop.f32.mrb[0].mxu0
        %v3595 = vpop.f32.mrb[0].mxu0
        %v3596 = vadd.f32 0.0, %v3595
        %v3597 = vpop.f32.mrb[0].mxu0
        %3598 = vmatprep.mubr.bf16.mxu0 0
        %3599 = vmatmul.mubr.bf16.gmra.mrb[0].mxu0 %v3464
        %v3600 = vpop.f32.mrb[0].mxu0
        %v3601 = vadd.f32 0.0, %v3600
        %v3602 = vpop.f32.mrb[0].mxu0
        %v3603 = vpop.f32.mrb[0].mxu0
        %v3604 = vadd.f32 0.0, %v3603
        %v3605 = vpop.f32.mrb[0].mxu0
        %3606 = vmatprep.mubr.bf16.mxu0 0
        %3607 = vmatmul.mubr.bf16.gmra.mrb[0].mxu0 %v3467
        %v3608 = vpop.f32.mrb[0].mxu0
        %v3609 = vadd.f32 0.0, %v3608
        %v3610 = vpop.f32.mrb[0].mxu0
        %v3611 = vpop.f32.mrb[0].mxu0
        %v3612 = vadd.f32 0.0, %v3611
        %v3613 = vpop.f32.mrb[0].mxu0
        %3614 = vmatprep.mubr.bf16.mxu0 0
        %3615 = vmatmul.mubr.bf16.gmra.mrb[0].mxu0 %v3470
        %v3616 = vpop.f32.mrb[0].mxu0
        %v3617 = vadd.f32 0.0, %v3616
        %v3618 = vpop.f32.mrb[0].mxu0
        %v3619 = vpop.f32.mrb[0].mxu0
        %v3620 = vadd.f32 0.0, %v3619
        %v3621 = vpop.f32.mrb[0].mxu0
        %3622 = vmatprep.mubr.bf16.mxu0 0
        %3623 = vmatmul.mubr.bf16.gmra.mrb[0].mxu0 %v3473
        %v3624 = vpop.f32.mrb[0].mxu0
        %v3625 = vadd.f32 0.0, %v3624
        %v3626 = vpop.f32.mrb[0].mxu0
        %v3627 = vpop.f32.mrb[0].mxu0
        %v3628 = vadd.f32 0.0, %v3627
        %v3629 = vpop.f32.mrb[0].mxu0
        %3630 = vmatprep.mubr.bf16.mxu0 0
        %3631 = vmatmul.mubr.bf16.gmra.mrb[0].mxu0 %v3476
        %v3632 = vpop.f32.mrb[0].mxu0
        %v3633 = vadd.f32 0.0, %v3632
        %v3634 = vpop.f32.mrb[0].mxu0
        %v3635 = vpop.f32.mrb[0].mxu0
        %v3636 = vadd.f32 0.0, %v3635
        %v3637 = vpop.f32.mrb[0].mxu0
        %3638 = vdwg.mxu0
        %v3639 = vmul.f32 %v3513, 0.17677669
        %v3640 = vmul.f32 %v3516, 0.17677669
        %v3641 = vmul.f32 %v3521, 0.17677669
        %v3642 = vmul.f32 %v3524, 0.17677669
        %v3643 = vmul.f32 %v3529, 0.17677669
        %v3644 = vmul.f32 %v3532, 0.17677669
        %v3645 = vmul.f32 %v3537, 0.17677669
        %v3646 = vmul.f32 %v3540, 0.17677669
        %v3647 = vmul.f32 %v3545, 0.17677669
        %v3648 = vmul.f32 %v3548, 0.17677669
        %v3649 = vmul.f32 %v3553, 0.17677669
        %v3650 = vmul.f32 %v3556, 0.17677669
        %v3651 = vmul.f32 %v3561, 0.17677669
        %v3652 = vmul.f32 %v3564, 0.17677669
        %v3653 = vmul.f32 %v3569, 0.17677669
        %v3654 = vmul.f32 %v3572, 0.17677669
        %v3655 = vmul.f32 %v3577, 0.17677669
        %v3656 = vmul.f32 %v3580, 0.17677669
        %v3657 = vmul.f32 %v3585, 0.17677669
        %v3658 = vmul.f32 %v3588, 0.17677669
        %v3659 = vmul.f32 %v3593, 0.17677669
        %v3660 = vmul.f32 %v3596, 0.17677669
        %v3661 = vmul.f32 %v3601, 0.17677669
        %v3662 = vmul.f32 %v3604, 0.17677669
        %v3663 = vmul.f32 %v3609, 0.17677669
        %v3664 = vmul.f32 %v3612, 0.17677669
        %v3665 = vmul.f32 %v3617, 0.17677669
        %v3666 = vmul.f32 %v3620, 0.17677669
        %v3667 = vmul.f32 %v3625, 0.17677669
        %v3668 = vmul.f32 %v3628, 0.17677669
        %v3669 = vmul.f32 %v3633, 0.17677669
        %v3670 = vmul.f32 %v3636, 0.17677669
        %s3671 = scalar_lea.vmem %s5, 256
        %v3672 = vld [vmem:[%s3671] sm:$0xff]
        %v3673 = vld [vmem:[%s3671 + $0x8] sm:$0xff]
        %v3674 = vld [vmem:[%s3671 + $0x10] sm:$0xff]
        %v3675 = vld [vmem:[%s3671 + $0x18] sm:$0xff]
        %v3676 = vld [vmem:[%s3671 + $0x20] sm:$0xff]
        %v3677 = vld [vmem:[%s3671 + $0x28] sm:$0xff]
        %v3678 = vld [vmem:[%s3671 + $0x30] sm:$0xff]
        %v3679 = vld [vmem:[%s3671 + $0x38] sm:$0xff]
        %v3680 = vld [vmem:[%s3671 + $0x40] sm:$0xff]
        %v3681 = vld [vmem:[%s3671 + $0x48] sm:$0xff]
        %v3682 = vld [vmem:[%s3671 + $0x50] sm:$0xff]
        %v3683 = vld [vmem:[%s3671 + $0x58] sm:$0xff]
        %v3684 = vld [vmem:[%s3671 + $0x60] sm:$0xff]
        %v3685 = vld [vmem:[%s3671 + $0x68] sm:$0xff]
        %v3686 = vld [vmem:[%s3671 + $0x70] sm:$0xff]
        %v3687 = vld [vmem:[%s3671 + $0x78] sm:$0xff]
        %v3688 = vld [vmem:[%s3671 + $0x80] sm:$0xff]
        %v3689 = vld [vmem:[%s3671 + $0x88] sm:$0xff]
        %v3690 = vld [vmem:[%s3671 + $0x90] sm:$0xff]
        %v3691 = vld [vmem:[%s3671 + $0x98] sm:$0xff]
        %v3692 = vld [vmem:[%s3671 + $0xa0] sm:$0xff]
        %v3693 = vld [vmem:[%s3671 + $0xa8] sm:$0xff]
        %v3694 = vld [vmem:[%s3671 + $0xb0] sm:$0xff]
        %v3695 = vld [vmem:[%s3671 + $0xb8] sm:$0xff]
        %v3696 = vld [vmem:[%s3671 + $0xc0] sm:$0xff]
        %v3697 = vld [vmem:[%s3671 + $0xc8] sm:$0xff]
        %v3698 = vld [vmem:[%s3671 + $0xd0] sm:$0xff]
        %v3699 = vld [vmem:[%s3671 + $0xd8] sm:$0xff]
        %v3700 = vld [vmem:[%s3671 + $0xe0] sm:$0xff]
        %v3701 = vld [vmem:[%s3671 + $0xe8] sm:$0xff]
        %v3702 = vld [vmem:[%s3671 + $0xf0] sm:$0xff]
        %v3703 = vld [vmem:[%s3671 + $0xf8] sm:$0xff]
        %v3704 = vadd.f32 %v3639, %v3672
        %v3705 = vadd.f32 %v3640, %v3673
        %v3706 = vadd.f32 %v3641, %v3674
        %v3707 = vadd.f32 %v3642, %v3675
        %v3708 = vadd.f32 %v3643, %v3676
        %v3709 = vadd.f32 %v3644, %v3677
        %v3710 = vadd.f32 %v3645, %v3678
        %v3711 = vadd.f32 %v3646, %v3679
        %v3712 = vadd.f32 %v3647, %v3680
        %v3713 = vadd.f32 %v3648, %v3681
        %v3714 = vadd.f32 %v3649, %v3682
        %v3715 = vadd.f32 %v3650, %v3683
        %v3716 = vadd.f32 %v3651, %v3684
        %v3717 = vadd.f32 %v3652, %v3685
        %v3718 = vadd.f32 %v3653, %v3686
        %v3719 = vadd.f32 %v3654, %v3687
        %v3720 = vadd.f32 %v3655, %v3688
        %v3721 = vadd.f32 %v3656, %v3689
        %v3722 = vadd.f32 %v3657, %v3690
        %v3723 = vadd.f32 %v3658, %v3691
        %v3724 = vadd.f32 %v3659, %v3692
        %v3725 = vadd.f32 %v3660, %v3693
        %v3726 = vadd.f32 %v3661, %v3694
        %v3727 = vadd.f32 %v3662, %v3695
        %v3728 = vadd.f32 %v3663, %v3696
        %v3729 = vadd.f32 %v3664, %v3697
        %v3730 = vadd.f32 %v3665, %v3698
        %v3731 = vadd.f32 %v3666, %v3699
        %v3732 = vadd.f32 %v3667, %v3700
        %v3733 = vadd.f32 %v3668, %v3701
        %v3734 = vadd.f32 %v3669, %v3702
        %v3735 = vadd.f32 %v3670, %v3703
        %v3736 = vsel %vm1832, %v3704, -inf
        %3737 = vmax.xlane.f32.xlu0 %v3736
        %v3738 = vpop.xlane.xlu0 %3737
        %v3739 = vsel %vm1832, %v3705, -inf
        %3740 = vmax.xlane.f32.xlu0 %v3739
        %v3741 = vpop.xlane.xlu0 %3740
        %v3742 = vsel %vm1832, %v3706, -inf
        %3743 = vmax.xlane.f32.xlu0 %v3742
        %v3744 = vpop.xlane.xlu0 %3743
        %v3745 = vsel %vm1832, %v3707, -inf
        %3746 = vmax.xlane.f32.xlu0 %v3745
        %v3747 = vpop.xlane.xlu0 %3746
        %v3748 = vsel %vm1832, %v3708, -inf
        %3749 = vmax.xlane.f32.xlu0 %v3748
        %v3750 = vpop.xlane.xlu0 %3749
        %v3751 = vsel %vm1832, %v3709, -inf
        %3752 = vmax.xlane.f32.xlu0 %v3751
        %v3753 = vpop.xlane.xlu0 %3752
        %v3754 = vsel %vm1832, %v3710, -inf
        %3755 = vmax.xlane.f32.xlu0 %v3754
        %v3756 = vpop.xlane.xlu0 %3755
        %v3757 = vsel %vm1832, %v3711, -inf
        %3758 = vmax.xlane.f32.xlu0 %v3757
        %v3759 = vpop.xlane.xlu0 %3758
        %v3760 = vsel %vm1832, %v3712, -inf
        %3761 = vmax.xlane.f32.xlu0 %v3760
        %v3762 = vpop.xlane.xlu0 %3761
        %v3763 = vsel %vm1832, %v3713, -inf
        %3764 = vmax.xlane.f32.xlu0 %v3763
        %v3765 = vpop.xlane.xlu0 %3764
        %v3766 = vsel %vm1832, %v3714, -inf
        %3767 = vmax.xlane.f32.xlu0 %v3766
        %v3768 = vpop.xlane.xlu0 %3767
        %v3769 = vsel %vm1832, %v3715, -inf
        %3770 = vmax.xlane.f32.xlu0 %v3769
        %v3771 = vpop.xlane.xlu0 %3770
        %v3772 = vsel %vm1832, %v3716, -inf
        %3773 = vmax.xlane.f32.xlu0 %v3772
        %v3774 = vpop.xlane.xlu0 %3773
        %v3775 = vsel %vm1832, %v3717, -inf
        %3776 = vmax.xlane.f32.xlu0 %v3775
        %v3777 = vpop.xlane.xlu0 %3776
        %v3778 = vsel %vm1832, %v3718, -inf
        %3779 = vmax.xlane.f32.xlu0 %v3778
        %v3780 = vpop.xlane.xlu0 %3779
        %v3781 = vsel %vm1832, %v3719, -inf
        %3782 = vmax.xlane.f32.xlu0 %v3781
        %v3783 = vpop.xlane.xlu0 %3782
        %v3784 = vsel %vm1832, %v3720, -inf
        %3785 = vmax.xlane.f32.xlu0 %v3784
        %v3786 = vpop.xlane.xlu0 %3785
        %v3787 = vsel %vm1832, %v3721, -inf
        %3788 = vmax.xlane.f32.xlu0 %v3787
        %v3789 = vpop.xlane.xlu0 %3788
        %v3790 = vsel %vm1832, %v3722, -inf
        %3791 = vmax.xlane.f32.xlu0 %v3790
        %v3792 = vpop.xlane.xlu0 %3791
        %v3793 = vsel %vm1832, %v3723, -inf
        %3794 = vmax.xlane.f32.xlu0 %v3793
        %v3795 = vpop.xlane.xlu0 %3794
        %v3796 = vsel %vm1832, %v3724, -inf
        %3797 = vmax.xlane.f32.xlu0 %v3796
        %v3798 = vpop.xlane.xlu0 %3797
        %v3799 = vsel %vm1832, %v3725, -inf
        %3800 = vmax.xlane.f32.xlu0 %v3799
        %v3801 = vpop.xlane.xlu0 %3800
        %v3802 = vsel %vm1832, %v3726, -inf
        %3803 = vmax.xlane.f32.xlu0 %v3802
        %v3804 = vpop.xlane.xlu0 %3803
        %v3805 = vsel %vm1832, %v3727, -inf
        %3806 = vmax.xlane.f32.xlu0 %v3805
        %v3807 = vpop.xlane.xlu0 %3806
        %v3808 = vsel %vm1832, %v3728, -inf
        %3809 = vmax.xlane.f32.xlu0 %v3808
        %v3810 = vpop.xlane.xlu0 %3809
        %v3811 = vsel %vm1832, %v3729, -inf
        %3812 = vmax.xlane.f32.xlu0 %v3811
        %v3813 = vpop.xlane.xlu0 %3812
        %v3814 = vsel %vm1832, %v3730, -inf
        %3815 = vmax.xlane.f32.xlu0 %v3814
        %v3816 = vpop.xlane.xlu0 %3815
        %v3817 = vsel %vm1832, %v3731, -inf
        %3818 = vmax.xlane.f32.xlu0 %v3817
        %v3819 = vpop.xlane.xlu0 %3818
        %v3820 = vsel %vm1832, %v3732, -inf
        %3821 = vmax.xlane.f32.xlu0 %v3820
        %v3822 = vpop.xlane.xlu0 %3821
        %v3823 = vsel %vm1832, %v3733, -inf
        %3824 = vmax.xlane.f32.xlu0 %v3823
        %v3825 = vpop.xlane.xlu0 %3824
        %v3826 = vsel %vm1832, %v3734, -inf
        %3827 = vmax.xlane.f32.xlu0 %v3826
        %v3828 = vpop.xlane.xlu0 %3827
        %v3829 = vsel %vm1832, %v3735, -inf
        %3830 = vmax.xlane.f32.xlu0 %v3829
        %v3831 = vpop.xlane.xlu0 %3830
        %v3832 = vsub.f32 %v3704, %v3738
        %v3833 = vsub.f32 %v3705, %v3741
        %v3834 = vsub.f32 %v3706, %v3744
        %v3835 = vsub.f32 %v3707, %v3747
        %v3836 = vsub.f32 %v3708, %v3750
        %v3837 = vsub.f32 %v3709, %v3753
        %v3838 = vsub.f32 %v3710, %v3756
        %v3839 = vsub.f32 %v3711, %v3759
        %v3840 = vsub.f32 %v3712, %v3762
        %v3841 = vsub.f32 %v3713, %v3765
        %v3842 = vsub.f32 %v3714, %v3768
        %v3843 = vsub.f32 %v3715, %v3771
        %v3844 = vsub.f32 %v3716, %v3774
        %v3845 = vsub.f32 %v3717, %v3777
        %v3846 = vsub.f32 %v3718, %v3780
        %v3847 = vsub.f32 %v3719, %v3783
        %v3848 = vsub.f32 %v3720, %v3786
        %v3849 = vsub.f32 %v3721, %v3789
        %v3850 = vsub.f32 %v3722, %v3792
        %v3851 = vsub.f32 %v3723, %v3795
        %v3852 = vsub.f32 %v3724, %v3798
        %v3853 = vsub.f32 %v3725, %v3801
        %v3854 = vsub.f32 %v3726, %v3804
        %v3855 = vsub.f32 %v3727, %v3807
        %v3856 = vsub.f32 %v3728, %v3810
        %v3857 = vsub.f32 %v3729, %v3813
        %v3858 = vsub.f32 %v3730, %v3816
        %v3859 = vsub.f32 %v3731, %v3819
        %v3860 = vsub.f32 %v3732, %v3822
        %v3861 = vsub.f32 %v3733, %v3825
        %v3862 = vsub.f32 %v3734, %v3828
        %v3863 = vsub.f32 %v3735, %v3831
        %v3864 = vmul.f32 %v3832, 1.442695
        %v3865 = vpow.pop %v3864
        %v3866 = vmul.f32 %v3833, 1.442695
        %v3867 = vpow.pop %v3866
        %v3868 = vmul.f32 %v3834, 1.442695
        %v3869 = vpow.pop %v3868
        %v3870 = vmul.f32 %v3835, 1.442695
        %v3871 = vpow.pop %v3870
        %v3872 = vmul.f32 %v3836, 1.442695
        %v3873 = vpow.pop %v3872
        %v3874 = vmul.f32 %v3837, 1.442695
        %v3875 = vpow.pop %v3874
        %v3876 = vmul.f32 %v3838, 1.442695
        %v3877 = vpow.pop %v3876
        %v3878 = vmul.f32 %v3839, 1.442695
        %v3879 = vpow.pop %v3878
        %v3880 = vmul.f32 %v3840, 1.442695
        %v3881 = vpow.pop %v3880
        %v3882 = vmul.f32 %v3841, 1.442695
        %v3883 = vpow.pop %v3882
        %v3884 = vmul.f32 %v3842, 1.442695
        %v3885 = vpow.pop %v3884
        %v3886 = vmul.f32 %v3843, 1.442695
        %v3887 = vpow.pop %v3886
        %v3888 = vmul.f32 %v3844, 1.442695
        %v3889 = vpow.pop %v3888
        %v3890 = vmul.f32 %v3845, 1.442695
        %v3891 = vpow.pop %v3890
        %v3892 = vmul.f32 %v3846, 1.442695
        %v3893 = vpow.pop %v3892
        %v3894 = vmul.f32 %v3847, 1.442695
        %v3895 = vpow.pop %v3894
        %v3896 = vmul.f32 %v3848, 1.442695
        %v3897 = vpow.pop %v3896
        %v3898 = vmul.f32 %v3849, 1.442695
        %v3899 = vpow.pop %v3898
        %v3900 = vmul.f32 %v3850, 1.442695
        %v3901 = vpow.pop %v3900
        %v3902 = vmul.f32 %v3851, 1.442695
        %v3903 = vpow.pop %v3902
        %v3904 = vmul.f32 %v3852, 1.442695
        %v3905 = vpow.pop %v3904
        %v3906 = vmul.f32 %v3853, 1.442695
        %v3907 = vpow.pop %v3906
        %v3908 = vmul.f32 %v3854, 1.442695
        %v3909 = vpow.pop %v3908
        %v3910 = vmul.f32 %v3855, 1.442695
        %v3911 = vpow.pop %v3910
        %v3912 = vmul.f32 %v3856, 1.442695
        %v3913 = vpow.pop %v3912
        %v3914 = vmul.f32 %v3857, 1.442695
        %v3915 = vpow.pop %v3914
        %v3916 = vmul.f32 %v3858, 1.442695
        %v3917 = vpow.pop %v3916
        %v3918 = vmul.f32 %v3859, 1.442695
        %v3919 = vpow.pop %v3918
        %v3920 = vmul.f32 %v3860, 1.442695
        %v3921 = vpow.pop %v3920
        %v3922 = vmul.f32 %v3861, 1.442695
        %v3923 = vpow.pop %v3922
        %v3924 = vmul.f32 %v3862, 1.442695
        %v3925 = vpow.pop %v3924
        %v3926 = vmul.f32 %v3863, 1.442695
        %v3927 = vpow.pop %v3926
        %v3928 = vsel %vm1832, %v3865, 0.0
        %3929 = vadd.xlane.f32.xlu0 %v3928
        %v3930 = vpop.xlane.xlu0 %3929
        %v3931 = vsel %vm1832, %v3867, 0.0
        %3932 = vadd.xlane.f32.xlu0 %v3931
        %v3933 = vpop.xlane.xlu0 %3932
        %v3934 = vsel %vm1832, %v3869, 0.0
        %3935 = vadd.xlane.f32.xlu0 %v3934
        %v3936 = vpop.xlane.xlu0 %3935
        %v3937 = vsel %vm1832, %v3871, 0.0
        %3938 = vadd.xlane.f32.xlu0 %v3937
        %v3939 = vpop.xlane.xlu0 %3938
        %v3940 = vsel %vm1832, %v3873, 0.0
        %3941 = vadd.xlane.f32.xlu0 %v3940
        %v3942 = vpop.xlane.xlu0 %3941
        %v3943 = vsel %vm1832, %v3875, 0.0
        %3944 = vadd.xlane.f32.xlu0 %v3943
        %v3945 = vpop.xlane.xlu0 %3944
        %v3946 = vsel %vm1832, %v3877, 0.0
        %3947 = vadd.xlane.f32.xlu0 %v3946
        %v3948 = vpop.xlane.xlu0 %3947
        %v3949 = vsel %vm1832, %v3879, 0.0
        %3950 = vadd.xlane.f32.xlu0 %v3949
        %v3951 = vpop.xlane.xlu0 %3950
        %v3952 = vsel %vm1832, %v3881, 0.0
        %3953 = vadd.xlane.f32.xlu0 %v3952
        %v3954 = vpop.xlane.xlu0 %3953
        %v3955 = vsel %vm1832, %v3883, 0.0
        %3956 = vadd.xlane.f32.xlu0 %v3955
        %v3957 = vpop.xlane.xlu0 %3956
        %v3958 = vsel %vm1832, %v3885, 0.0
        %3959 = vadd.xlane.f32.xlu0 %v3958
        %v3960 = vpop.xlane.xlu0 %3959
        %v3961 = vsel %vm1832, %v3887, 0.0
        %3962 = vadd.xlane.f32.xlu0 %v3961
        %v3963 = vpop.xlane.xlu0 %3962
        %v3964 = vsel %vm1832, %v3889, 0.0
        %3965 = vadd.xlane.f32.xlu0 %v3964
        %v3966 = vpop.xlane.xlu0 %3965
        %v3967 = vsel %vm1832, %v3891, 0.0
        %3968 = vadd.xlane.f32.xlu0 %v3967
        %v3969 = vpop.xlane.xlu0 %3968
        %v3970 = vsel %vm1832, %v3893, 0.0
        %3971 = vadd.xlane.f32.xlu0 %v3970
        %v3972 = vpop.xlane.xlu0 %3971
        %v3973 = vsel %vm1832, %v3895, 0.0
        %3974 = vadd.xlane.f32.xlu0 %v3973
        %v3975 = vpop.xlane.xlu0 %3974
        %v3976 = vsel %vm1832, %v3897, 0.0
        %3977 = vadd.xlane.f32.xlu0 %v3976
        %v3978 = vpop.xlane.xlu0 %3977
        %v3979 = vsel %vm1832, %v3899, 0.0
        %3980 = vadd.xlane.f32.xlu0 %v3979
        %v3981 = vpop.xlane.xlu0 %3980
        %v3982 = vsel %vm1832, %v3901, 0.0
        %3983 = vadd.xlane.f32.xlu0 %v3982
        %v3984 = vpop.xlane.xlu0 %3983
        %v3985 = vsel %vm1832, %v3903, 0.0
        %3986 = vadd.xlane.f32.xlu0 %v3985
        %v3987 = vpop.xlane.xlu0 %3986
        %v3988 = vsel %vm1832, %v3905, 0.0
        %3989 = vadd.xlane.f32.xlu0 %v3988
        %v3990 = vpop.xlane.xlu0 %3989
        %v3991 = vsel %vm1832, %v3907, 0.0
        %3992 = vadd.xlane.f32.xlu0 %v3991
        %v3993 = vpop.xlane.xlu0 %3992
        %v3994 = vsel %vm1832, %v3909, 0.0
        %3995 = vadd.xlane.f32.xlu0 %v3994
        %v3996 = vpop.xlane.xlu0 %3995
        %v3997 = vsel %vm1832, %v3911, 0.0
        %3998 = vadd.xlane.f32.xlu0 %v3997
        %v3999 = vpop.xlane.xlu0 %3998
        %v4000 = vsel %vm1832, %v3913, 0.0
        %4001 = vadd.xlane.f32.xlu0 %v4000
        %v4002 = vpop.xlane.xlu0 %4001
        %v4003 = vsel %vm1832, %v3915, 0.0
        %4004 = vadd.xlane.f32.xlu0 %v4003
        %v4005 = vpop.xlane.xlu0 %4004
        %v4006 = vsel %vm1832, %v3917, 0.0
        %4007 = vadd.xlane.f32.xlu0 %v4006
        %v4008 = vpop.xlane.xlu0 %4007
        %v4009 = vsel %vm1832, %v3919, 0.0
        %4010 = vadd.xlane.f32.xlu0 %v4009
        %v4011 = vpop.xlane.xlu0 %4010
        %v4012 = vsel %vm1832, %v3921, 0.0
        %4013 = vadd.xlane.f32.xlu0 %v4012
        %v4014 = vpop.xlane.xlu0 %4013
        %v4015 = vsel %vm1832, %v3923, 0.0
        %4016 = vadd.xlane.f32.xlu0 %v4015
        %v4017 = vpop.xlane.xlu0 %4016
        %v4018 = vsel %vm1832, %v3925, 0.0
        %4019 = vadd.xlane.f32.xlu0 %v4018
        %v4020 = vpop.xlane.xlu0 %4019
        %v4021 = vsel %vm1832, %v3927, 0.0
        %4022 = vadd.xlane.f32.xlu0 %v4021
        %v4023 = vpop.xlane.xlu0 %4022
        %v4024 = vrcp.pop %v3930
        %v4025 = vrcp.pop %v3933
        %v4026 = vrcp.pop %v3936
        %v4027 = vrcp.pop %v3939
        %v4028 = vrcp.pop %v3942
        %v4029 = vrcp.pop %v3945
        %v4030 = vrcp.pop %v3948
        %v4031 = vrcp.pop %v3951
        %v4032 = vrcp.pop %v3954
        %v4033 = vrcp.pop %v3957
        %v4034 = vrcp.pop %v3960
        %v4035 = vrcp.pop %v3963
        %v4036 = vrcp.pop %v3966
        %v4037 = vrcp.pop %v3969
        %v4038 = vrcp.pop %v3972
        %v4039 = vrcp.pop %v3975
        %v4040 = vrcp.pop %v3978
        %v4041 = vrcp.pop %v3981
        %v4042 = vrcp.pop %v3984
        %v4043 = vrcp.pop %v3987
        %v4044 = vrcp.pop %v3990
        %v4045 = vrcp.pop %v3993
        %v4046 = vrcp.pop %v3996
        %v4047 = vrcp.pop %v3999
        %v4048 = vrcp.pop %v4002
        %v4049 = vrcp.pop %v4005
        %v4050 = vrcp.pop %v4008
        %v4051 = vrcp.pop %v4011
        %v4052 = vrcp.pop %v4014
        %v4053 = vrcp.pop %v4017
        %v4054 = vrcp.pop %v4020
        %v4055 = vrcp.pop %v4023
        %v4056 = vmul.f32 %v3865, %v4024
        %v4057 = vmul.f32 %v3867, %v4025
        %v4058 = vmul.f32 %v3869, %v4026
        %v4059 = vmul.f32 %v3871, %v4027
        %v4060 = vmul.f32 %v3873, %v4028
        %v4061 = vmul.f32 %v3875, %v4029
        %v4062 = vmul.f32 %v3877, %v4030
        %v4063 = vmul.f32 %v3879, %v4031
        %v4064 = vmul.f32 %v3881, %v4032
        %v4065 = vmul.f32 %v3883, %v4033
        %v4066 = vmul.f32 %v3885, %v4034
        %v4067 = vmul.f32 %v3887, %v4035
        %v4068 = vmul.f32 %v3889, %v4036
        %v4069 = vmul.f32 %v3891, %v4037
        %v4070 = vmul.f32 %v3893, %v4038
        %v4071 = vmul.f32 %v3895, %v4039
        %v4072 = vmul.f32 %v3897, %v4040
        %v4073 = vmul.f32 %v3899, %v4041
        %v4074 = vmul.f32 %v3901, %v4042
        %v4075 = vmul.f32 %v3903, %v4043
        %v4076 = vmul.f32 %v3905, %v4044
        %v4077 = vmul.f32 %v3907, %v4045
        %v4078 = vmul.f32 %v3909, %v4046
        %v4079 = vmul.f32 %v3911, %v4047
        %v4080 = vmul.f32 %v3913, %v4048
        %v4081 = vmul.f32 %v3915, %v4049
        %v4082 = vmul.f32 %v3917, %v4050
        %v4083 = vmul.f32 %v3919, %v4051
        %v4084 = vmul.f32 %v3921, %v4052
        %v4085 = vmul.f32 %v3923, %v4053
        %v4086 = vmul.f32 %v3925, %v4054
        %v4087 = vmul.f32 %v3927, %v4055
        %v4088 = vpack.c.bf16 %v4057, %v4056
        %v4089 = vpack.c.bf16 %v4059, %v4058
        %v4090 = vpack.c.bf16 %v4061, %v4060
        %v4091 = vpack.c.bf16 %v4063, %v4062
        %v4092 = vpack.c.bf16 %v4065, %v4064
        %v4093 = vpack.c.bf16 %v4067, %v4066
        %v4094 = vpack.c.bf16 %v4069, %v4068
        %v4095 = vpack.c.bf16 %v4071, %v4070
        %v4096 = vpack.c.bf16 %v4073, %v4072
        %v4097 = vpack.c.bf16 %v4075, %v4074
        %v4098 = vpack.c.bf16 %v4077, %v4076
        %v4099 = vpack.c.bf16 %v4079, %v4078
        %v4100 = vpack.c.bf16 %v4081, %v4080
        %v4101 = vpack.c.bf16 %v4083, %v4082
        %v4102 = vpack.c.bf16 %v4085, %v4084
        %v4103 = vpack.c.bf16 %v4087, %v4086
        %v4104 = vpack.c.bf16 %v3323, %v3320
        %v4105 = vpack.c.bf16 %v3331, %v3328
        %v4106 = vpack.c.bf16 %v3339, %v3336
        %v4107 = vpack.c.bf16 %v3347, %v3344
        %v4109 = vsel %vm1832, %v4088, 0
        %v4112 = vsel %vm1832, %v4089, 0
        %v4115 = vsel %vm1832, %v4090, 0
        %v4118 = vsel %vm1832, %v4091, 0
        %v4121 = vsel %vm1832, %v4092, 0
        %v4124 = vsel %vm1832, %v4093, 0
        %v4127 = vsel %vm1832, %v4094, 0
        %v4130 = vsel %vm1832, %v4095, 0
        %v4133 = vsel %vm1832, %v4096, 0
        %v4136 = vsel %vm1832, %v4097, 0
        %v4139 = vsel %vm1832, %v4098, 0
        %v4142 = vsel %vm1832, %v4099, 0
        %v4145 = vsel %vm1832, %v4100, 0
        %v4148 = vsel %vm1832, %v4101, 0
        %v4151 = vsel %vm1832, %v4102, 0
        %v4154 = vsel %vm1832, %v4103, 0
        %4156 = vmatprep.subr.bf16.mxu0 0
        %4157 = vmatpush1.bf16.msra.mxu0 %v4104
        %4158 = vmatprep.subr.bf16.mxu0 0
        %4159 = vmatpush1.bf16.msra.mxu0 %v4105
        %4160 = vmatprep.subr.bf16.mxu0 0
        %4161 = vmatpush1.bf16.msra.mxu0 %v4106
        %4162 = vmatprep.subr.bf16.mxu0 0
        %4163 = vmatpush1.bf16.msra.mxu0 %v4107
        %4164 = vmatprep.subr.bf16.mxu0 0
        %4165 = vmatpush1.bf16.msra.mxu0 0
        %4166 = vmatprep.subr.bf16.mxu0 0
        %4167 = vmatpush1.bf16.msra.mxu0 0
        %4168 = vmatprep.subr.bf16.mxu0 0
        %4169 = vmatpush1.bf16.msra.mxu0 0
        %4170 = vmatprep.subr.bf16.mxu0 0
        %4171 = vmatpush1.bf16.msra.mxu0 0
        %4172 = vmatprep.subr.bf16.mxu0 0
        %4173 = vmatpush1.bf16.msra.mxu0 0
        %4174 = vmatprep.subr.bf16.mxu0 0
        %4175 = vmatpush1.bf16.msra.mxu0 0
        %4176 = vmatprep.subr.bf16.mxu0 0
        %4177 = vmatpush1.bf16.msra.mxu0 0
        %4178 = vmatprep.subr.bf16.mxu0 0
        %4179 = vmatpush1.bf16.msra.mxu0 0
        %4180 = vmatprep.subr.bf16.mxu0 0
        %4181 = vmatpush1.bf16.msra.mxu0 0
        %4182 = vmatprep.subr.bf16.mxu0 0
        %4183 = vmatpush1.bf16.msra.mxu0 0
        %4184 = vmatprep.subr.bf16.mxu0 0
        %4185 = vmatpush1.bf16.msra.mxu0 0
        %4186 = vmatprep.subr.bf16.mxu0 0
        %4187 = vmatpush1.bf16.msra.mxu0 0
        %4188 = vmatprep.mubr.bf16.mxu0 0
        %4189 = vmatmul.mubr.bf16.gmra.mrb[0].mxu0 %v4109
        %v4190 = vpop.f32.mrb[0].mxu0
        %v4191 = vadd.f32 0.0, %v4190
        %v4192 = vpop.f32.mrb[0].mxu0
        %v4193 = vpop.f32.mrb[0].mxu0
        %v4194 = vadd.f32 0.0, %v4193
        %v4195 = vpop.f32.mrb[0].mxu0
        %4196 = vmatprep.mubr.bf16.mxu0 0
        %4197 = vmatmul.mubr.bf16.gmra.mrb[0].mxu0 %v4112
        %v4198 = vpop.f32.mrb[0].mxu0
        %v4199 = vadd.f32 0.0, %v4198
        %v4200 = vpop.f32.mrb[0].mxu0
        %v4201 = vpop.f32.mrb[0].mxu0
        %v4202 = vadd.f32 0.0, %v4201
        %v4203 = vpop.f32.mrb[0].mxu0
        %4204 = vmatprep.mubr.bf16.mxu0 0
        %4205 = vmatmul.mubr.bf16.gmra.mrb[0].mxu0 %v4115
        %v4206 = vpop.f32.mrb[0].mxu0
        %v4207 = vadd.f32 0.0, %v4206
        %v4208 = vpop.f32.mrb[0].mxu0
        %v4209 = vpop.f32.mrb[0].mxu0
        %v4210 = vadd.f32 0.0, %v4209
        %v4211 = vpop.f32.mrb[0].mxu0
        %4212 = vmatprep.mubr.bf16.mxu0 0
        %4213 = vmatmul.mubr.bf16.gmra.mrb[0].mxu0 %v4118
        %v4214 = vpop.f32.mrb[0].mxu0
        %v4215 = vadd.f32 0.0, %v4214
        %v4216 = vpop.f32.mrb[0].mxu0
        %v4217 = vpop.f32.mrb[0].mxu0
        %v4218 = vadd.f32 0.0, %v4217
        %v4219 = vpop.f32.mrb[0].mxu0
        %4220 = vmatprep.mubr.bf16.mxu0 0
        %4221 = vmatmul.mubr.bf16.gmra.mrb[0].mxu0 %v4121
        %v4222 = vpop.f32.mrb[0].mxu0
        %v4223 = vadd.f32 0.0, %v4222
        %v4224 = vpop.f32.mrb[0].mxu0
        %v4225 = vpop.f32.mrb[0].mxu0
        %v4226 = vadd.f32 0.0, %v4225
        %v4227 = vpop.f32.mrb[0].mxu0
        %4228 = vmatprep.mubr.bf16.mxu0 0
        %4229 = vmatmul.mubr.bf16.gmra.mrb[0].mxu0 %v4124
        %v4230 = vpop.f32.mrb[0].mxu0
        %v4231 = vadd.f32 0.0, %v4230
        %v4232 = vpop.f32.mrb[0].mxu0
        %v4233 = vpop.f32.mrb[0].mxu0
        %v4234 = vadd.f32 0.0, %v4233
        %v4235 = vpop.f32.mrb[0].mxu0
        %4236 = vmatprep.mubr.bf16.mxu0 0
        %4237 = vmatmul.mubr.bf16.gmra.mrb[0].mxu0 %v4127
        %v4238 = vpop.f32.mrb[0].mxu0
        %v4239 = vadd.f32 0.0, %v4238
        %v4240 = vpop.f32.mrb[0].mxu0
        %v4241 = vpop.f32.mrb[0].mxu0
        %v4242 = vadd.f32 0.0, %v4241
        %v4243 = vpop.f32.mrb[0].mxu0
        %4244 = vmatprep.mubr.bf16.mxu0 0
        %4245 = vmatmul.mubr.bf16.gmra.mrb[0].mxu0 %v4130
        %v4246 = vpop.f32.mrb[0].mxu0
        %v4247 = vadd.f32 0.0, %v4246
        %v4248 = vpop.f32.mrb[0].mxu0
        %v4249 = vpop.f32.mrb[0].mxu0
        %v4250 = vadd.f32 0.0, %v4249
        %v4251 = vpop.f32.mrb[0].mxu0
        %4252 = vmatprep.mubr.bf16.mxu0 0
        %4253 = vmatmul.mubr.bf16.gmra.mrb[0].mxu0 %v4133
        %v4254 = vpop.f32.mrb[0].mxu0
        %v4255 = vadd.f32 0.0, %v4254
        %v4256 = vpop.f32.mrb[0].mxu0
        %v4257 = vpop.f32.mrb[0].mxu0
        %v4258 = vadd.f32 0.0, %v4257
        %v4259 = vpop.f32.mrb[0].mxu0
        %4260 = vmatprep.mubr.bf16.mxu0 0
        %4261 = vmatmul.mubr.bf16.gmra.mrb[0].mxu0 %v4136
        %v4262 = vpop.f32.mrb[0].mxu0
        %v4263 = vadd.f32 0.0, %v4262
        %v4264 = vpop.f32.mrb[0].mxu0
        %v4265 = vpop.f32.mrb[0].mxu0
        %v4266 = vadd.f32 0.0, %v4265
        %v4267 = vpop.f32.mrb[0].mxu0
        %4268 = vmatprep.mubr.bf16.mxu0 0
        %4269 = vmatmul.mubr.bf16.gmra.mrb[0].mxu0 %v4139
        %v4270 = vpop.f32.mrb[0].mxu0
        %v4271 = vadd.f32 0.0, %v4270
        %v4272 = vpop.f32.mrb[0].mxu0
        %v4273 = vpop.f32.mrb[0].mxu0
        %v4274 = vadd.f32 0.0, %v4273
        %v4275 = vpop.f32.mrb[0].mxu0
        %4276 = vmatprep.mubr.bf16.mxu0 0
        %4277 = vmatmul.mubr.bf16.gmra.mrb[0].mxu0 %v4142
        %v4278 = vpop.f32.mrb[0].mxu0
        %v4279 = vadd.f32 0.0, %v4278
        %v4280 = vpop.f32.mrb[0].mxu0
        %v4281 = vpop.f32.mrb[0].mxu0
        %v4282 = vadd.f32 0.0, %v4281
        %v4283 = vpop.f32.mrb[0].mxu0
        %4284 = vmatprep.mubr.bf16.mxu0 0
        %4285 = vmatmul.mubr.bf16.gmra.mrb[0].mxu0 %v4145
        %v4286 = vpop.f32.mrb[0].mxu0
        %v4287 = vadd.f32 0.0, %v4286
        %v4288 = vpop.f32.mrb[0].mxu0
        %v4289 = vpop.f32.mrb[0].mxu0
        %v4290 = vadd.f32 0.0, %v4289
        %v4291 = vpop.f32.mrb[0].mxu0
        %4292 = vmatprep.mubr.bf16.mxu0 0
        %4293 = vmatmul.mubr.bf16.gmra.mrb[0].mxu0 %v4148
        %v4294 = vpop.f32.mrb[0].mxu0
        %v4295 = vadd.f32 0.0, %v4294
        %v4296 = vpop.f32.mrb[0].mxu0
        %v4297 = vpop.f32.mrb[0].mxu0
        %v4298 = vadd.f32 0.0, %v4297
        %v4299 = vpop.f32.mrb[0].mxu0
        %4300 = vmatprep.mubr.bf16.mxu0 0
        %4301 = vmatmul.mubr.bf16.gmra.mrb[0].mxu0 %v4151
        %v4302 = vpop.f32.mrb[0].mxu0
        %v4303 = vadd.f32 0.0, %v4302
        %v4304 = vpop.f32.mrb[0].mxu0
        %v4305 = vpop.f32.mrb[0].mxu0
        %v4306 = vadd.f32 0.0, %v4305
        %v4307 = vpop.f32.mrb[0].mxu0
        %4308 = vmatprep.mubr.bf16.mxu0 0
        %4309 = vmatmul.mubr.bf16.gmra.mrb[0].mxu0 %v4154
        %v4310 = vpop.f32.mrb[0].mxu0
        %v4311 = vadd.f32 0.0, %v4310
        %v4312 = vpop.f32.mrb[0].mxu0
        %v4313 = vpop.f32.mrb[0].mxu0
        %v4314 = vadd.f32 0.0, %v4313
        %v4315 = vpop.f32.mrb[0].mxu0
        %4316 = vdwg.mxu0
        %v4317 = vpack.c.bf16 %v4194, %v4191
        %v4318 = vpack.c.bf16 %v4202, %v4199
        %v4319 = vpack.c.bf16 %v4210, %v4207
        %v4320 = vpack.c.bf16 %v4218, %v4215
        %v4321 = vpack.c.bf16 %v4226, %v4223
        %v4322 = vpack.c.bf16 %v4234, %v4231
        %v4323 = vpack.c.bf16 %v4242, %v4239
        %v4324 = vpack.c.bf16 %v4250, %v4247
        %v4325 = vpack.c.bf16 %v4258, %v4255
        %v4326 = vpack.c.bf16 %v4266, %v4263
        %v4327 = vpack.c.bf16 %v4274, %v4271
        %v4328 = vpack.c.bf16 %v4282, %v4279
        %v4329 = vpack.c.bf16 %v4290, %v4287
        %v4330 = vpack.c.bf16 %v4298, %v4295
        %v4331 = vpack.c.bf16 %v4306, %v4303
        %v4332 = vpack.c.bf16 %v4314, %v4311
        %v4334 = vsel %vm976, %v4317, 0
        %v4337 = vsel %vm976, %v4318, 0
        %v4340 = vsel %vm976, %v4319, 0
        %v4343 = vsel %vm976, %v4320, 0
        %v4346 = vsel %vm976, %v4321, 0
        %v4349 = vsel %vm976, %v4322, 0
        %v4352 = vsel %vm976, %v4323, 0
        %v4355 = vsel %vm976, %v4324, 0
        %v4358 = vsel %vm976, %v4325, 0
        %v4361 = vsel %vm976, %v4326, 0
        %v4364 = vsel %vm976, %v4327, 0
        %v4367 = vsel %vm976, %v4328, 0
        %v4370 = vsel %vm976, %v4329, 0
        %v4373 = vsel %vm976, %v4330, 0
        %v4376 = vsel %vm976, %v4331, 0
        %v4379 = vsel %vm976, %v4332, 0
        %4381 = vmatprep.subr.bf16.mxu0 0
        %4382 = vmatpush1.bf16.msra.mxu0 %v597
        %4383 = vmatprep.subr.bf16.mxu0 0
        %4384 = vmatpush1.bf16.msra.mxu0 %v598
        %4385 = vmatprep.subr.bf16.mxu0 0
        %4386 = vmatpush1.bf16.msra.mxu0 0
        %4387 = vmatprep.subr.bf16.mxu0 0
        %4388 = vmatpush1.bf16.msra.mxu0 0
        %4389 = vmatprep.subr.bf16.mxu0 0
        %4390 = vmatpush1.bf16.msra.mxu0 0
        %4391 = vmatprep.subr.bf16.mxu0 0
        %4392 = vmatpush1.bf16.msra.mxu0 0
        %4393 = vmatprep.subr.bf16.mxu0 0
        %4394 = vmatpush1.bf16.msra.mxu0 0
        %4395 = vmatprep.subr.bf16.mxu0 0
        %4396 = vmatpush1.bf16.msra.mxu0 0
        %4397 = vmatprep.subr.bf16.mxu0 0
        %4398 = vmatpush1.bf16.msra.mxu0 0
        %4399 = vmatprep.subr.bf16.mxu0 0
        %4400 = vmatpush1.bf16.msra.mxu0 0
        %4401 = vmatprep.subr.bf16.mxu0 0
        %4402 = vmatpush1.bf16.msra.mxu0 0
        %4403 = vmatprep.subr.bf16.mxu0 0
        %4404 = vmatpush1.bf16.msra.mxu0 0
        %4405 = vmatprep.subr.bf16.mxu0 0
        %4406 = vmatpush1.bf16.msra.mxu0 0
        %4407 = vmatprep.subr.bf16.mxu0 0
        %4408 = vmatpush1.bf16.msra.mxu0 0
        %4409 = vmatprep.subr.bf16.mxu0 0
        %4410 = vmatpush1.bf16.msra.mxu0 0
        %4411 = vmatprep.subr.bf16.mxu0 0
        %4412 = vmatpush1.bf16.msra.mxu0 0
        %4413 = vmatprep.mubr.bf16.mxu0 0
        %4414 = vmatmul.mubr.bf16.gmra.mrb[0].mxu0 %v4334
        %v4415 = vpop.f32.mrb[0].mxu0
        %v4416 = vadd.f32 0.0, %v4415
        %v4417 = vpop.f32.mrb[0].mxu0
        %v4418 = vpop.f32.mrb[0].mxu0
        %v4419 = vadd.f32 0.0, %v4418
        %v4420 = vpop.f32.mrb[0].mxu0
        %4421 = vmatprep.mubr.bf16.mxu0 0
        %4422 = vmatmul.mubr.bf16.gmra.mrb[0].mxu0 %v4337
        %v4423 = vpop.f32.mrb[0].mxu0
        %v4424 = vadd.f32 0.0, %v4423
        %v4425 = vpop.f32.mrb[0].mxu0
        %v4426 = vpop.f32.mrb[0].mxu0
        %v4427 = vadd.f32 0.0, %v4426
        %v4428 = vpop.f32.mrb[0].mxu0
        %4429 = vmatprep.mubr.bf16.mxu0 0
        %4430 = vmatmul.mubr.bf16.gmra.mrb[0].mxu0 %v4340
        %v4431 = vpop.f32.mrb[0].mxu0
        %v4432 = vadd.f32 0.0, %v4431
        %v4433 = vpop.f32.mrb[0].mxu0
        %v4434 = vpop.f32.mrb[0].mxu0
        %v4435 = vadd.f32 0.0, %v4434
        %v4436 = vpop.f32.mrb[0].mxu0
        %4437 = vmatprep.mubr.bf16.mxu0 0
        %4438 = vmatmul.mubr.bf16.gmra.mrb[0].mxu0 %v4343
        %v4439 = vpop.f32.mrb[0].mxu0
        %v4440 = vadd.f32 0.0, %v4439
        %v4441 = vpop.f32.mrb[0].mxu0
        %v4442 = vpop.f32.mrb[0].mxu0
        %v4443 = vadd.f32 0.0, %v4442
        %v4444 = vpop.f32.mrb[0].mxu0
        %4445 = vmatprep.mubr.bf16.mxu0 0
        %4446 = vmatmul.mubr.bf16.gmra.mrb[0].mxu0 %v4346
        %v4447 = vpop.f32.mrb[0].mxu0
        %v4448 = vadd.f32 0.0, %v4447
        %v4449 = vpop.f32.mrb[0].mxu0
        %v4450 = vpop.f32.mrb[0].mxu0
        %v4451 = vadd.f32 0.0, %v4450
        %v4452 = vpop.f32.mrb[0].mxu0
        %4453 = vmatprep.mubr.bf16.mxu0 0
        %4454 = vmatmul.mubr.bf16.gmra.mrb[0].mxu0 %v4349
        %v4455 = vpop.f32.mrb[0].mxu0
        %v4456 = vadd.f32 0.0, %v4455
        %v4457 = vpop.f32.mrb[0].mxu0
        %v4458 = vpop.f32.mrb[0].mxu0
        %v4459 = vadd.f32 0.0, %v4458
        %v4460 = vpop.f32.mrb[0].mxu0
        %4461 = vmatprep.mubr.bf16.mxu0 0
        %4462 = vmatmul.mubr.bf16.gmra.mrb[0].mxu0 %v4352
        %v4463 = vpop.f32.mrb[0].mxu0
        %v4464 = vadd.f32 0.0, %v4463
        %v4465 = vpop.f32.mrb[0].mxu0
        %v4466 = vpop.f32.mrb[0].mxu0
        %v4467 = vadd.f32 0.0, %v4466
        %v4468 = vpop.f32.mrb[0].mxu0
        %4469 = vmatprep.mubr.bf16.mxu0 0
        %4470 = vmatmul.mubr.bf16.gmra.mrb[0].mxu0 %v4355
        %v4471 = vpop.f32.mrb[0].mxu0
        %v4472 = vadd.f32 0.0, %v4471
        %v4473 = vpop.f32.mrb[0].mxu0
        %v4474 = vpop.f32.mrb[0].mxu0
        %v4475 = vadd.f32 0.0, %v4474
        %v4476 = vpop.f32.mrb[0].mxu0
        %4477 = vmatprep.mubr.bf16.mxu0 0
        %4478 = vmatmul.mubr.bf16.gmra.mrb[0].mxu0 %v4358
        %v4479 = vpop.f32.mrb[0].mxu0
        %v4480 = vadd.f32 0.0, %v4479
        %v4481 = vpop.f32.mrb[0].mxu0
        %v4482 = vpop.f32.mrb[0].mxu0
        %v4483 = vadd.f32 0.0, %v4482
        %v4484 = vpop.f32.mrb[0].mxu0
        %4485 = vmatprep.mubr.bf16.mxu0 0
        %4486 = vmatmul.mubr.bf16.gmra.mrb[0].mxu0 %v4361
        %v4487 = vpop.f32.mrb[0].mxu0
        %v4488 = vadd.f32 0.0, %v4487
        %v4489 = vpop.f32.mrb[0].mxu0
        %v4490 = vpop.f32.mrb[0].mxu0
        %v4491 = vadd.f32 0.0, %v4490
        %v4492 = vpop.f32.mrb[0].mxu0
        %4493 = vmatprep.mubr.bf16.mxu0 0
        %4494 = vmatmul.mubr.bf16.gmra.mrb[0].mxu0 %v4364
        %v4495 = vpop.f32.mrb[0].mxu0
        %v4496 = vadd.f32 0.0, %v4495
        %v4497 = vpop.f32.mrb[0].mxu0
        %v4498 = vpop.f32.mrb[0].mxu0
        %v4499 = vadd.f32 0.0, %v4498
        %v4500 = vpop.f32.mrb[0].mxu0
        %4501 = vmatprep.mubr.bf16.mxu0 0
        %4502 = vmatmul.mubr.bf16.gmra.mrb[0].mxu0 %v4367
        %v4503 = vpop.f32.mrb[0].mxu0
        %v4504 = vadd.f32 0.0, %v4503
        %v4505 = vpop.f32.mrb[0].mxu0
        %v4506 = vpop.f32.mrb[0].mxu0
        %v4507 = vadd.f32 0.0, %v4506
        %v4508 = vpop.f32.mrb[0].mxu0
        %4509 = vmatprep.mubr.bf16.mxu0 0
        %4510 = vmatmul.mubr.bf16.gmra.mrb[0].mxu0 %v4370
        %v4511 = vpop.f32.mrb[0].mxu0
        %v4512 = vadd.f32 0.0, %v4511
        %v4513 = vpop.f32.mrb[0].mxu0
        %v4514 = vpop.f32.mrb[0].mxu0
        %v4515 = vadd.f32 0.0, %v4514
        %v4516 = vpop.f32.mrb[0].mxu0
        %4517 = vmatprep.mubr.bf16.mxu0 0
        %4518 = vmatmul.mubr.bf16.gmra.mrb[0].mxu0 %v4373
        %v4519 = vpop.f32.mrb[0].mxu0
        %v4520 = vadd.f32 0.0, %v4519
        %v4521 = vpop.f32.mrb[0].mxu0
        %v4522 = vpop.f32.mrb[0].mxu0
        %v4523 = vadd.f32 0.0, %v4522
        %v4524 = vpop.f32.mrb[0].mxu0
        %4525 = vmatprep.mubr.bf16.mxu0 0
        %4526 = vmatmul.mubr.bf16.gmra.mrb[0].mxu0 %v4376
        %v4527 = vpop.f32.mrb[0].mxu0
        %v4528 = vadd.f32 0.0, %v4527
        %v4529 = vpop.f32.mrb[0].mxu0
        %v4530 = vpop.f32.mrb[0].mxu0
        %v4531 = vadd.f32 0.0, %v4530
        %v4532 = vpop.f32.mrb[0].mxu0
        %4533 = vmatprep.mubr.bf16.mxu0 0
        %4534 = vmatmul.mubr.bf16.gmra.mrb[0].mxu0 %v4379
        %v4535 = vpop.f32.mrb[0].mxu0
        %v4536 = vadd.f32 0.0, %v4535
        %v4537 = vpop.f32.mrb[0].mxu0
        %v4538 = vpop.f32.mrb[0].mxu0
        %v4539 = vadd.f32 0.0, %v4538
        %v4540 = vpop.f32.mrb[0].mxu0
        %4541 = vdwg.mxu0
        %v4542 = vadd.f32 %v2639, %v4416
        %v4543 = vadd.f32 %v2640, %v4419
        %v4544 = vadd.f32 %v2641, %v4424
        %v4545 = vadd.f32 %v2642, %v4427
        %v4546 = vadd.f32 %v2643, %v4432
        %v4547 = vadd.f32 %v2644, %v4435
        %v4548 = vadd.f32 %v2645, %v4440
        %v4549 = vadd.f32 %v2646, %v4443
        %v4550 = vadd.f32 %v2647, %v4448
        %v4551 = vadd.f32 %v2648, %v4451
        %v4552 = vadd.f32 %v2649, %v4456
        %v4553 = vadd.f32 %v2650, %v4459
        %v4554 = vadd.f32 %v2651, %v4464
        %v4555 = vadd.f32 %v2652, %v4467
        %v4556 = vadd.f32 %v2653, %v4472
        %v4557 = vadd.f32 %v2654, %v4475
        %v4558 = vadd.f32 %v2655, %v4480
        %v4559 = vadd.f32 %v2656, %v4483
        %v4560 = vadd.f32 %v2657, %v4488
        %v4561 = vadd.f32 %v2658, %v4491
        %v4562 = vadd.f32 %v2659, %v4496
        %v4563 = vadd.f32 %v2660, %v4499
        %v4564 = vadd.f32 %v2661, %v4504
        %v4565 = vadd.f32 %v2662, %v4507
        %v4566 = vadd.f32 %v2663, %v4512
        %v4567 = vadd.f32 %v2664, %v4515
        %v4568 = vadd.f32 %v2665, %v4520
        %v4569 = vadd.f32 %v2666, %v4523
        %v4570 = vadd.f32 %v2667, %v4528
        %v4571 = vadd.f32 %v2668, %v4531
        %v4572 = vadd.f32 %v2669, %v4536
        %v4573 = vadd.f32 %v2670, %v4539
        %s4574 = scalar_lea.vmem %s390, 256
        %v4575 = vld [vmem:[%s4574] sm:$0xf]
        %v4576 = vld [vmem:[%s4574 + $0x4] sm:$0xf]
        %v4577 = vld [vmem:[%s4574 + $0x8] sm:$0xf]
        %v4578 = vld [vmem:[%s4574 + $0xc] sm:$0xf]
        %v4579 = vld [vmem:[%s4574 + $0x10] sm:$0xf]
        %v4580 = vld [vmem:[%s4574 + $0x14] sm:$0xf]
        %v4581 = vld [vmem:[%s4574 + $0x18] sm:$0xf]
        %v4582 = vld [vmem:[%s4574 + $0x1c] sm:$0xf]
        %v4583 = vld [vmem:[%s4574 + $0x20] sm:$0xf]
        %v4584 = vld [vmem:[%s4574 + $0x24] sm:$0xf]
        %v4585 = vld [vmem:[%s4574 + $0x28] sm:$0xf]
        %v4586 = vld [vmem:[%s4574 + $0x2c] sm:$0xf]
        %v4587 = vld [vmem:[%s4574 + $0x30] sm:$0xf]
        %v4588 = vld [vmem:[%s4574 + $0x34] sm:$0xf]
        %v4589 = vld [vmem:[%s4574 + $0x38] sm:$0xf]
        %v4590 = vld [vmem:[%s4574 + $0x3c] sm:$0xf]
        %v4591 = vld [vmem:[%s4574 + $0x40] sm:$0xf]
        %v4592 = vld [vmem:[%s4574 + $0x44] sm:$0xf]
        %v4593 = vld [vmem:[%s4574 + $0x48] sm:$0xf]
        %v4594 = vld [vmem:[%s4574 + $0x4c] sm:$0xf]
        %v4595 = vld [vmem:[%s4574 + $0x50] sm:$0xf]
        %v4596 = vld [vmem:[%s4574 + $0x54] sm:$0xf]
        %v4597 = vld [vmem:[%s4574 + $0x58] sm:$0xf]
        %v4598 = vld [vmem:[%s4574 + $0x5c] sm:$0xf]
        %v4599 = vld [vmem:[%s4574 + $0x60] sm:$0xf]
        %v4600 = vld [vmem:[%s4574 + $0x64] sm:$0xf]
        %v4601 = vld [vmem:[%s4574 + $0x68] sm:$0xf]
        %v4602 = vld [vmem:[%s4574 + $0x6c] sm:$0xf]
        %v4603 = vld [vmem:[%s4574 + $0x70] sm:$0xf]
        %v4604 = vld [vmem:[%s4574 + $0x74] sm:$0xf]
        %v4605 = vld [vmem:[%s4574 + $0x78] sm:$0xf]
        %v4606 = vld [vmem:[%s4574 + $0x7c] sm:$0xf]
        %s4607 = scalar_lea.vmem %s395, 256
        %v4608 = vld [vmem:[%s4607] sm:$0xf]
        %v4609 = vld [vmem:[%s4607 + $0x4] sm:$0xf]
        %v4610 = vld [vmem:[%s4607 + $0x8] sm:$0xf]
        %v4611 = vld [vmem:[%s4607 + $0xc] sm:$0xf]
        %v4612 = vld [vmem:[%s4607 + $0x10] sm:$0xf]
        %v4613 = vld [vmem:[%s4607 + $0x14] sm:$0xf]
        %v4614 = vld [vmem:[%s4607 + $0x18] sm:$0xf]
        %v4615 = vld [vmem:[%s4607 + $0x1c] sm:$0xf]
        %v4616 = vld [vmem:[%s4607 + $0x20] sm:$0xf]
        %v4617 = vld [vmem:[%s4607 + $0x24] sm:$0xf]
        %v4618 = vld [vmem:[%s4607 + $0x28] sm:$0xf]
        %v4619 = vld [vmem:[%s4607 + $0x2c] sm:$0xf]
        %v4620 = vld [vmem:[%s4607 + $0x30] sm:$0xf]
        %v4621 = vld [vmem:[%s4607 + $0x34] sm:$0xf]
        %v4622 = vld [vmem:[%s4607 + $0x38] sm:$0xf]
        %v4623 = vld [vmem:[%s4607 + $0x3c] sm:$0xf]
        %v4624 = vld [vmem:[%s4607 + $0x40] sm:$0xf]
        %v4625 = vld [vmem:[%s4607 + $0x44] sm:$0xf]
        %v4626 = vld [vmem:[%s4607 + $0x48] sm:$0xf]
        %v4627 = vld [vmem:[%s4607 + $0x4c] sm:$0xf]
        %v4628 = vld [vmem:[%s4607 + $0x50] sm:$0xf]
        %v4629 = vld [vmem:[%s4607 + $0x54] sm:$0xf]
        %v4630 = vld [vmem:[%s4607 + $0x58] sm:$0xf]
        %v4631 = vld [vmem:[%s4607 + $0x5c] sm:$0xf]
        %v4632 = vld [vmem:[%s4607 + $0x60] sm:$0xf]
        %v4633 = vld [vmem:[%s4607 + $0x64] sm:$0xf]
        %v4634 = vld [vmem:[%s4607 + $0x68] sm:$0xf]
        %v4635 = vld [vmem:[%s4607 + $0x6c] sm:$0xf]
        %v4636 = vld [vmem:[%s4607 + $0x70] sm:$0xf]
        %v4637 = vld [vmem:[%s4607 + $0x74] sm:$0xf]
        %v4638 = vld [vmem:[%s4607 + $0x78] sm:$0xf]
        %v4639 = vld [vmem:[%s4607 + $0x7c] sm:$0xf]
        %s4640 = scalar_lea.vmem %s400, 256
        %v4641 = vld [vmem:[%s4640] sm:$0xf]
        %v4642 = vld [vmem:[%s4640 + $0x4] sm:$0xf]
        %v4643 = vld [vmem:[%s4640 + $0x8] sm:$0xf]
        %v4644 = vld [vmem:[%s4640 + $0xc] sm:$0xf]
        %v4645 = vld [vmem:[%s4640 + $0x10] sm:$0xf]
        %v4646 = vld [vmem:[%s4640 + $0x14] sm:$0xf]
        %v4647 = vld [vmem:[%s4640 + $0x18] sm:$0xf]
        %v4648 = vld [vmem:[%s4640 + $0x1c] sm:$0xf]
        %v4649 = vld [vmem:[%s4640 + $0x20] sm:$0xf]
        %v4650 = vld [vmem:[%s4640 + $0x24] sm:$0xf]
        %v4651 = vld [vmem:[%s4640 + $0x28] sm:$0xf]
        %v4652 = vld [vmem:[%s4640 + $0x2c] sm:$0xf]
        %v4653 = vld [vmem:[%s4640 + $0x30] sm:$0xf]
        %v4654 = vld [vmem:[%s4640 + $0x34] sm:$0xf]
        %v4655 = vld [vmem:[%s4640 + $0x38] sm:$0xf]
        %v4656 = vld [vmem:[%s4640 + $0x3c] sm:$0xf]
        %v4657 = vld [vmem:[%s4640 + $0x40] sm:$0xf]
        %v4658 = vld [vmem:[%s4640 + $0x44] sm:$0xf]
        %v4659 = vld [vmem:[%s4640 + $0x48] sm:$0xf]
        %v4660 = vld [vmem:[%s4640 + $0x4c] sm:$0xf]
        %v4661 = vld [vmem:[%s4640 + $0x50] sm:$0xf]
        %v4662 = vld [vmem:[%s4640 + $0x54] sm:$0xf]
        %v4663 = vld [vmem:[%s4640 + $0x58] sm:$0xf]
        %v4664 = vld [vmem:[%s4640 + $0x5c] sm:$0xf]
        %v4665 = vld [vmem:[%s4640 + $0x60] sm:$0xf]
        %v4666 = vld [vmem:[%s4640 + $0x64] sm:$0xf]
        %v4667 = vld [vmem:[%s4640 + $0x68] sm:$0xf]
        %v4668 = vld [vmem:[%s4640 + $0x6c] sm:$0xf]
        %v4669 = vld [vmem:[%s4640 + $0x70] sm:$0xf]
        %v4670 = vld [vmem:[%s4640 + $0x74] sm:$0xf]
        %v4671 = vld [vmem:[%s4640 + $0x78] sm:$0xf]
        %v4672 = vld [vmem:[%s4640 + $0x7c] sm:$0xf]
        %s4673 = scalar_lea.vmem %s405, 64
        %v4674 = vld [vmem:[%s4673] sm:$0xf]
        %v4675 = vld [vmem:[%s4673 + $0x4] sm:$0xf]
        %v4676 = vld [vmem:[%s4673 + $0x8] sm:$0xf]
        %v4677 = vld [vmem:[%s4673 + $0xc] sm:$0xf]
        %v4678 = vld [vmem:[%s4673 + $0x10] sm:$0xf]
        %v4679 = vld [vmem:[%s4673 + $0x14] sm:$0xf]
        %v4680 = vld [vmem:[%s4673 + $0x18] sm:$0xf]
        %v4681 = vld [vmem:[%s4673 + $0x1c] sm:$0xf]
        %v4690 = vunpack.c.l.b16 %v4674
        %v4691 = vunpack.c.l.b16 %v4675
        %v4692 = vunpack.c.l.b16 %v4676
        %v4693 = vunpack.c.l.b16 %v4677
        %v4694 = vunpack.c.l.b16 %v4678
        %v4695 = vunpack.c.l.b16 %v4679
        %v4696 = vunpack.c.l.b16 %v4680
        %v4697 = vunpack.c.l.b16 %v4681
        %v4698 = vpack.c.b16 %v4691, %v4690
        %v4699 = vpack.c.b16 %v4693, %v4692
        %v4700 = vpack.c.b16 %v4695, %v4694
        %v4701 = vpack.c.b16 %v4697, %v4696
        %v4734 = vunpack.c.l.b16 %v4608
        %v4735 = vunpack.c.l.b16 %v4609
        %v4736 = vunpack.c.l.b16 %v4610
        %v4737 = vunpack.c.l.b16 %v4611
        %v4738 = vunpack.c.l.b16 %v4612
        %v4739 = vunpack.c.l.b16 %v4613
        %v4740 = vunpack.c.l.b16 %v4614
        %v4741 = vunpack.c.l.b16 %v4615
        %v4742 = vunpack.c.l.b16 %v4616
        %v4743 = vunpack.c.l.b16 %v4617
        %v4744 = vunpack.c.l.b16 %v4618
        %v4745 = vunpack.c.l.b16 %v4619
        %v4746 = vunpack.c.l.b16 %v4620
        %v4747 = vunpack.c.l.b16 %v4621
        %v4748 = vunpack.c.l.b16 %v4622
        %v4749 = vunpack.c.l.b16 %v4623
        %v4750 = vunpack.c.l.b16 %v4624
        %v4751 = vunpack.c.l.b16 %v4625
        %v4752 = vunpack.c.l.b16 %v4626
        %v4753 = vunpack.c.l.b16 %v4627
        %v4754 = vunpack.c.l.b16 %v4628
        %v4755 = vunpack.c.l.b16 %v4629
        %v4756 = vunpack.c.l.b16 %v4630
        %v4757 = vunpack.c.l.b16 %v4631
        %v4758 = vunpack.c.l.b16 %v4632
        %v4759 = vunpack.c.l.b16 %v4633
        %v4760 = vunpack.c.l.b16 %v4634
        %v4761 = vunpack.c.l.b16 %v4635
        %v4762 = vunpack.c.l.b16 %v4636
        %v4763 = vunpack.c.l.b16 %v4637
        %v4764 = vunpack.c.l.b16 %v4638
        %v4765 = vunpack.c.l.b16 %v4639
        %v4766 = vpack.c.b16 %v4735, %v4734
        %v4767 = vpack.c.b16 %v4737, %v4736
        %v4768 = vpack.c.b16 %v4739, %v4738
        %v4769 = vpack.c.b16 %v4741, %v4740
        %v4770 = vpack.c.b16 %v4743, %v4742
        %v4771 = vpack.c.b16 %v4745, %v4744
        %v4772 = vpack.c.b16 %v4747, %v4746
        %v4773 = vpack.c.b16 %v4749, %v4748
        %v4774 = vpack.c.b16 %v4751, %v4750
        %v4775 = vpack.c.b16 %v4753, %v4752
        %v4776 = vpack.c.b16 %v4755, %v4754
        %v4777 = vpack.c.b16 %v4757, %v4756
        %v4778 = vpack.c.b16 %v4759, %v4758
        %v4779 = vpack.c.b16 %v4761, %v4760
        %v4780 = vpack.c.b16 %v4763, %v4762
        %v4781 = vpack.c.b16 %v4765, %v4764
        %v4783 = vsel %vm976, %v4698, 0
        %v4786 = vsel %vm976, %v4699, 0
        %v4789 = vsel %vm976, %v4700, 0
        %v4792 = vsel %vm976, %v4701, 0
        %v4795 = vsel %vm976, %v4766, 0
        %v4798 = vsel %vm976, %v4767, 0
        %v4801 = vsel %vm976, %v4768, 0
        %v4804 = vsel %vm976, %v4769, 0
        %v4807 = vsel %vm976, %v4770, 0
        %v4810 = vsel %vm976, %v4771, 0
        %v4813 = vsel %vm976, %v4772, 0
        %v4816 = vsel %vm976, %v4773, 0
        %v4819 = vsel %vm976, %v4774, 0
        %v4822 = vsel %vm976, %v4775, 0
        %v4825 = vsel %vm976, %v4776, 0
        %v4828 = vsel %vm976, %v4777, 0
        %v4831 = vsel %vm976, %v4778, 0
        %v4834 = vsel %vm976, %v4779, 0
        %v4837 = vsel %vm976, %v4780, 0
        %v4840 = vsel %vm976, %v4781, 0
        %4842 = vmatprep.subr.bf16.mxu0 0
        %4843 = vmatpush1.bf16.xpose.msra.mxu0 %v4795
        %4844 = vmatprep.subr.bf16.mxu0 0
        %4845 = vmatpush1.bf16.xpose.msra.mxu0 %v4798
        %4846 = vmatprep.subr.bf16.mxu0 0
        %4847 = vmatpush1.bf16.xpose.msra.mxu0 %v4801
        %4848 = vmatprep.subr.bf16.mxu0 0
        %4849 = vmatpush1.bf16.xpose.msra.mxu0 %v4804
        %4850 = vmatprep.subr.bf16.mxu0 0
        %4851 = vmatpush1.bf16.xpose.msra.mxu0 %v4807
        %4852 = vmatprep.subr.bf16.mxu0 0
        %4853 = vmatpush1.bf16.xpose.msra.mxu0 %v4810
        %4854 = vmatprep.subr.bf16.mxu0 0
        %4855 = vmatpush1.bf16.xpose.msra.mxu0 %v4813
        %4856 = vmatprep.subr.bf16.mxu0 0
        %4857 = vmatpush1.bf16.xpose.msra.mxu0 %v4816
        %4858 = vmatprep.subr.bf16.mxu0 0
        %4859 = vmatpush1.bf16.xpose.msra.mxu0 %v4819
        %4860 = vmatprep.subr.bf16.mxu0 0
        %4861 = vmatpush1.bf16.xpose.msra.mxu0 %v4822
        %4862 = vmatprep.subr.bf16.mxu0 0
        %4863 = vmatpush1.bf16.xpose.msra.mxu0 %v4825
        %4864 = vmatprep.subr.bf16.mxu0 0
        %4865 = vmatpush1.bf16.xpose.msra.mxu0 %v4828
        %4866 = vmatprep.subr.bf16.mxu0 0
        %4867 = vmatpush1.bf16.xpose.msra.mxu0 %v4831
        %4868 = vmatprep.subr.bf16.mxu0 0
        %4869 = vmatpush1.bf16.xpose.msra.mxu0 %v4834
        %4870 = vmatprep.subr.bf16.mxu0 0
        %4871 = vmatpush1.bf16.xpose.msra.mxu0 %v4837
        %4872 = vmatprep.subr.bf16.mxu0 0
        %4873 = vmatpush1.bf16.xpose.msra.mxu0 %v4840
        %4874 = vmatprep.mubr.bf16.mxu0 0
        %4875 = vmatmul.mubr.bf16.gmra.mrb[0].mxu0 %v4783
        %v4876 = vpop.f32.mrb[0].mxu0
        %v4877 = vadd.f32 0.0, %v4876
        %v4878 = vpop.f32.mrb[0].mxu0
        %v4879 = vadd.f32 0.0, %v4878
        %v4880 = vpop.f32.mrb[0].mxu0
        %v4881 = vadd.f32 0.0, %v4880
        %v4882 = vpop.f32.mrb[0].mxu0
        %v4883 = vadd.f32 0.0, %v4882
        %4884 = vmatprep.mubr.bf16.mxu0 0
        %4885 = vmatmul.mubr.bf16.gmra.mrb[0].mxu0 %v4786
        %v4886 = vpop.f32.mrb[0].mxu0
        %v4887 = vadd.f32 0.0, %v4886
        %v4888 = vpop.f32.mrb[0].mxu0
        %v4889 = vadd.f32 0.0, %v4888
        %v4890 = vpop.f32.mrb[0].mxu0
        %v4891 = vadd.f32 0.0, %v4890
        %v4892 = vpop.f32.mrb[0].mxu0
        %v4893 = vadd.f32 0.0, %v4892
        %4894 = vmatprep.mubr.bf16.mxu0 0
        %4895 = vmatmul.mubr.bf16.gmra.mrb[0].mxu0 %v4789
        %v4896 = vpop.f32.mrb[0].mxu0
        %v4897 = vadd.f32 0.0, %v4896
        %v4898 = vpop.f32.mrb[0].mxu0
        %v4899 = vadd.f32 0.0, %v4898
        %v4900 = vpop.f32.mrb[0].mxu0
        %v4901 = vadd.f32 0.0, %v4900
        %v4902 = vpop.f32.mrb[0].mxu0
        %v4903 = vadd.f32 0.0, %v4902
        %4904 = vmatprep.mubr.bf16.mxu0 0
        %4905 = vmatmul.mubr.bf16.gmra.mrb[0].mxu0 %v4792
        %v4906 = vpop.f32.mrb[0].mxu0
        %v4907 = vadd.f32 0.0, %v4906
        %v4908 = vpop.f32.mrb[0].mxu0
        %v4909 = vadd.f32 0.0, %v4908
        %v4910 = vpop.f32.mrb[0].mxu0
        %v4911 = vadd.f32 0.0, %v4910
        %v4912 = vpop.f32.mrb[0].mxu0
        %v4913 = vadd.f32 0.0, %v4912
        %4914 = vdwg.mxu0
        %v4915 = vmul.f32 %v4877, 0.17677669
        %v4916 = vmul.f32 %v4879, 0.17677669
        %v4917 = vmul.f32 %v4881, 0.17677669
        %v4918 = vmul.f32 %v4883, 0.17677669
        %v4919 = vmul.f32 %v4887, 0.17677669
        %v4920 = vmul.f32 %v4889, 0.17677669
        %v4921 = vmul.f32 %v4891, 0.17677669
        %v4922 = vmul.f32 %v4893, 0.17677669
        %v4923 = vmul.f32 %v4897, 0.17677669
        %v4924 = vmul.f32 %v4899, 0.17677669
        %v4925 = vmul.f32 %v4901, 0.17677669
        %v4926 = vmul.f32 %v4903, 0.17677669
        %v4927 = vmul.f32 %v4907, 0.17677669
        %v4928 = vmul.f32 %v4909, 0.17677669
        %v4929 = vmul.f32 %v4911, 0.17677669
        %v4930 = vmul.f32 %v4913, 0.17677669
        %s4931 = scalar_lea.vmem %s4, 256
        %v4932 = vld [vmem:[%s4931] sm:$0xff]
        %v4933 = vld [vmem:[%s4931 + $0x8] sm:$0xff]
        %v4934 = vld [vmem:[%s4931 + $0x10] sm:$0xff]
        %v4935 = vld [vmem:[%s4931 + $0x18] sm:$0xff]
        %v4936 = vld [vmem:[%s4931 + $0x20] sm:$0xff]
        %v4937 = vld [vmem:[%s4931 + $0x28] sm:$0xff]
        %v4938 = vld [vmem:[%s4931 + $0x30] sm:$0xff]
        %v4939 = vld [vmem:[%s4931 + $0x38] sm:$0xff]
        %v4940 = vld [vmem:[%s4931 + $0x40] sm:$0xff]
        %v4941 = vld [vmem:[%s4931 + $0x48] sm:$0xff]
        %v4942 = vld [vmem:[%s4931 + $0x50] sm:$0xff]
        %v4943 = vld [vmem:[%s4931 + $0x58] sm:$0xff]
        %v4944 = vld [vmem:[%s4931 + $0x60] sm:$0xff]
        %v4945 = vld [vmem:[%s4931 + $0x68] sm:$0xff]
        %v4946 = vld [vmem:[%s4931 + $0x70] sm:$0xff]
        %v4947 = vld [vmem:[%s4931 + $0x78] sm:$0xff]
        %v4948 = vadd.f32 %v4915, %v4932
        %v4949 = vadd.f32 %v4916, %v4933
        %v4950 = vadd.f32 %v4917, %v4934
        %v4951 = vadd.f32 %v4918, %v4935
        %v4952 = vadd.f32 %v4919, %v4936
        %v4953 = vadd.f32 %v4920, %v4937
        %v4954 = vadd.f32 %v4921, %v4938
        %v4955 = vadd.f32 %v4922, %v4939
        %v4956 = vadd.f32 %v4923, %v4940
        %v4957 = vadd.f32 %v4924, %v4941
        %v4958 = vadd.f32 %v4925, %v4942
        %v4959 = vadd.f32 %v4926, %v4943
        %v4960 = vadd.f32 %v4927, %v4944
        %v4961 = vadd.f32 %v4928, %v4945
        %v4962 = vadd.f32 %v4929, %v4946
        %v4963 = vadd.f32 %v4930, %v4947
        %v4964 = vmax.f32 %v4948, %v4949
        %4965 = vmax.xlane.f32.xlu0 %v4964
        %v4966 = vpop.xlane.xlu0 %4965
        %v4967 = vmax.f32 %v4950, %v4951
        %4968 = vmax.xlane.f32.xlu0 %v4967
        %v4969 = vpop.xlane.xlu0 %4968
        %v4970 = vmax.f32 %v4952, %v4953
        %4971 = vmax.xlane.f32.xlu0 %v4970
        %v4972 = vpop.xlane.xlu0 %4971
        %v4973 = vmax.f32 %v4954, %v4955
        %4974 = vmax.xlane.f32.xlu0 %v4973
        %v4975 = vpop.xlane.xlu0 %4974
        %v4976 = vmax.f32 %v4956, %v4957
        %4977 = vmax.xlane.f32.xlu0 %v4976
        %v4978 = vpop.xlane.xlu0 %4977
        %v4979 = vmax.f32 %v4958, %v4959
        %4980 = vmax.xlane.f32.xlu0 %v4979
        %v4981 = vpop.xlane.xlu0 %4980
        %v4982 = vmax.f32 %v4960, %v4961
        %4983 = vmax.xlane.f32.xlu0 %v4982
        %v4984 = vpop.xlane.xlu0 %4983
        %v4985 = vmax.f32 %v4962, %v4963
        %4986 = vmax.xlane.f32.xlu0 %v4985
        %v4987 = vpop.xlane.xlu0 %4986
        %v4988 = vsub.f32 %v4948, %v4966
        %v4989 = vsub.f32 %v4949, %v4966
        %v4990 = vsub.f32 %v4950, %v4969
        %v4991 = vsub.f32 %v4951, %v4969
        %v4992 = vsub.f32 %v4952, %v4972
        %v4993 = vsub.f32 %v4953, %v4972
        %v4994 = vsub.f32 %v4954, %v4975
        %v4995 = vsub.f32 %v4955, %v4975
        %v4996 = vsub.f32 %v4956, %v4978
        %v4997 = vsub.f32 %v4957, %v4978
        %v4998 = vsub.f32 %v4958, %v4981
        %v4999 = vsub.f32 %v4959, %v4981
        %v5000 = vsub.f32 %v4960, %v4984
        %v5001 = vsub.f32 %v4961, %v4984
        %v5002 = vsub.f32 %v4962, %v4987
        %v5003 = vsub.f32 %v4963, %v4987
        %v5004 = vmul.f32 %v4988, 1.442695
        %v5005 = vpow.pop %v5004
        %v5006 = vmul.f32 %v4989, 1.442695
        %v5007 = vpow.pop %v5006
        %v5008 = vmul.f32 %v4990, 1.442695
        %v5009 = vpow.pop %v5008
        %v5010 = vmul.f32 %v4991, 1.442695
        %v5011 = vpow.pop %v5010
        %v5012 = vmul.f32 %v4992, 1.442695
        %v5013 = vpow.pop %v5012
        %v5014 = vmul.f32 %v4993, 1.442695
        %v5015 = vpow.pop %v5014
        %v5016 = vmul.f32 %v4994, 1.442695
        %v5017 = vpow.pop %v5016
        %v5018 = vmul.f32 %v4995, 1.442695
        %v5019 = vpow.pop %v5018
        %v5020 = vmul.f32 %v4996, 1.442695
        %v5021 = vpow.pop %v5020
        %v5022 = vmul.f32 %v4997, 1.442695
        %v5023 = vpow.pop %v5022
        %v5024 = vmul.f32 %v4998, 1.442695
        %v5025 = vpow.pop %v5024
        %v5026 = vmul.f32 %v4999, 1.442695
        %v5027 = vpow.pop %v5026
        %v5028 = vmul.f32 %v5000, 1.442695
        %v5029 = vpow.pop %v5028
        %v5030 = vmul.f32 %v5001, 1.442695
        %v5031 = vpow.pop %v5030
        %v5032 = vmul.f32 %v5002, 1.442695
        %v5033 = vpow.pop %v5032
        %v5034 = vmul.f32 %v5003, 1.442695
        %v5035 = vpow.pop %v5034
        %v5036 = vadd.f32 %v5005, %v5007
        %5037 = vadd.xlane.f32.xlu0 %v5036
        %v5038 = vpop.xlane.xlu0 %5037
        %v5039 = vadd.f32 %v5009, %v5011
        %5040 = vadd.xlane.f32.xlu0 %v5039
        %v5041 = vpop.xlane.xlu0 %5040
        %v5042 = vadd.f32 %v5013, %v5015
        %5043 = vadd.xlane.f32.xlu0 %v5042
        %v5044 = vpop.xlane.xlu0 %5043
        %v5045 = vadd.f32 %v5017, %v5019
        %5046 = vadd.xlane.f32.xlu0 %v5045
        %v5047 = vpop.xlane.xlu0 %5046
        %v5048 = vadd.f32 %v5021, %v5023
        %5049 = vadd.xlane.f32.xlu0 %v5048
        %v5050 = vpop.xlane.xlu0 %5049
        %v5051 = vadd.f32 %v5025, %v5027
        %5052 = vadd.xlane.f32.xlu0 %v5051
        %v5053 = vpop.xlane.xlu0 %5052
        %v5054 = vadd.f32 %v5029, %v5031
        %5055 = vadd.xlane.f32.xlu0 %v5054
        %v5056 = vpop.xlane.xlu0 %5055
        %v5057 = vadd.f32 %v5033, %v5035
        %5058 = vadd.xlane.f32.xlu0 %v5057
        %v5059 = vpop.xlane.xlu0 %5058
        %v5060 = vrcp.pop %v5038
        %v5061 = vrcp.pop %v5041
        %v5062 = vrcp.pop %v5044
        %v5063 = vrcp.pop %v5047
        %v5064 = vrcp.pop %v5050
        %v5065 = vrcp.pop %v5053
        %v5066 = vrcp.pop %v5056
        %v5067 = vrcp.pop %v5059
        %v5068 = vmul.f32 %v5005, %v5060
        %v5069 = vmul.f32 %v5007, %v5060
        %v5070 = vmul.f32 %v5009, %v5061
        %v5071 = vmul.f32 %v5011, %v5061
        %v5072 = vmul.f32 %v5013, %v5062
        %v5073 = vmul.f32 %v5015, %v5062
        %v5074 = vmul.f32 %v5017, %v5063
        %v5075 = vmul.f32 %v5019, %v5063
        %v5076 = vmul.f32 %v5021, %v5064
        %v5077 = vmul.f32 %v5023, %v5064
        %v5078 = vmul.f32 %v5025, %v5065
        %v5079 = vmul.f32 %v5027, %v5065
        %v5080 = vmul.f32 %v5029, %v5066
        %v5081 = vmul.f32 %v5031, %v5066
        %v5082 = vmul.f32 %v5033, %v5067
        %v5083 = vmul.f32 %v5035, %v5067
        %v5084 = vpack.c.bf16 %v5070, %v5068
        %v5085 = vpack.c.bf16 %v5071, %v5069
        %v5086 = vpack.c.bf16 %v5074, %v5072
        %v5087 = vpack.c.bf16 %v5075, %v5073
        %v5088 = vpack.c.bf16 %v5078, %v5076
        %v5089 = vpack.c.bf16 %v5079, %v5077
        %v5090 = vpack.c.bf16 %v5082, %v5080
        %v5091 = vpack.c.bf16 %v5083, %v5081
        %v5124 = vunpack.c.l.b16 %v4641
        %v5125 = vunpack.c.l.b16 %v4642
        %v5126 = vunpack.c.l.b16 %v4643
        %v5127 = vunpack.c.l.b16 %v4644
        %v5128 = vunpack.c.l.b16 %v4645
        %v5129 = vunpack.c.l.b16 %v4646
        %v5130 = vunpack.c.l.b16 %v4647
        %v5131 = vunpack.c.l.b16 %v4648
        %v5132 = vunpack.c.l.b16 %v4649
        %v5133 = vunpack.c.l.b16 %v4650
        %v5134 = vunpack.c.l.b16 %v4651
        %v5135 = vunpack.c.l.b16 %v4652
        %v5136 = vunpack.c.l.b16 %v4653
        %v5137 = vunpack.c.l.b16 %v4654
        %v5138 = vunpack.c.l.b16 %v4655
        %v5139 = vunpack.c.l.b16 %v4656
        %v5140 = vunpack.c.l.b16 %v4657
        %v5141 = vunpack.c.l.b16 %v4658
        %v5142 = vunpack.c.l.b16 %v4659
        %v5143 = vunpack.c.l.b16 %v4660
        %v5144 = vunpack.c.l.b16 %v4661
        %v5145 = vunpack.c.l.b16 %v4662
        %v5146 = vunpack.c.l.b16 %v4663
        %v5147 = vunpack.c.l.b16 %v4664
        %v5148 = vunpack.c.l.b16 %v4665
        %v5149 = vunpack.c.l.b16 %v4666
        %v5150 = vunpack.c.l.b16 %v4667
        %v5151 = vunpack.c.l.b16 %v4668
        %v5152 = vunpack.c.l.b16 %v4669
        %v5153 = vunpack.c.l.b16 %v4670
        %v5154 = vunpack.c.l.b16 %v4671
        %v5155 = vunpack.c.l.b16 %v4672
        %v5156 = vpack.c.b16 %v5125, %v5124
        %v5157 = vpack.c.b16 %v5127, %v5126
        %v5158 = vpack.c.b16 %v5129, %v5128
        %v5159 = vpack.c.b16 %v5131, %v5130
        %v5160 = vpack.c.b16 %v5133, %v5132
        %v5161 = vpack.c.b16 %v5135, %v5134
        %v5162 = vpack.c.b16 %v5137, %v5136
        %v5163 = vpack.c.b16 %v5139, %v5138
        %v5164 = vpack.c.b16 %v5141, %v5140
        %v5165 = vpack.c.b16 %v5143, %v5142
        %v5166 = vpack.c.b16 %v5145, %v5144
        %v5167 = vpack.c.b16 %v5147, %v5146
        %v5168 = vpack.c.b16 %v5149, %v5148
        %v5169 = vpack.c.b16 %v5151, %v5150
        %v5170 = vpack.c.b16 %v5153, %v5152
        %v5171 = vpack.c.b16 %v5155, %v5154
        %5188 = vmatprep.subr.bf16.mxu0 0
        %5189 = vmatpush1.bf16.msra.mxu0 %v5156
        %5190 = vmatprep.subr.bf16.mxu0 0
        %5191 = vmatpush1.bf16.msra.mxu0 %v5157
        %5192 = vmatprep.subr.bf16.mxu0 0
        %5193 = vmatpush1.bf16.msra.mxu0 %v5158
        %5194 = vmatprep.subr.bf16.mxu0 0
        %5195 = vmatpush1.bf16.msra.mxu0 %v5159
        %5196 = vmatprep.subr.bf16.mxu0 0
        %5197 = vmatpush1.bf16.msra.mxu0 %v5160
        %5198 = vmatprep.subr.bf16.mxu0 0
        %5199 = vmatpush1.bf16.msra.mxu0 %v5161
        %5200 = vmatprep.subr.bf16.mxu0 0
        %5201 = vmatpush1.bf16.msra.mxu0 %v5162
        %5202 = vmatprep.subr.bf16.mxu0 0
        %5203 = vmatpush1.bf16.msra.mxu0 %v5163
        %5204 = vmatprep.subr.bf16.mxu0 0
        %5205 = vmatpush1.bf16.msra.mxu0 %v5164
        %5206 = vmatprep.subr.bf16.mxu0 0
        %5207 = vmatpush1.bf16.msra.mxu0 %v5165
        %5208 = vmatprep.subr.bf16.mxu0 0
        %5209 = vmatpush1.bf16.msra.mxu0 %v5166
        %5210 = vmatprep.subr.bf16.mxu0 0
        %5211 = vmatpush1.bf16.msra.mxu0 %v5167
        %5212 = vmatprep.subr.bf16.mxu0 0
        %5213 = vmatpush1.bf16.msra.mxu0 %v5168
        %5214 = vmatprep.subr.bf16.mxu0 0
        %5215 = vmatpush1.bf16.msra.mxu0 %v5169
        %5216 = vmatprep.subr.bf16.mxu0 0
        %5217 = vmatpush1.bf16.msra.mxu0 %v5170
        %5218 = vmatprep.subr.bf16.mxu0 0
        %5219 = vmatpush1.bf16.msra.mxu0 %v5171
        %5220 = vmatprep.mubr.bf16.mxu0 %v5085
        %5221 = vmatmul.mubr.bf16.gmra.mrb[0].mxu0 %v5084
        %v5222 = vpop.f32.mrb[0].mxu0
        %v5223 = vadd.f32 0.0, %v5222
        %v5224 = vpop.f32.mrb[0].mxu0
        %v5225 = vpop.f32.mrb[0].mxu0
        %v5226 = vadd.f32 0.0, %v5225
        %v5227 = vpop.f32.mrb[0].mxu0
        %5228 = vmatprep.mubr.bf16.mxu0 %v5087
        %5229 = vmatmul.mubr.bf16.gmra.mrb[0].mxu0 %v5086
        %v5230 = vpop.f32.mrb[0].mxu0
        %v5231 = vadd.f32 0.0, %v5230
        %v5232 = vpop.f32.mrb[0].mxu0
        %v5233 = vpop.f32.mrb[0].mxu0
        %v5234 = vadd.f32 0.0, %v5233
        %v5235 = vpop.f32.mrb[0].mxu0
        %5236 = vmatprep.mubr.bf16.mxu0 %v5089
        %5237 = vmatmul.mubr.bf16.gmra.mrb[0].mxu0 %v5088
        %v5238 = vpop.f32.mrb[0].mxu0
        %v5239 = vadd.f32 0.0, %v5238
        %v5240 = vpop.f32.mrb[0].mxu0
        %v5241 = vpop.f32.mrb[0].mxu0
        %v5242 = vadd.f32 0.0, %v5241
        %v5243 = vpop.f32.mrb[0].mxu0
        %5244 = vmatprep.mubr.bf16.mxu0 %v5091
        %5245 = vmatmul.mubr.bf16.gmra.mrb[0].mxu0 %v5090
        %v5246 = vpop.f32.mrb[0].mxu0
        %v5247 = vadd.f32 0.0, %v5246
        %v5248 = vpop.f32.mrb[0].mxu0
        %v5249 = vpop.f32.mrb[0].mxu0
        %v5250 = vadd.f32 0.0, %v5249
        %v5251 = vpop.f32.mrb[0].mxu0
        %5252 = vdwg.mxu0
        %v5285 = vunpack.c.l.b16 %v4575
        %v5286 = vunpack.c.l.b16 %v4576
        %v5287 = vunpack.c.l.b16 %v4577
        %v5288 = vunpack.c.l.b16 %v4578
        %v5289 = vunpack.c.l.b16 %v4579
        %v5290 = vunpack.c.l.b16 %v4580
        %v5291 = vunpack.c.l.b16 %v4581
        %v5292 = vunpack.c.l.b16 %v4582
        %v5293 = vunpack.c.l.b16 %v4583
        %v5294 = vunpack.c.l.b16 %v4584
        %v5295 = vunpack.c.l.b16 %v4585
        %v5296 = vunpack.c.l.b16 %v4586
        %v5297 = vunpack.c.l.b16 %v4587
        %v5298 = vunpack.c.l.b16 %v4588
        %v5299 = vunpack.c.l.b16 %v4589
        %v5300 = vunpack.c.l.b16 %v4590
        %v5301 = vunpack.c.l.b16 %v4591
        %v5302 = vunpack.c.l.b16 %v4592
        %v5303 = vunpack.c.l.b16 %v4593
        %v5304 = vunpack.c.l.b16 %v4594
        %v5305 = vunpack.c.l.b16 %v4595
        %v5306 = vunpack.c.l.b16 %v4596
        %v5307 = vunpack.c.l.b16 %v4597
        %v5308 = vunpack.c.l.b16 %v4598
        %v5309 = vunpack.c.l.b16 %v4599
        %v5310 = vunpack.c.l.b16 %v4600
        %v5311 = vunpack.c.l.b16 %v4601
        %v5312 = vunpack.c.l.b16 %v4602
        %v5313 = vunpack.c.l.b16 %v4603
        %v5314 = vunpack.c.l.b16 %v4604
        %v5315 = vunpack.c.l.b16 %v4605
        %v5316 = vunpack.c.l.b16 %v4606
        %v5317 = vpack.c.b16 %v5286, %v5285
        %v5318 = vpack.c.b16 %v5288, %v5287
        %v5319 = vpack.c.b16 %v5290, %v5289
        %v5320 = vpack.c.b16 %v5292, %v5291
        %v5321 = vpack.c.b16 %v5294, %v5293
        %v5322 = vpack.c.b16 %v5296, %v5295
        %v5323 = vpack.c.b16 %v5298, %v5297
        %v5324 = vpack.c.b16 %v5300, %v5299
        %v5325 = vpack.c.b16 %v5302, %v5301
        %v5326 = vpack.c.b16 %v5304, %v5303
        %v5327 = vpack.c.b16 %v5306, %v5305
        %v5328 = vpack.c.b16 %v5308, %v5307
        %v5329 = vpack.c.b16 %v5310, %v5309
        %v5330 = vpack.c.b16 %v5312, %v5311
        %v5331 = vpack.c.b16 %v5314, %v5313
        %v5332 = vpack.c.b16 %v5316, %v5315
        %v5334 = vsel %vm976, %v5317, 0
        %v5337 = vsel %vm976, %v5318, 0
        %v5340 = vsel %vm976, %v5319, 0
        %v5343 = vsel %vm976, %v5320, 0
        %v5346 = vsel %vm976, %v5321, 0
        %v5349 = vsel %vm976, %v5322, 0
        %v5352 = vsel %vm976, %v5323, 0
        %v5355 = vsel %vm976, %v5324, 0
        %v5358 = vsel %vm976, %v5325, 0
        %v5361 = vsel %vm976, %v5326, 0
        %v5364 = vsel %vm976, %v5327, 0
        %v5367 = vsel %vm976, %v5328, 0
        %v5370 = vsel %vm976, %v5329, 0
        %v5373 = vsel %vm976, %v5330, 0
        %v5376 = vsel %vm976, %v5331, 0
        %v5379 = vsel %vm976, %v5332, 0
        %5381 = vmatprep.subr.bf16.mxu0 0
        %5382 = vmatpush1.bf16.xpose.msra.mxu0 %v4783
        %5383 = vmatprep.subr.bf16.mxu0 0
        %5384 = vmatpush1.bf16.xpose.msra.mxu0 %v4786
        %5385 = vmatprep.subr.bf16.mxu0 0
        %5386 = vmatpush1.bf16.xpose.msra.mxu0 %v4789
        %5387 = vmatprep.subr.bf16.mxu0 0
        %5388 = vmatpush1.bf16.xpose.msra.mxu0 %v4792
        %5389 = vmatprep.subr.bf16.mxu0 0
        %5390 = vmatpush1.bf16.xpose.msra.mxu0 0
        %5391 = vmatprep.subr.bf16.mxu0 0
        %5392 = vmatpush1.bf16.xpose.msra.mxu0 0
        %5393 = vmatprep.subr.bf16.mxu0 0
        %5394 = vmatpush1.bf16.xpose.msra.mxu0 0
        %5395 = vmatprep.subr.bf16.mxu0 0
        %5396 = vmatpush1.bf16.xpose.msra.mxu0 0
        %5397 = vmatprep.subr.bf16.mxu0 0
        %5398 = vmatpush1.bf16.xpose.msra.mxu0 0
        %5399 = vmatprep.subr.bf16.mxu0 0
        %5400 = vmatpush1.bf16.xpose.msra.mxu0 0
        %5401 = vmatprep.subr.bf16.mxu0 0
        %5402 = vmatpush1.bf16.xpose.msra.mxu0 0
        %5403 = vmatprep.subr.bf16.mxu0 0
        %5404 = vmatpush1.bf16.xpose.msra.mxu0 0
        %5405 = vmatprep.subr.bf16.mxu0 0
        %5406 = vmatpush1.bf16.xpose.msra.mxu0 0
        %5407 = vmatprep.subr.bf16.mxu0 0
        %5408 = vmatpush1.bf16.xpose.msra.mxu0 0
        %5409 = vmatprep.subr.bf16.mxu0 0
        %5410 = vmatpush1.bf16.xpose.msra.mxu0 0
        %5411 = vmatprep.subr.bf16.mxu0 0
        %5412 = vmatpush1.bf16.xpose.msra.mxu0 0
        %5413 = vmatprep.mubr.bf16.mxu0 0
        %5414 = vmatmul.mubr.bf16.gmra.mrb[0].mxu0 %v5334
        %v5415 = vpop.f32.mrb[0].mxu0
        %v5416 = vadd.f32 0.0, %v5415
        %v5417 = vpop.f32.mrb[0].mxu0
        %v5418 = vpop.f32.mrb[0].mxu0
        %v5419 = vadd.f32 0.0, %v5418
        %v5420 = vpop.f32.mrb[0].mxu0
        %5421 = vmatprep.mubr.bf16.mxu0 0
        %5422 = vmatmul.mubr.bf16.gmra.mrb[0].mxu0 %v5337
        %v5423 = vpop.f32.mrb[0].mxu0
        %v5424 = vadd.f32 0.0, %v5423
        %v5425 = vpop.f32.mrb[0].mxu0
        %v5426 = vpop.f32.mrb[0].mxu0
        %v5427 = vadd.f32 0.0, %v5426
        %v5428 = vpop.f32.mrb[0].mxu0
        %5429 = vmatprep.mubr.bf16.mxu0 0
        %5430 = vmatmul.mubr.bf16.gmra.mrb[0].mxu0 %v5340
        %v5431 = vpop.f32.mrb[0].mxu0
        %v5432 = vadd.f32 0.0, %v5431
        %v5433 = vpop.f32.mrb[0].mxu0
        %v5434 = vpop.f32.mrb[0].mxu0
        %v5435 = vadd.f32 0.0, %v5434
        %v5436 = vpop.f32.mrb[0].mxu0
        %5437 = vmatprep.mubr.bf16.mxu0 0
        %5438 = vmatmul.mubr.bf16.gmra.mrb[0].mxu0 %v5343
        %v5439 = vpop.f32.mrb[0].mxu0
        %v5440 = vadd.f32 0.0, %v5439
        %v5441 = vpop.f32.mrb[0].mxu0
        %v5442 = vpop.f32.mrb[0].mxu0
        %v5443 = vadd.f32 0.0, %v5442
        %v5444 = vpop.f32.mrb[0].mxu0
        %5445 = vmatprep.mubr.bf16.mxu0 0
        %5446 = vmatmul.mubr.bf16.gmra.mrb[0].mxu0 %v5346
        %v5447 = vpop.f32.mrb[0].mxu0
        %v5448 = vadd.f32 0.0, %v5447
        %v5449 = vpop.f32.mrb[0].mxu0
        %v5450 = vpop.f32.mrb[0].mxu0
        %v5451 = vadd.f32 0.0, %v5450
        %v5452 = vpop.f32.mrb[0].mxu0
        %5453 = vmatprep.mubr.bf16.mxu0 0
        %5454 = vmatmul.mubr.bf16.gmra.mrb[0].mxu0 %v5349
        %v5455 = vpop.f32.mrb[0].mxu0
        %v5456 = vadd.f32 0.0, %v5455
        %v5457 = vpop.f32.mrb[0].mxu0
        %v5458 = vpop.f32.mrb[0].mxu0
        %v5459 = vadd.f32 0.0, %v5458
        %v5460 = vpop.f32.mrb[0].mxu0
        %5461 = vmatprep.mubr.bf16.mxu0 0
        %5462 = vmatmul.mubr.bf16.gmra.mrb[0].mxu0 %v5352
        %v5463 = vpop.f32.mrb[0].mxu0
        %v5464 = vadd.f32 0.0, %v5463
        %v5465 = vpop.f32.mrb[0].mxu0
        %v5466 = vpop.f32.mrb[0].mxu0
        %v5467 = vadd.f32 0.0, %v5466
        %v5468 = vpop.f32.mrb[0].mxu0
        %5469 = vmatprep.mubr.bf16.mxu0 0
        %5470 = vmatmul.mubr.bf16.gmra.mrb[0].mxu0 %v5355
        %v5471 = vpop.f32.mrb[0].mxu0
        %v5472 = vadd.f32 0.0, %v5471
        %v5473 = vpop.f32.mrb[0].mxu0
        %v5474 = vpop.f32.mrb[0].mxu0
        %v5475 = vadd.f32 0.0, %v5474
        %v5476 = vpop.f32.mrb[0].mxu0
        %5477 = vmatprep.mubr.bf16.mxu0 0
        %5478 = vmatmul.mubr.bf16.gmra.mrb[0].mxu0 %v5358
        %v5479 = vpop.f32.mrb[0].mxu0
        %v5480 = vadd.f32 0.0, %v5479
        %v5481 = vpop.f32.mrb[0].mxu0
        %v5482 = vpop.f32.mrb[0].mxu0
        %v5483 = vadd.f32 0.0, %v5482
        %v5484 = vpop.f32.mrb[0].mxu0
        %5485 = vmatprep.mubr.bf16.mxu0 0
        %5486 = vmatmul.mubr.bf16.gmra.mrb[0].mxu0 %v5361
        %v5487 = vpop.f32.mrb[0].mxu0
        %v5488 = vadd.f32 0.0, %v5487
        %v5489 = vpop.f32.mrb[0].mxu0
        %v5490 = vpop.f32.mrb[0].mxu0
        %v5491 = vadd.f32 0.0, %v5490
        %v5492 = vpop.f32.mrb[0].mxu0
        %5493 = vmatprep.mubr.bf16.mxu0 0
        %5494 = vmatmul.mubr.bf16.gmra.mrb[0].mxu0 %v5364
        %v5495 = vpop.f32.mrb[0].mxu0
        %v5496 = vadd.f32 0.0, %v5495
        %v5497 = vpop.f32.mrb[0].mxu0
        %v5498 = vpop.f32.mrb[0].mxu0
        %v5499 = vadd.f32 0.0, %v5498
        %v5500 = vpop.f32.mrb[0].mxu0
        %5501 = vmatprep.mubr.bf16.mxu0 0
        %5502 = vmatmul.mubr.bf16.gmra.mrb[0].mxu0 %v5367
        %v5503 = vpop.f32.mrb[0].mxu0
        %v5504 = vadd.f32 0.0, %v5503
        %v5505 = vpop.f32.mrb[0].mxu0
        %v5506 = vpop.f32.mrb[0].mxu0
        %v5507 = vadd.f32 0.0, %v5506
        %v5508 = vpop.f32.mrb[0].mxu0
        %5509 = vmatprep.mubr.bf16.mxu0 0
        %5510 = vmatmul.mubr.bf16.gmra.mrb[0].mxu0 %v5370
        %v5511 = vpop.f32.mrb[0].mxu0
        %v5512 = vadd.f32 0.0, %v5511
        %v5513 = vpop.f32.mrb[0].mxu0
        %v5514 = vpop.f32.mrb[0].mxu0
        %v5515 = vadd.f32 0.0, %v5514
        %v5516 = vpop.f32.mrb[0].mxu0
        %5517 = vmatprep.mubr.bf16.mxu0 0
        %5518 = vmatmul.mubr.bf16.gmra.mrb[0].mxu0 %v5373
        %v5519 = vpop.f32.mrb[0].mxu0
        %v5520 = vadd.f32 0.0, %v5519
        %v5521 = vpop.f32.mrb[0].mxu0
        %v5522 = vpop.f32.mrb[0].mxu0
        %v5523 = vadd.f32 0.0, %v5522
        %v5524 = vpop.f32.mrb[0].mxu0
        %5525 = vmatprep.mubr.bf16.mxu0 0
        %5526 = vmatmul.mubr.bf16.gmra.mrb[0].mxu0 %v5376
        %v5527 = vpop.f32.mrb[0].mxu0
        %v5528 = vadd.f32 0.0, %v5527
        %v5529 = vpop.f32.mrb[0].mxu0
        %v5530 = vpop.f32.mrb[0].mxu0
        %v5531 = vadd.f32 0.0, %v5530
        %v5532 = vpop.f32.mrb[0].mxu0
        %5533 = vmatprep.mubr.bf16.mxu0 0
        %5534 = vmatmul.mubr.bf16.gmra.mrb[0].mxu0 %v5379
        %v5535 = vpop.f32.mrb[0].mxu0
        %v5536 = vadd.f32 0.0, %v5535
        %v5537 = vpop.f32.mrb[0].mxu0
        %v5538 = vpop.f32.mrb[0].mxu0
        %v5539 = vadd.f32 0.0, %v5538
        %v5540 = vpop.f32.mrb[0].mxu0
        %5541 = vdwg.mxu0
        %v5542 = vmul.f32 %v5416, 0.17677669
        %v5543 = vmul.f32 %v5419, 0.17677669
        %v5544 = vmul.f32 %v5424, 0.17677669
        %v5545 = vmul.f32 %v5427, 0.17677669
        %v5546 = vmul.f32 %v5432, 0.17677669
        %v5547 = vmul.f32 %v5435, 0.17677669
        %v5548 = vmul.f32 %v5440, 0.17677669
        %v5549 = vmul.f32 %v5443, 0.17677669
        %v5550 = vmul.f32 %v5448, 0.17677669
        %v5551 = vmul.f32 %v5451, 0.17677669
        %v5552 = vmul.f32 %v5456, 0.17677669
        %v5553 = vmul.f32 %v5459, 0.17677669
        %v5554 = vmul.f32 %v5464, 0.17677669
        %v5555 = vmul.f32 %v5467, 0.17677669
        %v5556 = vmul.f32 %v5472, 0.17677669
        %v5557 = vmul.f32 %v5475, 0.17677669
        %v5558 = vmul.f32 %v5480, 0.17677669
        %v5559 = vmul.f32 %v5483, 0.17677669
        %v5560 = vmul.f32 %v5488, 0.17677669
        %v5561 = vmul.f32 %v5491, 0.17677669
        %v5562 = vmul.f32 %v5496, 0.17677669
        %v5563 = vmul.f32 %v5499, 0.17677669
        %v5564 = vmul.f32 %v5504, 0.17677669
        %v5565 = vmul.f32 %v5507, 0.17677669
        %v5566 = vmul.f32 %v5512, 0.17677669
        %v5567 = vmul.f32 %v5515, 0.17677669
        %v5568 = vmul.f32 %v5520, 0.17677669
        %v5569 = vmul.f32 %v5523, 0.17677669
        %v5570 = vmul.f32 %v5528, 0.17677669
        %v5571 = vmul.f32 %v5531, 0.17677669
        %v5572 = vmul.f32 %v5536, 0.17677669
        %v5573 = vmul.f32 %v5539, 0.17677669
        %s5574 = scalar_lea.vmem %s5, 512
        %v5575 = vld [vmem:[%s5574] sm:$0xff]
        %v5576 = vld [vmem:[%s5574 + $0x8] sm:$0xff]
        %v5577 = vld [vmem:[%s5574 + $0x10] sm:$0xff]
        %v5578 = vld [vmem:[%s5574 + $0x18] sm:$0xff]
        %v5579 = vld [vmem:[%s5574 + $0x20] sm:$0xff]
        %v5580 = vld [vmem:[%s5574 + $0x28] sm:$0xff]
        %v5581 = vld [vmem:[%s5574 + $0x30] sm:$0xff]
        %v5582 = vld [vmem:[%s5574 + $0x38] sm:$0xff]
        %v5583 = vld [vmem:[%s5574 + $0x40] sm:$0xff]
        %v5584 = vld [vmem:[%s5574 + $0x48] sm:$0xff]
        %v5585 = vld [vmem:[%s5574 + $0x50] sm:$0xff]
        %v5586 = vld [vmem:[%s5574 + $0x58] sm:$0xff]
        %v5587 = vld [vmem:[%s5574 + $0x60] sm:$0xff]
        %v5588 = vld [vmem:[%s5574 + $0x68] sm:$0xff]
        %v5589 = vld [vmem:[%s5574 + $0x70] sm:$0xff]
        %v5590 = vld [vmem:[%s5574 + $0x78] sm:$0xff]
        %v5591 = vld [vmem:[%s5574 + $0x80] sm:$0xff]
        %v5592 = vld [vmem:[%s5574 + $0x88] sm:$0xff]
        %v5593 = vld [vmem:[%s5574 + $0x90] sm:$0xff]
        %v5594 = vld [vmem:[%s5574 + $0x98] sm:$0xff]
        %v5595 = vld [vmem:[%s5574 + $0xa0] sm:$0xff]
        %v5596 = vld [vmem:[%s5574 + $0xa8] sm:$0xff]
        %v5597 = vld [vmem:[%s5574 + $0xb0] sm:$0xff]
        %v5598 = vld [vmem:[%s5574 + $0xb8] sm:$0xff]
        %v5599 = vld [vmem:[%s5574 + $0xc0] sm:$0xff]
        %v5600 = vld [vmem:[%s5574 + $0xc8] sm:$0xff]
        %v5601 = vld [vmem:[%s5574 + $0xd0] sm:$0xff]
        %v5602 = vld [vmem:[%s5574 + $0xd8] sm:$0xff]
        %v5603 = vld [vmem:[%s5574 + $0xe0] sm:$0xff]
        %v5604 = vld [vmem:[%s5574 + $0xe8] sm:$0xff]
        %v5605 = vld [vmem:[%s5574 + $0xf0] sm:$0xff]
        %v5606 = vld [vmem:[%s5574 + $0xf8] sm:$0xff]
        %v5607 = vadd.f32 %v5542, %v5575
        %v5608 = vadd.f32 %v5543, %v5576
        %v5609 = vadd.f32 %v5544, %v5577
        %v5610 = vadd.f32 %v5545, %v5578
        %v5611 = vadd.f32 %v5546, %v5579
        %v5612 = vadd.f32 %v5547, %v5580
        %v5613 = vadd.f32 %v5548, %v5581
        %v5614 = vadd.f32 %v5549, %v5582
        %v5615 = vadd.f32 %v5550, %v5583
        %v5616 = vadd.f32 %v5551, %v5584
        %v5617 = vadd.f32 %v5552, %v5585
        %v5618 = vadd.f32 %v5553, %v5586
        %v5619 = vadd.f32 %v5554, %v5587
        %v5620 = vadd.f32 %v5555, %v5588
        %v5621 = vadd.f32 %v5556, %v5589
        %v5622 = vadd.f32 %v5557, %v5590
        %v5623 = vadd.f32 %v5558, %v5591
        %v5624 = vadd.f32 %v5559, %v5592
        %v5625 = vadd.f32 %v5560, %v5593
        %v5626 = vadd.f32 %v5561, %v5594
        %v5627 = vadd.f32 %v5562, %v5595
        %v5628 = vadd.f32 %v5563, %v5596
        %v5629 = vadd.f32 %v5564, %v5597
        %v5630 = vadd.f32 %v5565, %v5598
        %v5631 = vadd.f32 %v5566, %v5599
        %v5632 = vadd.f32 %v5567, %v5600
        %v5633 = vadd.f32 %v5568, %v5601
        %v5634 = vadd.f32 %v5569, %v5602
        %v5635 = vadd.f32 %v5570, %v5603
        %v5636 = vadd.f32 %v5571, %v5604
        %v5637 = vadd.f32 %v5572, %v5605
        %v5638 = vadd.f32 %v5573, %v5606
        %v5639 = vsel %vm1832, %v5607, -inf
        %5640 = vmax.xlane.f32.xlu0 %v5639
        %v5641 = vpop.xlane.xlu0 %5640
        %v5642 = vsel %vm1832, %v5608, -inf
        %5643 = vmax.xlane.f32.xlu0 %v5642
        %v5644 = vpop.xlane.xlu0 %5643
        %v5645 = vsel %vm1832, %v5609, -inf
        %5646 = vmax.xlane.f32.xlu0 %v5645
        %v5647 = vpop.xlane.xlu0 %5646
        %v5648 = vsel %vm1832, %v5610, -inf
        %5649 = vmax.xlane.f32.xlu0 %v5648
        %v5650 = vpop.xlane.xlu0 %5649
        %v5651 = vsel %vm1832, %v5611, -inf
        %5652 = vmax.xlane.f32.xlu0 %v5651
        %v5653 = vpop.xlane.xlu0 %5652
        %v5654 = vsel %vm1832, %v5612, -inf
        %5655 = vmax.xlane.f32.xlu0 %v5654
        %v5656 = vpop.xlane.xlu0 %5655
        %v5657 = vsel %vm1832, %v5613, -inf
        %5658 = vmax.xlane.f32.xlu0 %v5657
        %v5659 = vpop.xlane.xlu0 %5658
        %v5660 = vsel %vm1832, %v5614, -inf
        %5661 = vmax.xlane.f32.xlu0 %v5660
        %v5662 = vpop.xlane.xlu0 %5661
        %v5663 = vsel %vm1832, %v5615, -inf
        %5664 = vmax.xlane.f32.xlu0 %v5663
        %v5665 = vpop.xlane.xlu0 %5664
        %v5666 = vsel %vm1832, %v5616, -inf
        %5667 = vmax.xlane.f32.xlu0 %v5666
        %v5668 = vpop.xlane.xlu0 %5667
        %v5669 = vsel %vm1832, %v5617, -inf
        %5670 = vmax.xlane.f32.xlu0 %v5669
        %v5671 = vpop.xlane.xlu0 %5670
        %v5672 = vsel %vm1832, %v5618, -inf
        %5673 = vmax.xlane.f32.xlu0 %v5672
        %v5674 = vpop.xlane.xlu0 %5673
        %v5675 = vsel %vm1832, %v5619, -inf
        %5676 = vmax.xlane.f32.xlu0 %v5675
        %v5677 = vpop.xlane.xlu0 %5676
        %v5678 = vsel %vm1832, %v5620, -inf
        %5679 = vmax.xlane.f32.xlu0 %v5678
        %v5680 = vpop.xlane.xlu0 %5679
        %v5681 = vsel %vm1832, %v5621, -inf
        %5682 = vmax.xlane.f32.xlu0 %v5681
        %v5683 = vpop.xlane.xlu0 %5682
        %v5684 = vsel %vm1832, %v5622, -inf
        %5685 = vmax.xlane.f32.xlu0 %v5684
        %v5686 = vpop.xlane.xlu0 %5685
        %v5687 = vsel %vm1832, %v5623, -inf
        %5688 = vmax.xlane.f32.xlu0 %v5687
        %v5689 = vpop.xlane.xlu0 %5688
        %v5690 = vsel %vm1832, %v5624, -inf
        %5691 = vmax.xlane.f32.xlu0 %v5690
        %v5692 = vpop.xlane.xlu0 %5691
        %v5693 = vsel %vm1832, %v5625, -inf
        %5694 = vmax.xlane.f32.xlu0 %v5693
        %v5695 = vpop.xlane.xlu0 %5694
        %v5696 = vsel %vm1832, %v5626, -inf
        %5697 = vmax.xlane.f32.xlu0 %v5696
        %v5698 = vpop.xlane.xlu0 %5697
        %v5699 = vsel %vm1832, %v5627, -inf
        %5700 = vmax.xlane.f32.xlu0 %v5699
        %v5701 = vpop.xlane.xlu0 %5700
        %v5702 = vsel %vm1832, %v5628, -inf
        %5703 = vmax.xlane.f32.xlu0 %v5702
        %v5704 = vpop.xlane.xlu0 %5703
        %v5705 = vsel %vm1832, %v5629, -inf
        %5706 = vmax.xlane.f32.xlu0 %v5705
        %v5707 = vpop.xlane.xlu0 %5706
        %v5708 = vsel %vm1832, %v5630, -inf
        %5709 = vmax.xlane.f32.xlu0 %v5708
        %v5710 = vpop.xlane.xlu0 %5709
        %v5711 = vsel %vm1832, %v5631, -inf
        %5712 = vmax.xlane.f32.xlu0 %v5711
        %v5713 = vpop.xlane.xlu0 %5712
        %v5714 = vsel %vm1832, %v5632, -inf
        %5715 = vmax.xlane.f32.xlu0 %v5714
        %v5716 = vpop.xlane.xlu0 %5715
        %v5717 = vsel %vm1832, %v5633, -inf
        %5718 = vmax.xlane.f32.xlu0 %v5717
        %v5719 = vpop.xlane.xlu0 %5718
        %v5720 = vsel %vm1832, %v5634, -inf
        %5721 = vmax.xlane.f32.xlu0 %v5720
        %v5722 = vpop.xlane.xlu0 %5721
        %v5723 = vsel %vm1832, %v5635, -inf
        %5724 = vmax.xlane.f32.xlu0 %v5723
        %v5725 = vpop.xlane.xlu0 %5724
        %v5726 = vsel %vm1832, %v5636, -inf
        %5727 = vmax.xlane.f32.xlu0 %v5726
        %v5728 = vpop.xlane.xlu0 %5727
        %v5729 = vsel %vm1832, %v5637, -inf
        %5730 = vmax.xlane.f32.xlu0 %v5729
        %v5731 = vpop.xlane.xlu0 %5730
        %v5732 = vsel %vm1832, %v5638, -inf
        %5733 = vmax.xlane.f32.xlu0 %v5732
        %v5734 = vpop.xlane.xlu0 %5733
        %v5735 = vsub.f32 %v5607, %v5641
        %v5736 = vsub.f32 %v5608, %v5644
        %v5737 = vsub.f32 %v5609, %v5647
        %v5738 = vsub.f32 %v5610, %v5650
        %v5739 = vsub.f32 %v5611, %v5653
        %v5740 = vsub.f32 %v5612, %v5656
        %v5741 = vsub.f32 %v5613, %v5659
        %v5742 = vsub.f32 %v5614, %v5662
        %v5743 = vsub.f32 %v5615, %v5665
        %v5744 = vsub.f32 %v5616, %v5668
        %v5745 = vsub.f32 %v5617, %v5671
        %v5746 = vsub.f32 %v5618, %v5674
        %v5747 = vsub.f32 %v5619, %v5677
        %v5748 = vsub.f32 %v5620, %v5680
        %v5749 = vsub.f32 %v5621, %v5683
        %v5750 = vsub.f32 %v5622, %v5686
        %v5751 = vsub.f32 %v5623, %v5689
        %v5752 = vsub.f32 %v5624, %v5692
        %v5753 = vsub.f32 %v5625, %v5695
        %v5754 = vsub.f32 %v5626, %v5698
        %v5755 = vsub.f32 %v5627, %v5701
        %v5756 = vsub.f32 %v5628, %v5704
        %v5757 = vsub.f32 %v5629, %v5707
        %v5758 = vsub.f32 %v5630, %v5710
        %v5759 = vsub.f32 %v5631, %v5713
        %v5760 = vsub.f32 %v5632, %v5716
        %v5761 = vsub.f32 %v5633, %v5719
        %v5762 = vsub.f32 %v5634, %v5722
        %v5763 = vsub.f32 %v5635, %v5725
        %v5764 = vsub.f32 %v5636, %v5728
        %v5765 = vsub.f32 %v5637, %v5731
        %v5766 = vsub.f32 %v5638, %v5734
        %v5767 = vmul.f32 %v5735, 1.442695
        %v5768 = vpow.pop %v5767
        %v5769 = vmul.f32 %v5736, 1.442695
        %v5770 = vpow.pop %v5769
        %v5771 = vmul.f32 %v5737, 1.442695
        %v5772 = vpow.pop %v5771
        %v5773 = vmul.f32 %v5738, 1.442695
        %v5774 = vpow.pop %v5773
        %v5775 = vmul.f32 %v5739, 1.442695
        %v5776 = vpow.pop %v5775
        %v5777 = vmul.f32 %v5740, 1.442695
        %v5778 = vpow.pop %v5777
        %v5779 = vmul.f32 %v5741, 1.442695
        %v5780 = vpow.pop %v5779
        %v5781 = vmul.f32 %v5742, 1.442695
        %v5782 = vpow.pop %v5781
        %v5783 = vmul.f32 %v5743, 1.442695
        %v5784 = vpow.pop %v5783
        %v5785 = vmul.f32 %v5744, 1.442695
        %v5786 = vpow.pop %v5785
        %v5787 = vmul.f32 %v5745, 1.442695
        %v5788 = vpow.pop %v5787
        %v5789 = vmul.f32 %v5746, 1.442695
        %v5790 = vpow.pop %v5789
        %v5791 = vmul.f32 %v5747, 1.442695
        %v5792 = vpow.pop %v5791
        %v5793 = vmul.f32 %v5748, 1.442695
        %v5794 = vpow.pop %v5793
        %v5795 = vmul.f32 %v5749, 1.442695
        %v5796 = vpow.pop %v5795
        %v5797 = vmul.f32 %v5750, 1.442695
        %v5798 = vpow.pop %v5797
        %v5799 = vmul.f32 %v5751, 1.442695
        %v5800 = vpow.pop %v5799
        %v5801 = vmul.f32 %v5752, 1.442695
        %v5802 = vpow.pop %v5801
        %v5803 = vmul.f32 %v5753, 1.442695
        %v5804 = vpow.pop %v5803
        %v5805 = vmul.f32 %v5754, 1.442695
        %v5806 = vpow.pop %v5805
        %v5807 = vmul.f32 %v5755, 1.442695
        %v5808 = vpow.pop %v5807
        %v5809 = vmul.f32 %v5756, 1.442695
        %v5810 = vpow.pop %v5809
        %v5811 = vmul.f32 %v5757, 1.442695
        %v5812 = vpow.pop %v5811
        %v5813 = vmul.f32 %v5758, 1.442695
        %v5814 = vpow.pop %v5813
        %v5815 = vmul.f32 %v5759, 1.442695
        %v5816 = vpow.pop %v5815
        %v5817 = vmul.f32 %v5760, 1.442695
        %v5818 = vpow.pop %v5817
        %v5819 = vmul.f32 %v5761, 1.442695
        %v5820 = vpow.pop %v5819
        %v5821 = vmul.f32 %v5762, 1.442695
        %v5822 = vpow.pop %v5821
        %v5823 = vmul.f32 %v5763, 1.442695
        %v5824 = vpow.pop %v5823
        %v5825 = vmul.f32 %v5764, 1.442695
        %v5826 = vpow.pop %v5825
        %v5827 = vmul.f32 %v5765, 1.442695
        %v5828 = vpow.pop %v5827
        %v5829 = vmul.f32 %v5766, 1.442695
        %v5830 = vpow.pop %v5829
        %v5831 = vsel %vm1832, %v5768, 0.0
        %5832 = vadd.xlane.f32.xlu0 %v5831
        %v5833 = vpop.xlane.xlu0 %5832
        %v5834 = vsel %vm1832, %v5770, 0.0
        %5835 = vadd.xlane.f32.xlu0 %v5834
        %v5836 = vpop.xlane.xlu0 %5835
        %v5837 = vsel %vm1832, %v5772, 0.0
        %5838 = vadd.xlane.f32.xlu0 %v5837
        %v5839 = vpop.xlane.xlu0 %5838
        %v5840 = vsel %vm1832, %v5774, 0.0
        %5841 = vadd.xlane.f32.xlu0 %v5840
        %v5842 = vpop.xlane.xlu0 %5841
        %v5843 = vsel %vm1832, %v5776, 0.0
        %5844 = vadd.xlane.f32.xlu0 %v5843
        %v5845 = vpop.xlane.xlu0 %5844
        %v5846 = vsel %vm1832, %v5778, 0.0
        %5847 = vadd.xlane.f32.xlu0 %v5846
        %v5848 = vpop.xlane.xlu0 %5847
        %v5849 = vsel %vm1832, %v5780, 0.0
        %5850 = vadd.xlane.f32.xlu0 %v5849
        %v5851 = vpop.xlane.xlu0 %5850
        %v5852 = vsel %vm1832, %v5782, 0.0
        %5853 = vadd.xlane.f32.xlu0 %v5852
        %v5854 = vpop.xlane.xlu0 %5853
        %v5855 = vsel %vm1832, %v5784, 0.0
        %5856 = vadd.xlane.f32.xlu0 %v5855
        %v5857 = vpop.xlane.xlu0 %5856
        %v5858 = vsel %vm1832, %v5786, 0.0
        %5859 = vadd.xlane.f32.xlu0 %v5858
        %v5860 = vpop.xlane.xlu0 %5859
        %v5861 = vsel %vm1832, %v5788, 0.0
        %5862 = vadd.xlane.f32.xlu0 %v5861
        %v5863 = vpop.xlane.xlu0 %5862
        %v5864 = vsel %vm1832, %v5790, 0.0
        %5865 = vadd.xlane.f32.xlu0 %v5864
        %v5866 = vpop.xlane.xlu0 %5865
        %v5867 = vsel %vm1832, %v5792, 0.0
        %5868 = vadd.xlane.f32.xlu0 %v5867
        %v5869 = vpop.xlane.xlu0 %5868
        %v5870 = vsel %vm1832, %v5794, 0.0
        %5871 = vadd.xlane.f32.xlu0 %v5870
        %v5872 = vpop.xlane.xlu0 %5871
        %v5873 = vsel %vm1832, %v5796, 0.0
        %5874 = vadd.xlane.f32.xlu0 %v5873
        %v5875 = vpop.xlane.xlu0 %5874
        %v5876 = vsel %vm1832, %v5798, 0.0
        %5877 = vadd.xlane.f32.xlu0 %v5876
        %v5878 = vpop.xlane.xlu0 %5877
        %v5879 = vsel %vm1832, %v5800, 0.0
        %5880 = vadd.xlane.f32.xlu0 %v5879
        %v5881 = vpop.xlane.xlu0 %5880
        %v5882 = vsel %vm1832, %v5802, 0.0
        %5883 = vadd.xlane.f32.xlu0 %v5882
        %v5884 = vpop.xlane.xlu0 %5883
        %v5885 = vsel %vm1832, %v5804, 0.0
        %5886 = vadd.xlane.f32.xlu0 %v5885
        %v5887 = vpop.xlane.xlu0 %5886
        %v5888 = vsel %vm1832, %v5806, 0.0
        %5889 = vadd.xlane.f32.xlu0 %v5888
        %v5890 = vpop.xlane.xlu0 %5889
        %v5891 = vsel %vm1832, %v5808, 0.0
        %5892 = vadd.xlane.f32.xlu0 %v5891
        %v5893 = vpop.xlane.xlu0 %5892
        %v5894 = vsel %vm1832, %v5810, 0.0
        %5895 = vadd.xlane.f32.xlu0 %v5894
        %v5896 = vpop.xlane.xlu0 %5895
        %v5897 = vsel %vm1832, %v5812, 0.0
        %5898 = vadd.xlane.f32.xlu0 %v5897
        %v5899 = vpop.xlane.xlu0 %5898
        %v5900 = vsel %vm1832, %v5814, 0.0
        %5901 = vadd.xlane.f32.xlu0 %v5900
        %v5902 = vpop.xlane.xlu0 %5901
        %v5903 = vsel %vm1832, %v5816, 0.0
        %5904 = vadd.xlane.f32.xlu0 %v5903
        %v5905 = vpop.xlane.xlu0 %5904
        %v5906 = vsel %vm1832, %v5818, 0.0
        %5907 = vadd.xlane.f32.xlu0 %v5906
        %v5908 = vpop.xlane.xlu0 %5907
        %v5909 = vsel %vm1832, %v5820, 0.0
        %5910 = vadd.xlane.f32.xlu0 %v5909
        %v5911 = vpop.xlane.xlu0 %5910
        %v5912 = vsel %vm1832, %v5822, 0.0
        %5913 = vadd.xlane.f32.xlu0 %v5912
        %v5914 = vpop.xlane.xlu0 %5913
        %v5915 = vsel %vm1832, %v5824, 0.0
        %5916 = vadd.xlane.f32.xlu0 %v5915
        %v5917 = vpop.xlane.xlu0 %5916
        %v5918 = vsel %vm1832, %v5826, 0.0
        %5919 = vadd.xlane.f32.xlu0 %v5918
        %v5920 = vpop.xlane.xlu0 %5919
        %v5921 = vsel %vm1832, %v5828, 0.0
        %5922 = vadd.xlane.f32.xlu0 %v5921
        %v5923 = vpop.xlane.xlu0 %5922
        %v5924 = vsel %vm1832, %v5830, 0.0
        %5925 = vadd.xlane.f32.xlu0 %v5924
        %v5926 = vpop.xlane.xlu0 %5925
        %v5927 = vrcp.pop %v5833
        %v5928 = vrcp.pop %v5836
        %v5929 = vrcp.pop %v5839
        %v5930 = vrcp.pop %v5842
        %v5931 = vrcp.pop %v5845
        %v5932 = vrcp.pop %v5848
        %v5933 = vrcp.pop %v5851
        %v5934 = vrcp.pop %v5854
        %v5935 = vrcp.pop %v5857
        %v5936 = vrcp.pop %v5860
        %v5937 = vrcp.pop %v5863
        %v5938 = vrcp.pop %v5866
        %v5939 = vrcp.pop %v5869
        %v5940 = vrcp.pop %v5872
        %v5941 = vrcp.pop %v5875
        %v5942 = vrcp.pop %v5878
        %v5943 = vrcp.pop %v5881
        %v5944 = vrcp.pop %v5884
        %v5945 = vrcp.pop %v5887
        %v5946 = vrcp.pop %v5890
        %v5947 = vrcp.pop %v5893
        %v5948 = vrcp.pop %v5896
        %v5949 = vrcp.pop %v5899
        %v5950 = vrcp.pop %v5902
        %v5951 = vrcp.pop %v5905
        %v5952 = vrcp.pop %v5908
        %v5953 = vrcp.pop %v5911
        %v5954 = vrcp.pop %v5914
        %v5955 = vrcp.pop %v5917
        %v5956 = vrcp.pop %v5920
        %v5957 = vrcp.pop %v5923
        %v5958 = vrcp.pop %v5926
        %v5959 = vmul.f32 %v5768, %v5927
        %v5960 = vmul.f32 %v5770, %v5928
        %v5961 = vmul.f32 %v5772, %v5929
        %v5962 = vmul.f32 %v5774, %v5930
        %v5963 = vmul.f32 %v5776, %v5931
        %v5964 = vmul.f32 %v5778, %v5932
        %v5965 = vmul.f32 %v5780, %v5933
        %v5966 = vmul.f32 %v5782, %v5934
        %v5967 = vmul.f32 %v5784, %v5935
        %v5968 = vmul.f32 %v5786, %v5936
        %v5969 = vmul.f32 %v5788, %v5937
        %v5970 = vmul.f32 %v5790, %v5938
        %v5971 = vmul.f32 %v5792, %v5939
        %v5972 = vmul.f32 %v5794, %v5940
        %v5973 = vmul.f32 %v5796, %v5941
        %v5974 = vmul.f32 %v5798, %v5942
        %v5975 = vmul.f32 %v5800, %v5943
        %v5976 = vmul.f32 %v5802, %v5944
        %v5977 = vmul.f32 %v5804, %v5945
        %v5978 = vmul.f32 %v5806, %v5946
        %v5979 = vmul.f32 %v5808, %v5947
        %v5980 = vmul.f32 %v5810, %v5948
        %v5981 = vmul.f32 %v5812, %v5949
        %v5982 = vmul.f32 %v5814, %v5950
        %v5983 = vmul.f32 %v5816, %v5951
        %v5984 = vmul.f32 %v5818, %v5952
        %v5985 = vmul.f32 %v5820, %v5953
        %v5986 = vmul.f32 %v5822, %v5954
        %v5987 = vmul.f32 %v5824, %v5955
        %v5988 = vmul.f32 %v5826, %v5956
        %v5989 = vmul.f32 %v5828, %v5957
        %v5990 = vmul.f32 %v5830, %v5958
        %v5991 = vpack.c.bf16 %v5960, %v5959
        %v5992 = vpack.c.bf16 %v5962, %v5961
        %v5993 = vpack.c.bf16 %v5964, %v5963
        %v5994 = vpack.c.bf16 %v5966, %v5965
        %v5995 = vpack.c.bf16 %v5968, %v5967
        %v5996 = vpack.c.bf16 %v5970, %v5969
        %v5997 = vpack.c.bf16 %v5972, %v5971
        %v5998 = vpack.c.bf16 %v5974, %v5973
        %v5999 = vpack.c.bf16 %v5976, %v5975
        %v6000 = vpack.c.bf16 %v5978, %v5977
        %v6001 = vpack.c.bf16 %v5980, %v5979
        %v6002 = vpack.c.bf16 %v5982, %v5981
        %v6003 = vpack.c.bf16 %v5984, %v5983
        %v6004 = vpack.c.bf16 %v5986, %v5985
        %v6005 = vpack.c.bf16 %v5988, %v5987
        %v6006 = vpack.c.bf16 %v5990, %v5989
        %v6007 = vpack.c.bf16 %v5226, %v5223
        %v6008 = vpack.c.bf16 %v5234, %v5231
        %v6009 = vpack.c.bf16 %v5242, %v5239
        %v6010 = vpack.c.bf16 %v5250, %v5247
        %v6012 = vsel %vm1832, %v5991, 0
        %v6015 = vsel %vm1832, %v5992, 0
        %v6018 = vsel %vm1832, %v5993, 0
        %v6021 = vsel %vm1832, %v5994, 0
        %v6024 = vsel %vm1832, %v5995, 0
        %v6027 = vsel %vm1832, %v5996, 0
        %v6030 = vsel %vm1832, %v5997, 0
        %v6033 = vsel %vm1832, %v5998, 0
        %v6036 = vsel %vm1832, %v5999, 0
        %v6039 = vsel %vm1832, %v6000, 0
        %v6042 = vsel %vm1832, %v6001, 0
        %v6045 = vsel %vm1832, %v6002, 0
        %v6048 = vsel %vm1832, %v6003, 0
        %v6051 = vsel %vm1832, %v6004, 0
        %v6054 = vsel %vm1832, %v6005, 0
        %v6057 = vsel %vm1832, %v6006, 0
        %6059 = vmatprep.subr.bf16.mxu0 0
        %6060 = vmatpush1.bf16.msra.mxu0 %v6007
        %6061 = vmatprep.subr.bf16.mxu0 0
        %6062 = vmatpush1.bf16.msra.mxu0 %v6008
        %6063 = vmatprep.subr.bf16.mxu0 0
        %6064 = vmatpush1.bf16.msra.mxu0 %v6009
        %6065 = vmatprep.subr.bf16.mxu0 0
        %6066 = vmatpush1.bf16.msra.mxu0 %v6010
        %6067 = vmatprep.subr.bf16.mxu0 0
        %6068 = vmatpush1.bf16.msra.mxu0 0
        %6069 = vmatprep.subr.bf16.mxu0 0
        %6070 = vmatpush1.bf16.msra.mxu0 0
        %6071 = vmatprep.subr.bf16.mxu0 0
        %6072 = vmatpush1.bf16.msra.mxu0 0
        %6073 = vmatprep.subr.bf16.mxu0 0
        %6074 = vmatpush1.bf16.msra.mxu0 0
        %6075 = vmatprep.subr.bf16.mxu0 0
        %6076 = vmatpush1.bf16.msra.mxu0 0
        %6077 = vmatprep.subr.bf16.mxu0 0
        %6078 = vmatpush1.bf16.msra.mxu0 0
        %6079 = vmatprep.subr.bf16.mxu0 0
        %6080 = vmatpush1.bf16.msra.mxu0 0
        %6081 = vmatprep.subr.bf16.mxu0 0
        %6082 = vmatpush1.bf16.msra.mxu0 0
        %6083 = vmatprep.subr.bf16.mxu0 0
        %6084 = vmatpush1.bf16.msra.mxu0 0
        %6085 = vmatprep.subr.bf16.mxu0 0
        %6086 = vmatpush1.bf16.msra.mxu0 0
        %6087 = vmatprep.subr.bf16.mxu0 0
        %6088 = vmatpush1.bf16.msra.mxu0 0
        %6089 = vmatprep.subr.bf16.mxu0 0
        %6090 = vmatpush1.bf16.msra.mxu0 0
        %6091 = vmatprep.mubr.bf16.mxu0 0
        %6092 = vmatmul.mubr.bf16.gmra.mrb[0].mxu0 %v6012
        %v6093 = vpop.f32.mrb[0].mxu0
        %v6094 = vadd.f32 0.0, %v6093
        %v6095 = vpop.f32.mrb[0].mxu0
        %v6096 = vpop.f32.mrb[0].mxu0
        %v6097 = vadd.f32 0.0, %v6096
        %v6098 = vpop.f32.mrb[0].mxu0
        %6099 = vmatprep.mubr.bf16.mxu0 0
        %6100 = vmatmul.mubr.bf16.gmra.mrb[0].mxu0 %v6015
        %v6101 = vpop.f32.mrb[0].mxu0
        %v6102 = vadd.f32 0.0, %v6101
        %v6103 = vpop.f32.mrb[0].mxu0
        %v6104 = vpop.f32.mrb[0].mxu0
        %v6105 = vadd.f32 0.0, %v6104
        %v6106 = vpop.f32.mrb[0].mxu0
        %6107 = vmatprep.mubr.bf16.mxu0 0
        %6108 = vmatmul.mubr.bf16.gmra.mrb[0].mxu0 %v6018
        %v6109 = vpop.f32.mrb[0].mxu0
        %v6110 = vadd.f32 0.0, %v6109
        %v6111 = vpop.f32.mrb[0].mxu0
        %v6112 = vpop.f32.mrb[0].mxu0
        %v6113 = vadd.f32 0.0, %v6112
        %v6114 = vpop.f32.mrb[0].mxu0
        %6115 = vmatprep.mubr.bf16.mxu0 0
        %6116 = vmatmul.mubr.bf16.gmra.mrb[0].mxu0 %v6021
        %v6117 = vpop.f32.mrb[0].mxu0
        %v6118 = vadd.f32 0.0, %v6117
        %v6119 = vpop.f32.mrb[0].mxu0
        %v6120 = vpop.f32.mrb[0].mxu0
        %v6121 = vadd.f32 0.0, %v6120
        %v6122 = vpop.f32.mrb[0].mxu0
        %6123 = vmatprep.mubr.bf16.mxu0 0
        %6124 = vmatmul.mubr.bf16.gmra.mrb[0].mxu0 %v6024
        %v6125 = vpop.f32.mrb[0].mxu0
        %v6126 = vadd.f32 0.0, %v6125
        %v6127 = vpop.f32.mrb[0].mxu0
        %v6128 = vpop.f32.mrb[0].mxu0
        %v6129 = vadd.f32 0.0, %v6128
        %v6130 = vpop.f32.mrb[0].mxu0
        %6131 = vmatprep.mubr.bf16.mxu0 0
        %6132 = vmatmul.mubr.bf16.gmra.mrb[0].mxu0 %v6027
        %v6133 = vpop.f32.mrb[0].mxu0
        %v6134 = vadd.f32 0.0, %v6133
        %v6135 = vpop.f32.mrb[0].mxu0
        %v6136 = vpop.f32.mrb[0].mxu0
        %v6137 = vadd.f32 0.0, %v6136
        %v6138 = vpop.f32.mrb[0].mxu0
        %6139 = vmatprep.mubr.bf16.mxu0 0
        %6140 = vmatmul.mubr.bf16.gmra.mrb[0].mxu0 %v6030
        %v6141 = vpop.f32.mrb[0].mxu0
        %v6142 = vadd.f32 0.0, %v6141
        %v6143 = vpop.f32.mrb[0].mxu0
        %v6144 = vpop.f32.mrb[0].mxu0
        %v6145 = vadd.f32 0.0, %v6144
        %v6146 = vpop.f32.mrb[0].mxu0
        %6147 = vmatprep.mubr.bf16.mxu0 0
        %6148 = vmatmul.mubr.bf16.gmra.mrb[0].mxu0 %v6033
        %v6149 = vpop.f32.mrb[0].mxu0
        %v6150 = vadd.f32 0.0, %v6149
        %v6151 = vpop.f32.mrb[0].mxu0
        %v6152 = vpop.f32.mrb[0].mxu0
        %v6153 = vadd.f32 0.0, %v6152
        %v6154 = vpop.f32.mrb[0].mxu0
        %6155 = vmatprep.mubr.bf16.mxu0 0
        %6156 = vmatmul.mubr.bf16.gmra.mrb[0].mxu0 %v6036
        %v6157 = vpop.f32.mrb[0].mxu0
        %v6158 = vadd.f32 0.0, %v6157
        %v6159 = vpop.f32.mrb[0].mxu0
        %v6160 = vpop.f32.mrb[0].mxu0
        %v6161 = vadd.f32 0.0, %v6160
        %v6162 = vpop.f32.mrb[0].mxu0
        %6163 = vmatprep.mubr.bf16.mxu0 0
        %6164 = vmatmul.mubr.bf16.gmra.mrb[0].mxu0 %v6039
        %v6165 = vpop.f32.mrb[0].mxu0
        %v6166 = vadd.f32 0.0, %v6165
        %v6167 = vpop.f32.mrb[0].mxu0
        %v6168 = vpop.f32.mrb[0].mxu0
        %v6169 = vadd.f32 0.0, %v6168
        %v6170 = vpop.f32.mrb[0].mxu0
        %6171 = vmatprep.mubr.bf16.mxu0 0
        %6172 = vmatmul.mubr.bf16.gmra.mrb[0].mxu0 %v6042
        %v6173 = vpop.f32.mrb[0].mxu0
        %v6174 = vadd.f32 0.0, %v6173
        %v6175 = vpop.f32.mrb[0].mxu0
        %v6176 = vpop.f32.mrb[0].mxu0
        %v6177 = vadd.f32 0.0, %v6176
        %v6178 = vpop.f32.mrb[0].mxu0
        %6179 = vmatprep.mubr.bf16.mxu0 0
        %6180 = vmatmul.mubr.bf16.gmra.mrb[0].mxu0 %v6045
        %v6181 = vpop.f32.mrb[0].mxu0
        %v6182 = vadd.f32 0.0, %v6181
        %v6183 = vpop.f32.mrb[0].mxu0
        %v6184 = vpop.f32.mrb[0].mxu0
        %v6185 = vadd.f32 0.0, %v6184
        %v6186 = vpop.f32.mrb[0].mxu0
        %6187 = vmatprep.mubr.bf16.mxu0 0
        %6188 = vmatmul.mubr.bf16.gmra.mrb[0].mxu0 %v6048
        %v6189 = vpop.f32.mrb[0].mxu0
        %v6190 = vadd.f32 0.0, %v6189
        %v6191 = vpop.f32.mrb[0].mxu0
        %v6192 = vpop.f32.mrb[0].mxu0
        %v6193 = vadd.f32 0.0, %v6192
        %v6194 = vpop.f32.mrb[0].mxu0
        %6195 = vmatprep.mubr.bf16.mxu0 0
        %6196 = vmatmul.mubr.bf16.gmra.mrb[0].mxu0 %v6051
        %v6197 = vpop.f32.mrb[0].mxu0
        %v6198 = vadd.f32 0.0, %v6197
        %v6199 = vpop.f32.mrb[0].mxu0
        %v6200 = vpop.f32.mrb[0].mxu0
        %v6201 = vadd.f32 0.0, %v6200
        %v6202 = vpop.f32.mrb[0].mxu0
        %6203 = vmatprep.mubr.bf16.mxu0 0
        %6204 = vmatmul.mubr.bf16.gmra.mrb[0].mxu0 %v6054
        %v6205 = vpop.f32.mrb[0].mxu0
        %v6206 = vadd.f32 0.0, %v6205
        %v6207 = vpop.f32.mrb[0].mxu0
        %v6208 = vpop.f32.mrb[0].mxu0
        %v6209 = vadd.f32 0.0, %v6208
        %v6210 = vpop.f32.mrb[0].mxu0
        %6211 = vmatprep.mubr.bf16.mxu0 0
        %6212 = vmatmul.mubr.bf16.gmra.mrb[0].mxu0 %v6057
        %v6213 = vpop.f32.mrb[0].mxu0
        %v6214 = vadd.f32 0.0, %v6213
        %v6215 = vpop.f32.mrb[0].mxu0
        %v6216 = vpop.f32.mrb[0].mxu0
        %v6217 = vadd.f32 0.0, %v6216
        %v6218 = vpop.f32.mrb[0].mxu0
        %6219 = vdwg.mxu0
        %v6220 = vpack.c.bf16 %v6097, %v6094
        %v6221 = vpack.c.bf16 %v6105, %v6102
        %v6222 = vpack.c.bf16 %v6113, %v6110
        %v6223 = vpack.c.bf16 %v6121, %v6118
        %v6224 = vpack.c.bf16 %v6129, %v6126
        %v6225 = vpack.c.bf16 %v6137, %v6134
        %v6226 = vpack.c.bf16 %v6145, %v6142
        %v6227 = vpack.c.bf16 %v6153, %v6150
        %v6228 = vpack.c.bf16 %v6161, %v6158
        %v6229 = vpack.c.bf16 %v6169, %v6166
        %v6230 = vpack.c.bf16 %v6177, %v6174
        %v6231 = vpack.c.bf16 %v6185, %v6182
        %v6232 = vpack.c.bf16 %v6193, %v6190
        %v6233 = vpack.c.bf16 %v6201, %v6198
        %v6234 = vpack.c.bf16 %v6209, %v6206
        %v6235 = vpack.c.bf16 %v6217, %v6214
        %v6237 = vsel %vm976, %v6220, 0
        %v6240 = vsel %vm976, %v6221, 0
        %v6243 = vsel %vm976, %v6222, 0
        %v6246 = vsel %vm976, %v6223, 0
        %v6249 = vsel %vm976, %v6224, 0
        %v6252 = vsel %vm976, %v6225, 0
        %v6255 = vsel %vm976, %v6226, 0
        %v6258 = vsel %vm976, %v6227, 0
        %v6261 = vsel %vm976, %v6228, 0
        %v6264 = vsel %vm976, %v6229, 0
        %v6267 = vsel %vm976, %v6230, 0
        %v6270 = vsel %vm976, %v6231, 0
        %v6273 = vsel %vm976, %v6232, 0
        %v6276 = vsel %vm976, %v6233, 0
        %v6279 = vsel %vm976, %v6234, 0
        %v6282 = vsel %vm976, %v6235, 0
        %6284 = vmatprep.subr.bf16.mxu0 0
        %6285 = vmatpush1.bf16.msra.mxu0 %v599
        %6286 = vmatprep.subr.bf16.mxu0 0
        %6287 = vmatpush1.bf16.msra.mxu0 %v600
        %6288 = vmatprep.subr.bf16.mxu0 0
        %6289 = vmatpush1.bf16.msra.mxu0 0
        %6290 = vmatprep.subr.bf16.mxu0 0
        %6291 = vmatpush1.bf16.msra.mxu0 0
        %6292 = vmatprep.subr.bf16.mxu0 0
        %6293 = vmatpush1.bf16.msra.mxu0 0
        %6294 = vmatprep.subr.bf16.mxu0 0
        %6295 = vmatpush1.bf16.msra.mxu0 0
        %6296 = vmatprep.subr.bf16.mxu0 0
        %6297 = vmatpush1.bf16.msra.mxu0 0
        %6298 = vmatprep.subr.bf16.mxu0 0
        %6299 = vmatpush1.bf16.msra.mxu0 0
        %6300 = vmatprep.subr.bf16.mxu0 0
        %6301 = vmatpush1.bf16.msra.mxu0 0
        %6302 = vmatprep.subr.bf16.mxu0 0
        %6303 = vmatpush1.bf16.msra.mxu0 0
        %6304 = vmatprep.subr.bf16.mxu0 0
        %6305 = vmatpush1.bf16.msra.mxu0 0
        %6306 = vmatprep.subr.bf16.mxu0 0
        %6307 = vmatpush1.bf16.msra.mxu0 0
        %6308 = vmatprep.subr.bf16.mxu0 0
        %6309 = vmatpush1.bf16.msra.mxu0 0
        %6310 = vmatprep.subr.bf16.mxu0 0
        %6311 = vmatpush1.bf16.msra.mxu0 0
        %6312 = vmatprep.subr.bf16.mxu0 0
        %6313 = vmatpush1.bf16.msra.mxu0 0
        %6314 = vmatprep.subr.bf16.mxu0 0
        %6315 = vmatpush1.bf16.msra.mxu0 0
        %6316 = vmatprep.mubr.bf16.mxu0 0
        %6317 = vmatmul.mubr.bf16.gmra.mrb[0].mxu0 %v6237
        %v6318 = vpop.f32.mrb[0].mxu0
        %v6319 = vadd.f32 0.0, %v6318
        %v6320 = vpop.f32.mrb[0].mxu0
        %v6321 = vpop.f32.mrb[0].mxu0
        %v6322 = vadd.f32 0.0, %v6321
        %v6323 = vpop.f32.mrb[0].mxu0
        %6324 = vmatprep.mubr.bf16.mxu0 0
        %6325 = vmatmul.mubr.bf16.gmra.mrb[0].mxu0 %v6240
        %v6326 = vpop.f32.mrb[0].mxu0
        %v6327 = vadd.f32 0.0, %v6326
        %v6328 = vpop.f32.mrb[0].mxu0
        %v6329 = vpop.f32.mrb[0].mxu0
        %v6330 = vadd.f32 0.0, %v6329
        %v6331 = vpop.f32.mrb[0].mxu0
        %6332 = vmatprep.mubr.bf16.mxu0 0
        %6333 = vmatmul.mubr.bf16.gmra.mrb[0].mxu0 %v6243
        %v6334 = vpop.f32.mrb[0].mxu0
        %v6335 = vadd.f32 0.0, %v6334
        %v6336 = vpop.f32.mrb[0].mxu0
        %v6337 = vpop.f32.mrb[0].mxu0
        %v6338 = vadd.f32 0.0, %v6337
        %v6339 = vpop.f32.mrb[0].mxu0
        %6340 = vmatprep.mubr.bf16.mxu0 0
        %6341 = vmatmul.mubr.bf16.gmra.mrb[0].mxu0 %v6246
        %v6342 = vpop.f32.mrb[0].mxu0
        %v6343 = vadd.f32 0.0, %v6342
        %v6344 = vpop.f32.mrb[0].mxu0
        %v6345 = vpop.f32.mrb[0].mxu0
        %v6346 = vadd.f32 0.0, %v6345
        %v6347 = vpop.f32.mrb[0].mxu0
        %6348 = vmatprep.mubr.bf16.mxu0 0
        %6349 = vmatmul.mubr.bf16.gmra.mrb[0].mxu0 %v6249
        %v6350 = vpop.f32.mrb[0].mxu0
        %v6351 = vadd.f32 0.0, %v6350
        %v6352 = vpop.f32.mrb[0].mxu0
        %v6353 = vpop.f32.mrb[0].mxu0
        %v6354 = vadd.f32 0.0, %v6353
        %v6355 = vpop.f32.mrb[0].mxu0
        %6356 = vmatprep.mubr.bf16.mxu0 0
        %6357 = vmatmul.mubr.bf16.gmra.mrb[0].mxu0 %v6252
        %v6358 = vpop.f32.mrb[0].mxu0
        %v6359 = vadd.f32 0.0, %v6358
        %v6360 = vpop.f32.mrb[0].mxu0
        %v6361 = vpop.f32.mrb[0].mxu0
        %v6362 = vadd.f32 0.0, %v6361
        %v6363 = vpop.f32.mrb[0].mxu0
        %6364 = vmatprep.mubr.bf16.mxu0 0
        %6365 = vmatmul.mubr.bf16.gmra.mrb[0].mxu0 %v6255
        %v6366 = vpop.f32.mrb[0].mxu0
        %v6367 = vadd.f32 0.0, %v6366
        %v6368 = vpop.f32.mrb[0].mxu0
        %v6369 = vpop.f32.mrb[0].mxu0
        %v6370 = vadd.f32 0.0, %v6369
        %v6371 = vpop.f32.mrb[0].mxu0
        %6372 = vmatprep.mubr.bf16.mxu0 0
        %6373 = vmatmul.mubr.bf16.gmra.mrb[0].mxu0 %v6258
        %v6374 = vpop.f32.mrb[0].mxu0
        %v6375 = vadd.f32 0.0, %v6374
        %v6376 = vpop.f32.mrb[0].mxu0
        %v6377 = vpop.f32.mrb[0].mxu0
        %v6378 = vadd.f32 0.0, %v6377
        %v6379 = vpop.f32.mrb[0].mxu0
        %6380 = vmatprep.mubr.bf16.mxu0 0
        %6381 = vmatmul.mubr.bf16.gmra.mrb[0].mxu0 %v6261
        %v6382 = vpop.f32.mrb[0].mxu0
        %v6383 = vadd.f32 0.0, %v6382
        %v6384 = vpop.f32.mrb[0].mxu0
        %v6385 = vpop.f32.mrb[0].mxu0
        %v6386 = vadd.f32 0.0, %v6385
        %v6387 = vpop.f32.mrb[0].mxu0
        %6388 = vmatprep.mubr.bf16.mxu0 0
        %6389 = vmatmul.mubr.bf16.gmra.mrb[0].mxu0 %v6264
        %v6390 = vpop.f32.mrb[0].mxu0
        %v6391 = vadd.f32 0.0, %v6390
        %v6392 = vpop.f32.mrb[0].mxu0
        %v6393 = vpop.f32.mrb[0].mxu0
        %v6394 = vadd.f32 0.0, %v6393
        %v6395 = vpop.f32.mrb[0].mxu0
        %6396 = vmatprep.mubr.bf16.mxu0 0
        %6397 = vmatmul.mubr.bf16.gmra.mrb[0].mxu0 %v6267
        %v6398 = vpop.f32.mrb[0].mxu0
        %v6399 = vadd.f32 0.0, %v6398
        %v6400 = vpop.f32.mrb[0].mxu0
        %v6401 = vpop.f32.mrb[0].mxu0
        %v6402 = vadd.f32 0.0, %v6401
        %v6403 = vpop.f32.mrb[0].mxu0
        %6404 = vmatprep.mubr.bf16.mxu0 0
        %6405 = vmatmul.mubr.bf16.gmra.mrb[0].mxu0 %v6270
        %v6406 = vpop.f32.mrb[0].mxu0
        %v6407 = vadd.f32 0.0, %v6406
        %v6408 = vpop.f32.mrb[0].mxu0
        %v6409 = vpop.f32.mrb[0].mxu0
        %v6410 = vadd.f32 0.0, %v6409
        %v6411 = vpop.f32.mrb[0].mxu0
        %6412 = vmatprep.mubr.bf16.mxu0 0
        %6413 = vmatmul.mubr.bf16.gmra.mrb[0].mxu0 %v6273
        %v6414 = vpop.f32.mrb[0].mxu0
        %v6415 = vadd.f32 0.0, %v6414
        %v6416 = vpop.f32.mrb[0].mxu0
        %v6417 = vpop.f32.mrb[0].mxu0
        %v6418 = vadd.f32 0.0, %v6417
        %v6419 = vpop.f32.mrb[0].mxu0
        %6420 = vmatprep.mubr.bf16.mxu0 0
        %6421 = vmatmul.mubr.bf16.gmra.mrb[0].mxu0 %v6276
        %v6422 = vpop.f32.mrb[0].mxu0
        %v6423 = vadd.f32 0.0, %v6422
        %v6424 = vpop.f32.mrb[0].mxu0
        %v6425 = vpop.f32.mrb[0].mxu0
        %v6426 = vadd.f32 0.0, %v6425
        %v6427 = vpop.f32.mrb[0].mxu0
        %6428 = vmatprep.mubr.bf16.mxu0 0
        %6429 = vmatmul.mubr.bf16.gmra.mrb[0].mxu0 %v6279
        %v6430 = vpop.f32.mrb[0].mxu0
        %v6431 = vadd.f32 0.0, %v6430
        %v6432 = vpop.f32.mrb[0].mxu0
        %v6433 = vpop.f32.mrb[0].mxu0
        %v6434 = vadd.f32 0.0, %v6433
        %v6435 = vpop.f32.mrb[0].mxu0
        %6436 = vmatprep.mubr.bf16.mxu0 0
        %6437 = vmatmul.mubr.bf16.gmra.mrb[0].mxu0 %v6282
        %v6438 = vpop.f32.mrb[0].mxu0
        %v6439 = vadd.f32 0.0, %v6438
        %v6440 = vpop.f32.mrb[0].mxu0
        %v6441 = vpop.f32.mrb[0].mxu0
        %v6442 = vadd.f32 0.0, %v6441
        %v6443 = vpop.f32.mrb[0].mxu0
        %6444 = vdwg.mxu0
        %v6445 = vadd.f32 %v4542, %v6319
        %v6446 = vadd.f32 %v4543, %v6322
        %v6447 = vadd.f32 %v4544, %v6327
        %v6448 = vadd.f32 %v4545, %v6330
        %v6449 = vadd.f32 %v4546, %v6335
        %v6450 = vadd.f32 %v4547, %v6338
        %v6451 = vadd.f32 %v4548, %v6343
        %v6452 = vadd.f32 %v4549, %v6346
        %v6453 = vadd.f32 %v4550, %v6351
        %v6454 = vadd.f32 %v4551, %v6354
        %v6455 = vadd.f32 %v4552, %v6359
        %v6456 = vadd.f32 %v4553, %v6362
        %v6457 = vadd.f32 %v4554, %v6367
        %v6458 = vadd.f32 %v4555, %v6370
        %v6459 = vadd.f32 %v4556, %v6375
        %v6460 = vadd.f32 %v4557, %v6378
        %v6461 = vadd.f32 %v4558, %v6383
        %v6462 = vadd.f32 %v4559, %v6386
        %v6463 = vadd.f32 %v4560, %v6391
        %v6464 = vadd.f32 %v4561, %v6394
        %v6465 = vadd.f32 %v4562, %v6399
        %v6466 = vadd.f32 %v4563, %v6402
        %v6467 = vadd.f32 %v4564, %v6407
        %v6468 = vadd.f32 %v4565, %v6410
        %v6469 = vadd.f32 %v4566, %v6415
        %v6470 = vadd.f32 %v4567, %v6418
        %v6471 = vadd.f32 %v4568, %v6423
        %v6472 = vadd.f32 %v4569, %v6426
        %v6473 = vadd.f32 %v4570, %v6431
        %v6474 = vadd.f32 %v4571, %v6434
        %v6475 = vadd.f32 %v4572, %v6439
        %v6476 = vadd.f32 %v4573, %v6442
        %s6477 = scalar_lea.vmem %s390, 384
        %v6478 = vld [vmem:[%s6477] sm:$0xf]
        %v6479 = vld [vmem:[%s6477 + $0x4] sm:$0xf]
        %v6480 = vld [vmem:[%s6477 + $0x8] sm:$0xf]
        %v6481 = vld [vmem:[%s6477 + $0xc] sm:$0xf]
        %v6482 = vld [vmem:[%s6477 + $0x10] sm:$0xf]
        %v6483 = vld [vmem:[%s6477 + $0x14] sm:$0xf]
        %v6484 = vld [vmem:[%s6477 + $0x18] sm:$0xf]
        %v6485 = vld [vmem:[%s6477 + $0x1c] sm:$0xf]
        %v6486 = vld [vmem:[%s6477 + $0x20] sm:$0xf]
        %v6487 = vld [vmem:[%s6477 + $0x24] sm:$0xf]
        %v6488 = vld [vmem:[%s6477 + $0x28] sm:$0xf]
        %v6489 = vld [vmem:[%s6477 + $0x2c] sm:$0xf]
        %v6490 = vld [vmem:[%s6477 + $0x30] sm:$0xf]
        %v6491 = vld [vmem:[%s6477 + $0x34] sm:$0xf]
        %v6492 = vld [vmem:[%s6477 + $0x38] sm:$0xf]
        %v6493 = vld [vmem:[%s6477 + $0x3c] sm:$0xf]
        %v6494 = vld [vmem:[%s6477 + $0x40] sm:$0xf]
        %v6495 = vld [vmem:[%s6477 + $0x44] sm:$0xf]
        %v6496 = vld [vmem:[%s6477 + $0x48] sm:$0xf]
        %v6497 = vld [vmem:[%s6477 + $0x4c] sm:$0xf]
        %v6498 = vld [vmem:[%s6477 + $0x50] sm:$0xf]
        %v6499 = vld [vmem:[%s6477 + $0x54] sm:$0xf]
        %v6500 = vld [vmem:[%s6477 + $0x58] sm:$0xf]
        %v6501 = vld [vmem:[%s6477 + $0x5c] sm:$0xf]
        %v6502 = vld [vmem:[%s6477 + $0x60] sm:$0xf]
        %v6503 = vld [vmem:[%s6477 + $0x64] sm:$0xf]
        %v6504 = vld [vmem:[%s6477 + $0x68] sm:$0xf]
        %v6505 = vld [vmem:[%s6477 + $0x6c] sm:$0xf]
        %v6506 = vld [vmem:[%s6477 + $0x70] sm:$0xf]
        %v6507 = vld [vmem:[%s6477 + $0x74] sm:$0xf]
        %v6508 = vld [vmem:[%s6477 + $0x78] sm:$0xf]
        %v6509 = vld [vmem:[%s6477 + $0x7c] sm:$0xf]
        %s6510 = scalar_lea.vmem %s395, 384
        %v6511 = vld [vmem:[%s6510] sm:$0xf]
        %v6512 = vld [vmem:[%s6510 + $0x4] sm:$0xf]
        %v6513 = vld [vmem:[%s6510 + $0x8] sm:$0xf]
        %v6514 = vld [vmem:[%s6510 + $0xc] sm:$0xf]
        %v6515 = vld [vmem:[%s6510 + $0x10] sm:$0xf]
        %v6516 = vld [vmem:[%s6510 + $0x14] sm:$0xf]
        %v6517 = vld [vmem:[%s6510 + $0x18] sm:$0xf]
        %v6518 = vld [vmem:[%s6510 + $0x1c] sm:$0xf]
        %v6519 = vld [vmem:[%s6510 + $0x20] sm:$0xf]
        %v6520 = vld [vmem:[%s6510 + $0x24] sm:$0xf]
        %v6521 = vld [vmem:[%s6510 + $0x28] sm:$0xf]
        %v6522 = vld [vmem:[%s6510 + $0x2c] sm:$0xf]
        %v6523 = vld [vmem:[%s6510 + $0x30] sm:$0xf]
        %v6524 = vld [vmem:[%s6510 + $0x34] sm:$0xf]
        %v6525 = vld [vmem:[%s6510 + $0x38] sm:$0xf]
        %v6526 = vld [vmem:[%s6510 + $0x3c] sm:$0xf]
        %v6527 = vld [vmem:[%s6510 + $0x40] sm:$0xf]
        %v6528 = vld [vmem:[%s6510 + $0x44] sm:$0xf]
        %v6529 = vld [vmem:[%s6510 + $0x48] sm:$0xf]
        %v6530 = vld [vmem:[%s6510 + $0x4c] sm:$0xf]
        %v6531 = vld [vmem:[%s6510 + $0x50] sm:$0xf]
        %v6532 = vld [vmem:[%s6510 + $0x54] sm:$0xf]
        %v6533 = vld [vmem:[%s6510 + $0x58] sm:$0xf]
        %v6534 = vld [vmem:[%s6510 + $0x5c] sm:$0xf]
        %v6535 = vld [vmem:[%s6510 + $0x60] sm:$0xf]
        %v6536 = vld [vmem:[%s6510 + $0x64] sm:$0xf]
        %v6537 = vld [vmem:[%s6510 + $0x68] sm:$0xf]
        %v6538 = vld [vmem:[%s6510 + $0x6c] sm:$0xf]
        %v6539 = vld [vmem:[%s6510 + $0x70] sm:$0xf]
        %v6540 = vld [vmem:[%s6510 + $0x74] sm:$0xf]
        %v6541 = vld [vmem:[%s6510 + $0x78] sm:$0xf]
        %v6542 = vld [vmem:[%s6510 + $0x7c] sm:$0xf]
        %s6543 = scalar_lea.vmem %s400, 384
        %v6544 = vld [vmem:[%s6543] sm:$0xf]
        %v6545 = vld [vmem:[%s6543 + $0x4] sm:$0xf]
        %v6546 = vld [vmem:[%s6543 + $0x8] sm:$0xf]
        %v6547 = vld [vmem:[%s6543 + $0xc] sm:$0xf]
        %v6548 = vld [vmem:[%s6543 + $0x10] sm:$0xf]
        %v6549 = vld [vmem:[%s6543 + $0x14] sm:$0xf]
        %v6550 = vld [vmem:[%s6543 + $0x18] sm:$0xf]
        %v6551 = vld [vmem:[%s6543 + $0x1c] sm:$0xf]
        %v6552 = vld [vmem:[%s6543 + $0x20] sm:$0xf]
        %v6553 = vld [vmem:[%s6543 + $0x24] sm:$0xf]
        %v6554 = vld [vmem:[%s6543 + $0x28] sm:$0xf]
        %v6555 = vld [vmem:[%s6543 + $0x2c] sm:$0xf]
        %v6556 = vld [vmem:[%s6543 + $0x30] sm:$0xf]
        %v6557 = vld [vmem:[%s6543 + $0x34] sm:$0xf]
        %v6558 = vld [vmem:[%s6543 + $0x38] sm:$0xf]
        %v6559 = vld [vmem:[%s6543 + $0x3c] sm:$0xf]
        %v6560 = vld [vmem:[%s6543 + $0x40] sm:$0xf]
        %v6561 = vld [vmem:[%s6543 + $0x44] sm:$0xf]
        %v6562 = vld [vmem:[%s6543 + $0x48] sm:$0xf]
        %v6563 = vld [vmem:[%s6543 + $0x4c] sm:$0xf]
        %v6564 = vld [vmem:[%s6543 + $0x50] sm:$0xf]
        %v6565 = vld [vmem:[%s6543 + $0x54] sm:$0xf]
        %v6566 = vld [vmem:[%s6543 + $0x58] sm:$0xf]
        %v6567 = vld [vmem:[%s6543 + $0x5c] sm:$0xf]
        %v6568 = vld [vmem:[%s6543 + $0x60] sm:$0xf]
        %v6569 = vld [vmem:[%s6543 + $0x64] sm:$0xf]
        %v6570 = vld [vmem:[%s6543 + $0x68] sm:$0xf]
        %v6571 = vld [vmem:[%s6543 + $0x6c] sm:$0xf]
        %v6572 = vld [vmem:[%s6543 + $0x70] sm:$0xf]
        %v6573 = vld [vmem:[%s6543 + $0x74] sm:$0xf]
        %v6574 = vld [vmem:[%s6543 + $0x78] sm:$0xf]
        %v6575 = vld [vmem:[%s6543 + $0x7c] sm:$0xf]
        %s6576 = scalar_lea.vmem %s405, 96
        %v6577 = vld [vmem:[%s6576] sm:$0xf]
        %v6578 = vld [vmem:[%s6576 + $0x4] sm:$0xf]
        %v6579 = vld [vmem:[%s6576 + $0x8] sm:$0xf]
        %v6580 = vld [vmem:[%s6576 + $0xc] sm:$0xf]
        %v6581 = vld [vmem:[%s6576 + $0x10] sm:$0xf]
        %v6582 = vld [vmem:[%s6576 + $0x14] sm:$0xf]
        %v6583 = vld [vmem:[%s6576 + $0x18] sm:$0xf]
        %v6584 = vld [vmem:[%s6576 + $0x1c] sm:$0xf]
        %v6593 = vunpack.c.l.b16 %v6577
        %v6594 = vunpack.c.l.b16 %v6578
        %v6595 = vunpack.c.l.b16 %v6579
        %v6596 = vunpack.c.l.b16 %v6580
        %v6597 = vunpack.c.l.b16 %v6581
        %v6598 = vunpack.c.l.b16 %v6582
        %v6599 = vunpack.c.l.b16 %v6583
        %v6600 = vunpack.c.l.b16 %v6584
        %v6601 = vpack.c.b16 %v6594, %v6593
        %v6602 = vpack.c.b16 %v6596, %v6595
        %v6603 = vpack.c.b16 %v6598, %v6597
        %v6604 = vpack.c.b16 %v6600, %v6599
        %v6637 = vunpack.c.l.b16 %v6511
        %v6638 = vunpack.c.l.b16 %v6512
        %v6639 = vunpack.c.l.b16 %v6513
        %v6640 = vunpack.c.l.b16 %v6514
        %v6641 = vunpack.c.l.b16 %v6515
        %v6642 = vunpack.c.l.b16 %v6516
        %v6643 = vunpack.c.l.b16 %v6517
        %v6644 = vunpack.c.l.b16 %v6518
        %v6645 = vunpack.c.l.b16 %v6519
        %v6646 = vunpack.c.l.b16 %v6520
        %v6647 = vunpack.c.l.b16 %v6521
        %v6648 = vunpack.c.l.b16 %v6522
        %v6649 = vunpack.c.l.b16 %v6523
        %v6650 = vunpack.c.l.b16 %v6524
        %v6651 = vunpack.c.l.b16 %v6525
        %v6652 = vunpack.c.l.b16 %v6526
        %v6653 = vunpack.c.l.b16 %v6527
        %v6654 = vunpack.c.l.b16 %v6528
        %v6655 = vunpack.c.l.b16 %v6529
        %v6656 = vunpack.c.l.b16 %v6530
        %v6657 = vunpack.c.l.b16 %v6531
        %v6658 = vunpack.c.l.b16 %v6532
        %v6659 = vunpack.c.l.b16 %v6533
        %v6660 = vunpack.c.l.b16 %v6534
        %v6661 = vunpack.c.l.b16 %v6535
        %v6662 = vunpack.c.l.b16 %v6536
        %v6663 = vunpack.c.l.b16 %v6537
        %v6664 = vunpack.c.l.b16 %v6538
        %v6665 = vunpack.c.l.b16 %v6539
        %v6666 = vunpack.c.l.b16 %v6540
        %v6667 = vunpack.c.l.b16 %v6541
        %v6668 = vunpack.c.l.b16 %v6542
        %v6669 = vpack.c.b16 %v6638, %v6637
        %v6670 = vpack.c.b16 %v6640, %v6639
        %v6671 = vpack.c.b16 %v6642, %v6641
        %v6672 = vpack.c.b16 %v6644, %v6643
        %v6673 = vpack.c.b16 %v6646, %v6645
        %v6674 = vpack.c.b16 %v6648, %v6647
        %v6675 = vpack.c.b16 %v6650, %v6649
        %v6676 = vpack.c.b16 %v6652, %v6651
        %v6677 = vpack.c.b16 %v6654, %v6653
        %v6678 = vpack.c.b16 %v6656, %v6655
        %v6679 = vpack.c.b16 %v6658, %v6657
        %v6680 = vpack.c.b16 %v6660, %v6659
        %v6681 = vpack.c.b16 %v6662, %v6661
        %v6682 = vpack.c.b16 %v6664, %v6663
        %v6683 = vpack.c.b16 %v6666, %v6665
        %v6684 = vpack.c.b16 %v6668, %v6667
        %v6686 = vsel %vm976, %v6601, 0
        %v6689 = vsel %vm976, %v6602, 0
        %v6692 = vsel %vm976, %v6603, 0
        %v6695 = vsel %vm976, %v6604, 0
        %v6698 = vsel %vm976, %v6669, 0
        %v6701 = vsel %vm976, %v6670, 0
        %v6704 = vsel %vm976, %v6671, 0
        %v6707 = vsel %vm976, %v6672, 0
        %v6710 = vsel %vm976, %v6673, 0
        %v6713 = vsel %vm976, %v6674, 0
        %v6716 = vsel %vm976, %v6675, 0
        %v6719 = vsel %vm976, %v6676, 0
        %v6722 = vsel %vm976, %v6677, 0
        %v6725 = vsel %vm976, %v6678, 0
        %v6728 = vsel %vm976, %v6679, 0
        %v6731 = vsel %vm976, %v6680, 0
        %v6734 = vsel %vm976, %v6681, 0
        %v6737 = vsel %vm976, %v6682, 0
        %v6740 = vsel %vm976, %v6683, 0
        %v6743 = vsel %vm976, %v6684, 0
        %6745 = vmatprep.subr.bf16.mxu0 0
        %6746 = vmatpush1.bf16.xpose.msra.mxu0 %v6698
        %6747 = vmatprep.subr.bf16.mxu0 0
        %6748 = vmatpush1.bf16.xpose.msra.mxu0 %v6701
        %6749 = vmatprep.subr.bf16.mxu0 0
        %6750 = vmatpush1.bf16.xpose.msra.mxu0 %v6704
        %6751 = vmatprep.subr.bf16.mxu0 0
        %6752 = vmatpush1.bf16.xpose.msra.mxu0 %v6707
        %6753 = vmatprep.subr.bf16.mxu0 0
        %6754 = vmatpush1.bf16.xpose.msra.mxu0 %v6710
        %6755 = vmatprep.subr.bf16.mxu0 0
        %6756 = vmatpush1.bf16.xpose.msra.mxu0 %v6713
        %6757 = vmatprep.subr.bf16.mxu0 0
        %6758 = vmatpush1.bf16.xpose.msra.mxu0 %v6716
        %6759 = vmatprep.subr.bf16.mxu0 0
        %6760 = vmatpush1.bf16.xpose.msra.mxu0 %v6719
        %6761 = vmatprep.subr.bf16.mxu0 0
        %6762 = vmatpush1.bf16.xpose.msra.mxu0 %v6722
        %6763 = vmatprep.subr.bf16.mxu0 0
        %6764 = vmatpush1.bf16.xpose.msra.mxu0 %v6725
        %6765 = vmatprep.subr.bf16.mxu0 0
        %6766 = vmatpush1.bf16.xpose.msra.mxu0 %v6728
        %6767 = vmatprep.subr.bf16.mxu0 0
        %6768 = vmatpush1.bf16.xpose.msra.mxu0 %v6731
        %6769 = vmatprep.subr.bf16.mxu0 0
        %6770 = vmatpush1.bf16.xpose.msra.mxu0 %v6734
        %6771 = vmatprep.subr.bf16.mxu0 0
        %6772 = vmatpush1.bf16.xpose.msra.mxu0 %v6737
        %6773 = vmatprep.subr.bf16.mxu0 0
        %6774 = vmatpush1.bf16.xpose.msra.mxu0 %v6740
        %6775 = vmatprep.subr.bf16.mxu0 0
        %6776 = vmatpush1.bf16.xpose.msra.mxu0 %v6743
        %6777 = vmatprep.mubr.bf16.mxu0 0
        %6778 = vmatmul.mubr.bf16.gmra.mrb[0].mxu0 %v6686
        %v6779 = vpop.f32.mrb[0].mxu0
        %v6780 = vadd.f32 0.0, %v6779
        %v6781 = vpop.f32.mrb[0].mxu0
        %v6782 = vadd.f32 0.0, %v6781
        %v6783 = vpop.f32.mrb[0].mxu0
        %v6784 = vadd.f32 0.0, %v6783
        %v6785 = vpop.f32.mrb[0].mxu0
        %v6786 = vadd.f32 0.0, %v6785
        %6787 = vmatprep.mubr.bf16.mxu0 0
        %6788 = vmatmul.mubr.bf16.gmra.mrb[0].mxu0 %v6689
        %v6789 = vpop.f32.mrb[0].mxu0
        %v6790 = vadd.f32 0.0, %v6789
        %v6791 = vpop.f32.mrb[0].mxu0
        %v6792 = vadd.f32 0.0, %v6791
        %v6793 = vpop.f32.mrb[0].mxu0
        %v6794 = vadd.f32 0.0, %v6793
        %v6795 = vpop.f32.mrb[0].mxu0
        %v6796 = vadd.f32 0.0, %v6795
        %6797 = vmatprep.mubr.bf16.mxu0 0
        %6798 = vmatmul.mubr.bf16.gmra.mrb[0].mxu0 %v6692
        %v6799 = vpop.f32.mrb[0].mxu0
        %v6800 = vadd.f32 0.0, %v6799
        %v6801 = vpop.f32.mrb[0].mxu0
        %v6802 = vadd.f32 0.0, %v6801
        %v6803 = vpop.f32.mrb[0].mxu0
        %v6804 = vadd.f32 0.0, %v6803
        %v6805 = vpop.f32.mrb[0].mxu0
        %v6806 = vadd.f32 0.0, %v6805
        %6807 = vmatprep.mubr.bf16.mxu0 0
        %6808 = vmatmul.mubr.bf16.gmra.mrb[0].mxu0 %v6695
        %v6809 = vpop.f32.mrb[0].mxu0
        %v6810 = vadd.f32 0.0, %v6809
        %v6811 = vpop.f32.mrb[0].mxu0
        %v6812 = vadd.f32 0.0, %v6811
        %v6813 = vpop.f32.mrb[0].mxu0
        %v6814 = vadd.f32 0.0, %v6813
        %v6815 = vpop.f32.mrb[0].mxu0
        %v6816 = vadd.f32 0.0, %v6815
        %6817 = vdwg.mxu0
        %v6818 = vmul.f32 %v6780, 0.17677669
        %v6819 = vmul.f32 %v6782, 0.17677669
        %v6820 = vmul.f32 %v6784, 0.17677669
        %v6821 = vmul.f32 %v6786, 0.17677669
        %v6822 = vmul.f32 %v6790, 0.17677669
        %v6823 = vmul.f32 %v6792, 0.17677669
        %v6824 = vmul.f32 %v6794, 0.17677669
        %v6825 = vmul.f32 %v6796, 0.17677669
        %v6826 = vmul.f32 %v6800, 0.17677669
        %v6827 = vmul.f32 %v6802, 0.17677669
        %v6828 = vmul.f32 %v6804, 0.17677669
        %v6829 = vmul.f32 %v6806, 0.17677669
        %v6830 = vmul.f32 %v6810, 0.17677669
        %v6831 = vmul.f32 %v6812, 0.17677669
        %v6832 = vmul.f32 %v6814, 0.17677669
        %v6833 = vmul.f32 %v6816, 0.17677669
        %s6834 = scalar_lea.vmem %s4, 384
        %v6835 = vld [vmem:[%s6834] sm:$0xff]
        %v6836 = vld [vmem:[%s6834 + $0x8] sm:$0xff]
        %v6837 = vld [vmem:[%s6834 + $0x10] sm:$0xff]
        %v6838 = vld [vmem:[%s6834 + $0x18] sm:$0xff]
        %v6839 = vld [vmem:[%s6834 + $0x20] sm:$0xff]
        %v6840 = vld [vmem:[%s6834 + $0x28] sm:$0xff]
        %v6841 = vld [vmem:[%s6834 + $0x30] sm:$0xff]
        %v6842 = vld [vmem:[%s6834 + $0x38] sm:$0xff]
        %v6843 = vld [vmem:[%s6834 + $0x40] sm:$0xff]
        %v6844 = vld [vmem:[%s6834 + $0x48] sm:$0xff]
        %v6845 = vld [vmem:[%s6834 + $0x50] sm:$0xff]
        %v6846 = vld [vmem:[%s6834 + $0x58] sm:$0xff]
        %v6847 = vld [vmem:[%s6834 + $0x60] sm:$0xff]
        %v6848 = vld [vmem:[%s6834 + $0x68] sm:$0xff]
        %v6849 = vld [vmem:[%s6834 + $0x70] sm:$0xff]
        %v6850 = vld [vmem:[%s6834 + $0x78] sm:$0xff]
        %v6851 = vadd.f32 %v6818, %v6835
        %v6852 = vadd.f32 %v6819, %v6836
        %v6853 = vadd.f32 %v6820, %v6837
        %v6854 = vadd.f32 %v6821, %v6838
        %v6855 = vadd.f32 %v6822, %v6839
        %v6856 = vadd.f32 %v6823, %v6840
        %v6857 = vadd.f32 %v6824, %v6841
        %v6858 = vadd.f32 %v6825, %v6842
        %v6859 = vadd.f32 %v6826, %v6843
        %v6860 = vadd.f32 %v6827, %v6844
        %v6861 = vadd.f32 %v6828, %v6845
        %v6862 = vadd.f32 %v6829, %v6846
        %v6863 = vadd.f32 %v6830, %v6847
        %v6864 = vadd.f32 %v6831, %v6848
        %v6865 = vadd.f32 %v6832, %v6849
        %v6866 = vadd.f32 %v6833, %v6850
        %v6867 = vmax.f32 %v6851, %v6852
        %6868 = vmax.xlane.f32.xlu0 %v6867
        %v6869 = vpop.xlane.xlu0 %6868
        %v6870 = vmax.f32 %v6853, %v6854
        %6871 = vmax.xlane.f32.xlu0 %v6870
        %v6872 = vpop.xlane.xlu0 %6871
        %v6873 = vmax.f32 %v6855, %v6856
        %6874 = vmax.xlane.f32.xlu0 %v6873
        %v6875 = vpop.xlane.xlu0 %6874
        %v6876 = vmax.f32 %v6857, %v6858
        %6877 = vmax.xlane.f32.xlu0 %v6876
        %v6878 = vpop.xlane.xlu0 %6877
        %v6879 = vmax.f32 %v6859, %v6860
        %6880 = vmax.xlane.f32.xlu0 %v6879
        %v6881 = vpop.xlane.xlu0 %6880
        %v6882 = vmax.f32 %v6861, %v6862
        %6883 = vmax.xlane.f32.xlu0 %v6882
        %v6884 = vpop.xlane.xlu0 %6883
        %v6885 = vmax.f32 %v6863, %v6864
        %6886 = vmax.xlane.f32.xlu0 %v6885
        %v6887 = vpop.xlane.xlu0 %6886
        %v6888 = vmax.f32 %v6865, %v6866
        %6889 = vmax.xlane.f32.xlu0 %v6888
        %v6890 = vpop.xlane.xlu0 %6889
        %v6891 = vsub.f32 %v6851, %v6869
        %v6892 = vsub.f32 %v6852, %v6869
        %v6893 = vsub.f32 %v6853, %v6872
        %v6894 = vsub.f32 %v6854, %v6872
        %v6895 = vsub.f32 %v6855, %v6875
        %v6896 = vsub.f32 %v6856, %v6875
        %v6897 = vsub.f32 %v6857, %v6878
        %v6898 = vsub.f32 %v6858, %v6878
        %v6899 = vsub.f32 %v6859, %v6881
        %v6900 = vsub.f32 %v6860, %v6881
        %v6901 = vsub.f32 %v6861, %v6884
        %v6902 = vsub.f32 %v6862, %v6884
        %v6903 = vsub.f32 %v6863, %v6887
        %v6904 = vsub.f32 %v6864, %v6887
        %v6905 = vsub.f32 %v6865, %v6890
        %v6906 = vsub.f32 %v6866, %v6890
        %v6907 = vmul.f32 %v6891, 1.442695
        %v6908 = vpow.pop %v6907
        %v6909 = vmul.f32 %v6892, 1.442695
        %v6910 = vpow.pop %v6909
        %v6911 = vmul.f32 %v6893, 1.442695
        %v6912 = vpow.pop %v6911
        %v6913 = vmul.f32 %v6894, 1.442695
        %v6914 = vpow.pop %v6913
        %v6915 = vmul.f32 %v6895, 1.442695
        %v6916 = vpow.pop %v6915
        %v6917 = vmul.f32 %v6896, 1.442695
        %v6918 = vpow.pop %v6917
        %v6919 = vmul.f32 %v6897, 1.442695
        %v6920 = vpow.pop %v6919
        %v6921 = vmul.f32 %v6898, 1.442695
        %v6922 = vpow.pop %v6921
        %v6923 = vmul.f32 %v6899, 1.442695
        %v6924 = vpow.pop %v6923
        %v6925 = vmul.f32 %v6900, 1.442695
        %v6926 = vpow.pop %v6925
        %v6927 = vmul.f32 %v6901, 1.442695
        %v6928 = vpow.pop %v6927
        %v6929 = vmul.f32 %v6902, 1.442695
        %v6930 = vpow.pop %v6929
        %v6931 = vmul.f32 %v6903, 1.442695
        %v6932 = vpow.pop %v6931
        %v6933 = vmul.f32 %v6904, 1.442695
        %v6934 = vpow.pop %v6933
        %v6935 = vmul.f32 %v6905, 1.442695
        %v6936 = vpow.pop %v6935
        %v6937 = vmul.f32 %v6906, 1.442695
        %v6938 = vpow.pop %v6937
        %v6939 = vadd.f32 %v6908, %v6910
        %6940 = vadd.xlane.f32.xlu0 %v6939
        %v6941 = vpop.xlane.xlu0 %6940
        %v6942 = vadd.f32 %v6912, %v6914
        %6943 = vadd.xlane.f32.xlu0 %v6942
        %v6944 = vpop.xlane.xlu0 %6943
        %v6945 = vadd.f32 %v6916, %v6918
        %6946 = vadd.xlane.f32.xlu0 %v6945
        %v6947 = vpop.xlane.xlu0 %6946
        %v6948 = vadd.f32 %v6920, %v6922
        %6949 = vadd.xlane.f32.xlu0 %v6948
        %v6950 = vpop.xlane.xlu0 %6949
        %v6951 = vadd.f32 %v6924, %v6926
        %6952 = vadd.xlane.f32.xlu0 %v6951
        %v6953 = vpop.xlane.xlu0 %6952
        %v6954 = vadd.f32 %v6928, %v6930
        %6955 = vadd.xlane.f32.xlu0 %v6954
        %v6956 = vpop.xlane.xlu0 %6955
        %v6957 = vadd.f32 %v6932, %v6934
        %6958 = vadd.xlane.f32.xlu0 %v6957
        %v6959 = vpop.xlane.xlu0 %6958
        %v6960 = vadd.f32 %v6936, %v6938
        %6961 = vadd.xlane.f32.xlu0 %v6960
        %v6962 = vpop.xlane.xlu0 %6961
        %v6963 = vrcp.pop %v6941
        %v6964 = vrcp.pop %v6944
        %v6965 = vrcp.pop %v6947
        %v6966 = vrcp.pop %v6950
        %v6967 = vrcp.pop %v6953
        %v6968 = vrcp.pop %v6956
        %v6969 = vrcp.pop %v6959
        %v6970 = vrcp.pop %v6962
        %v6971 = vmul.f32 %v6908, %v6963
        %v6972 = vmul.f32 %v6910, %v6963
        %v6973 = vmul.f32 %v6912, %v6964
        %v6974 = vmul.f32 %v6914, %v6964
        %v6975 = vmul.f32 %v6916, %v6965
        %v6976 = vmul.f32 %v6918, %v6965
        %v6977 = vmul.f32 %v6920, %v6966
        %v6978 = vmul.f32 %v6922, %v6966
        %v6979 = vmul.f32 %v6924, %v6967
        %v6980 = vmul.f32 %v6926, %v6967
        %v6981 = vmul.f32 %v6928, %v6968
        %v6982 = vmul.f32 %v6930, %v6968
        %v6983 = vmul.f32 %v6932, %v6969
        %v6984 = vmul.f32 %v6934, %v6969
        %v6985 = vmul.f32 %v6936, %v6970
        %v6986 = vmul.f32 %v6938, %v6970
        %v6987 = vpack.c.bf16 %v6973, %v6971
        %v6988 = vpack.c.bf16 %v6974, %v6972
        %v6989 = vpack.c.bf16 %v6977, %v6975
        %v6990 = vpack.c.bf16 %v6978, %v6976
        %v6991 = vpack.c.bf16 %v6981, %v6979
        %v6992 = vpack.c.bf16 %v6982, %v6980
        %v6993 = vpack.c.bf16 %v6985, %v6983
        %v6994 = vpack.c.bf16 %v6986, %v6984
        %v7027 = vunpack.c.l.b16 %v6544
        %v7028 = vunpack.c.l.b16 %v6545
        %v7029 = vunpack.c.l.b16 %v6546
        %v7030 = vunpack.c.l.b16 %v6547
        %v7031 = vunpack.c.l.b16 %v6548
        %v7032 = vunpack.c.l.b16 %v6549
        %v7033 = vunpack.c.l.b16 %v6550
        %v7034 = vunpack.c.l.b16 %v6551
        %v7035 = vunpack.c.l.b16 %v6552
        %v7036 = vunpack.c.l.b16 %v6553
        %v7037 = vunpack.c.l.b16 %v6554
        %v7038 = vunpack.c.l.b16 %v6555
        %v7039 = vunpack.c.l.b16 %v6556
        %v7040 = vunpack.c.l.b16 %v6557
        %v7041 = vunpack.c.l.b16 %v6558
        %v7042 = vunpack.c.l.b16 %v6559
        %v7043 = vunpack.c.l.b16 %v6560
        %v7044 = vunpack.c.l.b16 %v6561
        %v7045 = vunpack.c.l.b16 %v6562
        %v7046 = vunpack.c.l.b16 %v6563
        %v7047 = vunpack.c.l.b16 %v6564
        %v7048 = vunpack.c.l.b16 %v6565
        %v7049 = vunpack.c.l.b16 %v6566
        %v7050 = vunpack.c.l.b16 %v6567
        %v7051 = vunpack.c.l.b16 %v6568
        %v7052 = vunpack.c.l.b16 %v6569
        %v7053 = vunpack.c.l.b16 %v6570
        %v7054 = vunpack.c.l.b16 %v6571
        %v7055 = vunpack.c.l.b16 %v6572
        %v7056 = vunpack.c.l.b16 %v6573
        %v7057 = vunpack.c.l.b16 %v6574
        %v7058 = vunpack.c.l.b16 %v6575
        %v7059 = vpack.c.b16 %v7028, %v7027
        %v7060 = vpack.c.b16 %v7030, %v7029
        %v7061 = vpack.c.b16 %v7032, %v7031
        %v7062 = vpack.c.b16 %v7034, %v7033
        %v7063 = vpack.c.b16 %v7036, %v7035
        %v7064 = vpack.c.b16 %v7038, %v7037
        %v7065 = vpack.c.b16 %v7040, %v7039
        %v7066 = vpack.c.b16 %v7042, %v7041
        %v7067 = vpack.c.b16 %v7044, %v7043
        %v7068 = vpack.c.b16 %v7046, %v7045
        %v7069 = vpack.c.b16 %v7048, %v7047
        %v7070 = vpack.c.b16 %v7050, %v7049
        %v7071 = vpack.c.b16 %v7052, %v7051
        %v7072 = vpack.c.b16 %v7054, %v7053
        %v7073 = vpack.c.b16 %v7056, %v7055
        %v7074 = vpack.c.b16 %v7058, %v7057
        %7091 = vmatprep.subr.bf16.mxu0 0
        %7092 = vmatpush1.bf16.msra.mxu0 %v7059
        %7093 = vmatprep.subr.bf16.mxu0 0
        %7094 = vmatpush1.bf16.msra.mxu0 %v7060
        %7095 = vmatprep.subr.bf16.mxu0 0
        %7096 = vmatpush1.bf16.msra.mxu0 %v7061
        %7097 = vmatprep.subr.bf16.mxu0 0
        %7098 = vmatpush1.bf16.msra.mxu0 %v7062
        %7099 = vmatprep.subr.bf16.mxu0 0
        %7100 = vmatpush1.bf16.msra.mxu0 %v7063
        %7101 = vmatprep.subr.bf16.mxu0 0
        %7102 = vmatpush1.bf16.msra.mxu0 %v7064
        %7103 = vmatprep.subr.bf16.mxu0 0
        %7104 = vmatpush1.bf16.msra.mxu0 %v7065
        %7105 = vmatprep.subr.bf16.mxu0 0
        %7106 = vmatpush1.bf16.msra.mxu0 %v7066
        %7107 = vmatprep.subr.bf16.mxu0 0
        %7108 = vmatpush1.bf16.msra.mxu0 %v7067
        %7109 = vmatprep.subr.bf16.mxu0 0
        %7110 = vmatpush1.bf16.msra.mxu0 %v7068
        %7111 = vmatprep.subr.bf16.mxu0 0
        %7112 = vmatpush1.bf16.msra.mxu0 %v7069
        %7113 = vmatprep.subr.bf16.mxu0 0
        %7114 = vmatpush1.bf16.msra.mxu0 %v7070
        %7115 = vmatprep.subr.bf16.mxu0 0
        %7116 = vmatpush1.bf16.msra.mxu0 %v7071
        %7117 = vmatprep.subr.bf16.mxu0 0
        %7118 = vmatpush1.bf16.msra.mxu0 %v7072
        %7119 = vmatprep.subr.bf16.mxu0 0
        %7120 = vmatpush1.bf16.msra.mxu0 %v7073
        %7121 = vmatprep.subr.bf16.mxu0 0
        %7122 = vmatpush1.bf16.msra.mxu0 %v7074
        %7123 = vmatprep.mubr.bf16.mxu0 %v6988
        %7124 = vmatmul.mubr.bf16.gmra.mrb[0].mxu0 %v6987
        %v7125 = vpop.f32.mrb[0].mxu0
        %v7126 = vadd.f32 0.0, %v7125
        %v7127 = vpop.f32.mrb[0].mxu0
        %v7128 = vpop.f32.mrb[0].mxu0
        %v7129 = vadd.f32 0.0, %v7128
        %v7130 = vpop.f32.mrb[0].mxu0
        %7131 = vmatprep.mubr.bf16.mxu0 %v6990
        %7132 = vmatmul.mubr.bf16.gmra.mrb[0].mxu0 %v6989
        %v7133 = vpop.f32.mrb[0].mxu0
        %v7134 = vadd.f32 0.0, %v7133
        %v7135 = vpop.f32.mrb[0].mxu0
        %v7136 = vpop.f32.mrb[0].mxu0
        %v7137 = vadd.f32 0.0, %v7136
        %v7138 = vpop.f32.mrb[0].mxu0
        %7139 = vmatprep.mubr.bf16.mxu0 %v6992
        %7140 = vmatmul.mubr.bf16.gmra.mrb[0].mxu0 %v6991
        %v7141 = vpop.f32.mrb[0].mxu0
        %v7142 = vadd.f32 0.0, %v7141
        %v7143 = vpop.f32.mrb[0].mxu0
        %v7144 = vpop.f32.mrb[0].mxu0
        %v7145 = vadd.f32 0.0, %v7144
        %v7146 = vpop.f32.mrb[0].mxu0
        %7147 = vmatprep.mubr.bf16.mxu0 %v6994
        %7148 = vmatmul.mubr.bf16.gmra.mrb[0].mxu0 %v6993
        %v7149 = vpop.f32.mrb[0].mxu0
        %v7150 = vadd.f32 0.0, %v7149
        %v7151 = vpop.f32.mrb[0].mxu0
        %v7152 = vpop.f32.mrb[0].mxu0
        %v7153 = vadd.f32 0.0, %v7152
        %v7154 = vpop.f32.mrb[0].mxu0
        %7155 = vdwg.mxu0
        %v7188 = vunpack.c.l.b16 %v6478
        %v7189 = vunpack.c.l.b16 %v6479
        %v7190 = vunpack.c.l.b16 %v6480
        %v7191 = vunpack.c.l.b16 %v6481
        %v7192 = vunpack.c.l.b16 %v6482
        %v7193 = vunpack.c.l.b16 %v6483
        %v7194 = vunpack.c.l.b16 %v6484
        %v7195 = vunpack.c.l.b16 %v6485
        %v7196 = vunpack.c.l.b16 %v6486
        %v7197 = vunpack.c.l.b16 %v6487
        %v7198 = vunpack.c.l.b16 %v6488
        %v7199 = vunpack.c.l.b16 %v6489
        %v7200 = vunpack.c.l.b16 %v6490
        %v7201 = vunpack.c.l.b16 %v6491
        %v7202 = vunpack.c.l.b16 %v6492
        %v7203 = vunpack.c.l.b16 %v6493
        %v7204 = vunpack.c.l.b16 %v6494
        %v7205 = vunpack.c.l.b16 %v6495
        %v7206 = vunpack.c.l.b16 %v6496
        %v7207 = vunpack.c.l.b16 %v6497
        %v7208 = vunpack.c.l.b16 %v6498
        %v7209 = vunpack.c.l.b16 %v6499
        %v7210 = vunpack.c.l.b16 %v6500
        %v7211 = vunpack.c.l.b16 %v6501
        %v7212 = vunpack.c.l.b16 %v6502
        %v7213 = vunpack.c.l.b16 %v6503
        %v7214 = vunpack.c.l.b16 %v6504
        %v7215 = vunpack.c.l.b16 %v6505
        %v7216 = vunpack.c.l.b16 %v6506
        %v7217 = vunpack.c.l.b16 %v6507
        %v7218 = vunpack.c.l.b16 %v6508
        %v7219 = vunpack.c.l.b16 %v6509
        %v7220 = vpack.c.b16 %v7189, %v7188
        %v7221 = vpack.c.b16 %v7191, %v7190
        %v7222 = vpack.c.b16 %v7193, %v7192
        %v7223 = vpack.c.b16 %v7195, %v7194
        %v7224 = vpack.c.b16 %v7197, %v7196
        %v7225 = vpack.c.b16 %v7199, %v7198
        %v7226 = vpack.c.b16 %v7201, %v7200
        %v7227 = vpack.c.b16 %v7203, %v7202
        %v7228 = vpack.c.b16 %v7205, %v7204
        %v7229 = vpack.c.b16 %v7207, %v7206
        %v7230 = vpack.c.b16 %v7209, %v7208
        %v7231 = vpack.c.b16 %v7211, %v7210
        %v7232 = vpack.c.b16 %v7213, %v7212
        %v7233 = vpack.c.b16 %v7215, %v7214
        %v7234 = vpack.c.b16 %v7217, %v7216
        %v7235 = vpack.c.b16 %v7219, %v7218
        %v7237 = vsel %vm976, %v7220, 0
        %v7240 = vsel %vm976, %v7221, 0
        %v7243 = vsel %vm976, %v7222, 0
        %v7246 = vsel %vm976, %v7223, 0
        %v7249 = vsel %vm976, %v7224, 0
        %v7252 = vsel %vm976, %v7225, 0
        %v7255 = vsel %vm976, %v7226, 0
        %v7258 = vsel %vm976, %v7227, 0
        %v7261 = vsel %vm976, %v7228, 0
        %v7264 = vsel %vm976, %v7229, 0
        %v7267 = vsel %vm976, %v7230, 0
        %v7270 = vsel %vm976, %v7231, 0
        %v7273 = vsel %vm976, %v7232, 0
        %v7276 = vsel %vm976, %v7233, 0
        %v7279 = vsel %vm976, %v7234, 0
        %v7282 = vsel %vm976, %v7235, 0
        %7284 = vmatprep.subr.bf16.mxu0 0
        %7285 = vmatpush1.bf16.xpose.msra.mxu0 %v6686
        %7286 = vmatprep.subr.bf16.mxu0 0
        %7287 = vmatpush1.bf16.xpose.msra.mxu0 %v6689
        %7288 = vmatprep.subr.bf16.mxu0 0
        %7289 = vmatpush1.bf16.xpose.msra.mxu0 %v6692
        %7290 = vmatprep.subr.bf16.mxu0 0
        %7291 = vmatpush1.bf16.xpose.msra.mxu0 %v6695
        %7292 = vmatprep.subr.bf16.mxu0 0
        %7293 = vmatpush1.bf16.xpose.msra.mxu0 0
        %7294 = vmatprep.subr.bf16.mxu0 0
        %7295 = vmatpush1.bf16.xpose.msra.mxu0 0
        %7296 = vmatprep.subr.bf16.mxu0 0
        %7297 = vmatpush1.bf16.xpose.msra.mxu0 0
        %7298 = vmatprep.subr.bf16.mxu0 0
        %7299 = vmatpush1.bf16.xpose.msra.mxu0 0
        %7300 = vmatprep.subr.bf16.mxu0 0
        %7301 = vmatpush1.bf16.xpose.msra.mxu0 0
        %7302 = vmatprep.subr.bf16.mxu0 0
        %7303 = vmatpush1.bf16.xpose.msra.mxu0 0
        %7304 = vmatprep.subr.bf16.mxu0 0
        %7305 = vmatpush1.bf16.xpose.msra.mxu0 0
        %7306 = vmatprep.subr.bf16.mxu0 0
        %7307 = vmatpush1.bf16.xpose.msra.mxu0 0
        %7308 = vmatprep.subr.bf16.mxu0 0
        %7309 = vmatpush1.bf16.xpose.msra.mxu0 0
        %7310 = vmatprep.subr.bf16.mxu0 0
        %7311 = vmatpush1.bf16.xpose.msra.mxu0 0
        %7312 = vmatprep.subr.bf16.mxu0 0
        %7313 = vmatpush1.bf16.xpose.msra.mxu0 0
        %7314 = vmatprep.subr.bf16.mxu0 0
        %7315 = vmatpush1.bf16.xpose.msra.mxu0 0
        %7316 = vmatprep.mubr.bf16.mxu0 0
        %7317 = vmatmul.mubr.bf16.gmra.mrb[0].mxu0 %v7237
        %v7318 = vpop.f32.mrb[0].mxu0
        %v7319 = vadd.f32 0.0, %v7318
        %v7320 = vpop.f32.mrb[0].mxu0
        %v7321 = vpop.f32.mrb[0].mxu0
        %v7322 = vadd.f32 0.0, %v7321
        %v7323 = vpop.f32.mrb[0].mxu0
        %7324 = vmatprep.mubr.bf16.mxu0 0
        %7325 = vmatmul.mubr.bf16.gmra.mrb[0].mxu0 %v7240
        %v7326 = vpop.f32.mrb[0].mxu0
        %v7327 = vadd.f32 0.0, %v7326
        %v7328 = vpop.f32.mrb[0].mxu0
        %v7329 = vpop.f32.mrb[0].mxu0
        %v7330 = vadd.f32 0.0, %v7329
        %v7331 = vpop.f32.mrb[0].mxu0
        %7332 = vmatprep.mubr.bf16.mxu0 0
        %7333 = vmatmul.mubr.bf16.gmra.mrb[0].mxu0 %v7243
        %v7334 = vpop.f32.mrb[0].mxu0
        %v7335 = vadd.f32 0.0, %v7334
        %v7336 = vpop.f32.mrb[0].mxu0
        %v7337 = vpop.f32.mrb[0].mxu0
        %v7338 = vadd.f32 0.0, %v7337
        %v7339 = vpop.f32.mrb[0].mxu0
        %7340 = vmatprep.mubr.bf16.mxu0 0
        %7341 = vmatmul.mubr.bf16.gmra.mrb[0].mxu0 %v7246
        %v7342 = vpop.f32.mrb[0].mxu0
        %v7343 = vadd.f32 0.0, %v7342
        %v7344 = vpop.f32.mrb[0].mxu0
        %v7345 = vpop.f32.mrb[0].mxu0
        %v7346 = vadd.f32 0.0, %v7345
        %v7347 = vpop.f32.mrb[0].mxu0
        %7348 = vmatprep.mubr.bf16.mxu0 0
        %7349 = vmatmul.mubr.bf16.gmra.mrb[0].mxu0 %v7249
        %v7350 = vpop.f32.mrb[0].mxu0
        %v7351 = vadd.f32 0.0, %v7350
        %v7352 = vpop.f32.mrb[0].mxu0
        %v7353 = vpop.f32.mrb[0].mxu0
        %v7354 = vadd.f32 0.0, %v7353
        %v7355 = vpop.f32.mrb[0].mxu0
        %7356 = vmatprep.mubr.bf16.mxu0 0
        %7357 = vmatmul.mubr.bf16.gmra.mrb[0].mxu0 %v7252
        %v7358 = vpop.f32.mrb[0].mxu0
        %v7359 = vadd.f32 0.0, %v7358
        %v7360 = vpop.f32.mrb[0].mxu0
        %v7361 = vpop.f32.mrb[0].mxu0
        %v7362 = vadd.f32 0.0, %v7361
        %v7363 = vpop.f32.mrb[0].mxu0
        %7364 = vmatprep.mubr.bf16.mxu0 0
        %7365 = vmatmul.mubr.bf16.gmra.mrb[0].mxu0 %v7255
        %v7366 = vpop.f32.mrb[0].mxu0
        %v7367 = vadd.f32 0.0, %v7366
        %v7368 = vpop.f32.mrb[0].mxu0
        %v7369 = vpop.f32.mrb[0].mxu0
        %v7370 = vadd.f32 0.0, %v7369
        %v7371 = vpop.f32.mrb[0].mxu0
        %7372 = vmatprep.mubr.bf16.mxu0 0
        %7373 = vmatmul.mubr.bf16.gmra.mrb[0].mxu0 %v7258
        %v7374 = vpop.f32.mrb[0].mxu0
        %v7375 = vadd.f32 0.0, %v7374
        %v7376 = vpop.f32.mrb[0].mxu0
        %v7377 = vpop.f32.mrb[0].mxu0
        %v7378 = vadd.f32 0.0, %v7377
        %v7379 = vpop.f32.mrb[0].mxu0
        %7380 = vmatprep.mubr.bf16.mxu0 0
        %7381 = vmatmul.mubr.bf16.gmra.mrb[0].mxu0 %v7261
        %v7382 = vpop.f32.mrb[0].mxu0
        %v7383 = vadd.f32 0.0, %v7382
        %v7384 = vpop.f32.mrb[0].mxu0
        %v7385 = vpop.f32.mrb[0].mxu0
        %v7386 = vadd.f32 0.0, %v7385
        %v7387 = vpop.f32.mrb[0].mxu0
        %7388 = vmatprep.mubr.bf16.mxu0 0
        %7389 = vmatmul.mubr.bf16.gmra.mrb[0].mxu0 %v7264
        %v7390 = vpop.f32.mrb[0].mxu0
        %v7391 = vadd.f32 0.0, %v7390
        %v7392 = vpop.f32.mrb[0].mxu0
        %v7393 = vpop.f32.mrb[0].mxu0
        %v7394 = vadd.f32 0.0, %v7393
        %v7395 = vpop.f32.mrb[0].mxu0
        %7396 = vmatprep.mubr.bf16.mxu0 0
        %7397 = vmatmul.mubr.bf16.gmra.mrb[0].mxu0 %v7267
        %v7398 = vpop.f32.mrb[0].mxu0
        %v7399 = vadd.f32 0.0, %v7398
        %v7400 = vpop.f32.mrb[0].mxu0
        %v7401 = vpop.f32.mrb[0].mxu0
        %v7402 = vadd.f32 0.0, %v7401
        %v7403 = vpop.f32.mrb[0].mxu0
        %7404 = vmatprep.mubr.bf16.mxu0 0
        %7405 = vmatmul.mubr.bf16.gmra.mrb[0].mxu0 %v7270
        %v7406 = vpop.f32.mrb[0].mxu0
        %v7407 = vadd.f32 0.0, %v7406
        %v7408 = vpop.f32.mrb[0].mxu0
        %v7409 = vpop.f32.mrb[0].mxu0
        %v7410 = vadd.f32 0.0, %v7409
        %v7411 = vpop.f32.mrb[0].mxu0
        %7412 = vmatprep.mubr.bf16.mxu0 0
        %7413 = vmatmul.mubr.bf16.gmra.mrb[0].mxu0 %v7273
        %v7414 = vpop.f32.mrb[0].mxu0
        %v7415 = vadd.f32 0.0, %v7414
        %v7416 = vpop.f32.mrb[0].mxu0
        %v7417 = vpop.f32.mrb[0].mxu0
        %v7418 = vadd.f32 0.0, %v7417
        %v7419 = vpop.f32.mrb[0].mxu0
        %7420 = vmatprep.mubr.bf16.mxu0 0
        %7421 = vmatmul.mubr.bf16.gmra.mrb[0].mxu0 %v7276
        %v7422 = vpop.f32.mrb[0].mxu0
        %v7423 = vadd.f32 0.0, %v7422
        %v7424 = vpop.f32.mrb[0].mxu0
        %v7425 = vpop.f32.mrb[0].mxu0
        %v7426 = vadd.f32 0.0, %v7425
        %v7427 = vpop.f32.mrb[0].mxu0
        %7428 = vmatprep.mubr.bf16.mxu0 0
        %7429 = vmatmul.mubr.bf16.gmra.mrb[0].mxu0 %v7279
        %v7430 = vpop.f32.mrb[0].mxu0
        %v7431 = vadd.f32 0.0, %v7430
        %v7432 = vpop.f32.mrb[0].mxu0
        %v7433 = vpop.f32.mrb[0].mxu0
        %v7434 = vadd.f32 0.0, %v7433
        %v7435 = vpop.f32.mrb[0].mxu0
        %7436 = vmatprep.mubr.bf16.mxu0 0
        %7437 = vmatmul.mubr.bf16.gmra.mrb[0].mxu0 %v7282
        %v7438 = vpop.f32.mrb[0].mxu0
        %v7439 = vadd.f32 0.0, %v7438
        %v7440 = vpop.f32.mrb[0].mxu0
        %v7441 = vpop.f32.mrb[0].mxu0
        %v7442 = vadd.f32 0.0, %v7441
        %v7443 = vpop.f32.mrb[0].mxu0
        %7444 = vdwg.mxu0
        %v7445 = vmul.f32 %v7319, 0.17677669
        %v7446 = vmul.f32 %v7322, 0.17677669
        %v7447 = vmul.f32 %v7327, 0.17677669
        %v7448 = vmul.f32 %v7330, 0.17677669
        %v7449 = vmul.f32 %v7335, 0.17677669
        %v7450 = vmul.f32 %v7338, 0.17677669
        %v7451 = vmul.f32 %v7343, 0.17677669
        %v7452 = vmul.f32 %v7346, 0.17677669
        %v7453 = vmul.f32 %v7351, 0.17677669
        %v7454 = vmul.f32 %v7354, 0.17677669
        %v7455 = vmul.f32 %v7359, 0.17677669
        %v7456 = vmul.f32 %v7362, 0.17677669
        %v7457 = vmul.f32 %v7367, 0.17677669
        %v7458 = vmul.f32 %v7370, 0.17677669
        %v7459 = vmul.f32 %v7375, 0.17677669
        %v7460 = vmul.f32 %v7378, 0.17677669
        %v7461 = vmul.f32 %v7383, 0.17677669
        %v7462 = vmul.f32 %v7386, 0.17677669
        %v7463 = vmul.f32 %v7391, 0.17677669
        %v7464 = vmul.f32 %v7394, 0.17677669
        %v7465 = vmul.f32 %v7399, 0.17677669
        %v7466 = vmul.f32 %v7402, 0.17677669
        %v7467 = vmul.f32 %v7407, 0.17677669
        %v7468 = vmul.f32 %v7410, 0.17677669
        %v7469 = vmul.f32 %v7415, 0.17677669
        %v7470 = vmul.f32 %v7418, 0.17677669
        %v7471 = vmul.f32 %v7423, 0.17677669
        %v7472 = vmul.f32 %v7426, 0.17677669
        %v7473 = vmul.f32 %v7431, 0.17677669
        %v7474 = vmul.f32 %v7434, 0.17677669
        %v7475 = vmul.f32 %v7439, 0.17677669
        %v7476 = vmul.f32 %v7442, 0.17677669
        %s7477 = scalar_lea.vmem %s5, 768
        %v7478 = vld [vmem:[%s7477] sm:$0xff]
        %v7479 = vld [vmem:[%s7477 + $0x8] sm:$0xff]
        %v7480 = vld [vmem:[%s7477 + $0x10] sm:$0xff]
        %v7481 = vld [vmem:[%s7477 + $0x18] sm:$0xff]
        %v7482 = vld [vmem:[%s7477 + $0x20] sm:$0xff]
        %v7483 = vld [vmem:[%s7477 + $0x28] sm:$0xff]
        %v7484 = vld [vmem:[%s7477 + $0x30] sm:$0xff]
        %v7485 = vld [vmem:[%s7477 + $0x38] sm:$0xff]
        %v7486 = vld [vmem:[%s7477 + $0x40] sm:$0xff]
        %v7487 = vld [vmem:[%s7477 + $0x48] sm:$0xff]
        %v7488 = vld [vmem:[%s7477 + $0x50] sm:$0xff]
        %v7489 = vld [vmem:[%s7477 + $0x58] sm:$0xff]
        %v7490 = vld [vmem:[%s7477 + $0x60] sm:$0xff]
        %v7491 = vld [vmem:[%s7477 + $0x68] sm:$0xff]
        %v7492 = vld [vmem:[%s7477 + $0x70] sm:$0xff]
        %v7493 = vld [vmem:[%s7477 + $0x78] sm:$0xff]
        %v7494 = vld [vmem:[%s7477 + $0x80] sm:$0xff]
        %v7495 = vld [vmem:[%s7477 + $0x88] sm:$0xff]
        %v7496 = vld [vmem:[%s7477 + $0x90] sm:$0xff]
        %v7497 = vld [vmem:[%s7477 + $0x98] sm:$0xff]
        %v7498 = vld [vmem:[%s7477 + $0xa0] sm:$0xff]
        %v7499 = vld [vmem:[%s7477 + $0xa8] sm:$0xff]
        %v7500 = vld [vmem:[%s7477 + $0xb0] sm:$0xff]
        %v7501 = vld [vmem:[%s7477 + $0xb8] sm:$0xff]
        %v7502 = vld [vmem:[%s7477 + $0xc0] sm:$0xff]
        %v7503 = vld [vmem:[%s7477 + $0xc8] sm:$0xff]
        %v7504 = vld [vmem:[%s7477 + $0xd0] sm:$0xff]
        %v7505 = vld [vmem:[%s7477 + $0xd8] sm:$0xff]
        %v7506 = vld [vmem:[%s7477 + $0xe0] sm:$0xff]
        %v7507 = vld [vmem:[%s7477 + $0xe8] sm:$0xff]
        %v7508 = vld [vmem:[%s7477 + $0xf0] sm:$0xff]
        %v7509 = vld [vmem:[%s7477 + $0xf8] sm:$0xff]
        %v7510 = vadd.f32 %v7445, %v7478
        %v7511 = vadd.f32 %v7446, %v7479
        %v7512 = vadd.f32 %v7447, %v7480
        %v7513 = vadd.f32 %v7448, %v7481
        %v7514 = vadd.f32 %v7449, %v7482
        %v7515 = vadd.f32 %v7450, %v7483
        %v7516 = vadd.f32 %v7451, %v7484
        %v7517 = vadd.f32 %v7452, %v7485
        %v7518 = vadd.f32 %v7453, %v7486
        %v7519 = vadd.f32 %v7454, %v7487
        %v7520 = vadd.f32 %v7455, %v7488
        %v7521 = vadd.f32 %v7456, %v7489
        %v7522 = vadd.f32 %v7457, %v7490
        %v7523 = vadd.f32 %v7458, %v7491
        %v7524 = vadd.f32 %v7459, %v7492
        %v7525 = vadd.f32 %v7460, %v7493
        %v7526 = vadd.f32 %v7461, %v7494
        %v7527 = vadd.f32 %v7462, %v7495
        %v7528 = vadd.f32 %v7463, %v7496
        %v7529 = vadd.f32 %v7464, %v7497
        %v7530 = vadd.f32 %v7465, %v7498
        %v7531 = vadd.f32 %v7466, %v7499
        %v7532 = vadd.f32 %v7467, %v7500
        %v7533 = vadd.f32 %v7468, %v7501
        %v7534 = vadd.f32 %v7469, %v7502
        %v7535 = vadd.f32 %v7470, %v7503
        %v7536 = vadd.f32 %v7471, %v7504
        %v7537 = vadd.f32 %v7472, %v7505
        %v7538 = vadd.f32 %v7473, %v7506
        %v7539 = vadd.f32 %v7474, %v7507
        %v7540 = vadd.f32 %v7475, %v7508
        %v7541 = vadd.f32 %v7476, %v7509
        %v7542 = vsel %vm1832, %v7510, -inf
        %7543 = vmax.xlane.f32.xlu0 %v7542
        %v7544 = vpop.xlane.xlu0 %7543
        %v7545 = vsel %vm1832, %v7511, -inf
        %7546 = vmax.xlane.f32.xlu0 %v7545
        %v7547 = vpop.xlane.xlu0 %7546
        %v7548 = vsel %vm1832, %v7512, -inf
        %7549 = vmax.xlane.f32.xlu0 %v7548
        %v7550 = vpop.xlane.xlu0 %7549
        %v7551 = vsel %vm1832, %v7513, -inf
        %7552 = vmax.xlane.f32.xlu0 %v7551
        %v7553 = vpop.xlane.xlu0 %7552
        %v7554 = vsel %vm1832, %v7514, -inf
        %7555 = vmax.xlane.f32.xlu0 %v7554
        %v7556 = vpop.xlane.xlu0 %7555
        %v7557 = vsel %vm1832, %v7515, -inf
        %7558 = vmax.xlane.f32.xlu0 %v7557
        %v7559 = vpop.xlane.xlu0 %7558
        %v7560 = vsel %vm1832, %v7516, -inf
        %7561 = vmax.xlane.f32.xlu0 %v7560
        %v7562 = vpop.xlane.xlu0 %7561
        %v7563 = vsel %vm1832, %v7517, -inf
        %7564 = vmax.xlane.f32.xlu0 %v7563
        %v7565 = vpop.xlane.xlu0 %7564
        %v7566 = vsel %vm1832, %v7518, -inf
        %7567 = vmax.xlane.f32.xlu0 %v7566
        %v7568 = vpop.xlane.xlu0 %7567
        %v7569 = vsel %vm1832, %v7519, -inf
        %7570 = vmax.xlane.f32.xlu0 %v7569
        %v7571 = vpop.xlane.xlu0 %7570
        %v7572 = vsel %vm1832, %v7520, -inf
        %7573 = vmax.xlane.f32.xlu0 %v7572
        %v7574 = vpop.xlane.xlu0 %7573
        %v7575 = vsel %vm1832, %v7521, -inf
        %7576 = vmax.xlane.f32.xlu0 %v7575
        %v7577 = vpop.xlane.xlu0 %7576
        %v7578 = vsel %vm1832, %v7522, -inf
        %7579 = vmax.xlane.f32.xlu0 %v7578
        %v7580 = vpop.xlane.xlu0 %7579
        %v7581 = vsel %vm1832, %v7523, -inf
        %7582 = vmax.xlane.f32.xlu0 %v7581
        %v7583 = vpop.xlane.xlu0 %7582
        %v7584 = vsel %vm1832, %v7524, -inf
        %7585 = vmax.xlane.f32.xlu0 %v7584
        %v7586 = vpop.xlane.xlu0 %7585
        %v7587 = vsel %vm1832, %v7525, -inf
        %7588 = vmax.xlane.f32.xlu0 %v7587
        %v7589 = vpop.xlane.xlu0 %7588
        %v7590 = vsel %vm1832, %v7526, -inf
        %7591 = vmax.xlane.f32.xlu0 %v7590
        %v7592 = vpop.xlane.xlu0 %7591
        %v7593 = vsel %vm1832, %v7527, -inf
        %7594 = vmax.xlane.f32.xlu0 %v7593
        %v7595 = vpop.xlane.xlu0 %7594
        %v7596 = vsel %vm1832, %v7528, -inf
        %7597 = vmax.xlane.f32.xlu0 %v7596
        %v7598 = vpop.xlane.xlu0 %7597
        %v7599 = vsel %vm1832, %v7529, -inf
        %7600 = vmax.xlane.f32.xlu0 %v7599
        %v7601 = vpop.xlane.xlu0 %7600
        %v7602 = vsel %vm1832, %v7530, -inf
        %7603 = vmax.xlane.f32.xlu0 %v7602
        %v7604 = vpop.xlane.xlu0 %7603
        %v7605 = vsel %vm1832, %v7531, -inf
        %7606 = vmax.xlane.f32.xlu0 %v7605
        %v7607 = vpop.xlane.xlu0 %7606
        %v7608 = vsel %vm1832, %v7532, -inf
        %7609 = vmax.xlane.f32.xlu0 %v7608
        %v7610 = vpop.xlane.xlu0 %7609
        %v7611 = vsel %vm1832, %v7533, -inf
        %7612 = vmax.xlane.f32.xlu0 %v7611
        %v7613 = vpop.xlane.xlu0 %7612
        %v7614 = vsel %vm1832, %v7534, -inf
        %7615 = vmax.xlane.f32.xlu0 %v7614
        %v7616 = vpop.xlane.xlu0 %7615
        %v7617 = vsel %vm1832, %v7535, -inf
        %7618 = vmax.xlane.f32.xlu0 %v7617
        %v7619 = vpop.xlane.xlu0 %7618
        %v7620 = vsel %vm1832, %v7536, -inf
        %7621 = vmax.xlane.f32.xlu0 %v7620
        %v7622 = vpop.xlane.xlu0 %7621
        %v7623 = vsel %vm1832, %v7537, -inf
        %7624 = vmax.xlane.f32.xlu0 %v7623
        %v7625 = vpop.xlane.xlu0 %7624
        %v7626 = vsel %vm1832, %v7538, -inf
        %7627 = vmax.xlane.f32.xlu0 %v7626
        %v7628 = vpop.xlane.xlu0 %7627
        %v7629 = vsel %vm1832, %v7539, -inf
        %7630 = vmax.xlane.f32.xlu0 %v7629
        %v7631 = vpop.xlane.xlu0 %7630
        %v7632 = vsel %vm1832, %v7540, -inf
        %7633 = vmax.xlane.f32.xlu0 %v7632
        %v7634 = vpop.xlane.xlu0 %7633
        %v7635 = vsel %vm1832, %v7541, -inf
        %7636 = vmax.xlane.f32.xlu0 %v7635
        %v7637 = vpop.xlane.xlu0 %7636
        %v7638 = vsub.f32 %v7510, %v7544
        %v7639 = vsub.f32 %v7511, %v7547
        %v7640 = vsub.f32 %v7512, %v7550
        %v7641 = vsub.f32 %v7513, %v7553
        %v7642 = vsub.f32 %v7514, %v7556
        %v7643 = vsub.f32 %v7515, %v7559
        %v7644 = vsub.f32 %v7516, %v7562
        %v7645 = vsub.f32 %v7517, %v7565
        %v7646 = vsub.f32 %v7518, %v7568
        %v7647 = vsub.f32 %v7519, %v7571
        %v7648 = vsub.f32 %v7520, %v7574
        %v7649 = vsub.f32 %v7521, %v7577
        %v7650 = vsub.f32 %v7522, %v7580
        %v7651 = vsub.f32 %v7523, %v7583
        %v7652 = vsub.f32 %v7524, %v7586
        %v7653 = vsub.f32 %v7525, %v7589
        %v7654 = vsub.f32 %v7526, %v7592
        %v7655 = vsub.f32 %v7527, %v7595
        %v7656 = vsub.f32 %v7528, %v7598
        %v7657 = vsub.f32 %v7529, %v7601
        %v7658 = vsub.f32 %v7530, %v7604
        %v7659 = vsub.f32 %v7531, %v7607
        %v7660 = vsub.f32 %v7532, %v7610
        %v7661 = vsub.f32 %v7533, %v7613
        %v7662 = vsub.f32 %v7534, %v7616
        %v7663 = vsub.f32 %v7535, %v7619
        %v7664 = vsub.f32 %v7536, %v7622
        %v7665 = vsub.f32 %v7537, %v7625
        %v7666 = vsub.f32 %v7538, %v7628
        %v7667 = vsub.f32 %v7539, %v7631
        %v7668 = vsub.f32 %v7540, %v7634
        %v7669 = vsub.f32 %v7541, %v7637
        %v7670 = vmul.f32 %v7638, 1.442695
        %v7671 = vpow.pop %v7670
        %v7672 = vmul.f32 %v7639, 1.442695
        %v7673 = vpow.pop %v7672
        %v7674 = vmul.f32 %v7640, 1.442695
        %v7675 = vpow.pop %v7674
        %v7676 = vmul.f32 %v7641, 1.442695
        %v7677 = vpow.pop %v7676
        %v7678 = vmul.f32 %v7642, 1.442695
        %v7679 = vpow.pop %v7678
        %v7680 = vmul.f32 %v7643, 1.442695
        %v7681 = vpow.pop %v7680
        %v7682 = vmul.f32 %v7644, 1.442695
        %v7683 = vpow.pop %v7682
        %v7684 = vmul.f32 %v7645, 1.442695
        %v7685 = vpow.pop %v7684
        %v7686 = vmul.f32 %v7646, 1.442695
        %v7687 = vpow.pop %v7686
        %v7688 = vmul.f32 %v7647, 1.442695
        %v7689 = vpow.pop %v7688
        %v7690 = vmul.f32 %v7648, 1.442695
        %v7691 = vpow.pop %v7690
        %v7692 = vmul.f32 %v7649, 1.442695
        %v7693 = vpow.pop %v7692
        %v7694 = vmul.f32 %v7650, 1.442695
        %v7695 = vpow.pop %v7694
        %v7696 = vmul.f32 %v7651, 1.442695
        %v7697 = vpow.pop %v7696
        %v7698 = vmul.f32 %v7652, 1.442695
        %v7699 = vpow.pop %v7698
        %v7700 = vmul.f32 %v7653, 1.442695
        %v7701 = vpow.pop %v7700
        %v7702 = vmul.f32 %v7654, 1.442695
        %v7703 = vpow.pop %v7702
        %v7704 = vmul.f32 %v7655, 1.442695
        %v7705 = vpow.pop %v7704
        %v7706 = vmul.f32 %v7656, 1.442695
        %v7707 = vpow.pop %v7706
        %v7708 = vmul.f32 %v7657, 1.442695
        %v7709 = vpow.pop %v7708
        %v7710 = vmul.f32 %v7658, 1.442695
        %v7711 = vpow.pop %v7710
        %v7712 = vmul.f32 %v7659, 1.442695
        %v7713 = vpow.pop %v7712
        %v7714 = vmul.f32 %v7660, 1.442695
        %v7715 = vpow.pop %v7714
        %v7716 = vmul.f32 %v7661, 1.442695
        %v7717 = vpow.pop %v7716
        %v7718 = vmul.f32 %v7662, 1.442695
        %v7719 = vpow.pop %v7718
        %v7720 = vmul.f32 %v7663, 1.442695
        %v7721 = vpow.pop %v7720
        %v7722 = vmul.f32 %v7664, 1.442695
        %v7723 = vpow.pop %v7722
        %v7724 = vmul.f32 %v7665, 1.442695
        %v7725 = vpow.pop %v7724
        %v7726 = vmul.f32 %v7666, 1.442695
        %v7727 = vpow.pop %v7726
        %v7728 = vmul.f32 %v7667, 1.442695
        %v7729 = vpow.pop %v7728
        %v7730 = vmul.f32 %v7668, 1.442695
        %v7731 = vpow.pop %v7730
        %v7732 = vmul.f32 %v7669, 1.442695
        %v7733 = vpow.pop %v7732
        %v7734 = vsel %vm1832, %v7671, 0.0
        %7735 = vadd.xlane.f32.xlu0 %v7734
        %v7736 = vpop.xlane.xlu0 %7735
        %v7737 = vsel %vm1832, %v7673, 0.0
        %7738 = vadd.xlane.f32.xlu0 %v7737
        %v7739 = vpop.xlane.xlu0 %7738
        %v7740 = vsel %vm1832, %v7675, 0.0
        %7741 = vadd.xlane.f32.xlu0 %v7740
        %v7742 = vpop.xlane.xlu0 %7741
        %v7743 = vsel %vm1832, %v7677, 0.0
        %7744 = vadd.xlane.f32.xlu0 %v7743
        %v7745 = vpop.xlane.xlu0 %7744
        %v7746 = vsel %vm1832, %v7679, 0.0
        %7747 = vadd.xlane.f32.xlu0 %v7746
        %v7748 = vpop.xlane.xlu0 %7747
        %v7749 = vsel %vm1832, %v7681, 0.0
        %7750 = vadd.xlane.f32.xlu0 %v7749
        %v7751 = vpop.xlane.xlu0 %7750
        %v7752 = vsel %vm1832, %v7683, 0.0
        %7753 = vadd.xlane.f32.xlu0 %v7752
        %v7754 = vpop.xlane.xlu0 %7753
        %v7755 = vsel %vm1832, %v7685, 0.0
        %7756 = vadd.xlane.f32.xlu0 %v7755
        %v7757 = vpop.xlane.xlu0 %7756
        %v7758 = vsel %vm1832, %v7687, 0.0
        %7759 = vadd.xlane.f32.xlu0 %v7758
        %v7760 = vpop.xlane.xlu0 %7759
        %v7761 = vsel %vm1832, %v7689, 0.0
        %7762 = vadd.xlane.f32.xlu0 %v7761
        %v7763 = vpop.xlane.xlu0 %7762
        %v7764 = vsel %vm1832, %v7691, 0.0
        %7765 = vadd.xlane.f32.xlu0 %v7764
        %v7766 = vpop.xlane.xlu0 %7765
        %v7767 = vsel %vm1832, %v7693, 0.0
        %7768 = vadd.xlane.f32.xlu0 %v7767
        %v7769 = vpop.xlane.xlu0 %7768
        %v7770 = vsel %vm1832, %v7695, 0.0
        %7771 = vadd.xlane.f32.xlu0 %v7770
        %v7772 = vpop.xlane.xlu0 %7771
        %v7773 = vsel %vm1832, %v7697, 0.0
        %7774 = vadd.xlane.f32.xlu0 %v7773
        %v7775 = vpop.xlane.xlu0 %7774
        %v7776 = vsel %vm1832, %v7699, 0.0
        %7777 = vadd.xlane.f32.xlu0 %v7776
        %v7778 = vpop.xlane.xlu0 %7777
        %v7779 = vsel %vm1832, %v7701, 0.0
        %7780 = vadd.xlane.f32.xlu0 %v7779
        %v7781 = vpop.xlane.xlu0 %7780
        %v7782 = vsel %vm1832, %v7703, 0.0
        %7783 = vadd.xlane.f32.xlu0 %v7782
        %v7784 = vpop.xlane.xlu0 %7783
        %v7785 = vsel %vm1832, %v7705, 0.0
        %7786 = vadd.xlane.f32.xlu0 %v7785
        %v7787 = vpop.xlane.xlu0 %7786
        %v7788 = vsel %vm1832, %v7707, 0.0
        %7789 = vadd.xlane.f32.xlu0 %v7788
        %v7790 = vpop.xlane.xlu0 %7789
        %v7791 = vsel %vm1832, %v7709, 0.0
        %7792 = vadd.xlane.f32.xlu0 %v7791
        %v7793 = vpop.xlane.xlu0 %7792
        %v7794 = vsel %vm1832, %v7711, 0.0
        %7795 = vadd.xlane.f32.xlu0 %v7794
        %v7796 = vpop.xlane.xlu0 %7795
        %v7797 = vsel %vm1832, %v7713, 0.0
        %7798 = vadd.xlane.f32.xlu0 %v7797
        %v7799 = vpop.xlane.xlu0 %7798
        %v7800 = vsel %vm1832, %v7715, 0.0
        %7801 = vadd.xlane.f32.xlu0 %v7800
        %v7802 = vpop.xlane.xlu0 %7801
        %v7803 = vsel %vm1832, %v7717, 0.0
        %7804 = vadd.xlane.f32.xlu0 %v7803
        %v7805 = vpop.xlane.xlu0 %7804
        %v7806 = vsel %vm1832, %v7719, 0.0
        %7807 = vadd.xlane.f32.xlu0 %v7806
        %v7808 = vpop.xlane.xlu0 %7807
        %v7809 = vsel %vm1832, %v7721, 0.0
        %7810 = vadd.xlane.f32.xlu0 %v7809
        %v7811 = vpop.xlane.xlu0 %7810
        %v7812 = vsel %vm1832, %v7723, 0.0
        %7813 = vadd.xlane.f32.xlu0 %v7812
        %v7814 = vpop.xlane.xlu0 %7813
        %v7815 = vsel %vm1832, %v7725, 0.0
        %7816 = vadd.xlane.f32.xlu0 %v7815
        %v7817 = vpop.xlane.xlu0 %7816
        %v7818 = vsel %vm1832, %v7727, 0.0
        %7819 = vadd.xlane.f32.xlu0 %v7818
        %v7820 = vpop.xlane.xlu0 %7819
        %v7821 = vsel %vm1832, %v7729, 0.0
        %7822 = vadd.xlane.f32.xlu0 %v7821
        %v7823 = vpop.xlane.xlu0 %7822
        %v7824 = vsel %vm1832, %v7731, 0.0
        %7825 = vadd.xlane.f32.xlu0 %v7824
        %v7826 = vpop.xlane.xlu0 %7825
        %v7827 = vsel %vm1832, %v7733, 0.0
        %7828 = vadd.xlane.f32.xlu0 %v7827
        %v7829 = vpop.xlane.xlu0 %7828
        %v7830 = vrcp.pop %v7736
        %v7831 = vrcp.pop %v7739
        %v7832 = vrcp.pop %v7742
        %v7833 = vrcp.pop %v7745
        %v7834 = vrcp.pop %v7748
        %v7835 = vrcp.pop %v7751
        %v7836 = vrcp.pop %v7754
        %v7837 = vrcp.pop %v7757
        %v7838 = vrcp.pop %v7760
        %v7839 = vrcp.pop %v7763
        %v7840 = vrcp.pop %v7766
        %v7841 = vrcp.pop %v7769
        %v7842 = vrcp.pop %v7772
        %v7843 = vrcp.pop %v7775
        %v7844 = vrcp.pop %v7778
        %v7845 = vrcp.pop %v7781
        %v7846 = vrcp.pop %v7784
        %v7847 = vrcp.pop %v7787
        %v7848 = vrcp.pop %v7790
        %v7849 = vrcp.pop %v7793
        %v7850 = vrcp.pop %v7796
        %v7851 = vrcp.pop %v7799
        %v7852 = vrcp.pop %v7802
        %v7853 = vrcp.pop %v7805
        %v7854 = vrcp.pop %v7808
        %v7855 = vrcp.pop %v7811
        %v7856 = vrcp.pop %v7814
        %v7857 = vrcp.pop %v7817
        %v7858 = vrcp.pop %v7820
        %v7859 = vrcp.pop %v7823
        %v7860 = vrcp.pop %v7826
        %v7861 = vrcp.pop %v7829
        %v7862 = vmul.f32 %v7671, %v7830
        %v7863 = vmul.f32 %v7673, %v7831
        %v7864 = vmul.f32 %v7675, %v7832
        %v7865 = vmul.f32 %v7677, %v7833
        %v7866 = vmul.f32 %v7679, %v7834
        %v7867 = vmul.f32 %v7681, %v7835
        %v7868 = vmul.f32 %v7683, %v7836
        %v7869 = vmul.f32 %v7685, %v7837
        %v7870 = vmul.f32 %v7687, %v7838
        %v7871 = vmul.f32 %v7689, %v7839
        %v7872 = vmul.f32 %v7691, %v7840
        %v7873 = vmul.f32 %v7693, %v7841
        %v7874 = vmul.f32 %v7695, %v7842
        %v7875 = vmul.f32 %v7697, %v7843
        %v7876 = vmul.f32 %v7699, %v7844
        %v7877 = vmul.f32 %v7701, %v7845
        %v7878 = vmul.f32 %v7703, %v7846
        %v7879 = vmul.f32 %v7705, %v7847
        %v7880 = vmul.f32 %v7707, %v7848
        %v7881 = vmul.f32 %v7709, %v7849
        %v7882 = vmul.f32 %v7711, %v7850
        %v7883 = vmul.f32 %v7713, %v7851
        %v7884 = vmul.f32 %v7715, %v7852
        %v7885 = vmul.f32 %v7717, %v7853
        %v7886 = vmul.f32 %v7719, %v7854
        %v7887 = vmul.f32 %v7721, %v7855
        %v7888 = vmul.f32 %v7723, %v7856
        %v7889 = vmul.f32 %v7725, %v7857
        %v7890 = vmul.f32 %v7727, %v7858
        %v7891 = vmul.f32 %v7729, %v7859
        %v7892 = vmul.f32 %v7731, %v7860
        %v7893 = vmul.f32 %v7733, %v7861
        %v7894 = vpack.c.bf16 %v7863, %v7862
        %v7895 = vpack.c.bf16 %v7865, %v7864
        %v7896 = vpack.c.bf16 %v7867, %v7866
        %v7897 = vpack.c.bf16 %v7869, %v7868
        %v7898 = vpack.c.bf16 %v7871, %v7870
        %v7899 = vpack.c.bf16 %v7873, %v7872
        %v7900 = vpack.c.bf16 %v7875, %v7874
        %v7901 = vpack.c.bf16 %v7877, %v7876
        %v7902 = vpack.c.bf16 %v7879, %v7878
        %v7903 = vpack.c.bf16 %v7881, %v7880
        %v7904 = vpack.c.bf16 %v7883, %v7882
        %v7905 = vpack.c.bf16 %v7885, %v7884
        %v7906 = vpack.c.bf16 %v7887, %v7886
        %v7907 = vpack.c.bf16 %v7889, %v7888
        %v7908 = vpack.c.bf16 %v7891, %v7890
        %v7909 = vpack.c.bf16 %v7893, %v7892
        %v7910 = vpack.c.bf16 %v7129, %v7126
        %v7911 = vpack.c.bf16 %v7137, %v7134
        %v7912 = vpack.c.bf16 %v7145, %v7142
        %v7913 = vpack.c.bf16 %v7153, %v7150
        %v7915 = vsel %vm1832, %v7894, 0
        %v7918 = vsel %vm1832, %v7895, 0
        %v7921 = vsel %vm1832, %v7896, 0
        %v7924 = vsel %vm1832, %v7897, 0
        %v7927 = vsel %vm1832, %v7898, 0
        %v7930 = vsel %vm1832, %v7899, 0
        %v7933 = vsel %vm1832, %v7900, 0
        %v7936 = vsel %vm1832, %v7901, 0
        %v7939 = vsel %vm1832, %v7902, 0
        %v7942 = vsel %vm1832, %v7903, 0
        %v7945 = vsel %vm1832, %v7904, 0
        %v7948 = vsel %vm1832, %v7905, 0
        %v7951 = vsel %vm1832, %v7906, 0
        %v7954 = vsel %vm1832, %v7907, 0
        %v7957 = vsel %vm1832, %v7908, 0
        %v7960 = vsel %vm1832, %v7909, 0
        %7962 = vmatprep.subr.bf16.mxu0 0
        %7963 = vmatpush1.bf16.msra.mxu0 %v7910
        %7964 = vmatprep.subr.bf16.mxu0 0
        %7965 = vmatpush1.bf16.msra.mxu0 %v7911
        %7966 = vmatprep.subr.bf16.mxu0 0
        %7967 = vmatpush1.bf16.msra.mxu0 %v7912
        %7968 = vmatprep.subr.bf16.mxu0 0
        %7969 = vmatpush1.bf16.msra.mxu0 %v7913
        %7970 = vmatprep.subr.bf16.mxu0 0
        %7971 = vmatpush1.bf16.msra.mxu0 0
        %7972 = vmatprep.subr.bf16.mxu0 0
        %7973 = vmatpush1.bf16.msra.mxu0 0
        %7974 = vmatprep.subr.bf16.mxu0 0
        %7975 = vmatpush1.bf16.msra.mxu0 0
        %7976 = vmatprep.subr.bf16.mxu0 0
        %7977 = vmatpush1.bf16.msra.mxu0 0
        %7978 = vmatprep.subr.bf16.mxu0 0
        %7979 = vmatpush1.bf16.msra.mxu0 0
        %7980 = vmatprep.subr.bf16.mxu0 0
        %7981 = vmatpush1.bf16.msra.mxu0 0
        %7982 = vmatprep.subr.bf16.mxu0 0
        %7983 = vmatpush1.bf16.msra.mxu0 0
        %7984 = vmatprep.subr.bf16.mxu0 0
        %7985 = vmatpush1.bf16.msra.mxu0 0
        %7986 = vmatprep.subr.bf16.mxu0 0
        %7987 = vmatpush1.bf16.msra.mxu0 0
        %7988 = vmatprep.subr.bf16.mxu0 0
        %7989 = vmatpush1.bf16.msra.mxu0 0
        %7990 = vmatprep.subr.bf16.mxu0 0
        %7991 = vmatpush1.bf16.msra.mxu0 0
        %7992 = vmatprep.subr.bf16.mxu0 0
        %7993 = vmatpush1.bf16.msra.mxu0 0
        %7994 = vmatprep.mubr.bf16.mxu0 0
        %7995 = vmatmul.mubr.bf16.gmra.mrb[0].mxu0 %v7915
        %v7996 = vpop.f32.mrb[0].mxu0
        %v7997 = vadd.f32 0.0, %v7996
        %v7998 = vpop.f32.mrb[0].mxu0
        %v7999 = vpop.f32.mrb[0].mxu0
        %v8000 = vadd.f32 0.0, %v7999
        %v8001 = vpop.f32.mrb[0].mxu0
        %8002 = vmatprep.mubr.bf16.mxu0 0
        %8003 = vmatmul.mubr.bf16.gmra.mrb[0].mxu0 %v7918
        %v8004 = vpop.f32.mrb[0].mxu0
        %v8005 = vadd.f32 0.0, %v8004
        %v8006 = vpop.f32.mrb[0].mxu0
        %v8007 = vpop.f32.mrb[0].mxu0
        %v8008 = vadd.f32 0.0, %v8007
        %v8009 = vpop.f32.mrb[0].mxu0
        %8010 = vmatprep.mubr.bf16.mxu0 0
        %8011 = vmatmul.mubr.bf16.gmra.mrb[0].mxu0 %v7921
        %v8012 = vpop.f32.mrb[0].mxu0
        %v8013 = vadd.f32 0.0, %v8012
        %v8014 = vpop.f32.mrb[0].mxu0
        %v8015 = vpop.f32.mrb[0].mxu0
        %v8016 = vadd.f32 0.0, %v8015
        %v8017 = vpop.f32.mrb[0].mxu0
        %8018 = vmatprep.mubr.bf16.mxu0 0
        %8019 = vmatmul.mubr.bf16.gmra.mrb[0].mxu0 %v7924
        %v8020 = vpop.f32.mrb[0].mxu0
        %v8021 = vadd.f32 0.0, %v8020
        %v8022 = vpop.f32.mrb[0].mxu0
        %v8023 = vpop.f32.mrb[0].mxu0
        %v8024 = vadd.f32 0.0, %v8023
        %v8025 = vpop.f32.mrb[0].mxu0
        %8026 = vmatprep.mubr.bf16.mxu0 0
        %8027 = vmatmul.mubr.bf16.gmra.mrb[0].mxu0 %v7927
        %v8028 = vpop.f32.mrb[0].mxu0
        %v8029 = vadd.f32 0.0, %v8028
        %v8030 = vpop.f32.mrb[0].mxu0
        %v8031 = vpop.f32.mrb[0].mxu0
        %v8032 = vadd.f32 0.0, %v8031
        %v8033 = vpop.f32.mrb[0].mxu0
        %8034 = vmatprep.mubr.bf16.mxu0 0
        %8035 = vmatmul.mubr.bf16.gmra.mrb[0].mxu0 %v7930
        %v8036 = vpop.f32.mrb[0].mxu0
        %v8037 = vadd.f32 0.0, %v8036
        %v8038 = vpop.f32.mrb[0].mxu0
        %v8039 = vpop.f32.mrb[0].mxu0
        %v8040 = vadd.f32 0.0, %v8039
        %v8041 = vpop.f32.mrb[0].mxu0
        %8042 = vmatprep.mubr.bf16.mxu0 0
        %8043 = vmatmul.mubr.bf16.gmra.mrb[0].mxu0 %v7933
        %v8044 = vpop.f32.mrb[0].mxu0
        %v8045 = vadd.f32 0.0, %v8044
        %v8046 = vpop.f32.mrb[0].mxu0
        %v8047 = vpop.f32.mrb[0].mxu0
        %v8048 = vadd.f32 0.0, %v8047
        %v8049 = vpop.f32.mrb[0].mxu0
        %8050 = vmatprep.mubr.bf16.mxu0 0
        %8051 = vmatmul.mubr.bf16.gmra.mrb[0].mxu0 %v7936
        %v8052 = vpop.f32.mrb[0].mxu0
        %v8053 = vadd.f32 0.0, %v8052
        %v8054 = vpop.f32.mrb[0].mxu0
        %v8055 = vpop.f32.mrb[0].mxu0
        %v8056 = vadd.f32 0.0, %v8055
        %v8057 = vpop.f32.mrb[0].mxu0
        %8058 = vmatprep.mubr.bf16.mxu0 0
        %8059 = vmatmul.mubr.bf16.gmra.mrb[0].mxu0 %v7939
        %v8060 = vpop.f32.mrb[0].mxu0
        %v8061 = vadd.f32 0.0, %v8060
        %v8062 = vpop.f32.mrb[0].mxu0
        %v8063 = vpop.f32.mrb[0].mxu0
        %v8064 = vadd.f32 0.0, %v8063
        %v8065 = vpop.f32.mrb[0].mxu0
        %8066 = vmatprep.mubr.bf16.mxu0 0
        %8067 = vmatmul.mubr.bf16.gmra.mrb[0].mxu0 %v7942
        %v8068 = vpop.f32.mrb[0].mxu0
        %v8069 = vadd.f32 0.0, %v8068
        %v8070 = vpop.f32.mrb[0].mxu0
        %v8071 = vpop.f32.mrb[0].mxu0
        %v8072 = vadd.f32 0.0, %v8071
        %v8073 = vpop.f32.mrb[0].mxu0
        %8074 = vmatprep.mubr.bf16.mxu0 0
        %8075 = vmatmul.mubr.bf16.gmra.mrb[0].mxu0 %v7945
        %v8076 = vpop.f32.mrb[0].mxu0
        %v8077 = vadd.f32 0.0, %v8076
        %v8078 = vpop.f32.mrb[0].mxu0
        %v8079 = vpop.f32.mrb[0].mxu0
        %v8080 = vadd.f32 0.0, %v8079
        %v8081 = vpop.f32.mrb[0].mxu0
        %8082 = vmatprep.mubr.bf16.mxu0 0
        %8083 = vmatmul.mubr.bf16.gmra.mrb[0].mxu0 %v7948
        %v8084 = vpop.f32.mrb[0].mxu0
        %v8085 = vadd.f32 0.0, %v8084
        %v8086 = vpop.f32.mrb[0].mxu0
        %v8087 = vpop.f32.mrb[0].mxu0
        %v8088 = vadd.f32 0.0, %v8087
        %v8089 = vpop.f32.mrb[0].mxu0
        %8090 = vmatprep.mubr.bf16.mxu0 0
        %8091 = vmatmul.mubr.bf16.gmra.mrb[0].mxu0 %v7951
        %v8092 = vpop.f32.mrb[0].mxu0
        %v8093 = vadd.f32 0.0, %v8092
        %v8094 = vpop.f32.mrb[0].mxu0
        %v8095 = vpop.f32.mrb[0].mxu0
        %v8096 = vadd.f32 0.0, %v8095
        %v8097 = vpop.f32.mrb[0].mxu0
        %8098 = vmatprep.mubr.bf16.mxu0 0
        %8099 = vmatmul.mubr.bf16.gmra.mrb[0].mxu0 %v7954
        %v8100 = vpop.f32.mrb[0].mxu0
        %v8101 = vadd.f32 0.0, %v8100
        %v8102 = vpop.f32.mrb[0].mxu0
        %v8103 = vpop.f32.mrb[0].mxu0
        %v8104 = vadd.f32 0.0, %v8103
        %v8105 = vpop.f32.mrb[0].mxu0
        %8106 = vmatprep.mubr.bf16.mxu0 0
        %8107 = vmatmul.mubr.bf16.gmra.mrb[0].mxu0 %v7957
        %v8108 = vpop.f32.mrb[0].mxu0
        %v8109 = vadd.f32 0.0, %v8108
        %v8110 = vpop.f32.mrb[0].mxu0
        %v8111 = vpop.f32.mrb[0].mxu0
        %v8112 = vadd.f32 0.0, %v8111
        %v8113 = vpop.f32.mrb[0].mxu0
        %8114 = vmatprep.mubr.bf16.mxu0 0
        %8115 = vmatmul.mubr.bf16.gmra.mrb[0].mxu0 %v7960
        %v8116 = vpop.f32.mrb[0].mxu0
        %v8117 = vadd.f32 0.0, %v8116
        %v8118 = vpop.f32.mrb[0].mxu0
        %v8119 = vpop.f32.mrb[0].mxu0
        %v8120 = vadd.f32 0.0, %v8119
        %v8121 = vpop.f32.mrb[0].mxu0
        %8122 = vdwg.mxu0
        %v8123 = vpack.c.bf16 %v8000, %v7997
        %v8124 = vpack.c.bf16 %v8008, %v8005
        %v8125 = vpack.c.bf16 %v8016, %v8013
        %v8126 = vpack.c.bf16 %v8024, %v8021
        %v8127 = vpack.c.bf16 %v8032, %v8029
        %v8128 = vpack.c.bf16 %v8040, %v8037
        %v8129 = vpack.c.bf16 %v8048, %v8045
        %v8130 = vpack.c.bf16 %v8056, %v8053
        %v8131 = vpack.c.bf16 %v8064, %v8061
        %v8132 = vpack.c.bf16 %v8072, %v8069
        %v8133 = vpack.c.bf16 %v8080, %v8077
        %v8134 = vpack.c.bf16 %v8088, %v8085
        %v8135 = vpack.c.bf16 %v8096, %v8093
        %v8136 = vpack.c.bf16 %v8104, %v8101
        %v8137 = vpack.c.bf16 %v8112, %v8109
        %v8138 = vpack.c.bf16 %v8120, %v8117
        %v8140 = vsel %vm976, %v8123, 0
        %v8143 = vsel %vm976, %v8124, 0
        %v8146 = vsel %vm976, %v8125, 0
        %v8149 = vsel %vm976, %v8126, 0
        %v8152 = vsel %vm976, %v8127, 0
        %v8155 = vsel %vm976, %v8128, 0
        %v8158 = vsel %vm976, %v8129, 0
        %v8161 = vsel %vm976, %v8130, 0
        %v8164 = vsel %vm976, %v8131, 0
        %v8167 = vsel %vm976, %v8132, 0
        %v8170 = vsel %vm976, %v8133, 0
        %v8173 = vsel %vm976, %v8134, 0
        %v8176 = vsel %vm976, %v8135, 0
        %v8179 = vsel %vm976, %v8136, 0
        %v8182 = vsel %vm976, %v8137, 0
        %v8185 = vsel %vm976, %v8138, 0
        %8187 = vmatprep.subr.bf16.mxu0 0
        %8188 = vmatpush1.bf16.msra.mxu0 %v601
        %8189 = vmatprep.subr.bf16.mxu0 0
        %8190 = vmatpush1.bf16.msra.mxu0 %v602
        %8191 = vmatprep.subr.bf16.mxu0 0
        %8192 = vmatpush1.bf16.msra.mxu0 0
        %8193 = vmatprep.subr.bf16.mxu0 0
        %8194 = vmatpush1.bf16.msra.mxu0 0
        %8195 = vmatprep.subr.bf16.mxu0 0
        %8196 = vmatpush1.bf16.msra.mxu0 0
        %8197 = vmatprep.subr.bf16.mxu0 0
        %8198 = vmatpush1.bf16.msra.mxu0 0
        %8199 = vmatprep.subr.bf16.mxu0 0
        %8200 = vmatpush1.bf16.msra.mxu0 0
        %8201 = vmatprep.subr.bf16.mxu0 0
        %8202 = vmatpush1.bf16.msra.mxu0 0
        %8203 = vmatprep.subr.bf16.mxu0 0
        %8204 = vmatpush1.bf16.msra.mxu0 0
        %8205 = vmatprep.subr.bf16.mxu0 0
        %8206 = vmatpush1.bf16.msra.mxu0 0
        %8207 = vmatprep.subr.bf16.mxu0 0
        %8208 = vmatpush1.bf16.msra.mxu0 0
        %8209 = vmatprep.subr.bf16.mxu0 0
        %8210 = vmatpush1.bf16.msra.mxu0 0
        %8211 = vmatprep.subr.bf16.mxu0 0
        %8212 = vmatpush1.bf16.msra.mxu0 0
        %8213 = vmatprep.subr.bf16.mxu0 0
        %8214 = vmatpush1.bf16.msra.mxu0 0
        %8215 = vmatprep.subr.bf16.mxu0 0
        %8216 = vmatpush1.bf16.msra.mxu0 0
        %8217 = vmatprep.subr.bf16.mxu0 0
        %8218 = vmatpush1.bf16.msra.mxu0 0
        %8219 = vmatprep.mubr.bf16.mxu0 0
        %8220 = vmatmul.mubr.bf16.gmra.mrb[0].mxu0 %v8140
        %v8221 = vpop.f32.mrb[0].mxu0
        %v8222 = vadd.f32 0.0, %v8221
        %v8223 = vpop.f32.mrb[0].mxu0
        %v8224 = vpop.f32.mrb[0].mxu0
        %v8225 = vadd.f32 0.0, %v8224
        %v8226 = vpop.f32.mrb[0].mxu0
        %8227 = vmatprep.mubr.bf16.mxu0 0
        %8228 = vmatmul.mubr.bf16.gmra.mrb[0].mxu0 %v8143
        %v8229 = vpop.f32.mrb[0].mxu0
        %v8230 = vadd.f32 0.0, %v8229
        %v8231 = vpop.f32.mrb[0].mxu0
        %v8232 = vpop.f32.mrb[0].mxu0
        %v8233 = vadd.f32 0.0, %v8232
        %v8234 = vpop.f32.mrb[0].mxu0
        %8235 = vmatprep.mubr.bf16.mxu0 0
        %8236 = vmatmul.mubr.bf16.gmra.mrb[0].mxu0 %v8146
        %v8237 = vpop.f32.mrb[0].mxu0
        %v8238 = vadd.f32 0.0, %v8237
        %v8239 = vpop.f32.mrb[0].mxu0
        %v8240 = vpop.f32.mrb[0].mxu0
        %v8241 = vadd.f32 0.0, %v8240
        %v8242 = vpop.f32.mrb[0].mxu0
        %8243 = vmatprep.mubr.bf16.mxu0 0
        %8244 = vmatmul.mubr.bf16.gmra.mrb[0].mxu0 %v8149
        %v8245 = vpop.f32.mrb[0].mxu0
        %v8246 = vadd.f32 0.0, %v8245
        %v8247 = vpop.f32.mrb[0].mxu0
        %v8248 = vpop.f32.mrb[0].mxu0
        %v8249 = vadd.f32 0.0, %v8248
        %v8250 = vpop.f32.mrb[0].mxu0
        %8251 = vmatprep.mubr.bf16.mxu0 0
        %8252 = vmatmul.mubr.bf16.gmra.mrb[0].mxu0 %v8152
        %v8253 = vpop.f32.mrb[0].mxu0
        %v8254 = vadd.f32 0.0, %v8253
        %v8255 = vpop.f32.mrb[0].mxu0
        %v8256 = vpop.f32.mrb[0].mxu0
        %v8257 = vadd.f32 0.0, %v8256
        %v8258 = vpop.f32.mrb[0].mxu0
        %8259 = vmatprep.mubr.bf16.mxu0 0
        %8260 = vmatmul.mubr.bf16.gmra.mrb[0].mxu0 %v8155
        %v8261 = vpop.f32.mrb[0].mxu0
        %v8262 = vadd.f32 0.0, %v8261
        %v8263 = vpop.f32.mrb[0].mxu0
        %v8264 = vpop.f32.mrb[0].mxu0
        %v8265 = vadd.f32 0.0, %v8264
        %v8266 = vpop.f32.mrb[0].mxu0
        %8267 = vmatprep.mubr.bf16.mxu0 0
        %8268 = vmatmul.mubr.bf16.gmra.mrb[0].mxu0 %v8158
        %v8269 = vpop.f32.mrb[0].mxu0
        %v8270 = vadd.f32 0.0, %v8269
        %v8271 = vpop.f32.mrb[0].mxu0
        %v8272 = vpop.f32.mrb[0].mxu0
        %v8273 = vadd.f32 0.0, %v8272
        %v8274 = vpop.f32.mrb[0].mxu0
        %8275 = vmatprep.mubr.bf16.mxu0 0
        %8276 = vmatmul.mubr.bf16.gmra.mrb[0].mxu0 %v8161
        %v8277 = vpop.f32.mrb[0].mxu0
        %v8278 = vadd.f32 0.0, %v8277
        %v8279 = vpop.f32.mrb[0].mxu0
        %v8280 = vpop.f32.mrb[0].mxu0
        %v8281 = vadd.f32 0.0, %v8280
        %v8282 = vpop.f32.mrb[0].mxu0
        %8283 = vmatprep.mubr.bf16.mxu0 0
        %8284 = vmatmul.mubr.bf16.gmra.mrb[0].mxu0 %v8164
        %v8285 = vpop.f32.mrb[0].mxu0
        %v8286 = vadd.f32 0.0, %v8285
        %v8287 = vpop.f32.mrb[0].mxu0
        %v8288 = vpop.f32.mrb[0].mxu0
        %v8289 = vadd.f32 0.0, %v8288
        %v8290 = vpop.f32.mrb[0].mxu0
        %8291 = vmatprep.mubr.bf16.mxu0 0
        %8292 = vmatmul.mubr.bf16.gmra.mrb[0].mxu0 %v8167
        %v8293 = vpop.f32.mrb[0].mxu0
        %v8294 = vadd.f32 0.0, %v8293
        %v8295 = vpop.f32.mrb[0].mxu0
        %v8296 = vpop.f32.mrb[0].mxu0
        %v8297 = vadd.f32 0.0, %v8296
        %v8298 = vpop.f32.mrb[0].mxu0
        %8299 = vmatprep.mubr.bf16.mxu0 0
        %8300 = vmatmul.mubr.bf16.gmra.mrb[0].mxu0 %v8170
        %v8301 = vpop.f32.mrb[0].mxu0
        %v8302 = vadd.f32 0.0, %v8301
        %v8303 = vpop.f32.mrb[0].mxu0
        %v8304 = vpop.f32.mrb[0].mxu0
        %v8305 = vadd.f32 0.0, %v8304
        %v8306 = vpop.f32.mrb[0].mxu0
        %8307 = vmatprep.mubr.bf16.mxu0 0
        %8308 = vmatmul.mubr.bf16.gmra.mrb[0].mxu0 %v8173
        %v8309 = vpop.f32.mrb[0].mxu0
        %v8310 = vadd.f32 0.0, %v8309
        %v8311 = vpop.f32.mrb[0].mxu0
        %v8312 = vpop.f32.mrb[0].mxu0
        %v8313 = vadd.f32 0.0, %v8312
        %v8314 = vpop.f32.mrb[0].mxu0
        %8315 = vmatprep.mubr.bf16.mxu0 0
        %8316 = vmatmul.mubr.bf16.gmra.mrb[0].mxu0 %v8176
        %v8317 = vpop.f32.mrb[0].mxu0
        %v8318 = vadd.f32 0.0, %v8317
        %v8319 = vpop.f32.mrb[0].mxu0
        %v8320 = vpop.f32.mrb[0].mxu0
        %v8321 = vadd.f32 0.0, %v8320
        %v8322 = vpop.f32.mrb[0].mxu0
        %8323 = vmatprep.mubr.bf16.mxu0 0
        %8324 = vmatmul.mubr.bf16.gmra.mrb[0].mxu0 %v8179
        %v8325 = vpop.f32.mrb[0].mxu0
        %v8326 = vadd.f32 0.0, %v8325
        %v8327 = vpop.f32.mrb[0].mxu0
        %v8328 = vpop.f32.mrb[0].mxu0
        %v8329 = vadd.f32 0.0, %v8328
        %v8330 = vpop.f32.mrb[0].mxu0
        %8331 = vmatprep.mubr.bf16.mxu0 0
        %8332 = vmatmul.mubr.bf16.gmra.mrb[0].mxu0 %v8182
        %v8333 = vpop.f32.mrb[0].mxu0
        %v8334 = vadd.f32 0.0, %v8333
        %v8335 = vpop.f32.mrb[0].mxu0
        %v8336 = vpop.f32.mrb[0].mxu0
        %v8337 = vadd.f32 0.0, %v8336
        %v8338 = vpop.f32.mrb[0].mxu0
        %8339 = vmatprep.mubr.bf16.mxu0 0
        %8340 = vmatmul.mubr.bf16.gmra.mrb[0].mxu0 %v8185
        %v8341 = vpop.f32.mrb[0].mxu0
        %v8342 = vadd.f32 0.0, %v8341
        %v8343 = vpop.f32.mrb[0].mxu0
        %v8344 = vpop.f32.mrb[0].mxu0
        %v8345 = vadd.f32 0.0, %v8344
        %v8346 = vpop.f32.mrb[0].mxu0
        %8347 = vdwg.mxu0
        %v8348 = vadd.f32 %v6445, %v8222
        %v8349 = vadd.f32 %v6446, %v8225
        %v8350 = vadd.f32 %v6447, %v8230
        %v8351 = vadd.f32 %v6448, %v8233
        %v8352 = vadd.f32 %v6449, %v8238
        %v8353 = vadd.f32 %v6450, %v8241
        %v8354 = vadd.f32 %v6451, %v8246
        %v8355 = vadd.f32 %v6452, %v8249
        %v8356 = vadd.f32 %v6453, %v8254
        %v8357 = vadd.f32 %v6454, %v8257
        %v8358 = vadd.f32 %v6455, %v8262
        %v8359 = vadd.f32 %v6456, %v8265
        %v8360 = vadd.f32 %v6457, %v8270
        %v8361 = vadd.f32 %v6458, %v8273
        %v8362 = vadd.f32 %v6459, %v8278
        %v8363 = vadd.f32 %v6460, %v8281
        %v8364 = vadd.f32 %v6461, %v8286
        %v8365 = vadd.f32 %v6462, %v8289
        %v8366 = vadd.f32 %v6463, %v8294
        %v8367 = vadd.f32 %v6464, %v8297
        %v8368 = vadd.f32 %v6465, %v8302
        %v8369 = vadd.f32 %v6466, %v8305
        %v8370 = vadd.f32 %v6467, %v8310
        %v8371 = vadd.f32 %v6468, %v8313
        %v8372 = vadd.f32 %v6469, %v8318
        %v8373 = vadd.f32 %v6470, %v8321
        %v8374 = vadd.f32 %v6471, %v8326
        %v8375 = vadd.f32 %v6472, %v8329
        %v8376 = vadd.f32 %v6473, %v8334
        %v8377 = vadd.f32 %v6474, %v8337
        %v8378 = vadd.f32 %v6475, %v8342
        %v8379 = vadd.f32 %v6476, %v8345
        %8380 = vst [vmem:[%s385] sm:$0xff] %v8348
        %8381 = vst [vmem:[%s385 + $0x8] sm:$0xff] %v8349
        %8382 = vst [vmem:[%s385 + $0x10] sm:$0xff] %v8350
        %8383 = vst [vmem:[%s385 + $0x18] sm:$0xff] %v8351
        %8384 = vst [vmem:[%s385 + $0x20] sm:$0xff] %v8352
        %8385 = vst [vmem:[%s385 + $0x28] sm:$0xff] %v8353
        %8386 = vst [vmem:[%s385 + $0x30] sm:$0xff] %v8354
        %8387 = vst [vmem:[%s385 + $0x38] sm:$0xff] %v8355
        %8388 = vst [vmem:[%s385 + $0x40] sm:$0xff] %v8356
        %8389 = vst [vmem:[%s385 + $0x48] sm:$0xff] %v8357
        %8390 = vst [vmem:[%s385 + $0x50] sm:$0xff] %v8358
        %8391 = vst [vmem:[%s385 + $0x58] sm:$0xff] %v8359
        %8392 = vst [vmem:[%s385 + $0x60] sm:$0xff] %v8360
        %8393 = vst [vmem:[%s385 + $0x68] sm:$0xff] %v8361
        %8394 = vst [vmem:[%s385 + $0x70] sm:$0xff] %v8362
        %8395 = vst [vmem:[%s385 + $0x78] sm:$0xff] %v8363
        %8396 = vst [vmem:[%s385 + $0x80] sm:$0xff] %v8364
        %8397 = vst [vmem:[%s385 + $0x88] sm:$0xff] %v8365
        %8398 = vst [vmem:[%s385 + $0x90] sm:$0xff] %v8366
        %8399 = vst [vmem:[%s385 + $0x98] sm:$0xff] %v8367
        %8400 = vst [vmem:[%s385 + $0xa0] sm:$0xff] %v8368
        %8401 = vst [vmem:[%s385 + $0xa8] sm:$0xff] %v8369
        %8402 = vst [vmem:[%s385 + $0xb0] sm:$0xff] %v8370
        %8403 = vst [vmem:[%s385 + $0xb8] sm:$0xff] %v8371
        %8404 = vst [vmem:[%s385 + $0xc0] sm:$0xff] %v8372
        %8405 = vst [vmem:[%s385 + $0xc8] sm:$0xff] %v8373
        %8406 = vst [vmem:[%s385 + $0xd0] sm:$0xff] %v8374
        %8407 = vst [vmem:[%s385 + $0xd8] sm:$0xff] %v8375
        %8408 = vst [vmem:[%s385 + $0xe0] sm:$0xff] %v8376
        %8409 = vst [vmem:[%s385 + $0xe8] sm:$0xff] %v8377
        %8410 = vst [vmem:[%s385 + $0xf0] sm:$0xff] %v8378
        %8411 = vst [vmem:[%s385 + $0xf8] sm:$0xff] %v8379
        %s8412 = sand.u32 %s245, 1
        %s8413 = scalar_lea.sflag [#allocation3], %s8412
        %s8414 = sand.u32 %s245, 1
        %s8415 = smul.addr %s8414, 256
        %s8416 = scalar_lea.vmem [#allocation2], %s8415
        // Predicated region
        $region57: #{attention_with_mediators_forward.1} parent=55 // pred_check
          %p8417 = pneg %p255
        $region58: #{attention_with_mediators_forward.1} parent=55 // pred_check_branch
          %8419 = sbr.rel (%p8417) target = $region60
        $region59: #{attention_with_mediators_forward.1} parent=55 // pred_region
          %s8421 = ssub.s32 4096, 4096
          %8422 = vsyncadd %s8413, %s8421
          %s8423 = smul.addr %s23, 32
          %s8424 = smul.addr %s8423, 128
          %s8425 = scalar_lea.hbm %s9, %s8424
          %s8426 = sshll.u32 %s8416, 4
          %s8427 = int_to_ptr.vmem [resolvable:$true] %s8426
          %8432 = dma.vmem_to_hbm [thread:$0]  %s8427, 4096, %s8425, %s8413, 128, 128, 8
        $region60: #{attention_with_mediators_forward.1} parent=55 // pred_fallthru
          _
      $region56: #{attention_with_mediators_forward.1} parent=5 // pred_fallthru
        _
      %p8433 = scmp.le.s32.totalorder 2, %s18
      // Predicated region
      $region61: #{attention_with_mediators_forward.1} parent=5 // pred_check
        %p8434 = pneg %p8433
      $region62: #{attention_with_mediators_forward.1} parent=5 // pred_check_branch
        %8436 = sbr.rel (%p8434) target = $region64
      $region63: #{attention_with_mediators_forward.1} parent=5 // pred_region
        %s8437 = ssub.s32 %s18, 2
        // Predicated region
        $region65: #{attention_with_mediators_forward.1} parent=63 // pred_check
          %p8438 = pneg %p261
        $region66: #{attention_with_mediators_forward.1} parent=63 // pred_check_branch
          %8440 = sbr.rel (%p8438) target = $region68
        $region67: #{attention_with_mediators_forward.1} parent=63 // pred_region
          %s8441 = sand.u32 %s246, 1
          %s8442 = scalar_lea.sflag [#allocation3], %s8441
          %s8443 = sand.u32 %s246, 1
          %s8444 = smul.addr %s8443, 256
          %s8445 = scalar_lea.vmem [#allocation2], %s8444
          %8446 = dma.done %s8442, 4096
        $region68: #{attention_with_mediators_forward.1} parent=63 // pred_fallthru
          _
      $region64: #{attention_with_mediators_forward.1} parent=5 // pred_fallthru
        _
    $region6: #{attention_with_mediators_forward.1} parent=1 // loop_footer
      %s22 = sadd.s32 1, %s18
    $region7: #{attention_with_mediators_forward.1} parent=1 // loop_footer_branch
      %17 = sbr.rel target = $region3
    $region8: #{attention_with_mediators_forward.1} parent=1 // loop_exit
      _
    %8447 = vsyncpa [#allocation3], 1
    %s8448 = scalar_lea.sflag [#allocation3], 1
    %8449 = vsyncpa %s8448, 1

</llo_original>
